<compile_context>
chip_gen: v7x
topology: tpu7x:2x2x1
jax: 0.10.0
libtpu: 0.0.40
codegen_flags: <defaults>
</compile_context>

<pallas_src>
import functools

import jax
import jax.numpy as jnp
from jax.experimental import pallas as pl
from jax.experimental.pallas import tpu as pltpu


def _round_up(x, m):
    return ((x + m - 1) // m) * m


def _lstm_kernel(x_ref, len_ref, wih_ref, whh_ref, b_ref,
                 out_ref, ht_ref, ct_ref,
                 gx_scr, gates_scr, h_scr, c_scr,
                 *, t_blk, b_tile, hidden_pad):
    """One grid step = one (batch-tile, time-block).

    x_ref     : (T_BLK, B_TILE, Ep)   embedded inputs (MXU dtype, time-major)
    len_ref   : (B_TILE, 1) int32     sequence lengths (per batch tile)
    wih_ref   : (Ep, 4*Hp)            input->gates weights  (resident, MXU dtype)
    whh_ref   : (Hp, 4*Hp)            hidden->gates weights (resident, MXU dtype)
    b_ref     : (1, 4*Hp)  f32        fused bias b_ih + b_hh (resident)
    out_ref   : (T_BLK, B_TILE, Hp)   per-step hidden outputs (f32)
    ht_ref/ct_ref : (B_TILE, Hp) f32  final state (written on last time block)
    gx_scr    : (T_BLK*B_TILE, 4*Hp)  hoisted input projection (MXU dtype)
    gates_scr : (B_TILE, 4*Hp)  f32   per-step gate pre-activations (staged in
                                      VMEM so ~one gate of vregs is live)
    h_scr/c_scr : (B_TILE, Hp)  f32   recurrent state carried across time blocks
    """
    tb = pl.program_id(1)
    Hp = hidden_pad

    @pl.when(tb == 0)
    def _():
        h_scr[...] = jnp.zeros_like(h_scr)
        c_scr[...] = jnp.zeros_like(c_scr)

    # Hoisted input projection: one (T_BLK*B_TILE, Ep) x (Ep, 4Hp) MXU matmul
    # per time block (bf16 operands, f32 accumulation).  Stored in the MXU
    # dtype so the dominant scratch fits the v7x 64 MiB VMEM budget.
    e_pad = x_ref.shape[2]
    # Layout-preserving reshape: b_tile is a multiple of the sublane pack.
    x2d = x_ref[...].reshape(t_blk * b_tile, e_pad)
    gx_scr[...] = jnp.dot(x2d, wih_ref[...],
                          preferred_element_type=jnp.float32
                          ).astype(gx_scr.dtype)

    whh = whh_ref[...]                 # resident hidden->gates weights
    bias = b_ref[...]                  # (1, 4Hp) f32, added in f32 per step
    lengths = len_ref[...]             # (B_TILE, 1) int32
    mxu_dtype = whh.dtype
    t0 = tb * t_blk

    def step(k, carry):
        h, c = carry
        row0 = pl.multiple_of(k * b_tile, b_tile)
        gx_k = gx_scr[pl.ds(row0, b_tile), :]                # (B_TILE, 4Hp)
        # Recurrent projection (B_TILE, Hp) x (Hp, 4Hp); gates staged through
        # VMEM and sliced per gate to bound vreg live ranges at large B_TILE.
        gates_scr[...] = (jnp.dot(h.astype(mxu_dtype), whh,
                                  preferred_element_type=jnp.float32)
                          + gx_k.astype(jnp.float32) + bias)
        i_g = jax.nn.sigmoid(gates_scr[:, 0 * Hp:1 * Hp])
        f_g = jax.nn.sigmoid(gates_scr[:, 1 * Hp:2 * Hp])
        g_g = jnp.tanh(gates_scr[:, 2 * Hp:3 * Hp])
        o_g = jax.nn.sigmoid(gates_scr[:, 3 * Hp:4 * Hp])
        c_new = f_g * c + i_g * g_g
        h_new = o_g * jnp.tanh(c_new)
        # Masked state update: positions past the sequence length (including
        # any time/batch padding) keep the previous (h, c).
        m = ((t0 + k) < lengths).astype(jnp.float32)         # (B_TILE, 1)
        h = h + m * (h_new - h)
        c = c + m * (c_new - c)
        out_ref[k] = h
        return h, c

    h, c = jax.lax.fori_loop(0, t_blk, step, (h_scr[...], c_scr[...]),
                             unroll=True)
    h_scr[...] = h
    c_scr[...] = c

    @pl.when(tb == pl.num_programs(1) - 1)
    def _():
        ht_ref[...] = h
        ct_ref[...] = c


def masked_lstm_pallas(embeds_tm, lengths, wih_t, whh_t, bias, *,
                       t_blk=16, max_b_tile=128, target_batch_tiles=1,
                       mxu_dtype=jnp.bfloat16):
    """Masked single-layer LSTM (torch LSTMCell gate order i,f,g,o).

    embeds_tm : (S, B, E) time-major embedded inputs.
    lengths   : (B,) valid sequence lengths.
    Returns (out (S, B, H) f32, ht (B, H) f32, ct (B, H) f32).
    """
    S, B, E = embeds_tm.shape
    H = whh_t.shape[0]
    mxu_dtype = jnp.dtype(mxu_dtype)

    Hp = _round_up(H, 128)             # lane-dense gates / outputs
    Ep = _round_up(E, 128)             # lane-dense input loads

    # Sublane pack of the MXU dtype (8 for f32, 16 for bf16): b_tile multiples
    # of this keep the in-kernel (t_blk, b_tile, Ep) -> 2D reshape a pure view.
    sub = 32 // mxu_dtype.itemsize

    # Batch tile: as large as possible — MXU row utilization of the serial
    # h @ W_hh^T matmul is the bottleneck.  target_batch_tiles=2 keeps both
    # v7x TensorCores busy; max_b_tile ~128 (v5e) / up to 256 (v6e, v7x/core).
    cap = max(sub, (max_b_tile // sub) * sub)
    want = -(-B // max(1, int(target_batch_tiles)))          # ceil division
    b_tile = min(_round_up(max(want, 1), sub), cap)
    Bp = _round_up(B, b_tile)
    n_b = Bp // b_tile

    t_blk = max(1, min(t_blk, S))
    Sp = _round_up(S, t_blk)
    n_t = Sp // t_blk

    # Per-gate lane-aligned zero padding preserving torch's (i,f,g,o) layout.
    # Padded gate columns / rows are exactly zero, so padded hidden lanes keep
    # c == 0 (g = tanh(0) = 0) and padded batch rows stay zero via the mask.
    def pad_gates(w_t, rows_pad, dtype):
        rows = w_t.shape[0]
        out = jnp.zeros((rows_pad, 4 * Hp), dtype)
        for g in range(4):
            out = out.at[:rows, g * Hp:g * Hp + H].set(
                w_t[:, g * H:(g + 1) * H].astype(dtype))
        return out

    wih_p = pad_gates(wih_t, Ep, mxu_dtype)          # (Ep, 4Hp)  MXU operand
    whh_p = pad_gates(whh_t, Hp, mxu_dtype)          # (Hp, 4Hp)  MXU operand
    bias_p = pad_gates(bias, 1, jnp.float32)         # (1, 4Hp)   f32 VPU add

    # Time-major, lane/sublane padded activations and lengths.
    x_p = jnp.zeros((Sp, Bp, Ep), mxu_dtype)
    x_p = x_p.at[:S, :B, :E].set(embeds_tm.astype(mxu_dtype))
    len_p = jnp.zeros((Bp, 1), jnp.int32).at[:B, 0].set(
        lengths.astype(jnp.int32))

    kernel = functools.partial(_lstm_kernel, t_blk=t_blk, b_tile=b_tile,
                               hidden_pad=Hp)
    out_shapes = (
        jax.ShapeDtypeStruct((Sp, Bp, Hp), jnp.float32),
        jax.ShapeDtypeStruct((Bp, Hp), jnp.float32),
        jax.ShapeDtypeStruct((Bp, Hp), jnp.float32),
    )

    def build_call(single_buffer_resident):
        # Constant-index resident weight blocks: single-buffer them so they are
        # not double-buffered (pure VMEM waste for a constant index_map).
        res = (dict(pipeline_mode=pl.Buffered(1))
               if single_buffer_resident else {})
        grid_spec = pltpu.PrefetchScalarGridSpec(
            num_scalar_prefetch=0,
            grid=(n_b, n_t),
            in_specs=[
                pl.BlockSpec((t_blk, b_tile, Ep), lambda b, t: (t, b, 0)),   # x
                pl.BlockSpec((b_tile, 1), lambda b, t: (b, 0)),              # lengths
                pl.BlockSpec((Ep, 4 * Hp), lambda b, t: (0, 0), **res),      # W_ih^T
                pl.BlockSpec((Hp, 4 * Hp), lambda b, t: (0, 0), **res),      # W_hh^T
                pl.BlockSpec((1, 4 * Hp), lambda b, t: (0, 0), **res),       # bias
            ],
            out_specs=[
                pl.BlockSpec((t_blk, b_tile, Hp), lambda b, t: (t, b, 0)),   # out seq
                pl.BlockSpec((b_tile, Hp), lambda b, t: (b, 0)),             # ht
                pl.BlockSpec((b_tile, Hp), lambda b, t: (b, 0)),             # ct
            ],
            scratch_shapes=[
                pltpu.VMEM((t_blk * b_tile, 4 * Hp), mxu_dtype),   # gx block
                pltpu.VMEM((b_tile, 4 * Hp), jnp.float32),         # gates
                pltpu.VMEM((b_tile, Hp), jnp.float32),             # h state
                pltpu.VMEM((b_tile, Hp), jnp.float32),             # c state
            ],
        )
        return pl.pallas_call(
            kernel,
            out_shape=out_shapes,
            grid_spec=grid_spec,
            compiler_params=pltpu.CompilerParams(
                # Batch axis may split across TensorCores on v7x (pass
                # target_batch_tiles=2 there); time axis carries the VMEM state
                # and must stay sequential ("arbitrary").
                dimension_semantics=("parallel", "arbitrary"),
                # Explicit scoped-VMEM budget: above v5e's 16 MiB default,
                # ~25% headroom under v7x's 64 MiB physical VMEM.
                vmem_limit_bytes=48 * 1024 * 1024,
            ),
        )

    args = (x_p, len_p, wih_p, whh_p, bias_p)
    try:
        out_p, ht_p, ct_p = build_call(True)(*args)
    except Exception:
        # pipeline_mode=pl.Buffered(1) is a VMEM-footprint optimization only;
        # fall back to default double-buffering if this jax/Mosaic version
        # rejects it on pallas_call BlockSpecs.
        out_p, ht_p, ct_p = build_call(False)(*args)

    return out_p[:S, :B, :H], ht_p[:B, :H], ct_p[:B, :H]


def translator_encoder_rnn_forward(inputs, lengths, params, *, t_blk=16,
                                   max_b_tile=128, target_batch_tiles=1,
                                   mxu_dtype=jnp.bfloat16):
    """inputs: (B, S) int32 token ids; lengths: (B,) int32.

    Returns (output (S,B,H), ht (B,H), ct (B,H), mask (B,S)) matching the
    torch module's (output.transpose(0,1), ht.squeeze(), ct.squeeze(), mask).
    """
    emb_table = params["embedding"]     # (V, E), padding_idx row is zero
    wih_t = params["wih_t"]             # (E, 4H)
    whh_t = params["whh_t"]             # (H, 4H)
    bias = params["bias"]               # (1, 4H)  = b_ih + b_hh

    B, S = inputs.shape

    # nn.Embedding gather (+ nn.Dropout = identity at eval), emitted directly
    # in time-major order and MXU dtype so no separate HBM transpose pass of
    # the (B,S,E) activations sits in front of the kernel.
    embeds_tm = jnp.take(emb_table.astype(mxu_dtype), jnp.transpose(inputs),
                         axis=0)                                      # (S,B,E)

    # create_mask(batch, max_len, lengths)
    mask = (jnp.arange(S)[None, :] < lengths[:, None]).astype(jnp.float32)

    out, ht, ct = masked_lstm_pallas(
        embeds_tm, lengths, wih_t, whh_t, bias, t_blk=t_blk,
        max_b_tile=max_b_tile, target_batch_tiles=target_batch_tiles,
        mxu_dtype=mxu_dtype)
    return out, ht, ct, mask


def _reference_forward(inputs, lengths, params):
    """Pure-JAX f32 reference of the same forward (lax.scan masked LSTM)."""
    emb_table = params["embedding"]
    wih_t, whh_t, bias = params["wih_t"], params["whh_t"], params["bias"]
    B, S = inputs.shape
    H = whh_t.shape[0]
    embeds = jnp.take(emb_table, inputs, axis=0)
    mask = (jnp.arange(S)[None, :] < lengths[:, None]).astype(jnp.float32)

    def step(carry, xs):
        h, c = carry
        x_t, m_t = xs
        gates = x_t @ wih_t + h @ whh_t + bias
        i_g = jax.nn.sigmoid(gates[:, 0 * H:1 * H])
        f_g = jax.nn.sigmoid(gates[:, 1 * H:2 * H])
        g_g = jnp.tanh(gates[:, 2 * H:3 * H])
        o_g = jax.nn.sigmoid(gates[:, 3 * H:4 * H])
        c_new = f_g * c + i_g * g_g
        h_new = o_g * jnp.tanh(c_new)
        h2 = h_new * m_t + h * (1.0 - m_t)
        c2 = c_new * m_t + c * (1.0 - m_t)
        return (h2, c2), h2

    h0 = jnp.zeros((B, H), jnp.float32)
    c0 = jnp.zeros((B, H), jnp.float32)
    xs = (jnp.transpose(embeds, (1, 0, 2)),
          jnp.transpose(mask, (1, 0))[:, :, None])
    (ht, ct), out = jax.lax.scan(step, (h0, c0), xs)
    return out, ht, ct, mask


def init_params(key, vocab_size, embedding_size, hidden_size, padding_idx):
    k_emb, k_wih, k_whh, k_bih, k_bhh = jax.random.split(key, 5)
    scale = 1.0 / jnp.sqrt(hidden_size)
    emb = jax.random.normal(k_emb, (vocab_size, embedding_size), jnp.float32) * 0.1
    emb = emb.at[padding_idx].set(0.0)                    # padding_idx row zeroed
    w_ih = jax.random.uniform(k_wih, (4 * hidden_size, embedding_size),
                              jnp.float32, -scale, scale)
    w_hh = jax.random.uniform(k_whh, (4 * hidden_size, hidden_size),
                              jnp.float32, -scale, scale)
    b_ih = jax.random.uniform(k_bih, (4 * hidden_size,), jnp.float32, -scale, scale)
    b_hh = jax.random.uniform(k_bhh, (4 * hidden_size,), jnp.float32, -scale, scale)
    return {
        "embedding": emb,
        "wih_t": jnp.transpose(w_ih),                     # (E, 4H)
        "whh_t": jnp.transpose(w_hh),                     # (H, 4H)
        "bias": (b_ih + b_hh)[None, :],                   # (1, 4H)  = b_ih + b_hh
    }


if __name__ == "__main__":
    # Small shapes consistent with the module's forward.
    VOCAB, EMB, HID = 16, 32, 32
    BATCH, SEQ = 2, 8
    PAD_IDX = 0

    key = jax.random.PRNGKey(0)
    k_par, k_tok = jax.random.split(key)
    params = init_params(k_par, VOCAB, EMB, HID, PAD_IDX)

    inputs = jax.random.randint(k_tok, (BATCH, SEQ), 1, VOCAB).astype(jnp.int32)
    lengths = jnp.array([8, 5], dtype=jnp.int32)
    # pad tokens past each sequence's length with padding_idx
    inputs = jnp.where(jnp.arange(SEQ)[None, :] < lengths[:, None], inputs, PAD_IDX)

    out, ht, ct, mask = translator_encoder_rnn_forward(inputs, lengths, params)
    jax.block_until_ready((out, ht, ct, mask))

    ref_out, ref_ht, ref_ct, ref_mask = _reference_forward(inputs, lengths, params)
    assert out.shape == (SEQ, BATCH, HID)
    assert ht.shape == (BATCH, HID) and ct.shape == (BATCH, HID)
    assert mask.shape == (BATCH, SEQ)
    # bf16 MXU operands (f32 accumulation / f32 gate math) -> loosened tolerance.
    assert jnp.allclose(out, ref_out, atol=2e-2, rtol=2e-2)
    assert jnp.allclose(ht, ref_ht, atol=2e-2, rtol=2e-2)
    assert jnp.allclose(ct, ref_ct, atol=2e-2, rtol=2e-2)
    assert jnp.allclose(mask, ref_mask)

    print("KERNEL_OK")
</pallas_src>

<mosaic_0001>
module attributes {stable_mosaic.version = 11 : i64} {
  func.func @_lstm_kernel(%arg0: i32, %arg1: i32, %arg2: memref<8x16x128xbf16, #tpu.memory_space<vmem>>, %arg3: memref<16x1xi32, #tpu.memory_space<vmem>>, %arg4: memref<128x512xbf16, #tpu.memory_space<vmem>>, %arg5: memref<128x512xbf16, #tpu.memory_space<vmem>>, %arg6: memref<1x512xf32, #tpu.memory_space<vmem>>, %arg7: memref<8x16x128xf32, #tpu.memory_space<vmem>>, %arg8: memref<16x128xf32, #tpu.memory_space<vmem>>, %arg9: memref<16x128xf32, #tpu.memory_space<vmem>>, %arg10: memref<128x512xbf16, #tpu.memory_space<vmem>>, %arg11: memref<16x512xf32, #tpu.memory_space<vmem>>, %arg12: memref<16x128xf32, #tpu.memory_space<vmem>>, %arg13: memref<16x128xf32, #tpu.memory_space<vmem>>) attributes {dimension_semantics = [#tpu.dimension_semantics<parallel>, #tpu.dimension_semantics<arbitrary>], iteration_bounds = array<i64: 1, 1>, scalar_prefetch = 0 : i64, scratch_operands = 4 : i64, tpu.core_type = #tpu.core_type<tc>, window_params = [{transform_indices = @transform_0, window_bounds = array<i64: 8, 16, 128>}, {transform_indices = @transform_1, window_bounds = array<i64: 16, 1>}, {pipeline_mode = #tpu.pipeline_mode<synchronous>, transform_indices = @transform_2, window_bounds = array<i64: 128, 512>}, {pipeline_mode = #tpu.pipeline_mode<synchronous>, transform_indices = @transform_3, window_bounds = array<i64: 128, 512>}, {pipeline_mode = #tpu.pipeline_mode<synchronous>, transform_indices = @transform_4, window_bounds = array<i64: 1, 512>}, {transform_indices = @transform_5, window_bounds = array<i64: 8, 16, 128>}, {transform_indices = @transform_6, window_bounds = array<i64: 16, 128>}, {transform_indices = @transform_7, window_bounds = array<i64: 16, 128>}]} {
    %c0_i32 = arith.constant 0 : i32
    %0 = arith.cmpi eq, %arg1, %c0_i32 : i32
    %1 = arith.extui %0 : i1 to i32
    %c0_i32_0 = arith.constant 0 : i32
    %2 = arith.cmpi ne, %1, %c0_i32_0 : i32
    scf.if %2 {
      %cst_165 = arith.constant 0.000000e+00 : f32
      %444 = vector.broadcast %cst_165 : f32 to vector<16x128xf32>
      %c0_166 = arith.constant 0 : index
      %c0_167 = arith.constant 0 : index
      %445 = vector.load %arg12[%c0_166, %c0_167] : memref<16x128xf32, #tpu.memory_space<vmem>>, vector<16x128xf32>
      tpu.vector_store %arg12[%c0_166, %c0_167], %444 {strides = array<i32>} : memref<16x128xf32, #tpu.memory_space<vmem>>, vector<16x128xf32>,
      %cst_168 = arith.constant 0.000000e+00 : f32
      %446 = vector.broadcast %cst_168 : f32 to vector<16x128xf32>
      %c0_169 = arith.constant 0 : index
      %c0_170 = arith.constant 0 : index
      %447 = vector.load %arg13[%c0_169, %c0_170] : memref<16x128xf32, #tpu.memory_space<vmem>>, vector<16x128xf32>
      tpu.vector_store %arg13[%c0_169, %c0_170], %446 {strides = array<i32>} : memref<16x128xf32, #tpu.memory_space<vmem>>, vector<16x128xf32>,
    } else {
    }
    %c0 = arith.constant 0 : index
    %c0_1 = arith.constant 0 : index
    %c0_2 = arith.constant 0 : index
    %3 = vector.load %arg2[%c0, %c0_1, %c0_2] : memref<8x16x128xbf16, #tpu.memory_space<vmem>>, vector<8x16x128xbf16>
    %4 = vector.shape_cast %3 : vector<8x16x128xbf16> to vector<128x128xbf16>
    %c0_3 = arith.constant 0 : index
    %c0_4 = arith.constant 0 : index
    %5 = vector.load %arg4[%c0_3, %c0_4] : memref<128x512xbf16, #tpu.memory_space<vmem>>, vector<128x512xbf16>
    %cst = arith.constant dense<0.000000e+00> : vector<128x512xf32>
    %6 = tpu.matmul %4, %5, %cst {dimension_numbers = #tpu.dot_dimension_numbers<[1], [0], [0], [1], [0, 0, 1, 1], [], []>} : vector<128x128xbf16>, vector<128x512xbf16>, vector<128x512xf32> -> vector<128x512xf32>
    %7 = arith.truncf %6 : vector<128x512xf32> to vector<128x512xbf16>
    %c0_5 = arith.constant 0 : index
    %c0_6 = arith.constant 0 : index
    %8 = vector.load %arg10[%c0_5, %c0_6] : memref<128x512xbf16, #tpu.memory_space<vmem>>, vector<128x512xbf16>
    tpu.vector_store %arg10[%c0_5, %c0_6], %7 {strides = array<i32>} : memref<128x512xbf16, #tpu.memory_space<vmem>>, vector<128x512xbf16>,
    %c0_7 = arith.constant 0 : index
    %c0_8 = arith.constant 0 : index
    %9 = vector.load %arg5[%c0_7, %c0_8] : memref<128x512xbf16, #tpu.memory_space<vmem>>, vector<128x512xbf16>
    %c0_9 = arith.constant 0 : index
    %c0_10 = arith.constant 0 : index
    %10 = vector.load %arg6[%c0_9, %c0_10] : memref<1x512xf32, #tpu.memory_space<vmem>>, vector<1x512xf32>
    %c0_11 = arith.constant 0 : index
    %c0_12 = arith.constant 0 : index
    %11 = vector.load %arg3[%c0_11, %c0_12] : memref<16x1xi32, #tpu.memory_space<vmem>>, vector<16x1xi32>
    %c8_i32 = arith.constant 8 : i32
    %12 = arith.muli %arg1, %c8_i32 : i32
    %c0_13 = arith.constant 0 : index
    %c0_14 = arith.constant 0 : index
    %13 = vector.load %arg12[%c0_13, %c0_14] : memref<16x128xf32, #tpu.memory_space<vmem>>, vector<16x128xf32>
    %c0_15 = arith.constant 0 : index
    %c0_16 = arith.constant 0 : index
    %14 = vector.load %arg13[%c0_15, %c0_16] : memref<16x128xf32, #tpu.memory_space<vmem>>, vector<16x128xf32>
    %c0_i32_17 = arith.constant 0 : i32
    %c16_i32 = arith.constant 16 : i32
    %15 = arith.muli %c0_i32_17, %c16_i32 : i32
    %16 = tpu.assume_multiple %15, 16 : i32
    %17 = arith.index_cast %16 : i32 to index
    %c0_18 = arith.constant 0 : index
    %18 = vector.load %arg10[%17, %c0_18] : memref<128x512xbf16, #tpu.memory_space<vmem>>, vector<16x512xbf16>
    %19 = arith.truncf %13 : vector<16x128xf32> to vector<16x128xbf16>
    %cst_19 = arith.constant dense<0.000000e+00> : vector<16x512xf32>
    %20 = tpu.matmul %19, %9, %cst_19 {dimension_numbers = #tpu.dot_dimension_numbers<[1], [0], [0], [1], [0, 0, 1, 1], [], []>} : vector<16x128xbf16>, vector<128x512xbf16>, vector<16x512xf32> -> vector<16x512xf32>
    %21 = arith.extf %18 : vector<16x512xbf16> to vector<16x512xf32>
    %22 = arith.addf %20, %21 : vector<16x512xf32>
    %23 = vector.broadcast %10 : vector<1x512xf32> to vector<16x512xf32>
    %24 = arith.addf %22, %23 : vector<16x512xf32>
    %c0_20 = arith.constant 0 : index
    %c0_21 = arith.constant 0 : index
    %25 = vector.load %arg11[%c0_20, %c0_21] : memref<16x512xf32, #tpu.memory_space<vmem>>, vector<16x512xf32>
    tpu.vector_store %arg11[%c0_20, %c0_21], %24 {strides = array<i32>} : memref<16x512xf32, #tpu.memory_space<vmem>>, vector<16x512xf32>,
    %c0_22 = arith.constant 0 : index
    %c0_23 = arith.constant 0 : index
    %26 = vector.load %arg11[%c0_22, %c0_23] : memref<16x512xf32, #tpu.memory_space<vmem>>, vector<16x128xf32>
    %27 = arith.negf %26 : vector<16x128xf32>
    %28 = math.exp %27 : vector<16x128xf32>
    %cst_24 = arith.constant 1.000000e+00 : f32
    %29 = vector.broadcast %cst_24 : f32 to vector<16x128xf32>
    %30 = arith.addf %29, %28 : vector<16x128xf32>
    %31 = arith.divf %29, %30 : vector<16x128xf32>
    %c0_25 = arith.constant 0 : index
    %c128 = arith.constant 128 : index
    %32 = vector.load %arg11[%c0_25, %c128] : memref<16x512xf32, #tpu.memory_space<vmem>>, vector<16x128xf32>
    %33 = arith.negf %32 : vector<16x128xf32>
    %34 = math.exp %33 : vector<16x128xf32>
    %cst_26 = arith.constant 1.000000e+00 : f32
    %35 = vector.broadcast %cst_26 : f32 to vector<16x128xf32>
    %36 = arith.addf %35, %34 : vector<16x128xf32>
    %37 = arith.divf %35, %36 : vector<16x128xf32>
    %c0_27 = arith.constant 0 : index
    %c256 = arith.constant 256 : index
    %38 = vector.load %arg11[%c0_27, %c256] : memref<16x512xf32, #tpu.memory_space<vmem>>, vector<16x128xf32>
    %39 = math.tanh %38 : vector<16x128xf32>
    %c0_28 = arith.constant 0 : index
    %c384 = arith.constant 384 : index
    %40 = vector.load %arg11[%c0_28, %c384] : memref<16x512xf32, #tpu.memory_space<vmem>>, vector<16x128xf32>
    %41 = arith.negf %40 : vector<16x128xf32>
    %42 = math.exp %41 : vector<16x128xf32>
    %cst_29 = arith.constant 1.000000e+00 : f32
    %43 = vector.broadcast %cst_29 : f32 to vector<16x128xf32>
    %44 = arith.addf %43, %42 : vector<16x128xf32>
    %45 = arith.divf %43, %44 : vector<16x128xf32>
    %46 = arith.mulf %37, %14 : vector<16x128xf32>
    %47 = arith.mulf %31, %39 : vector<16x128xf32>
    %48 = arith.addf %46, %47 : vector<16x128xf32>
    %49 = math.tanh %48 : vector<16x128xf32>
    %50 = arith.mulf %45, %49 : vector<16x128xf32>
    %51 = arith.addi %12, %c0_i32_17 : i32
    %52 = vector.broadcast %51 : i32 to vector<16x1xi32>
    %53 = arith.cmpi slt, %52, %11 : vector<16x1xi32>
    %54 = arith.extui %53 : vector<16x1xi1> to vector<16x1xi32>
    %55 = arith.sitofp %54 : vector<16x1xi32> to vector<16x1xf32>
    %56 = arith.subf %50, %13 : vector<16x128xf32>
    %57 = vector.broadcast %55 : vector<16x1xf32> to vector<16x128xf32>
    %58 = arith.mulf %57, %56 : vector<16x128xf32>
    %59 = arith.addf %13, %58 : vector<16x128xf32>
    %60 = arith.subf %48, %14 : vector<16x128xf32>
    %61 = vector.broadcast %55 : vector<16x1xf32> to vector<16x128xf32>
    %62 = arith.mulf %61, %60 : vector<16x128xf32>
    %63 = arith.addf %14, %62 : vector<16x128xf32>
    %64 = arith.index_cast %c0_i32_17 : i32 to index
    %c0_30 = arith.constant 0 : index
    %c0_31 = arith.constant 0 : index
    %65 = vector.load %arg7[%64, %c0_30, %c0_31] : memref<8x16x128xf32, #tpu.memory_space<vmem>>, vector<1x16x128xf32>
    %66 = vector.shape_cast %65 : vector<1x16x128xf32> to vector<16x128xf32>
    %67 = vector.shape_cast %59 : vector<16x128xf32> to vector<1x16x128xf32>
    tpu.vector_store %arg7[%64, %c0_30, %c0_31], %67 {strides = array<i32>} : memref<8x16x128xf32, #tpu.memory_space<vmem>>, vector<1x16x128xf32>,
    %c1_i32 = arith.constant 1 : i32
    %c16_i32_32 = arith.constant 16 : i32
    %68 = arith.muli %c1_i32, %c16_i32_32 : i32
    %69 = tpu.assume_multiple %68, 16 : i32
    %70 = arith.index_cast %69 : i32 to index
    %c0_33 = arith.constant 0 : index
    %71 = vector.load %arg10[%70, %c0_33] : memref<128x512xbf16, #tpu.memory_space<vmem>>, vector<16x512xbf16>
    %72 = arith.truncf %59 : vector<16x128xf32> to vector<16x128xbf16>
    %cst_34 = arith.constant dense<0.000000e+00> : vector<16x512xf32>
    %73 = tpu.matmul %72, %9, %cst_34 {dimension_numbers = #tpu.dot_dimension_numbers<[1], [0], [0], [1], [0, 0, 1, 1], [], []>} : vector<16x128xbf16>, vector<128x512xbf16>, vector<16x512xf32> -> vector<16x512xf32>
    %74 = arith.extf %71 : vector<16x512xbf16> to vector<16x512xf32>
    %75 = arith.addf %73, %74 : vector<16x512xf32>
    %76 = vector.broadcast %10 : vector<1x512xf32> to vector<16x512xf32>
    %77 = arith.addf %75, %76 : vector<16x512xf32>
    %c0_35 = arith.constant 0 : index
    %c0_36 = arith.constant 0 : index
    %78 = vector.load %arg11[%c0_35, %c0_36] : memref<16x512xf32, #tpu.memory_space<vmem>>, vector<16x512xf32>
    tpu.vector_store %arg11[%c0_35, %c0_36], %77 {strides = array<i32>} : memref<16x512xf32, #tpu.memory_space<vmem>>, vector<16x512xf32>,
    %c0_37 = arith.constant 0 : index
    %c0_38 = arith.constant 0 : index
    %79 = vector.load %arg11[%c0_37, %c0_38] : memref<16x512xf32, #tpu.memory_space<vmem>>, vector<16x128xf32>
    %80 = arith.negf %79 : vector<16x128xf32>
    %81 = math.exp %80 : vector<16x128xf32>
    %cst_39 = arith.constant 1.000000e+00 : f32
    %82 = vector.broadcast %cst_39 : f32 to vector<16x128xf32>
    %83 = arith.addf %82, %81 : vector<16x128xf32>
    %84 = arith.divf %82, %83 : vector<16x128xf32>
    %c0_40 = arith.constant 0 : index
    %c128_41 = arith.constant 128 : index
    %85 = vector.load %arg11[%c0_40, %c128_41] : memref<16x512xf32, #tpu.memory_space<vmem>>, vector<16x128xf32>
    %86 = arith.negf %85 : vector<16x128xf32>
    %87 = math.exp %86 : vector<16x128xf32>
    %cst_42 = arith.constant 1.000000e+00 : f32
    %88 = vector.broadcast %cst_42 : f32 to vector<16x128xf32>
    %89 = arith.addf %88, %87 : vector<16x128xf32>
    %90 = arith.divf %88, %89 : vector<16x128xf32>
    %c0_43 = arith.constant 0 : index
    %c256_44 = arith.constant 256 : index
    %91 = vector.load %arg11[%c0_43, %c256_44] : memref<16x512xf32, #tpu.memory_space<vmem>>, vector<16x128xf32>
    %92 = math.tanh %91 : vector<16x128xf32>
    %c0_45 = arith.constant 0 : index
    %c384_46 = arith.constant 384 : index
    %93 = vector.load %arg11[%c0_45, %c384_46] : memref<16x512xf32, #tpu.memory_space<vmem>>, vector<16x128xf32>
    %94 = arith.negf %93 : vector<16x128xf32>
    %95 = math.exp %94 : vector<16x128xf32>
    %cst_47 = arith.constant 1.000000e+00 : f32
    %96 = vector.broadcast %cst_47 : f32 to vector<16x128xf32>
    %97 = arith.addf %96, %95 : vector<16x128xf32>
    %98 = arith.divf %96, %97 : vector<16x128xf32>
    %99 = arith.mulf %90, %63 : vector<16x128xf32>
    %100 = arith.mulf %84, %92 : vector<16x128xf32>
    %101 = arith.addf %99, %100 : vector<16x128xf32>
    %102 = math.tanh %101 : vector<16x128xf32>
    %103 = arith.mulf %98, %102 : vector<16x128xf32>
    %104 = arith.addi %12, %c1_i32 : i32
    %105 = vector.broadcast %104 : i32 to vector<16x1xi32>
    %106 = arith.cmpi slt, %105, %11 : vector<16x1xi32>
    %107 = arith.extui %106 : vector<16x1xi1> to vector<16x1xi32>
    %108 = arith.sitofp %107 : vector<16x1xi32> to vector<16x1xf32>
    %109 = arith.subf %103, %59 : vector<16x128xf32>
    %110 = vector.broadcast %108 : vector<16x1xf32> to vector<16x128xf32>
    %111 = arith.mulf %110, %109 : vector<16x128xf32>
    %112 = arith.addf %59, %111 : vector<16x128xf32>
    %113 = arith.subf %101, %63 : vector<16x128xf32>
    %114 = vector.broadcast %108 : vector<16x1xf32> to vector<16x128xf32>
    %115 = arith.mulf %114, %113 : vector<16x128xf32>
    %116 = arith.addf %63, %115 : vector<16x128xf32>
    %117 = arith.index_cast %c1_i32 : i32 to index
    %c0_48 = arith.constant 0 : index
    %c0_49 = arith.constant 0 : index
    %118 = vector.load %arg7[%117, %c0_48, %c0_49] : memref<8x16x128xf32, #tpu.memory_space<vmem>>, vector<1x16x128xf32>
    %119 = vector.shape_cast %118 : vector<1x16x128xf32> to vector<16x128xf32>
    %120 = vector.shape_cast %112 : vector<16x128xf32> to vector<1x16x128xf32>
    tpu.vector_store %arg7[%117, %c0_48, %c0_49], %120 {strides = array<i32>} : memref<8x16x128xf32, #tpu.memory_space<vmem>>, vector<1x16x128xf32>,
    %c2_i32 = arith.constant 2 : i32
    %c16_i32_50 = arith.constant 16 : i32
    %121 = arith.muli %c2_i32, %c16_i32_50 : i32
    %122 = tpu.assume_multiple %121, 16 : i32
    %123 = arith.index_cast %122 : i32 to index
    %c0_51 = arith.constant 0 : index
    %124 = vector.load %arg10[%123, %c0_51] : memref<128x512xbf16, #tpu.memory_space<vmem>>, vector<16x512xbf16>
    %125 = arith.truncf %112 : vector<16x128xf32> to vector<16x128xbf16>
    %cst_52 = arith.constant dense<0.000000e+00> : vector<16x512xf32>
    %126 = tpu.matmul %125, %9, %cst_52 {dimension_numbers = #tpu.dot_dimension_numbers<[1], [0], [0], [1], [0, 0, 1, 1], [], []>} : vector<16x128xbf16>, vector<128x512xbf16>, vector<16x512xf32> -> vector<16x512xf32>
    %127 = arith.extf %124 : vector<16x512xbf16> to vector<16x512xf32>
    %128 = arith.addf %126, %127 : vector<16x512xf32>
    %129 = vector.broadcast %10 : vector<1x512xf32> to vector<16x512xf32>
    %130 = arith.addf %128, %129 : vector<16x512xf32>
    %c0_53 = arith.constant 0 : index
    %c0_54 = arith.constant 0 : index
    %131 = vector.load %arg11[%c0_53, %c0_54] : memref<16x512xf32, #tpu.memory_space<vmem>>, vector<16x512xf32>
    tpu.vector_store %arg11[%c0_53, %c0_54], %130 {strides = array<i32>} : memref<16x512xf32, #tpu.memory_space<vmem>>, vector<16x512xf32>,
    %c0_55 = arith.constant 0 : index
    %c0_56 = arith.constant 0 : index
    %132 = vector.load %arg11[%c0_55, %c0_56] : memref<16x512xf32, #tpu.memory_space<vmem>>, vector<16x128xf32>
    %133 = arith.negf %132 : vector<16x128xf32>
    %134 = math.exp %133 : vector<16x128xf32>
    %cst_57 = arith.constant 1.000000e+00 : f32
    %135 = vector.broadcast %cst_57 : f32 to vector<16x128xf32>
    %136 = arith.addf %135, %134 : vector<16x128xf32>
    %137 = arith.divf %135, %136 : vector<16x128xf32>
    %c0_58 = arith.constant 0 : index
    %c128_59 = arith.constant 128 : index
    %138 = vector.load %arg11[%c0_58, %c128_59] : memref<16x512xf32, #tpu.memory_space<vmem>>, vector<16x128xf32>
    %139 = arith.negf %138 : vector<16x128xf32>
    %140 = math.exp %139 : vector<16x128xf32>
    %cst_60 = arith.constant 1.000000e+00 : f32
    %141 = vector.broadcast %cst_60 : f32 to vector<16x128xf32>
    %142 = arith.addf %141, %140 : vector<16x128xf32>
    %143 = arith.divf %141, %142 : vector<16x128xf32>
    %c0_61 = arith.constant 0 : index
    %c256_62 = arith.constant 256 : index
    %144 = vector.load %arg11[%c0_61, %c256_62] : memref<16x512xf32, #tpu.memory_space<vmem>>, vector<16x128xf32>
    %145 = math.tanh %144 : vector<16x128xf32>
    %c0_63 = arith.constant 0 : index
    %c384_64 = arith.constant 384 : index
    %146 = vector.load %arg11[%c0_63, %c384_64] : memref<16x512xf32, #tpu.memory_space<vmem>>, vector<16x128xf32>
    %147 = arith.negf %146 : vector<16x128xf32>
    %148 = math.exp %147 : vector<16x128xf32>
    %cst_65 = arith.constant 1.000000e+00 : f32
    %149 = vector.broadcast %cst_65 : f32 to vector<16x128xf32>
    %150 = arith.addf %149, %148 : vector<16x128xf32>
    %151 = arith.divf %149, %150 : vector<16x128xf32>
    %152 = arith.mulf %143, %116 : vector<16x128xf32>
    %153 = arith.mulf %137, %145 : vector<16x128xf32>
    %154 = arith.addf %152, %153 : vector<16x128xf32>
    %155 = math.tanh %154 : vector<16x128xf32>
    %156 = arith.mulf %151, %155 : vector<16x128xf32>
    %157 = arith.addi %12, %c2_i32 : i32
    %158 = vector.broadcast %157 : i32 to vector<16x1xi32>
    %159 = arith.cmpi slt, %158, %11 : vector<16x1xi32>
    %160 = arith.extui %159 : vector<16x1xi1> to vector<16x1xi32>
    %161 = arith.sitofp %160 : vector<16x1xi32> to vector<16x1xf32>
    %162 = arith.subf %156, %112 : vector<16x128xf32>
    %163 = vector.broadcast %161 : vector<16x1xf32> to vector<16x128xf32>
    %164 = arith.mulf %163, %162 : vector<16x128xf32>
    %165 = arith.addf %112, %164 : vector<16x128xf32>
    %166 = arith.subf %154, %116 : vector<16x128xf32>
    %167 = vector.broadcast %161 : vector<16x1xf32> to vector<16x128xf32>
    %168 = arith.mulf %167, %166 : vector<16x128xf32>
    %169 = arith.addf %116, %168 : vector<16x128xf32>
    %170 = arith.index_cast %c2_i32 : i32 to index
    %c0_66 = arith.constant 0 : index
    %c0_67 = arith.constant 0 : index
    %171 = vector.load %arg7[%170, %c0_66, %c0_67] : memref<8x16x128xf32, #tpu.memory_space<vmem>>, vector<1x16x128xf32>
    %172 = vector.shape_cast %171 : vector<1x16x128xf32> to vector<16x128xf32>
    %173 = vector.shape_cast %165 : vector<16x128xf32> to vector<1x16x128xf32>
    tpu.vector_store %arg7[%170, %c0_66, %c0_67], %173 {strides = array<i32>} : memref<8x16x128xf32, #tpu.memory_space<vmem>>, vector<1x16x128xf32>,
    %c3_i32 = arith.constant 3 : i32
    %c16_i32_68 = arith.constant 16 : i32
    %174 = arith.muli %c3_i32, %c16_i32_68 : i32
    %175 = tpu.assume_multiple %174, 16 : i32
    %176 = arith.index_cast %175 : i32 to index
    %c0_69 = arith.constant 0 : index
    %177 = vector.load %arg10[%176, %c0_69] : memref<128x512xbf16, #tpu.memory_space<vmem>>, vector<16x512xbf16>
    %178 = arith.truncf %165 : vector<16x128xf32> to vector<16x128xbf16>
    %cst_70 = arith.constant dense<0.000000e+00> : vector<16x512xf32>
    %179 = tpu.matmul %178, %9, %cst_70 {dimension_numbers = #tpu.dot_dimension_numbers<[1], [0], [0], [1], [0, 0, 1, 1], [], []>} : vector<16x128xbf16>, vector<128x512xbf16>, vector<16x512xf32> -> vector<16x512xf32>
    %180 = arith.extf %177 : vector<16x512xbf16> to vector<16x512xf32>
    %181 = arith.addf %179, %180 : vector<16x512xf32>
    %182 = vector.broadcast %10 : vector<1x512xf32> to vector<16x512xf32>
    %183 = arith.addf %181, %182 : vector<16x512xf32>
    %c0_71 = arith.constant 0 : index
    %c0_72 = arith.constant 0 : index
    %184 = vector.load %arg11[%c0_71, %c0_72] : memref<16x512xf32, #tpu.memory_space<vmem>>, vector<16x512xf32>
    tpu.vector_store %arg11[%c0_71, %c0_72], %183 {strides = array<i32>} : memref<16x512xf32, #tpu.memory_space<vmem>>, vector<16x512xf32>,
    %c0_73 = arith.constant 0 : index
    %c0_74 = arith.constant 0 : index
    %185 = vector.load %arg11[%c0_73, %c0_74] : memref<16x512xf32, #tpu.memory_space<vmem>>, vector<16x128xf32>
    %186 = arith.negf %185 : vector<16x128xf32>
    %187 = math.exp %186 : vector<16x128xf32>
    %cst_75 = arith.constant 1.000000e+00 : f32
    %188 = vector.broadcast %cst_75 : f32 to vector<16x128xf32>
    %189 = arith.addf %188, %187 : vector<16x128xf32>
    %190 = arith.divf %188, %189 : vector<16x128xf32>
    %c0_76 = arith.constant 0 : index
    %c128_77 = arith.constant 128 : index
    %191 = vector.load %arg11[%c0_76, %c128_77] : memref<16x512xf32, #tpu.memory_space<vmem>>, vector<16x128xf32>
    %192 = arith.negf %191 : vector<16x128xf32>
    %193 = math.exp %192 : vector<16x128xf32>
    %cst_78 = arith.constant 1.000000e+00 : f32
    %194 = vector.broadcast %cst_78 : f32 to vector<16x128xf32>
    %195 = arith.addf %194, %193 : vector<16x128xf32>
    %196 = arith.divf %194, %195 : vector<16x128xf32>
    %c0_79 = arith.constant 0 : index
    %c256_80 = arith.constant 256 : index
    %197 = vector.load %arg11[%c0_79, %c256_80] : memref<16x512xf32, #tpu.memory_space<vmem>>, vector<16x128xf32>
    %198 = math.tanh %197 : vector<16x128xf32>
    %c0_81 = arith.constant 0 : index
    %c384_82 = arith.constant 384 : index
    %199 = vector.load %arg11[%c0_81, %c384_82] : memref<16x512xf32, #tpu.memory_space<vmem>>, vector<16x128xf32>
    %200 = arith.negf %199 : vector<16x128xf32>
    %201 = math.exp %200 : vector<16x128xf32>
    %cst_83 = arith.constant 1.000000e+00 : f32
    %202 = vector.broadcast %cst_83 : f32 to vector<16x128xf32>
    %203 = arith.addf %202, %201 : vector<16x128xf32>
    %204 = arith.divf %202, %203 : vector<16x128xf32>
    %205 = arith.mulf %196, %169 : vector<16x128xf32>
    %206 = arith.mulf %190, %198 : vector<16x128xf32>
    %207 = arith.addf %205, %206 : vector<16x128xf32>
    %208 = math.tanh %207 : vector<16x128xf32>
    %209 = arith.mulf %204, %208 : vector<16x128xf32>
    %210 = arith.addi %12, %c3_i32 : i32
    %211 = vector.broadcast %210 : i32 to vector<16x1xi32>
    %212 = arith.cmpi slt, %211, %11 : vector<16x1xi32>
    %213 = arith.extui %212 : vector<16x1xi1> to vector<16x1xi32>
    %214 = arith.sitofp %213 : vector<16x1xi32> to vector<16x1xf32>
    %215 = arith.subf %209, %165 : vector<16x128xf32>
    %216 = vector.broadcast %214 : vector<16x1xf32> to vector<16x128xf32>
    %217 = arith.mulf %216, %215 : vector<16x128xf32>
    %218 = arith.addf %165, %217 : vector<16x128xf32>
    %219 = arith.subf %207, %169 : vector<16x128xf32>
    %220 = vector.broadcast %214 : vector<16x1xf32> to vector<16x128xf32>
    %221 = arith.mulf %220, %219 : vector<16x128xf32>
    %222 = arith.addf %169, %221 : vector<16x128xf32>
    %223 = arith.index_cast %c3_i32 : i32 to index
    %c0_84 = arith.constant 0 : index
    %c0_85 = arith.constant 0 : index
    %224 = vector.load %arg7[%223, %c0_84, %c0_85] : memref<8x16x128xf32, #tpu.memory_space<vmem>>, vector<1x16x128xf32>
    %225 = vector.shape_cast %224 : vector<1x16x128xf32> to vector<16x128xf32>
    %226 = vector.shape_cast %218 : vector<16x128xf32> to vector<1x16x128xf32>
    tpu.vector_store %arg7[%223, %c0_84, %c0_85], %226 {strides = array<i32>} : memref<8x16x128xf32, #tpu.memory_space<vmem>>, vector<1x16x128xf32>,
    %c4_i32 = arith.constant 4 : i32
    %c16_i32_86 = arith.constant 16 : i32
    %227 = arith.muli %c4_i32, %c16_i32_86 : i32
    %228 = tpu.assume_multiple %227, 16 : i32
    %229 = arith.index_cast %228 : i32 to index
    %c0_87 = arith.constant 0 : index
    %230 = vector.load %arg10[%229, %c0_87] : memref<128x512xbf16, #tpu.memory_space<vmem>>, vector<16x512xbf16>
    %231 = arith.truncf %218 : vector<16x128xf32> to vector<16x128xbf16>
    %cst_88 = arith.constant dense<0.000000e+00> : vector<16x512xf32>
    %232 = tpu.matmul %231, %9, %cst_88 {dimension_numbers = #tpu.dot_dimension_numbers<[1], [0], [0], [1], [0, 0, 1, 1], [], []>} : vector<16x128xbf16>, vector<128x512xbf16>, vector<16x512xf32> -> vector<16x512xf32>
    %233 = arith.extf %230 : vector<16x512xbf16> to vector<16x512xf32>
    %234 = arith.addf %232, %233 : vector<16x512xf32>
    %235 = vector.broadcast %10 : vector<1x512xf32> to vector<16x512xf32>
    %236 = arith.addf %234, %235 : vector<16x512xf32>
    %c0_89 = arith.constant 0 : index
    %c0_90 = arith.constant 0 : index
    %237 = vector.load %arg11[%c0_89, %c0_90] : memref<16x512xf32, #tpu.memory_space<vmem>>, vector<16x512xf32>
    tpu.vector_store %arg11[%c0_89, %c0_90], %236 {strides = array<i32>} : memref<16x512xf32, #tpu.memory_space<vmem>>, vector<16x512xf32>,
    %c0_91 = arith.constant 0 : index
    %c0_92 = arith.constant 0 : index
    %238 = vector.load %arg11[%c0_91, %c0_92] : memref<16x512xf32, #tpu.memory_space<vmem>>, vector<16x128xf32>
    %239 = arith.negf %238 : vector<16x128xf32>
    %240 = math.exp %239 : vector<16x128xf32>
    %cst_93 = arith.constant 1.000000e+00 : f32
    %241 = vector.broadcast %cst_93 : f32 to vector<16x128xf32>
    %242 = arith.addf %241, %240 : vector<16x128xf32>
    %243 = arith.divf %241, %242 : vector<16x128xf32>
    %c0_94 = arith.constant 0 : index
    %c128_95 = arith.constant 128 : index
    %244 = vector.load %arg11[%c0_94, %c128_95] : memref<16x512xf32, #tpu.memory_space<vmem>>, vector<16x128xf32>
    %245 = arith.negf %244 : vector<16x128xf32>
    %246 = math.exp %245 : vector<16x128xf32>
    %cst_96 = arith.constant 1.000000e+00 : f32
    %247 = vector.broadcast %cst_96 : f32 to vector<16x128xf32>
    %248 = arith.addf %247, %246 : vector<16x128xf32>
    %249 = arith.divf %247, %248 : vector<16x128xf32>
    %c0_97 = arith.constant 0 : index
    %c256_98 = arith.constant 256 : index
    %250 = vector.load %arg11[%c0_97, %c256_98] : memref<16x512xf32, #tpu.memory_space<vmem>>, vector<16x128xf32>
    %251 = math.tanh %250 : vector<16x128xf32>
    %c0_99 = arith.constant 0 : index
    %c384_100 = arith.constant 384 : index
    %252 = vector.load %arg11[%c0_99, %c384_100] : memref<16x512xf32, #tpu.memory_space<vmem>>, vector<16x128xf32>
    %253 = arith.negf %252 : vector<16x128xf32>
    %254 = math.exp %253 : vector<16x128xf32>
    %cst_101 = arith.constant 1.000000e+00 : f32
    %255 = vector.broadcast %cst_101 : f32 to vector<16x128xf32>
    %256 = arith.addf %255, %254 : vector<16x128xf32>
    %257 = arith.divf %255, %256 : vector<16x128xf32>
    %258 = arith.mulf %249, %222 : vector<16x128xf32>
    %259 = arith.mulf %243, %251 : vector<16x128xf32>
    %260 = arith.addf %258, %259 : vector<16x128xf32>
    %261 = math.tanh %260 : vector<16x128xf32>
    %262 = arith.mulf %257, %261 : vector<16x128xf32>
    %263 = arith.addi %12, %c4_i32 : i32
    %264 = vector.broadcast %263 : i32 to vector<16x1xi32>
    %265 = arith.cmpi slt, %264, %11 : vector<16x1xi32>
    %266 = arith.extui %265 : vector<16x1xi1> to vector<16x1xi32>
    %267 = arith.sitofp %266 : vector<16x1xi32> to vector<16x1xf32>
    %268 = arith.subf %262, %218 : vector<16x128xf32>
    %269 = vector.broadcast %267 : vector<16x1xf32> to vector<16x128xf32>
    %270 = arith.mulf %269, %268 : vector<16x128xf32>
    %271 = arith.addf %218, %270 : vector<16x128xf32>
    %272 = arith.subf %260, %222 : vector<16x128xf32>
    %273 = vector.broadcast %267 : vector<16x1xf32> to vector<16x128xf32>
    %274 = arith.mulf %273, %272 : vector<16x128xf32>
    %275 = arith.addf %222, %274 : vector<16x128xf32>
    %276 = arith.index_cast %c4_i32 : i32 to index
    %c0_102 = arith.constant 0 : index
    %c0_103 = arith.constant 0 : index
    %277 = vector.load %arg7[%276, %c0_102, %c0_103] : memref<8x16x128xf32, #tpu.memory_space<vmem>>, vector<1x16x128xf32>
    %278 = vector.shape_cast %277 : vector<1x16x128xf32> to vector<16x128xf32>
    %279 = vector.shape_cast %271 : vector<16x128xf32> to vector<1x16x128xf32>
    tpu.vector_store %arg7[%276, %c0_102, %c0_103], %279 {strides = array<i32>} : memref<8x16x128xf32, #tpu.memory_space<vmem>>, vector<1x16x128xf32>,
    %c5_i32 = arith.constant 5 : i32
    %c16_i32_104 = arith.constant 16 : i32
    %280 = arith.muli %c5_i32, %c16_i32_104 : i32
    %281 = tpu.assume_multiple %280, 16 : i32
    %282 = arith.index_cast %281 : i32 to index
    %c0_105 = arith.constant 0 : index
    %283 = vector.load %arg10[%282, %c0_105] : memref<128x512xbf16, #tpu.memory_space<vmem>>, vector<16x512xbf16>
    %284 = arith.truncf %271 : vector<16x128xf32> to vector<16x128xbf16>
    %cst_106 = arith.constant dense<0.000000e+00> : vector<16x512xf32>
    %285 = tpu.matmul %284, %9, %cst_106 {dimension_numbers = #tpu.dot_dimension_numbers<[1], [0], [0], [1], [0, 0, 1, 1], [], []>} : vector<16x128xbf16>, vector<128x512xbf16>, vector<16x512xf32> -> vector<16x512xf32>
    %286 = arith.extf %283 : vector<16x512xbf16> to vector<16x512xf32>
    %287 = arith.addf %285, %286 : vector<16x512xf32>
    %288 = vector.broadcast %10 : vector<1x512xf32> to vector<16x512xf32>
    %289 = arith.addf %287, %288 : vector<16x512xf32>
    %c0_107 = arith.constant 0 : index
    %c0_108 = arith.constant 0 : index
    %290 = vector.load %arg11[%c0_107, %c0_108] : memref<16x512xf32, #tpu.memory_space<vmem>>, vector<16x512xf32>
    tpu.vector_store %arg11[%c0_107, %c0_108], %289 {strides = array<i32>} : memref<16x512xf32, #tpu.memory_space<vmem>>, vector<16x512xf32>,
    %c0_109 = arith.constant 0 : index
    %c0_110 = arith.constant 0 : index
    %291 = vector.load %arg11[%c0_109, %c0_110] : memref<16x512xf32, #tpu.memory_space<vmem>>, vector<16x128xf32>
    %292 = arith.negf %291 : vector<16x128xf32>
    %293 = math.exp %292 : vector<16x128xf32>
    %cst_111 = arith.constant 1.000000e+00 : f32
    %294 = vector.broadcast %cst_111 : f32 to vector<16x128xf32>
    %295 = arith.addf %294, %293 : vector<16x128xf32>
    %296 = arith.divf %294, %295 : vector<16x128xf32>
    %c0_112 = arith.constant 0 : index
    %c128_113 = arith.constant 128 : index
    %297 = vector.load %arg11[%c0_112, %c128_113] : memref<16x512xf32, #tpu.memory_space<vmem>>, vector<16x128xf32>
    %298 = arith.negf %297 : vector<16x128xf32>
    %299 = math.exp %298 : vector<16x128xf32>
    %cst_114 = arith.constant 1.000000e+00 : f32
    %300 = vector.broadcast %cst_114 : f32 to vector<16x128xf32>
    %301 = arith.addf %300, %299 : vector<16x128xf32>
    %302 = arith.divf %300, %301 : vector<16x128xf32>
    %c0_115 = arith.constant 0 : index
    %c256_116 = arith.constant 256 : index
    %303 = vector.load %arg11[%c0_115, %c256_116] : memref<16x512xf32, #tpu.memory_space<vmem>>, vector<16x128xf32>
    %304 = math.tanh %303 : vector<16x128xf32>
    %c0_117 = arith.constant 0 : index
    %c384_118 = arith.constant 384 : index
    %305 = vector.load %arg11[%c0_117, %c384_118] : memref<16x512xf32, #tpu.memory_space<vmem>>, vector<16x128xf32>
    %306 = arith.negf %305 : vector<16x128xf32>
    %307 = math.exp %306 : vector<16x128xf32>
    %cst_119 = arith.constant 1.000000e+00 : f32
    %308 = vector.broadcast %cst_119 : f32 to vector<16x128xf32>
    %309 = arith.addf %308, %307 : vector<16x128xf32>
    %310 = arith.divf %308, %309 : vector<16x128xf32>
    %311 = arith.mulf %302, %275 : vector<16x128xf32>
    %312 = arith.mulf %296, %304 : vector<16x128xf32>
    %313 = arith.addf %311, %312 : vector<16x128xf32>
    %314 = math.tanh %313 : vector<16x128xf32>
    %315 = arith.mulf %310, %314 : vector<16x128xf32>
    %316 = arith.addi %12, %c5_i32 : i32
    %317 = vector.broadcast %316 : i32 to vector<16x1xi32>
    %318 = arith.cmpi slt, %317, %11 : vector<16x1xi32>
    %319 = arith.extui %318 : vector<16x1xi1> to vector<16x1xi32>
    %320 = arith.sitofp %319 : vector<16x1xi32> to vector<16x1xf32>
    %321 = arith.subf %315, %271 : vector<16x128xf32>
    %322 = vector.broadcast %320 : vector<16x1xf32> to vector<16x128xf32>
    %323 = arith.mulf %322, %321 : vector<16x128xf32>
    %324 = arith.addf %271, %323 : vector<16x128xf32>
    %325 = arith.subf %313, %275 : vector<16x128xf32>
    %326 = vector.broadcast %320 : vector<16x1xf32> to vector<16x128xf32>
    %327 = arith.mulf %326, %325 : vector<16x128xf32>
    %328 = arith.addf %275, %327 : vector<16x128xf32>
    %329 = arith.index_cast %c5_i32 : i32 to index
    %c0_120 = arith.constant 0 : index
    %c0_121 = arith.constant 0 : index
    %330 = vector.load %arg7[%329, %c0_120, %c0_121] : memref<8x16x128xf32, #tpu.memory_space<vmem>>, vector<1x16x128xf32>
    %331 = vector.shape_cast %330 : vector<1x16x128xf32> to vector<16x128xf32>
    %332 = vector.shape_cast %324 : vector<16x128xf32> to vector<1x16x128xf32>
    tpu.vector_store %arg7[%329, %c0_120, %c0_121], %332 {strides = array<i32>} : memref<8x16x128xf32, #tpu.memory_space<vmem>>, vector<1x16x128xf32>,
    %c6_i32 = arith.constant 6 : i32
    %c16_i32_122 = arith.constant 16 : i32
    %333 = arith.muli %c6_i32, %c16_i32_122 : i32
    %334 = tpu.assume_multiple %333, 16 : i32
    %335 = arith.index_cast %334 : i32 to index
    %c0_123 = arith.constant 0 : index
    %336 = vector.load %arg10[%335, %c0_123] : memref<128x512xbf16, #tpu.memory_space<vmem>>, vector<16x512xbf16>
    %337 = arith.truncf %324 : vector<16x128xf32> to vector<16x128xbf16>
    %cst_124 = arith.constant dense<0.000000e+00> : vector<16x512xf32>
    %338 = tpu.matmul %337, %9, %cst_124 {dimension_numbers = #tpu.dot_dimension_numbers<[1], [0], [0], [1], [0, 0, 1, 1], [], []>} : vector<16x128xbf16>, vector<128x512xbf16>, vector<16x512xf32> -> vector<16x512xf32>
    %339 = arith.extf %336 : vector<16x512xbf16> to vector<16x512xf32>
    %340 = arith.addf %338, %339 : vector<16x512xf32>
    %341 = vector.broadcast %10 : vector<1x512xf32> to vector<16x512xf32>
    %342 = arith.addf %340, %341 : vector<16x512xf32>
    %c0_125 = arith.constant 0 : index
    %c0_126 = arith.constant 0 : index
    %343 = vector.load %arg11[%c0_125, %c0_126] : memref<16x512xf32, #tpu.memory_space<vmem>>, vector<16x512xf32>
    tpu.vector_store %arg11[%c0_125, %c0_126], %342 {strides = array<i32>} : memref<16x512xf32, #tpu.memory_space<vmem>>, vector<16x512xf32>,
    %c0_127 = arith.constant 0 : index
    %c0_128 = arith.constant 0 : index
    %344 = vector.load %arg11[%c0_127, %c0_128] : memref<16x512xf32, #tpu.memory_space<vmem>>, vector<16x128xf32>
    %345 = arith.negf %344 : vector<16x128xf32>
    %346 = math.exp %345 : vector<16x128xf32>
    %cst_129 = arith.constant 1.000000e+00 : f32
    %347 = vector.broadcast %cst_129 : f32 to vector<16x128xf32>
    %348 = arith.addf %347, %346 : vector<16x128xf32>
    %349 = arith.divf %347, %348 : vector<16x128xf32>
    %c0_130 = arith.constant 0 : index
    %c128_131 = arith.constant 128 : index
    %350 = vector.load %arg11[%c0_130, %c128_131] : memref<16x512xf32, #tpu.memory_space<vmem>>, vector<16x128xf32>
    %351 = arith.negf %350 : vector<16x128xf32>
    %352 = math.exp %351 : vector<16x128xf32>
    %cst_132 = arith.constant 1.000000e+00 : f32
    %353 = vector.broadcast %cst_132 : f32 to vector<16x128xf32>
    %354 = arith.addf %353, %352 : vector<16x128xf32>
    %355 = arith.divf %353, %354 : vector<16x128xf32>
    %c0_133 = arith.constant 0 : index
    %c256_134 = arith.constant 256 : index
    %356 = vector.load %arg11[%c0_133, %c256_134] : memref<16x512xf32, #tpu.memory_space<vmem>>, vector<16x128xf32>
    %357 = math.tanh %356 : vector<16x128xf32>
    %c0_135 = arith.constant 0 : index
    %c384_136 = arith.constant 384 : index
    %358 = vector.load %arg11[%c0_135, %c384_136] : memref<16x512xf32, #tpu.memory_space<vmem>>, vector<16x128xf32>
    %359 = arith.negf %358 : vector<16x128xf32>
    %360 = math.exp %359 : vector<16x128xf32>
    %cst_137 = arith.constant 1.000000e+00 : f32
    %361 = vector.broadcast %cst_137 : f32 to vector<16x128xf32>
    %362 = arith.addf %361, %360 : vector<16x128xf32>
    %363 = arith.divf %361, %362 : vector<16x128xf32>
    %364 = arith.mulf %355, %328 : vector<16x128xf32>
    %365 = arith.mulf %349, %357 : vector<16x128xf32>
    %366 = arith.addf %364, %365 : vector<16x128xf32>
    %367 = math.tanh %366 : vector<16x128xf32>
    %368 = arith.mulf %363, %367 : vector<16x128xf32>
    %369 = arith.addi %12, %c6_i32 : i32
    %370 = vector.broadcast %369 : i32 to vector<16x1xi32>
    %371 = arith.cmpi slt, %370, %11 : vector<16x1xi32>
    %372 = arith.extui %371 : vector<16x1xi1> to vector<16x1xi32>
    %373 = arith.sitofp %372 : vector<16x1xi32> to vector<16x1xf32>
    %374 = arith.subf %368, %324 : vector<16x128xf32>
    %375 = vector.broadcast %373 : vector<16x1xf32> to vector<16x128xf32>
    %376 = arith.mulf %375, %374 : vector<16x128xf32>
    %377 = arith.addf %324, %376 : vector<16x128xf32>
    %378 = arith.subf %366, %328 : vector<16x128xf32>
    %379 = vector.broadcast %373 : vector<16x1xf32> to vector<16x128xf32>
    %380 = arith.mulf %379, %378 : vector<16x128xf32>
    %381 = arith.addf %328, %380 : vector<16x128xf32>
    %382 = arith.index_cast %c6_i32 : i32 to index
    %c0_138 = arith.constant 0 : index
    %c0_139 = arith.constant 0 : index
    %383 = vector.load %arg7[%382, %c0_138, %c0_139] : memref<8x16x128xf32, #tpu.memory_space<vmem>>, vector<1x16x128xf32>
    %384 = vector.shape_cast %383 : vector<1x16x128xf32> to vector<16x128xf32>
    %385 = vector.shape_cast %377 : vector<16x128xf32> to vector<1x16x128xf32>
    tpu.vector_store %arg7[%382, %c0_138, %c0_139], %385 {strides = array<i32>} : memref<8x16x128xf32, #tpu.memory_space<vmem>>, vector<1x16x128xf32>,
    %c7_i32 = arith.constant 7 : i32
    %c16_i32_140 = arith.constant 16 : i32
    %386 = arith.muli %c7_i32, %c16_i32_140 : i32
    %387 = tpu.assume_multiple %386, 16 : i32
    %388 = arith.index_cast %387 : i32 to index
    %c0_141 = arith.constant 0 : index
    %389 = vector.load %arg10[%388, %c0_141] : memref<128x512xbf16, #tpu.memory_space<vmem>>, vector<16x512xbf16>
    %390 = arith.truncf %377 : vector<16x128xf32> to vector<16x128xbf16>
    %cst_142 = arith.constant dense<0.000000e+00> : vector<16x512xf32>
    %391 = tpu.matmul %390, %9, %cst_142 {dimension_numbers = #tpu.dot_dimension_numbers<[1], [0], [0], [1], [0, 0, 1, 1], [], []>} : vector<16x128xbf16>, vector<128x512xbf16>, vector<16x512xf32> -> vector<16x512xf32>
    %392 = arith.extf %389 : vector<16x512xbf16> to vector<16x512xf32>
    %393 = arith.addf %391, %392 : vector<16x512xf32>
    %394 = vector.broadcast %10 : vector<1x512xf32> to vector<16x512xf32>
    %395 = arith.addf %393, %394 : vector<16x512xf32>
    %c0_143 = arith.constant 0 : index
    %c0_144 = arith.constant 0 : index
    %396 = vector.load %arg11[%c0_143, %c0_144] : memref<16x512xf32, #tpu.memory_space<vmem>>, vector<16x512xf32>
    tpu.vector_store %arg11[%c0_143, %c0_144], %395 {strides = array<i32>} : memref<16x512xf32, #tpu.memory_space<vmem>>, vector<16x512xf32>,
    %c0_145 = arith.constant 0 : index
    %c0_146 = arith.constant 0 : index
    %397 = vector.load %arg11[%c0_145, %c0_146] : memref<16x512xf32, #tpu.memory_space<vmem>>, vector<16x128xf32>
    %398 = arith.negf %397 : vector<16x128xf32>
    %399 = math.exp %398 : vector<16x128xf32>
    %cst_147 = arith.constant 1.000000e+00 : f32
    %400 = vector.broadcast %cst_147 : f32 to vector<16x128xf32>
    %401 = arith.addf %400, %399 : vector<16x128xf32>
    %402 = arith.divf %400, %401 : vector<16x128xf32>
    %c0_148 = arith.constant 0 : index
    %c128_149 = arith.constant 128 : index
    %403 = vector.load %arg11[%c0_148, %c128_149] : memref<16x512xf32, #tpu.memory_space<vmem>>, vector<16x128xf32>
    %404 = arith.negf %403 : vector<16x128xf32>
    %405 = math.exp %404 : vector<16x128xf32>
    %cst_150 = arith.constant 1.000000e+00 : f32
    %406 = vector.broadcast %cst_150 : f32 to vector<16x128xf32>
    %407 = arith.addf %406, %405 : vector<16x128xf32>
    %408 = arith.divf %406, %407 : vector<16x128xf32>
    %c0_151 = arith.constant 0 : index
    %c256_152 = arith.constant 256 : index
    %409 = vector.load %arg11[%c0_151, %c256_152] : memref<16x512xf32, #tpu.memory_space<vmem>>, vector<16x128xf32>
    %410 = math.tanh %409 : vector<16x128xf32>
    %c0_153 = arith.constant 0 : index
    %c384_154 = arith.constant 384 : index
    %411 = vector.load %arg11[%c0_153, %c384_154] : memref<16x512xf32, #tpu.memory_space<vmem>>, vector<16x128xf32>
    %412 = arith.negf %411 : vector<16x128xf32>
    %413 = math.exp %412 : vector<16x128xf32>
    %cst_155 = arith.constant 1.000000e+00 : f32
    %414 = vector.broadcast %cst_155 : f32 to vector<16x128xf32>
    %415 = arith.addf %414, %413 : vector<16x128xf32>
    %416 = arith.divf %414, %415 : vector<16x128xf32>
    %417 = arith.mulf %408, %381 : vector<16x128xf32>
    %418 = arith.mulf %402, %410 : vector<16x128xf32>
    %419 = arith.addf %417, %418 : vector<16x128xf32>
    %420 = math.tanh %419 : vector<16x128xf32>
    %421 = arith.mulf %416, %420 : vector<16x128xf32>
    %422 = arith.addi %12, %c7_i32 : i32
    %423 = vector.broadcast %422 : i32 to vector<16x1xi32>
    %424 = arith.cmpi slt, %423, %11 : vector<16x1xi32>
    %425 = arith.extui %424 : vector<16x1xi1> to vector<16x1xi32>
    %426 = arith.sitofp %425 : vector<16x1xi32> to vector<16x1xf32>
    %427 = arith.subf %421, %377 : vector<16x128xf32>
    %428 = vector.broadcast %426 : vector<16x1xf32> to vector<16x128xf32>
    %429 = arith.mulf %428, %427 : vector<16x128xf32>
    %430 = arith.addf %377, %429 : vector<16x128xf32>
    %431 = arith.subf %419, %381 : vector<16x128xf32>
    %432 = vector.broadcast %426 : vector<16x1xf32> to vector<16x128xf32>
    %433 = arith.mulf %432, %431 : vector<16x128xf32>
    %434 = arith.addf %381, %433 : vector<16x128xf32>
    %435 = arith.index_cast %c7_i32 : i32 to index
    %c0_156 = arith.constant 0 : index
    %c0_157 = arith.constant 0 : index
    %436 = vector.load %arg7[%435, %c0_156, %c0_157] : memref<8x16x128xf32, #tpu.memory_space<vmem>>, vector<1x16x128xf32>
    %437 = vector.shape_cast %436 : vector<1x16x128xf32> to vector<16x128xf32>
    %438 = vector.shape_cast %430 : vector<16x128xf32> to vector<1x16x128xf32>
    tpu.vector_store %arg7[%435, %c0_156, %c0_157], %438 {strides = array<i32>} : memref<8x16x128xf32, #tpu.memory_space<vmem>>, vector<1x16x128xf32>,
    %c8_i32_158 = arith.constant 8 : i32
    %c0_159 = arith.constant 0 : index
    %c0_160 = arith.constant 0 : index
    %439 = vector.load %arg12[%c0_159, %c0_160] : memref<16x128xf32, #tpu.memory_space<vmem>>, vector<16x128xf32>
    tpu.vector_store %arg12[%c0_159, %c0_160], %430 {strides = array<i32>} : memref<16x128xf32, #tpu.memory_space<vmem>>, vector<16x128xf32>,
    %c0_161 = arith.constant 0 : index
    %c0_162 = arith.constant 0 : index
    %440 = vector.load %arg13[%c0_161, %c0_162] : memref<16x128xf32, #tpu.memory_space<vmem>>, vector<16x128xf32>
    tpu.vector_store %arg13[%c0_161, %c0_162], %434 {strides = array<i32>} : memref<16x128xf32, #tpu.memory_space<vmem>>, vector<16x128xf32>,
    %c0_i32_163 = arith.constant 0 : i32
    %441 = arith.cmpi eq, %arg1, %c0_i32_163 : i32
    %442 = arith.extui %441 : i1 to i32
    %c0_i32_164 = arith.constant 0 : i32
    %443 = arith.cmpi ne, %442, %c0_i32_164 : i32
    scf.if %443 {
      %c0_165 = arith.constant 0 : index
      %c0_166 = arith.constant 0 : index
      %444 = vector.load %arg8[%c0_165, %c0_166] : memref<16x128xf32, #tpu.memory_space<vmem>>, vector<16x128xf32>
      tpu.vector_store %arg8[%c0_165, %c0_166], %430 {strides = array<i32>} : memref<16x128xf32, #tpu.memory_space<vmem>>, vector<16x128xf32>,
      %c0_167 = arith.constant 0 : index
      %c0_168 = arith.constant 0 : index
      %445 = vector.load %arg9[%c0_167, %c0_168] : memref<16x128xf32, #tpu.memory_space<vmem>>, vector<16x128xf32>
      tpu.vector_store %arg9[%c0_167, %c0_168], %434 {strides = array<i32>} : memref<16x128xf32, #tpu.memory_space<vmem>>, vector<16x128xf32>,
    } else {
    }
    return
  }
  func.func @transform_0(%arg0: i32, %arg1: i32) -> (i32, i32, i32) {
    %c0_i32 = arith.constant 0 : i32
    %c0_i32_0 = arith.constant 0 : i32
    return %arg1, %arg0, %c0_i32 : i32, i32, i32
  }
  func.func @transform_1(%arg0: i32, %arg1: i32) -> (i32, i32) {
    %c0_i32 = arith.constant 0 : i32
    %c0_i32_0 = arith.constant 0 : i32
    return %arg0, %c0_i32 : i32, i32
  }
  func.func @transform_2(%arg0: i32, %arg1: i32) -> (i32, i32) {
    %c0_i32 = arith.constant 0 : i32
    %c0_i32_0 = arith.constant 0 : i32
    %c0_i32_1 = arith.constant 0 : i32
    return %c0_i32, %c0_i32_0 : i32, i32
  }
  func.func @transform_3(%arg0: i32, %arg1: i32) -> (i32, i32) {
    %c0_i32 = arith.constant 0 : i32
    %c0_i32_0 = arith.constant 0 : i32
    %c0_i32_1 = arith.constant 0 : i32
    return %c0_i32, %c0_i32_0 : i32, i32
  }
  func.func @transform_4(%arg0: i32, %arg1: i32) -> (i32, i32) {
    %c0_i32 = arith.constant 0 : i32
    %c0_i32_0 = arith.constant 0 : i32
    %c0_i32_1 = arith.constant 0 : i32
    return %c0_i32, %c0_i32_0 : i32, i32
  }
  func.func @transform_5(%arg0: i32, %arg1: i32) -> (i32, i32, i32) {
    %c0_i32 = arith.constant 0 : i32
    %c0_i32_0 = arith.constant 0 : i32
    return %arg1, %arg0, %c0_i32 : i32, i32, i32
  }
  func.func @transform_6(%arg0: i32, %arg1: i32) -> (i32, i32) {
    %c0_i32 = arith.constant 0 : i32
    %c0_i32_0 = arith.constant 0 : i32
    return %arg0, %c0_i32 : i32, i32
  }
  func.func @transform_7(%arg0: i32, %arg1: i32) -> (i32, i32) {
    %c0_i32 = arith.constant 0 : i32
    %c0_i32_0 = arith.constant 0 : i32
    return %arg0, %c0_i32 : i32, i32
  }
}

module attributes {stable_mosaic.version = 11 : i64} {
  func.func @_lstm_kernel(%arg0: i32, %arg1: i32, %arg2: memref<8x16x128xbf16, #tpu.memory_space<vmem>>, %arg3: memref<16x1xi32, #tpu.memory_space<vmem>>, %arg4: memref<128x512xbf16, #tpu.memory_space<vmem>>, %arg5: memref<128x512xbf16, #tpu.memory_space<vmem>>, %arg6: memref<1x512xf32, #tpu.memory_space<vmem>>, %arg7: memref<8x16x128xf32, #tpu.memory_space<vmem>>, %arg8: memref<16x128xf32, #tpu.memory_space<vmem>>, %arg9: memref<16x128xf32, #tpu.memory_space<vmem>>, %arg10: memref<128x512xbf16, #tpu.memory_space<vmem>>, %arg11: memref<16x512xf32, #tpu.memory_space<vmem>>, %arg12: memref<16x128xf32, #tpu.memory_space<vmem>>, %arg13: memref<16x128xf32, #tpu.memory_space<vmem>>) attributes {dimension_semantics = [#tpu.dimension_semantics<parallel>, #tpu.dimension_semantics<arbitrary>], iteration_bounds = array<i64: 1, 1>, scalar_prefetch = 0 : i64, scratch_operands = 4 : i64, tpu.core_type = #tpu.core_type<tc>, window_params = [{transform_indices = @transform_0, window_bounds = array<i64: 8, 16, 128>}, {transform_indices = @transform_1, window_bounds = array<i64: 16, 1>}, {pipeline_mode = #tpu.pipeline_mode<synchronous>, transform_indices = @transform_2, window_bounds = array<i64: 128, 512>}, {pipeline_mode = #tpu.pipeline_mode<synchronous>, transform_indices = @transform_3, window_bounds = array<i64: 128, 512>}, {pipeline_mode = #tpu.pipeline_mode<synchronous>, transform_indices = @transform_4, window_bounds = array<i64: 1, 512>}, {transform_indices = @transform_5, window_bounds = array<i64: 8, 16, 128>}, {transform_indices = @transform_6, window_bounds = array<i64: 16, 128>}, {transform_indices = @transform_7, window_bounds = array<i64: 16, 128>}]} {
    %c0_i32 = arith.constant 0 : i32
    %0 = arith.cmpi eq, %arg1, %c0_i32 : i32
    %1 = arith.extui %0 : i1 to i32
    %c0_i32_0 = arith.constant 0 : i32
    %2 = arith.cmpi ne, %1, %c0_i32_0 : i32
    scf.if %2 {
      %cst_165 = arith.constant 0.000000e+00 : f32
      %444 = vector.broadcast %cst_165 : f32 to vector<16x128xf32>
      %c0_166 = arith.constant 0 : index
      %c0_167 = arith.constant 0 : index
      %445 = vector.load %arg12[%c0_166, %c0_167] : memref<16x128xf32, #tpu.memory_space<vmem>>, vector<16x128xf32>
      tpu.vector_store %arg12[%c0_166, %c0_167], %444 {strides = array<i32>} : memref<16x128xf32, #tpu.memory_space<vmem>>, vector<16x128xf32>,
      %cst_168 = arith.constant 0.000000e+00 : f32
      %446 = vector.broadcast %cst_168 : f32 to vector<16x128xf32>
      %c0_169 = arith.constant 0 : index
      %c0_170 = arith.constant 0 : index
      %447 = vector.load %arg13[%c0_169, %c0_170] : memref<16x128xf32, #tpu.memory_space<vmem>>, vector<16x128xf32>
      tpu.vector_store %arg13[%c0_169, %c0_170], %446 {strides = array<i32>} : memref<16x128xf32, #tpu.memory_space<vmem>>, vector<16x128xf32>,
    } else {
    }
    %c0 = arith.constant 0 : index
    %c0_1 = arith.constant 0 : index
    %c0_2 = arith.constant 0 : index
    %3 = vector.load %arg2[%c0, %c0_1, %c0_2] : memref<8x16x128xbf16, #tpu.memory_space<vmem>>, vector<8x16x128xbf16>
    %4 = vector.shape_cast %3 : vector<8x16x128xbf16> to vector<128x128xbf16>
    %c0_3 = arith.constant 0 : index
    %c0_4 = arith.constant 0 : index
    %5 = vector.load %arg4[%c0_3, %c0_4] : memref<128x512xbf16, #tpu.memory_space<vmem>>, vector<128x512xbf16>
    %cst = arith.constant dense<0.000000e+00> : vector<128x512xf32>
    %6 = tpu.matmul %4, %5, %cst {dimension_numbers = #tpu.dot_dimension_numbers<[1], [0], [0], [1], [0, 0, 1, 1], [], []>} : vector<128x128xbf16>, vector<128x512xbf16>, vector<128x512xf32> -> vector<128x512xf32>
    %7 = arith.truncf %6 : vector<128x512xf32> to vector<128x512xbf16>
    %c0_5 = arith.constant 0 : index
    %c0_6 = arith.constant 0 : index
    %8 = vector.load %arg10[%c0_5, %c0_6] : memref<128x512xbf16, #tpu.memory_space<vmem>>, vector<128x512xbf16>
    tpu.vector_store %arg10[%c0_5, %c0_6], %7 {strides = array<i32>} : memref<128x512xbf16, #tpu.memory_space<vmem>>, vector<128x512xbf16>,
    %c0_7 = arith.constant 0 : index
    %c0_8 = arith.constant 0 : index
    %9 = vector.load %arg5[%c0_7, %c0_8] : memref<128x512xbf16, #tpu.memory_space<vmem>>, vector<128x512xbf16>
    %c0_9 = arith.constant 0 : index
    %c0_10 = arith.constant 0 : index
    %10 = vector.load %arg6[%c0_9, %c0_10] : memref<1x512xf32, #tpu.memory_space<vmem>>, vector<1x512xf32>
    %c0_11 = arith.constant 0 : index
    %c0_12 = arith.constant 0 : index
    %11 = vector.load %arg3[%c0_11, %c0_12] : memref<16x1xi32, #tpu.memory_space<vmem>>, vector<16x1xi32>
    %c8_i32 = arith.constant 8 : i32
    %12 = arith.muli %arg1, %c8_i32 : i32
    %c0_13 = arith.constant 0 : index
    %c0_14 = arith.constant 0 : index
    %13 = vector.load %arg12[%c0_13, %c0_14] : memref<16x128xf32, #tpu.memory_space<vmem>>, vector<16x128xf32>
    %c0_15 = arith.constant 0 : index
    %c0_16 = arith.constant 0 : index
    %14 = vector.load %arg13[%c0_15, %c0_16] : memref<16x128xf32, #tpu.memory_space<vmem>>, vector<16x128xf32>
    %c0_i32_17 = arith.constant 0 : i32
    %c16_i32 = arith.constant 16 : i32
    %15 = arith.muli %c0_i32_17, %c16_i32 : i32
    %16 = tpu.assume_multiple %15, 16 : i32
    %17 = arith.index_cast %16 : i32 to index
    %c0_18 = arith.constant 0 : index
    %18 = vector.load %arg10[%17, %c0_18] : memref<128x512xbf16, #tpu.memory_space<vmem>>, vector<16x512xbf16>
    %19 = arith.truncf %13 : vector<16x128xf32> to vector<16x128xbf16>
    %cst_19 = arith.constant dense<0.000000e+00> : vector<16x512xf32>
    %20 = tpu.matmul %19, %9, %cst_19 {dimension_numbers = #tpu.dot_dimension_numbers<[1], [0], [0], [1], [0, 0, 1, 1], [], []>} : vector<16x128xbf16>, vector<128x512xbf16>, vector<16x512xf32> -> vector<16x512xf32>
    %21 = arith.extf %18 : vector<16x512xbf16> to vector<16x512xf32>
    %22 = arith.addf %20, %21 : vector<16x512xf32>
    %23 = vector.broadcast %10 : vector<1x512xf32> to vector<16x512xf32>
    %24 = arith.addf %22, %23 : vector<16x512xf32>
    %c0_20 = arith.constant 0 : index
    %c0_21 = arith.constant 0 : index
    %25 = vector.load %arg11[%c0_20, %c0_21] : memref<16x512xf32, #tpu.memory_space<vmem>>, vector<16x512xf32>
    tpu.vector_store %arg11[%c0_20, %c0_21], %24 {strides = array<i32>} : memref<16x512xf32, #tpu.memory_space<vmem>>, vector<16x512xf32>,
    %c0_22 = arith.constant 0 : index
    %c0_23 = arith.constant 0 : index
    %26 = vector.load %arg11[%c0_22, %c0_23] : memref<16x512xf32, #tpu.memory_space<vmem>>, vector<16x128xf32>
    %27 = arith.negf %26 : vector<16x128xf32>
    %28 = math.exp %27 : vector<16x128xf32>
    %cst_24 = arith.constant 1.000000e+00 : f32
    %29 = vector.broadcast %cst_24 : f32 to vector<16x128xf32>
    %30 = arith.addf %29, %28 : vector<16x128xf32>
    %31 = arith.divf %29, %30 : vector<16x128xf32>
    %c0_25 = arith.constant 0 : index
    %c128 = arith.constant 128 : index
    %32 = vector.load %arg11[%c0_25, %c128] : memref<16x512xf32, #tpu.memory_space<vmem>>, vector<16x128xf32>
    %33 = arith.negf %32 : vector<16x128xf32>
    %34 = math.exp %33 : vector<16x128xf32>
    %cst_26 = arith.constant 1.000000e+00 : f32
    %35 = vector.broadcast %cst_26 : f32 to vector<16x128xf32>
    %36 = arith.addf %35, %34 : vector<16x128xf32>
    %37 = arith.divf %35, %36 : vector<16x128xf32>
    %c0_27 = arith.constant 0 : index
    %c256 = arith.constant 256 : index
    %38 = vector.load %arg11[%c0_27, %c256] : memref<16x512xf32, #tpu.memory_space<vmem>>, vector<16x128xf32>
    %39 = math.tanh %38 : vector<16x128xf32>
    %c0_28 = arith.constant 0 : index
    %c384 = arith.constant 384 : index
    %40 = vector.load %arg11[%c0_28, %c384] : memref<16x512xf32, #tpu.memory_space<vmem>>, vector<16x128xf32>
    %41 = arith.negf %40 : vector<16x128xf32>
    %42 = math.exp %41 : vector<16x128xf32>
    %cst_29 = arith.constant 1.000000e+00 : f32
    %43 = vector.broadcast %cst_29 : f32 to vector<16x128xf32>
    %44 = arith.addf %43, %42 : vector<16x128xf32>
    %45 = arith.divf %43, %44 : vector<16x128xf32>
    %46 = arith.mulf %37, %14 : vector<16x128xf32>
    %47 = arith.mulf %31, %39 : vector<16x128xf32>
    %48 = arith.addf %46, %47 : vector<16x128xf32>
    %49 = math.tanh %48 : vector<16x128xf32>
    %50 = arith.mulf %45, %49 : vector<16x128xf32>
    %51 = arith.addi %12, %c0_i32_17 : i32
    %52 = vector.broadcast %51 : i32 to vector<16x1xi32>
    %53 = arith.cmpi slt, %52, %11 : vector<16x1xi32>
    %54 = arith.extui %53 : vector<16x1xi1> to vector<16x1xi32>
    %55 = arith.sitofp %54 : vector<16x1xi32> to vector<16x1xf32>
    %56 = arith.subf %50, %13 : vector<16x128xf32>
    %57 = vector.broadcast %55 : vector<16x1xf32> to vector<16x128xf32>
    %58 = arith.mulf %57, %56 : vector<16x128xf32>
    %59 = arith.addf %13, %58 : vector<16x128xf32>
    %60 = arith.subf %48, %14 : vector<16x128xf32>
    %61 = vector.broadcast %55 : vector<16x1xf32> to vector<16x128xf32>
    %62 = arith.mulf %61, %60 : vector<16x128xf32>
    %63 = arith.addf %14, %62 : vector<16x128xf32>
    %64 = arith.index_cast %c0_i32_17 : i32 to index
    %c0_30 = arith.constant 0 : index
    %c0_31 = arith.constant 0 : index
    %65 = vector.load %arg7[%64, %c0_30, %c0_31] : memref<8x16x128xf32, #tpu.memory_space<vmem>>, vector<1x16x128xf32>
    %66 = vector.shape_cast %65 : vector<1x16x128xf32> to vector<16x128xf32>
    %67 = vector.shape_cast %59 : vector<16x128xf32> to vector<1x16x128xf32>
    tpu.vector_store %arg7[%64, %c0_30, %c0_31], %67 {strides = array<i32>} : memref<8x16x128xf32, #tpu.memory_space<vmem>>, vector<1x16x128xf32>,
    %c1_i32 = arith.constant 1 : i32
    %c16_i32_32 = arith.constant 16 : i32
    %68 = arith.muli %c1_i32, %c16_i32_32 : i32
    %69 = tpu.assume_multiple %68, 16 : i32
    %70 = arith.index_cast %69 : i32 to index
    %c0_33 = arith.constant 0 : index
    %71 = vector.load %arg10[%70, %c0_33] : memref<128x512xbf16, #tpu.memory_space<vmem>>, vector<16x512xbf16>
    %72 = arith.truncf %59 : vector<16x128xf32> to vector<16x128xbf16>
    %cst_34 = arith.constant dense<0.000000e+00> : vector<16x512xf32>
    %73 = tpu.matmul %72, %9, %cst_34 {dimension_numbers = #tpu.dot_dimension_numbers<[1], [0], [0], [1], [0, 0, 1, 1], [], []>} : vector<16x128xbf16>, vector<128x512xbf16>, vector<16x512xf32> -> vector<16x512xf32>
    %74 = arith.extf %71 : vector<16x512xbf16> to vector<16x512xf32>
    %75 = arith.addf %73, %74 : vector<16x512xf32>
    %76 = vector.broadcast %10 : vector<1x512xf32> to vector<16x512xf32>
    %77 = arith.addf %75, %76 : vector<16x512xf32>
    %c0_35 = arith.constant 0 : index
    %c0_36 = arith.constant 0 : index
    %78 = vector.load %arg11[%c0_35, %c0_36] : memref<16x512xf32, #tpu.memory_space<vmem>>, vector<16x512xf32>
    tpu.vector_store %arg11[%c0_35, %c0_36], %77 {strides = array<i32>} : memref<16x512xf32, #tpu.memory_space<vmem>>, vector<16x512xf32>,
    %c0_37 = arith.constant 0 : index
    %c0_38 = arith.constant 0 : index
    %79 = vector.load %arg11[%c0_37, %c0_38] : memref<16x512xf32, #tpu.memory_space<vmem>>, vector<16x128xf32>
    %80 = arith.negf %79 : vector<16x128xf32>
    %81 = math.exp %80 : vector<16x128xf32>
    %cst_39 = arith.constant 1.000000e+00 : f32
    %82 = vector.broadcast %cst_39 : f32 to vector<16x128xf32>
    %83 = arith.addf %82, %81 : vector<16x128xf32>
    %84 = arith.divf %82, %83 : vector<16x128xf32>
    %c0_40 = arith.constant 0 : index
    %c128_41 = arith.constant 128 : index
    %85 = vector.load %arg11[%c0_40, %c128_41] : memref<16x512xf32, #tpu.memory_space<vmem>>, vector<16x128xf32>
    %86 = arith.negf %85 : vector<16x128xf32>
    %87 = math.exp %86 : vector<16x128xf32>
    %cst_42 = arith.constant 1.000000e+00 : f32
    %88 = vector.broadcast %cst_42 : f32 to vector<16x128xf32>
    %89 = arith.addf %88, %87 : vector<16x128xf32>
    %90 = arith.divf %88, %89 : vector<16x128xf32>
    %c0_43 = arith.constant 0 : index
    %c256_44 = arith.constant 256 : index
    %91 = vector.load %arg11[%c0_43, %c256_44] : memref<16x512xf32, #tpu.memory_space<vmem>>, vector<16x128xf32>
    %92 = math.tanh %91 : vector<16x128xf32>
    %c0_45 = arith.constant 0 : index
    %c384_46 = arith.constant 384 : index
    %93 = vector.load %arg11[%c0_45, %c384_46] : memref<16x512xf32, #tpu.memory_space<vmem>>, vector<16x128xf32>
    %94 = arith.negf %93 : vector<16x128xf32>
    %95 = math.exp %94 : vector<16x128xf32>
    %cst_47 = arith.constant 1.000000e+00 : f32
    %96 = vector.broadcast %cst_47 : f32 to vector<16x128xf32>
    %97 = arith.addf %96, %95 : vector<16x128xf32>
    %98 = arith.divf %96, %97 : vector<16x128xf32>
    %99 = arith.mulf %90, %63 : vector<16x128xf32>
    %100 = arith.mulf %84, %92 : vector<16x128xf32>
    %101 = arith.addf %99, %100 : vector<16x128xf32>
    %102 = math.tanh %101 : vector<16x128xf32>
    %103 = arith.mulf %98, %102 : vector<16x128xf32>
    %104 = arith.addi %12, %c1_i32 : i32
    %105 = vector.broadcast %104 : i32 to vector<16x1xi32>
    %106 = arith.cmpi slt, %105, %11 : vector<16x1xi32>
    %107 = arith.extui %106 : vector<16x1xi1> to vector<16x1xi32>
    %108 = arith.sitofp %107 : vector<16x1xi32> to vector<16x1xf32>
    %109 = arith.subf %103, %59 : vector<16x128xf32>
    %110 = vector.broadcast %108 : vector<16x1xf32> to vector<16x128xf32>
    %111 = arith.mulf %110, %109 : vector<16x128xf32>
    %112 = arith.addf %59, %111 : vector<16x128xf32>
    %113 = arith.subf %101, %63 : vector<16x128xf32>
    %114 = vector.broadcast %108 : vector<16x1xf32> to vector<16x128xf32>
    %115 = arith.mulf %114, %113 : vector<16x128xf32>
    %116 = arith.addf %63, %115 : vector<16x128xf32>
    %117 = arith.index_cast %c1_i32 : i32 to index
    %c0_48 = arith.constant 0 : index
    %c0_49 = arith.constant 0 : index
    %118 = vector.load %arg7[%117, %c0_48, %c0_49] : memref<8x16x128xf32, #tpu.memory_space<vmem>>, vector<1x16x128xf32>
    %119 = vector.shape_cast %118 : vector<1x16x128xf32> to vector<16x128xf32>
    %120 = vector.shape_cast %112 : vector<16x128xf32> to vector<1x16x128xf32>
    tpu.vector_store %arg7[%117, %c0_48, %c0_49], %120 {strides = array<i32>} : memref<8x16x128xf32, #tpu.memory_space<vmem>>, vector<1x16x128xf32>,
    %c2_i32 = arith.constant 2 : i32
    %c16_i32_50 = arith.constant 16 : i32
    %121 = arith.muli %c2_i32, %c16_i32_50 : i32
    %122 = tpu.assume_multiple %121, 16 : i32
    %123 = arith.index_cast %122 : i32 to index
    %c0_51 = arith.constant 0 : index
    %124 = vector.load %arg10[%123, %c0_51] : memref<128x512xbf16, #tpu.memory_space<vmem>>, vector<16x512xbf16>
    %125 = arith.truncf %112 : vector<16x128xf32> to vector<16x128xbf16>
    %cst_52 = arith.constant dense<0.000000e+00> : vector<16x512xf32>
    %126 = tpu.matmul %125, %9, %cst_52 {dimension_numbers = #tpu.dot_dimension_numbers<[1], [0], [0], [1], [0, 0, 1, 1], [], []>} : vector<16x128xbf16>, vector<128x512xbf16>, vector<16x512xf32> -> vector<16x512xf32>
    %127 = arith.extf %124 : vector<16x512xbf16> to vector<16x512xf32>
    %128 = arith.addf %126, %127 : vector<16x512xf32>
    %129 = vector.broadcast %10 : vector<1x512xf32> to vector<16x512xf32>
    %130 = arith.addf %128, %129 : vector<16x512xf32>
    %c0_53 = arith.constant 0 : index
    %c0_54 = arith.constant 0 : index
    %131 = vector.load %arg11[%c0_53, %c0_54] : memref<16x512xf32, #tpu.memory_space<vmem>>, vector<16x512xf32>
    tpu.vector_store %arg11[%c0_53, %c0_54], %130 {strides = array<i32>} : memref<16x512xf32, #tpu.memory_space<vmem>>, vector<16x512xf32>,
    %c0_55 = arith.constant 0 : index
    %c0_56 = arith.constant 0 : index
    %132 = vector.load %arg11[%c0_55, %c0_56] : memref<16x512xf32, #tpu.memory_space<vmem>>, vector<16x128xf32>
    %133 = arith.negf %132 : vector<16x128xf32>
    %134 = math.exp %133 : vector<16x128xf32>
    %cst_57 = arith.constant 1.000000e+00 : f32
    %135 = vector.broadcast %cst_57 : f32 to vector<16x128xf32>
    %136 = arith.addf %135, %134 : vector<16x128xf32>
    %137 = arith.divf %135, %136 : vector<16x128xf32>
    %c0_58 = arith.constant 0 : index
    %c128_59 = arith.constant 128 : index
    %138 = vector.load %arg11[%c0_58, %c128_59] : memref<16x512xf32, #tpu.memory_space<vmem>>, vector<16x128xf32>
    %139 = arith.negf %138 : vector<16x128xf32>
    %140 = math.exp %139 : vector<16x128xf32>
    %cst_60 = arith.constant 1.000000e+00 : f32
    %141 = vector.broadcast %cst_60 : f32 to vector<16x128xf32>
    %142 = arith.addf %141, %140 : vector<16x128xf32>
    %143 = arith.divf %141, %142 : vector<16x128xf32>
    %c0_61 = arith.constant 0 : index
    %c256_62 = arith.constant 256 : index
    %144 = vector.load %arg11[%c0_61, %c256_62] : memref<16x512xf32, #tpu.memory_space<vmem>>, vector<16x128xf32>
    %145 = math.tanh %144 : vector<16x128xf32>
    %c0_63 = arith.constant 0 : index
    %c384_64 = arith.constant 384 : index
    %146 = vector.load %arg11[%c0_63, %c384_64] : memref<16x512xf32, #tpu.memory_space<vmem>>, vector<16x128xf32>
    %147 = arith.negf %146 : vector<16x128xf32>
    %148 = math.exp %147 : vector<16x128xf32>
    %cst_65 = arith.constant 1.000000e+00 : f32
    %149 = vector.broadcast %cst_65 : f32 to vector<16x128xf32>
    %150 = arith.addf %149, %148 : vector<16x128xf32>
    %151 = arith.divf %149, %150 : vector<16x128xf32>
    %152 = arith.mulf %143, %116 : vector<16x128xf32>
    %153 = arith.mulf %137, %145 : vector<16x128xf32>
    %154 = arith.addf %152, %153 : vector<16x128xf32>
    %155 = math.tanh %154 : vector<16x128xf32>
    %156 = arith.mulf %151, %155 : vector<16x128xf32>
    %157 = arith.addi %12, %c2_i32 : i32
    %158 = vector.broadcast %157 : i32 to vector<16x1xi32>
    %159 = arith.cmpi slt, %158, %11 : vector<16x1xi32>
    %160 = arith.extui %159 : vector<16x1xi1> to vector<16x1xi32>
    %161 = arith.sitofp %160 : vector<16x1xi32> to vector<16x1xf32>
    %162 = arith.subf %156, %112 : vector<16x128xf32>
    %163 = vector.broadcast %161 : vector<16x1xf32> to vector<16x128xf32>
    %164 = arith.mulf %163, %162 : vector<16x128xf32>
    %165 = arith.addf %112, %164 : vector<16x128xf32>
    %166 = arith.subf %154, %116 : vector<16x128xf32>
    %167 = vector.broadcast %161 : vector<16x1xf32> to vector<16x128xf32>
    %168 = arith.mulf %167, %166 : vector<16x128xf32>
    %169 = arith.addf %116, %168 : vector<16x128xf32>
    %170 = arith.index_cast %c2_i32 : i32 to index
    %c0_66 = arith.constant 0 : index
    %c0_67 = arith.constant 0 : index
    %171 = vector.load %arg7[%170, %c0_66, %c0_67] : memref<8x16x128xf32, #tpu.memory_space<vmem>>, vector<1x16x128xf32>
    %172 = vector.shape_cast %171 : vector<1x16x128xf32> to vector<16x128xf32>
    %173 = vector.shape_cast %165 : vector<16x128xf32> to vector<1x16x128xf32>
    tpu.vector_store %arg7[%170, %c0_66, %c0_67], %173 {strides = array<i32>} : memref<8x16x128xf32, #tpu.memory_space<vmem>>, vector<1x16x128xf32>,
    %c3_i32 = arith.constant 3 : i32
    %c16_i32_68 = arith.constant 16 : i32
    %174 = arith.muli %c3_i32, %c16_i32_68 : i32
    %175 = tpu.assume_multiple %174, 16 : i32
    %176 = arith.index_cast %175 : i32 to index
    %c0_69 = arith.constant 0 : index
    %177 = vector.load %arg10[%176, %c0_69] : memref<128x512xbf16, #tpu.memory_space<vmem>>, vector<16x512xbf16>
    %178 = arith.truncf %165 : vector<16x128xf32> to vector<16x128xbf16>
    %cst_70 = arith.constant dense<0.000000e+00> : vector<16x512xf32>
    %179 = tpu.matmul %178, %9, %cst_70 {dimension_numbers = #tpu.dot_dimension_numbers<[1], [0], [0], [1], [0, 0, 1, 1], [], []>} : vector<16x128xbf16>, vector<128x512xbf16>, vector<16x512xf32> -> vector<16x512xf32>
    %180 = arith.extf %177 : vector<16x512xbf16> to vector<16x512xf32>
    %181 = arith.addf %179, %180 : vector<16x512xf32>
    %182 = vector.broadcast %10 : vector<1x512xf32> to vector<16x512xf32>
    %183 = arith.addf %181, %182 : vector<16x512xf32>
    %c0_71 = arith.constant 0 : index
    %c0_72 = arith.constant 0 : index
    %184 = vector.load %arg11[%c0_71, %c0_72] : memref<16x512xf32, #tpu.memory_space<vmem>>, vector<16x512xf32>
    tpu.vector_store %arg11[%c0_71, %c0_72], %183 {strides = array<i32>} : memref<16x512xf32, #tpu.memory_space<vmem>>, vector<16x512xf32>,
    %c0_73 = arith.constant 0 : index
    %c0_74 = arith.constant 0 : index
    %185 = vector.load %arg11[%c0_73, %c0_74] : memref<16x512xf32, #tpu.memory_space<vmem>>, vector<16x128xf32>
    %186 = arith.negf %185 : vector<16x128xf32>
    %187 = math.exp %186 : vector<16x128xf32>
    %cst_75 = arith.constant 1.000000e+00 : f32
    %188 = vector.broadcast %cst_75 : f32 to vector<16x128xf32>
    %189 = arith.addf %188, %187 : vector<16x128xf32>
    %190 = arith.divf %188, %189 : vector<16x128xf32>
    %c0_76 = arith.constant 0 : index
    %c128_77 = arith.constant 128 : index
    %191 = vector.load %arg11[%c0_76, %c128_77] : memref<16x512xf32, #tpu.memory_space<vmem>>, vector<16x128xf32>
    %192 = arith.negf %191 : vector<16x128xf32>
    %193 = math.exp %192 : vector<16x128xf32>
    %cst_78 = arith.constant 1.000000e+00 : f32
    %194 = vector.broadcast %cst_78 : f32 to vector<16x128xf32>
    %195 = arith.addf %194, %193 : vector<16x128xf32>
    %196 = arith.divf %194, %195 : vector<16x128xf32>
    %c0_79 = arith.constant 0 : index
    %c256_80 = arith.constant 256 : index
    %197 = vector.load %arg11[%c0_79, %c256_80] : memref<16x512xf32, #tpu.memory_space<vmem>>, vector<16x128xf32>
    %198 = math.tanh %197 : vector<16x128xf32>
    %c0_81 = arith.constant 0 : index
    %c384_82 = arith.constant 384 : index
    %199 = vector.load %arg11[%c0_81, %c384_82] : memref<16x512xf32, #tpu.memory_space<vmem>>, vector<16x128xf32>
    %200 = arith.negf %199 : vector<16x128xf32>
    %201 = math.exp %200 : vector<16x128xf32>
    %cst_83 = arith.constant 1.000000e+00 : f32
    %202 = vector.broadcast %cst_83 : f32 to vector<16x128xf32>
    %203 = arith.addf %202, %201 : vector<16x128xf32>
    %204 = arith.divf %202, %203 : vector<16x128xf32>
    %205 = arith.mulf %196, %169 : vector<16x128xf32>
    %206 = arith.mulf %190, %198 : vector<16x128xf32>
    %207 = arith.addf %205, %206 : vector<16x128xf32>
    %208 = math.tanh %207 : vector<16x128xf32>
    %209 = arith.mulf %204, %208 : vector<16x128xf32>
    %210 = arith.addi %12, %c3_i32 : i32
    %211 = vector.broadcast %210 : i32 to vector<16x1xi32>
    %212 = arith.cmpi slt, %211, %11 : vector<16x1xi32>
    %213 = arith.extui %212 : vector<16x1xi1> to vector<16x1xi32>
    %214 = arith.sitofp %213 : vector<16x1xi32> to vector<16x1xf32>
    %215 = arith.subf %209, %165 : vector<16x128xf32>
    %216 = vector.broadcast %214 : vector<16x1xf32> to vector<16x128xf32>
    %217 = arith.mulf %216, %215 : vector<16x128xf32>
    %218 = arith.addf %165, %217 : vector<16x128xf32>
    %219 = arith.subf %207, %169 : vector<16x128xf32>
    %220 = vector.broadcast %214 : vector<16x1xf32> to vector<16x128xf32>
    %221 = arith.mulf %220, %219 : vector<16x128xf32>
    %222 = arith.addf %169, %221 : vector<16x128xf32>
    %223 = arith.index_cast %c3_i32 : i32 to index
    %c0_84 = arith.constant 0 : index
    %c0_85 = arith.constant 0 : index
    %224 = vector.load %arg7[%223, %c0_84, %c0_85] : memref<8x16x128xf32, #tpu.memory_space<vmem>>, vector<1x16x128xf32>
    %225 = vector.shape_cast %224 : vector<1x16x128xf32> to vector<16x128xf32>
    %226 = vector.shape_cast %218 : vector<16x128xf32> to vector<1x16x128xf32>
    tpu.vector_store %arg7[%223, %c0_84, %c0_85], %226 {strides = array<i32>} : memref<8x16x128xf32, #tpu.memory_space<vmem>>, vector<1x16x128xf32>,
    %c4_i32 = arith.constant 4 : i32
    %c16_i32_86 = arith.constant 16 : i32
    %227 = arith.muli %c4_i32, %c16_i32_86 : i32
    %228 = tpu.assume_multiple %227, 16 : i32
    %229 = arith.index_cast %228 : i32 to index
    %c0_87 = arith.constant 0 : index
    %230 = vector.load %arg10[%229, %c0_87] : memref<128x512xbf16, #tpu.memory_space<vmem>>, vector<16x512xbf16>
    %231 = arith.truncf %218 : vector<16x128xf32> to vector<16x128xbf16>
    %cst_88 = arith.constant dense<0.000000e+00> : vector<16x512xf32>
    %232 = tpu.matmul %231, %9, %cst_88 {dimension_numbers = #tpu.dot_dimension_numbers<[1], [0], [0], [1], [0, 0, 1, 1], [], []>} : vector<16x128xbf16>, vector<128x512xbf16>, vector<16x512xf32> -> vector<16x512xf32>
    %233 = arith.extf %230 : vector<16x512xbf16> to vector<16x512xf32>
    %234 = arith.addf %232, %233 : vector<16x512xf32>
    %235 = vector.broadcast %10 : vector<1x512xf32> to vector<16x512xf32>
    %236 = arith.addf %234, %235 : vector<16x512xf32>
    %c0_89 = arith.constant 0 : index
    %c0_90 = arith.constant 0 : index
    %237 = vector.load %arg11[%c0_89, %c0_90] : memref<16x512xf32, #tpu.memory_space<vmem>>, vector<16x512xf32>
    tpu.vector_store %arg11[%c0_89, %c0_90], %236 {strides = array<i32>} : memref<16x512xf32, #tpu.memory_space<vmem>>, vector<16x512xf32>,
    %c0_91 = arith.constant 0 : index
    %c0_92 = arith.constant 0 : index
    %238 = vector.load %arg11[%c0_91, %c0_92] : memref<16x512xf32, #tpu.memory_space<vmem>>, vector<16x128xf32>
    %239 = arith.negf %238 : vector<16x128xf32>
    %240 = math.exp %239 : vector<16x128xf32>
    %cst_93 = arith.constant 1.000000e+00 : f32
    %241 = vector.broadcast %cst_93 : f32 to vector<16x128xf32>
    %242 = arith.addf %241, %240 : vector<16x128xf32>
    %243 = arith.divf %241, %242 : vector<16x128xf32>
    %c0_94 = arith.constant 0 : index
    %c128_95 = arith.constant 128 : index
    %244 = vector.load %arg11[%c0_94, %c128_95] : memref<16x512xf32, #tpu.memory_space<vmem>>, vector<16x128xf32>
    %245 = arith.negf %244 : vector<16x128xf32>
    %246 = math.exp %245 : vector<16x128xf32>
    %cst_96 = arith.constant 1.000000e+00 : f32
    %247 = vector.broadcast %cst_96 : f32 to vector<16x128xf32>
    %248 = arith.addf %247, %246 : vector<16x128xf32>
    %249 = arith.divf %247, %248 : vector<16x128xf32>
    %c0_97 = arith.constant 0 : index
    %c256_98 = arith.constant 256 : index
    %250 = vector.load %arg11[%c0_97, %c256_98] : memref<16x512xf32, #tpu.memory_space<vmem>>, vector<16x128xf32>
    %251 = math.tanh %250 : vector<16x128xf32>
    %c0_99 = arith.constant 0 : index
    %c384_100 = arith.constant 384 : index
    %252 = vector.load %arg11[%c0_99, %c384_100] : memref<16x512xf32, #tpu.memory_space<vmem>>, vector<16x128xf32>
    %253 = arith.negf %252 : vector<16x128xf32>
    %254 = math.exp %253 : vector<16x128xf32>
    %cst_101 = arith.constant 1.000000e+00 : f32
    %255 = vector.broadcast %cst_101 : f32 to vector<16x128xf32>
    %256 = arith.addf %255, %254 : vector<16x128xf32>
    %257 = arith.divf %255, %256 : vector<16x128xf32>
    %258 = arith.mulf %249, %222 : vector<16x128xf32>
    %259 = arith.mulf %243, %251 : vector<16x128xf32>
    %260 = arith.addf %258, %259 : vector<16x128xf32>
    %261 = math.tanh %260 : vector<16x128xf32>
    %262 = arith.mulf %257, %261 : vector<16x128xf32>
    %263 = arith.addi %12, %c4_i32 : i32
    %264 = vector.broadcast %263 : i32 to vector<16x1xi32>
    %265 = arith.cmpi slt, %264, %11 : vector<16x1xi32>
    %266 = arith.extui %265 : vector<16x1xi1> to vector<16x1xi32>
    %267 = arith.sitofp %266 : vector<16x1xi32> to vector<16x1xf32>
    %268 = arith.subf %262, %218 : vector<16x128xf32>
    %269 = vector.broadcast %267 : vector<16x1xf32> to vector<16x128xf32>
    %270 = arith.mulf %269, %268 : vector<16x128xf32>
    %271 = arith.addf %218, %270 : vector<16x128xf32>
    %272 = arith.subf %260, %222 : vector<16x128xf32>
    %273 = vector.broadcast %267 : vector<16x1xf32> to vector<16x128xf32>
    %274 = arith.mulf %273, %272 : vector<16x128xf32>
    %275 = arith.addf %222, %274 : vector<16x128xf32>
    %276 = arith.index_cast %c4_i32 : i32 to index
    %c0_102 = arith.constant 0 : index
    %c0_103 = arith.constant 0 : index
    %277 = vector.load %arg7[%276, %c0_102, %c0_103] : memref<8x16x128xf32, #tpu.memory_space<vmem>>, vector<1x16x128xf32>
    %278 = vector.shape_cast %277 : vector<1x16x128xf32> to vector<16x128xf32>
    %279 = vector.shape_cast %271 : vector<16x128xf32> to vector<1x16x128xf32>
    tpu.vector_store %arg7[%276, %c0_102, %c0_103], %279 {strides = array<i32>} : memref<8x16x128xf32, #tpu.memory_space<vmem>>, vector<1x16x128xf32>,
    %c5_i32 = arith.constant 5 : i32
    %c16_i32_104 = arith.constant 16 : i32
    %280 = arith.muli %c5_i32, %c16_i32_104 : i32
    %281 = tpu.assume_multiple %280, 16 : i32
    %282 = arith.index_cast %281 : i32 to index
    %c0_105 = arith.constant 0 : index
    %283 = vector.load %arg10[%282, %c0_105] : memref<128x512xbf16, #tpu.memory_space<vmem>>, vector<16x512xbf16>
    %284 = arith.truncf %271 : vector<16x128xf32> to vector<16x128xbf16>
    %cst_106 = arith.constant dense<0.000000e+00> : vector<16x512xf32>
    %285 = tpu.matmul %284, %9, %cst_106 {dimension_numbers = #tpu.dot_dimension_numbers<[1], [0], [0], [1], [0, 0, 1, 1], [], []>} : vector<16x128xbf16>, vector<128x512xbf16>, vector<16x512xf32> -> vector<16x512xf32>
    %286 = arith.extf %283 : vector<16x512xbf16> to vector<16x512xf32>
    %287 = arith.addf %285, %286 : vector<16x512xf32>
    %288 = vector.broadcast %10 : vector<1x512xf32> to vector<16x512xf32>
    %289 = arith.addf %287, %288 : vector<16x512xf32>
    %c0_107 = arith.constant 0 : index
    %c0_108 = arith.constant 0 : index
    %290 = vector.load %arg11[%c0_107, %c0_108] : memref<16x512xf32, #tpu.memory_space<vmem>>, vector<16x512xf32>
    tpu.vector_store %arg11[%c0_107, %c0_108], %289 {strides = array<i32>} : memref<16x512xf32, #tpu.memory_space<vmem>>, vector<16x512xf32>,
    %c0_109 = arith.constant 0 : index
    %c0_110 = arith.constant 0 : index
    %291 = vector.load %arg11[%c0_109, %c0_110] : memref<16x512xf32, #tpu.memory_space<vmem>>, vector<16x128xf32>
    %292 = arith.negf %291 : vector<16x128xf32>
    %293 = math.exp %292 : vector<16x128xf32>
    %cst_111 = arith.constant 1.000000e+00 : f32
    %294 = vector.broadcast %cst_111 : f32 to vector<16x128xf32>
    %295 = arith.addf %294, %293 : vector<16x128xf32>
    %296 = arith.divf %294, %295 : vector<16x128xf32>
    %c0_112 = arith.constant 0 : index
    %c128_113 = arith.constant 128 : index
    %297 = vector.load %arg11[%c0_112, %c128_113] : memref<16x512xf32, #tpu.memory_space<vmem>>, vector<16x128xf32>
    %298 = arith.negf %297 : vector<16x128xf32>
    %299 = math.exp %298 : vector<16x128xf32>
    %cst_114 = arith.constant 1.000000e+00 : f32
    %300 = vector.broadcast %cst_114 : f32 to vector<16x128xf32>
    %301 = arith.addf %300, %299 : vector<16x128xf32>
    %302 = arith.divf %300, %301 : vector<16x128xf32>
    %c0_115 = arith.constant 0 : index
    %c256_116 = arith.constant 256 : index
    %303 = vector.load %arg11[%c0_115, %c256_116] : memref<16x512xf32, #tpu.memory_space<vmem>>, vector<16x128xf32>
    %304 = math.tanh %303 : vector<16x128xf32>
    %c0_117 = arith.constant 0 : index
    %c384_118 = arith.constant 384 : index
    %305 = vector.load %arg11[%c0_117, %c384_118] : memref<16x512xf32, #tpu.memory_space<vmem>>, vector<16x128xf32>
    %306 = arith.negf %305 : vector<16x128xf32>
    %307 = math.exp %306 : vector<16x128xf32>
    %cst_119 = arith.constant 1.000000e+00 : f32
    %308 = vector.broadcast %cst_119 : f32 to vector<16x128xf32>
    %309 = arith.addf %308, %307 : vector<16x128xf32>
    %310 = arith.divf %308, %309 : vector<16x128xf32>
    %311 = arith.mulf %302, %275 : vector<16x128xf32>
    %312 = arith.mulf %296, %304 : vector<16x128xf32>
    %313 = arith.addf %311, %312 : vector<16x128xf32>
    %314 = math.tanh %313 : vector<16x128xf32>
    %315 = arith.mulf %310, %314 : vector<16x128xf32>
    %316 = arith.addi %12, %c5_i32 : i32
    %317 = vector.broadcast %316 : i32 to vector<16x1xi32>
    %318 = arith.cmpi slt, %317, %11 : vector<16x1xi32>
    %319 = arith.extui %318 : vector<16x1xi1> to vector<16x1xi32>
    %320 = arith.sitofp %319 : vector<16x1xi32> to vector<16x1xf32>
    %321 = arith.subf %315, %271 : vector<16x128xf32>
    %322 = vector.broadcast %320 : vector<16x1xf32> to vector<16x128xf32>
    %323 = arith.mulf %322, %321 : vector<16x128xf32>
    %324 = arith.addf %271, %323 : vector<16x128xf32>
    %325 = arith.subf %313, %275 : vector<16x128xf32>
    %326 = vector.broadcast %320 : vector<16x1xf32> to vector<16x128xf32>
    %327 = arith.mulf %326, %325 : vector<16x128xf32>
    %328 = arith.addf %275, %327 : vector<16x128xf32>
    %329 = arith.index_cast %c5_i32 : i32 to index
    %c0_120 = arith.constant 0 : index
    %c0_121 = arith.constant 0 : index
    %330 = vector.load %arg7[%329, %c0_120, %c0_121] : memref<8x16x128xf32, #tpu.memory_space<vmem>>, vector<1x16x128xf32>
    %331 = vector.shape_cast %330 : vector<1x16x128xf32> to vector<16x128xf32>
    %332 = vector.shape_cast %324 : vector<16x128xf32> to vector<1x16x128xf32>
    tpu.vector_store %arg7[%329, %c0_120, %c0_121], %332 {strides = array<i32>} : memref<8x16x128xf32, #tpu.memory_space<vmem>>, vector<1x16x128xf32>,
    %c6_i32 = arith.constant 6 : i32
    %c16_i32_122 = arith.constant 16 : i32
    %333 = arith.muli %c6_i32, %c16_i32_122 : i32
    %334 = tpu.assume_multiple %333, 16 : i32
    %335 = arith.index_cast %334 : i32 to index
    %c0_123 = arith.constant 0 : index
    %336 = vector.load %arg10[%335, %c0_123] : memref<128x512xbf16, #tpu.memory_space<vmem>>, vector<16x512xbf16>
    %337 = arith.truncf %324 : vector<16x128xf32> to vector<16x128xbf16>
    %cst_124 = arith.constant dense<0.000000e+00> : vector<16x512xf32>
    %338 = tpu.matmul %337, %9, %cst_124 {dimension_numbers = #tpu.dot_dimension_numbers<[1], [0], [0], [1], [0, 0, 1, 1], [], []>} : vector<16x128xbf16>, vector<128x512xbf16>, vector<16x512xf32> -> vector<16x512xf32>
    %339 = arith.extf %336 : vector<16x512xbf16> to vector<16x512xf32>
    %340 = arith.addf %338, %339 : vector<16x512xf32>
    %341 = vector.broadcast %10 : vector<1x512xf32> to vector<16x512xf32>
    %342 = arith.addf %340, %341 : vector<16x512xf32>
    %c0_125 = arith.constant 0 : index
    %c0_126 = arith.constant 0 : index
    %343 = vector.load %arg11[%c0_125, %c0_126] : memref<16x512xf32, #tpu.memory_space<vmem>>, vector<16x512xf32>
    tpu.vector_store %arg11[%c0_125, %c0_126], %342 {strides = array<i32>} : memref<16x512xf32, #tpu.memory_space<vmem>>, vector<16x512xf32>,
    %c0_127 = arith.constant 0 : index
    %c0_128 = arith.constant 0 : index
    %344 = vector.load %arg11[%c0_127, %c0_128] : memref<16x512xf32, #tpu.memory_space<vmem>>, vector<16x128xf32>
    %345 = arith.negf %344 : vector<16x128xf32>
    %346 = math.exp %345 : vector<16x128xf32>
    %cst_129 = arith.constant 1.000000e+00 : f32
    %347 = vector.broadcast %cst_129 : f32 to vector<16x128xf32>
    %348 = arith.addf %347, %346 : vector<16x128xf32>
    %349 = arith.divf %347, %348 : vector<16x128xf32>
    %c0_130 = arith.constant 0 : index
    %c128_131 = arith.constant 128 : index
    %350 = vector.load %arg11[%c0_130, %c128_131] : memref<16x512xf32, #tpu.memory_space<vmem>>, vector<16x128xf32>
    %351 = arith.negf %350 : vector<16x128xf32>
    %352 = math.exp %351 : vector<16x128xf32>
    %cst_132 = arith.constant 1.000000e+00 : f32
    %353 = vector.broadcast %cst_132 : f32 to vector<16x128xf32>
    %354 = arith.addf %353, %352 : vector<16x128xf32>
    %355 = arith.divf %353, %354 : vector<16x128xf32>
    %c0_133 = arith.constant 0 : index
    %c256_134 = arith.constant 256 : index
    %356 = vector.load %arg11[%c0_133, %c256_134] : memref<16x512xf32, #tpu.memory_space<vmem>>, vector<16x128xf32>
    %357 = math.tanh %356 : vector<16x128xf32>
    %c0_135 = arith.constant 0 : index
    %c384_136 = arith.constant 384 : index
    %358 = vector.load %arg11[%c0_135, %c384_136] : memref<16x512xf32, #tpu.memory_space<vmem>>, vector<16x128xf32>
    %359 = arith.negf %358 : vector<16x128xf32>
    %360 = math.exp %359 : vector<16x128xf32>
    %cst_137 = arith.constant 1.000000e+00 : f32
    %361 = vector.broadcast %cst_137 : f32 to vector<16x128xf32>
    %362 = arith.addf %361, %360 : vector<16x128xf32>
    %363 = arith.divf %361, %362 : vector<16x128xf32>
    %364 = arith.mulf %355, %328 : vector<16x128xf32>
    %365 = arith.mulf %349, %357 : vector<16x128xf32>
    %366 = arith.addf %364, %365 : vector<16x128xf32>
    %367 = math.tanh %366 : vector<16x128xf32>
    %368 = arith.mulf %363, %367 : vector<16x128xf32>
    %369 = arith.addi %12, %c6_i32 : i32
    %370 = vector.broadcast %369 : i32 to vector<16x1xi32>
    %371 = arith.cmpi slt, %370, %11 : vector<16x1xi32>
    %372 = arith.extui %371 : vector<16x1xi1> to vector<16x1xi32>
    %373 = arith.sitofp %372 : vector<16x1xi32> to vector<16x1xf32>
    %374 = arith.subf %368, %324 : vector<16x128xf32>
    %375 = vector.broadcast %373 : vector<16x1xf32> to vector<16x128xf32>
    %376 = arith.mulf %375, %374 : vector<16x128xf32>
    %377 = arith.addf %324, %376 : vector<16x128xf32>
    %378 = arith.subf %366, %328 : vector<16x128xf32>
    %379 = vector.broadcast %373 : vector<16x1xf32> to vector<16x128xf32>
    %380 = arith.mulf %379, %378 : vector<16x128xf32>
    %381 = arith.addf %328, %380 : vector<16x128xf32>
    %382 = arith.index_cast %c6_i32 : i32 to index
    %c0_138 = arith.constant 0 : index
    %c0_139 = arith.constant 0 : index
    %383 = vector.load %arg7[%382, %c0_138, %c0_139] : memref<8x16x128xf32, #tpu.memory_space<vmem>>, vector<1x16x128xf32>
    %384 = vector.shape_cast %383 : vector<1x16x128xf32> to vector<16x128xf32>
    %385 = vector.shape_cast %377 : vector<16x128xf32> to vector<1x16x128xf32>
    tpu.vector_store %arg7[%382, %c0_138, %c0_139], %385 {strides = array<i32>} : memref<8x16x128xf32, #tpu.memory_space<vmem>>, vector<1x16x128xf32>,
    %c7_i32 = arith.constant 7 : i32
    %c16_i32_140 = arith.constant 16 : i32
    %386 = arith.muli %c7_i32, %c16_i32_140 : i32
    %387 = tpu.assume_multiple %386, 16 : i32
    %388 = arith.index_cast %387 : i32 to index
    %c0_141 = arith.constant 0 : index
    %389 = vector.load %arg10[%388, %c0_141] : memref<128x512xbf16, #tpu.memory_space<vmem>>, vector<16x512xbf16>
    %390 = arith.truncf %377 : vector<16x128xf32> to vector<16x128xbf16>
    %cst_142 = arith.constant dense<0.000000e+00> : vector<16x512xf32>
    %391 = tpu.matmul %390, %9, %cst_142 {dimension_numbers = #tpu.dot_dimension_numbers<[1], [0], [0], [1], [0, 0, 1, 1], [], []>} : vector<16x128xbf16>, vector<128x512xbf16>, vector<16x512xf32> -> vector<16x512xf32>
    %392 = arith.extf %389 : vector<16x512xbf16> to vector<16x512xf32>
    %393 = arith.addf %391, %392 : vector<16x512xf32>
    %394 = vector.broadcast %10 : vector<1x512xf32> to vector<16x512xf32>
    %395 = arith.addf %393, %394 : vector<16x512xf32>
    %c0_143 = arith.constant 0 : index
    %c0_144 = arith.constant 0 : index
    %396 = vector.load %arg11[%c0_143, %c0_144] : memref<16x512xf32, #tpu.memory_space<vmem>>, vector<16x512xf32>
    tpu.vector_store %arg11[%c0_143, %c0_144], %395 {strides = array<i32>} : memref<16x512xf32, #tpu.memory_space<vmem>>, vector<16x512xf32>,
    %c0_145 = arith.constant 0 : index
    %c0_146 = arith.constant 0 : index
    %397 = vector.load %arg11[%c0_145, %c0_146] : memref<16x512xf32, #tpu.memory_space<vmem>>, vector<16x128xf32>
    %398 = arith.negf %397 : vector<16x128xf32>
    %399 = math.exp %398 : vector<16x128xf32>
    %cst_147 = arith.constant 1.000000e+00 : f32
    %400 = vector.broadcast %cst_147 : f32 to vector<16x128xf32>
    %401 = arith.addf %400, %399 : vector<16x128xf32>
    %402 = arith.divf %400, %401 : vector<16x128xf32>
    %c0_148 = arith.constant 0 : index
    %c128_149 = arith.constant 128 : index
    %403 = vector.load %arg11[%c0_148, %c128_149] : memref<16x512xf32, #tpu.memory_space<vmem>>, vector<16x128xf32>
    %404 = arith.negf %403 : vector<16x128xf32>
    %405 = math.exp %404 : vector<16x128xf32>
    %cst_150 = arith.constant 1.000000e+00 : f32
    %406 = vector.broadcast %cst_150 : f32 to vector<16x128xf32>
    %407 = arith.addf %406, %405 : vector<16x128xf32>
    %408 = arith.divf %406, %407 : vector<16x128xf32>
    %c0_151 = arith.constant 0 : index
    %c256_152 = arith.constant 256 : index
    %409 = vector.load %arg11[%c0_151, %c256_152] : memref<16x512xf32, #tpu.memory_space<vmem>>, vector<16x128xf32>
    %410 = math.tanh %409 : vector<16x128xf32>
    %c0_153 = arith.constant 0 : index
    %c384_154 = arith.constant 384 : index
    %411 = vector.load %arg11[%c0_153, %c384_154] : memref<16x512xf32, #tpu.memory_space<vmem>>, vector<16x128xf32>
    %412 = arith.negf %411 : vector<16x128xf32>
    %413 = math.exp %412 : vector<16x128xf32>
    %cst_155 = arith.constant 1.000000e+00 : f32
    %414 = vector.broadcast %cst_155 : f32 to vector<16x128xf32>
    %415 = arith.addf %414, %413 : vector<16x128xf32>
    %416 = arith.divf %414, %415 : vector<16x128xf32>
    %417 = arith.mulf %408, %381 : vector<16x128xf32>
    %418 = arith.mulf %402, %410 : vector<16x128xf32>
    %419 = arith.addf %417, %418 : vector<16x128xf32>
    %420 = math.tanh %419 : vector<16x128xf32>
    %421 = arith.mulf %416, %420 : vector<16x128xf32>
    %422 = arith.addi %12, %c7_i32 : i32
    %423 = vector.broadcast %422 : i32 to vector<16x1xi32>
    %424 = arith.cmpi slt, %423, %11 : vector<16x1xi32>
    %425 = arith.extui %424 : vector<16x1xi1> to vector<16x1xi32>
    %426 = arith.sitofp %425 : vector<16x1xi32> to vector<16x1xf32>
    %427 = arith.subf %421, %377 : vector<16x128xf32>
    %428 = vector.broadcast %426 : vector<16x1xf32> to vector<16x128xf32>
    %429 = arith.mulf %428, %427 : vector<16x128xf32>
    %430 = arith.addf %377, %429 : vector<16x128xf32>
    %431 = arith.subf %419, %381 : vector<16x128xf32>
    %432 = vector.broadcast %426 : vector<16x1xf32> to vector<16x128xf32>
    %433 = arith.mulf %432, %431 : vector<16x128xf32>
    %434 = arith.addf %381, %433 : vector<16x128xf32>
    %435 = arith.index_cast %c7_i32 : i32 to index
    %c0_156 = arith.constant 0 : index
    %c0_157 = arith.constant 0 : index
    %436 = vector.load %arg7[%435, %c0_156, %c0_157] : memref<8x16x128xf32, #tpu.memory_space<vmem>>, vector<1x16x128xf32>
    %437 = vector.shape_cast %436 : vector<1x16x128xf32> to vector<16x128xf32>
    %438 = vector.shape_cast %430 : vector<16x128xf32> to vector<1x16x128xf32>
    tpu.vector_store %arg7[%435, %c0_156, %c0_157], %438 {strides = array<i32>} : memref<8x16x128xf32, #tpu.memory_space<vmem>>, vector<1x16x128xf32>,
    %c8_i32_158 = arith.constant 8 : i32
    %c0_159 = arith.constant 0 : index
    %c0_160 = arith.constant 0 : index
    %439 = vector.load %arg12[%c0_159, %c0_160] : memref<16x128xf32, #tpu.memory_space<vmem>>, vector<16x128xf32>
    tpu.vector_store %arg12[%c0_159, %c0_160], %430 {strides = array<i32>} : memref<16x128xf32, #tpu.memory_space<vmem>>, vector<16x128xf32>,
    %c0_161 = arith.constant 0 : index
    %c0_162 = arith.constant 0 : index
    %440 = vector.load %arg13[%c0_161, %c0_162] : memref<16x128xf32, #tpu.memory_space<vmem>>, vector<16x128xf32>
    tpu.vector_store %arg13[%c0_161, %c0_162], %434 {strides = array<i32>} : memref<16x128xf32, #tpu.memory_space<vmem>>, vector<16x128xf32>,
    %c0_i32_163 = arith.constant 0 : i32
    %441 = arith.cmpi eq, %arg1, %c0_i32_163 : i32
    %442 = arith.extui %441 : i1 to i32
    %c0_i32_164 = arith.constant 0 : i32
    %443 = arith.cmpi ne, %442, %c0_i32_164 : i32
    scf.if %443 {
      %c0_165 = arith.constant 0 : index
      %c0_166 = arith.constant 0 : index
      %444 = vector.load %arg8[%c0_165, %c0_166] : memref<16x128xf32, #tpu.memory_space<vmem>>, vector<16x128xf32>
      tpu.vector_store %arg8[%c0_165, %c0_166], %430 {strides = array<i32>} : memref<16x128xf32, #tpu.memory_space<vmem>>, vector<16x128xf32>,
      %c0_167 = arith.constant 0 : index
      %c0_168 = arith.constant 0 : index
      %445 = vector.load %arg9[%c0_167, %c0_168] : memref<16x128xf32, #tpu.memory_space<vmem>>, vector<16x128xf32>
      tpu.vector_store %arg9[%c0_167, %c0_168], %434 {strides = array<i32>} : memref<16x128xf32, #tpu.memory_space<vmem>>, vector<16x128xf32>,
    } else {
    }
    return
  }
  func.func @transform_0(%arg0: i32, %arg1: i32) -> (i32, i32, i32) {
    %c0_i32 = arith.constant 0 : i32
    %c0_i32_0 = arith.constant 0 : i32
    return %arg1, %arg0, %c0_i32 : i32, i32, i32
  }
  func.func @transform_1(%arg0: i32, %arg1: i32) -> (i32, i32) {
    %c0_i32 = arith.constant 0 : i32
    %c0_i32_0 = arith.constant 0 : i32
    return %arg0, %c0_i32 : i32, i32
  }
  func.func @transform_2(%arg0: i32, %arg1: i32) -> (i32, i32) {
    %c0_i32 = arith.constant 0 : i32
    %c0_i32_0 = arith.constant 0 : i32
    %c0_i32_1 = arith.constant 0 : i32
    return %c0_i32, %c0_i32_0 : i32, i32
  }
  func.func @transform_3(%arg0: i32, %arg1: i32) -> (i32, i32) {
    %c0_i32 = arith.constant 0 : i32
    %c0_i32_0 = arith.constant 0 : i32
    %c0_i32_1 = arith.constant 0 : i32
    return %c0_i32, %c0_i32_0 : i32, i32
  }
  func.func @transform_4(%arg0: i32, %arg1: i32) -> (i32, i32) {
    %c0_i32 = arith.constant 0 : i32
    %c0_i32_0 = arith.constant 0 : i32
    %c0_i32_1 = arith.constant 0 : i32
    return %c0_i32, %c0_i32_0 : i32, i32
  }
  func.func @transform_5(%arg0: i32, %arg1: i32) -> (i32, i32, i32) {
    %c0_i32 = arith.constant 0 : i32
    %c0_i32_0 = arith.constant 0 : i32
    return %arg1, %arg0, %c0_i32 : i32, i32, i32
  }
  func.func @transform_6(%arg0: i32, %arg1: i32) -> (i32, i32) {
    %c0_i32 = arith.constant 0 : i32
    %c0_i32_0 = arith.constant 0 : i32
    return %arg0, %c0_i32 : i32, i32
  }
  func.func @transform_7(%arg0: i32, %arg1: i32) -> (i32, i32) {
    %c0_i32 = arith.constant 0 : i32
    %c0_i32_0 = arith.constant 0 : i32
    return %arg0, %c0_i32 : i32, i32
  }
}

</mosaic_0001>

<llo_original>
// kernel: tpu_custom_call.1
$region0: #{tpu_custom_call.1}
  #allocation0 [shape = 'u32[]', space=smem, size = 0x4, offset = 0x4, fixed_abs, tag = 'smem constant byte address 0x4 - core index']
  #allocation1 [shape = 'u32[144,128]{1,0:T(1,128)}', space=vmem, size = 0x12000, scoped, tag = 'internal scratch']
  #allocation2 [shape = 'bf16[128,512]{1,0:T(16,128)(2,1)}', space=vmem, size = 0x20000, scoped, tag = 'scratch operand']
  #allocation3 [shape = 'f32[16,512]{1,0:T(8,128)}', space=vmem, size = 0x8000, scoped, tag = 'scratch operand']
  #allocation4 [shape = 'f32[16,128]{1,0:T(8,128)}', space=vmem, size = 0x2000, scoped, tag = 'scratch operand']
  #allocation5 [shape = 'f32[16,128]{1,0:T(8,128)}', space=vmem, size = 0x2000, scoped, tag = 'scratch operand']
  %s0 = inlined_call_operand.hbm [shape: bf16[8,16,128], index: 0, kind: input, shape index: {}]
  %s1 = inlined_call_operand.vmem [shape: s32[16,1], index: 1, kind: input, shape index: {}]
  %s2 = inlined_call_operand.hbm [shape: bf16[128,512], index: 2, kind: input, shape index: {}]
  %s3 = inlined_call_operand.hbm [shape: bf16[128,512], index: 3, kind: input, shape index: {}]
  %s4 = inlined_call_operand.vmem [shape: f32[1,512], index: 4, kind: input, shape index: {}]
  %s5 = inlined_call_operand.hbm [shape: f32[8,16,128], index: 5, kind: output, shape index: {0}]
  %s6 = inlined_call_operand.hbm [shape: f32[16,128], index: 6, kind: output, shape index: {1}]
  %s7 = inlined_call_operand.hbm [shape: f32[16,128], index: 7, kind: output, shape index: {2}]
  %8 = xla_tuple %s5, %s6, %s7
  %s9 = sld [smem:[#allocation0]]
  $region66: #{tpu_custom_call.1} parent=0
    _
  %s11 = ssub.s32 1, %s9
  %s12 = scalar_select 0, %s11, %s9
  $region1: #{tpu_custom_call.1} parent=0
    #allocation6 [shape = 'u8[32768]{0}', space=vmem, size = 0x8000, scoped, tag = 'input window, operand 0, single buffered']
    #allocation7 [shape = 's32[1]{0}', space=sflag, size = 0x4, scoped, tag = 'scoped memory for tpu_custom_call.1']
    #allocation8 [shape = 's32[1]{0}', space=sflag, size = 0x4, scoped, tag = 'scoped memory for tpu_custom_call.1']
    #allocation9 [shape = 'u8[131072]{0}', space=vmem, size = 0x20000, scoped, tag = 'input window, operand 2, single buffered']
    #allocation10 [shape = 's32[1]{0}', space=sflag, size = 0x4, scoped, tag = 'scoped memory for tpu_custom_call.1']
    #allocation11 [shape = 'u8[131072]{0}', space=vmem, size = 0x20000, scoped, tag = 'input window, operand 3, single buffered']
    #allocation12 [shape = 'u8[65536]{0}', space=vmem, size = 0x10000, scoped, tag = 'output window, operand 0, single buffered']
    #allocation13 [shape = 'u8[8192]{0}', space=vmem, size = 0x2000, scoped, tag = 'output window, operand 1, single buffered']
    #allocation14 [shape = 's32[1]{0}', space=sflag, size = 0x4, scoped, tag = 'scoped memory for tpu_custom_call.1']
    #allocation15 [shape = 'u8[8192]{0}', space=vmem, size = 0x2000, scoped, tag = 'output window, operand 2, single buffered']
    %13 = vsyncpa [#allocation7], 0
    %14 = vsyncpa [#allocation10], 0
    %15 = vsyncpa [#allocation8], 0
    %16 = vsyncpa [#allocation14], 0
    // Predicated region
    $region2: #{tpu_custom_call.1} parent=1 // pred_check
      _
    $region3: #{tpu_custom_call.1} parent=1 // pred_check_branch
      %18 = sbr.rel (0) target = $region5
    $region4: #{tpu_custom_call.1} parent=1 // pred_region
      %s20 = ssub.s32 1024, 1024
      %21 = vsyncadd [#allocation7], %s20
      %s22 = sshll.u32 [#allocation6], 4
      %s23 = int_to_ptr.vmem [resolvable:$true] %s22
      %28 = dma.hbm_to_vmem [thread:$0]  %s0, 1024, %s23, [#allocation7], 64, 64, 4
    $region5: #{tpu_custom_call.1} parent=1 // pred_fallthru
      _
    // Predicated region
    $region6: #{tpu_custom_call.1} parent=1 // pred_check
      _
    $region7: #{tpu_custom_call.1} parent=1 // pred_check_branch
      %30 = sbr.rel (0) target = $region9
    $region8: #{tpu_custom_call.1} parent=1 // pred_region
      _
    $region9: #{tpu_custom_call.1} parent=1 // pred_fallthru
      _
    // Predicated region
    $region10: #{tpu_custom_call.1} parent=1 // pred_check
      _
    $region11: #{tpu_custom_call.1} parent=1 // pred_check_branch
      %32 = sbr.rel (0) target = $region13
    $region12: #{tpu_custom_call.1} parent=1 // pred_region
      %s34 = ssub.s32 4096, 4096
      %35 = vsyncadd [#allocation10], %s34
      %s36 = sshll.u32 [#allocation9], 4
      %s37 = int_to_ptr.vmem [resolvable:$true] %s36
      %42 = dma.hbm_to_vmem [thread:$0]  %s2, 4096, %s37, [#allocation10], 256, 256, 16
    $region13: #{tpu_custom_call.1} parent=1 // pred_fallthru
      _
    // Predicated region
    $region14: #{tpu_custom_call.1} parent=1 // pred_check
      _
    $region15: #{tpu_custom_call.1} parent=1 // pred_check_branch
      %44 = sbr.rel (0) target = $region17
    $region16: #{tpu_custom_call.1} parent=1 // pred_region
      %s46 = ssub.s32 4096, 4096
      %47 = vsyncadd [#allocation10], %s46
      %s48 = sshll.u32 [#allocation11], 4
      %s49 = int_to_ptr.vmem [resolvable:$true] %s48
      %54 = dma.hbm_to_vmem [thread:$0]  %s3, 4096, %s49, [#allocation10], 256, 256, 16
    $region17: #{tpu_custom_call.1} parent=1 // pred_fallthru
      _
    // Predicated region
    $region18: #{tpu_custom_call.1} parent=1 // pred_check
      _
    $region19: #{tpu_custom_call.1} parent=1 // pred_check_branch
      %56 = sbr.rel (0) target = $region21
    $region20: #{tpu_custom_call.1} parent=1 // pred_region
      _
    $region21: #{tpu_custom_call.1} parent=1 // pred_fallthru
      _
    // Predicated region
    $region22: #{tpu_custom_call.1} parent=1 // pred_check
      _
    $region23: #{tpu_custom_call.1} parent=1 // pred_check_branch
      %58 = sbr.rel (0) target = $region25
    $region24: #{tpu_custom_call.1} parent=1 // pred_region
      %59 = dma.done [#allocation7], 1024
    $region25: #{tpu_custom_call.1} parent=1 // pred_fallthru
      _
    // Predicated region
    $region26: #{tpu_custom_call.1} parent=1 // pred_check
      _
    $region27: #{tpu_custom_call.1} parent=1 // pred_check_branch
      %61 = sbr.rel (0) target = $region29
    $region28: #{tpu_custom_call.1} parent=1 // pred_region
      %62 = dma.done [#allocation10], 4096
    $region29: #{tpu_custom_call.1} parent=1 // pred_fallthru
      _
    // Predicated region
    $region30: #{tpu_custom_call.1} parent=1 // pred_check
      _
    $region31: #{tpu_custom_call.1} parent=1 // pred_check_branch
      %64 = sbr.rel (0) target = $region33
    $region32: #{tpu_custom_call.1} parent=1 // pred_region
      %65 = dma.done [#allocation10], 4096
    $region33: #{tpu_custom_call.1} parent=1 // pred_fallthru
      _
    %p67 = scmp.eq.s32.totalorder 0, 0
    // Predicated region
    $region34: #{tpu_custom_call.1} parent=1 // pred_check
      %p68 = pneg %p67
    $region35: #{tpu_custom_call.1} parent=1 // pred_check_branch
      %70 = sbr.rel (%p68) target = $region37
    $region36: #{tpu_custom_call.1} parent=1 // pred_region
      %71 = vst [vmem:[#allocation4] sm:$0xff] 0.0
      %72 = vst [vmem:[#allocation4 + $0x8] sm:$0xff] 0.0
      %73 = vst [vmem:[#allocation5] sm:$0xff] 0.0
      %74 = vst [vmem:[#allocation5 + $0x8] sm:$0xff] 0.0
    $region37: #{tpu_custom_call.1} parent=1 // pred_fallthru
      _
    %v75 = vld [vmem:[#allocation6] sm:$0xf]
    %v76 = vld [vmem:[#allocation6 + $0x4] sm:$0xf]
    %v77 = vld [vmem:[#allocation6 + $0x8] sm:$0xf]
    %v78 = vld [vmem:[#allocation6 + $0xc] sm:$0xf]
    %v79 = vld [vmem:[#allocation6 + $0x10] sm:$0xf]
    %v80 = vld [vmem:[#allocation6 + $0x14] sm:$0xf]
    %v81 = vld [vmem:[#allocation6 + $0x18] sm:$0xf]
    %v82 = vld [vmem:[#allocation6 + $0x1c] sm:$0xf]
    %v83 = vld [vmem:[#allocation6 + $0x20] sm:$0xf]
    %v84 = vld [vmem:[#allocation6 + $0x24] sm:$0xf]
    %v85 = vld [vmem:[#allocation6 + $0x28] sm:$0xf]
    %v86 = vld [vmem:[#allocation6 + $0x2c] sm:$0xf]
    %v87 = vld [vmem:[#allocation6 + $0x30] sm:$0xf]
    %v88 = vld [vmem:[#allocation6 + $0x34] sm:$0xf]
    %v89 = vld [vmem:[#allocation6 + $0x38] sm:$0xf]
    %v90 = vld [vmem:[#allocation6 + $0x3c] sm:$0xf]
    %v91 = vld [vmem:[#allocation9] sm:$0xff]
    %v92 = vld [vmem:[#allocation9 + $0x8] sm:$0xff]
    %v93 = vld [vmem:[#allocation9 + $0x10] sm:$0xff]
    %v94 = vld [vmem:[#allocation9 + $0x18] sm:$0xff]
    %v95 = vld [vmem:[#allocation9 + $0x20] sm:$0xff]
    %v96 = vld [vmem:[#allocation9 + $0x28] sm:$0xff]
    %v97 = vld [vmem:[#allocation9 + $0x30] sm:$0xff]
    %v98 = vld [vmem:[#allocation9 + $0x38] sm:$0xff]
    %v99 = vld [vmem:[#allocation9 + $0x40] sm:$0xff]
    %v100 = vld [vmem:[#allocation9 + $0x48] sm:$0xff]
    %v101 = vld [vmem:[#allocation9 + $0x50] sm:$0xff]
    %v102 = vld [vmem:[#allocation9 + $0x58] sm:$0xff]
    %v103 = vld [vmem:[#allocation9 + $0x60] sm:$0xff]
    %v104 = vld [vmem:[#allocation9 + $0x68] sm:$0xff]
    %v105 = vld [vmem:[#allocation9 + $0x70] sm:$0xff]
    %v106 = vld [vmem:[#allocation9 + $0x78] sm:$0xff]
    %v107 = vld [vmem:[#allocation9 + $0x80] sm:$0xff]
    %v108 = vld [vmem:[#allocation9 + $0x88] sm:$0xff]
    %v109 = vld [vmem:[#allocation9 + $0x90] sm:$0xff]
    %v110 = vld [vmem:[#allocation9 + $0x98] sm:$0xff]
    %v111 = vld [vmem:[#allocation9 + $0xa0] sm:$0xff]
    %v112 = vld [vmem:[#allocation9 + $0xa8] sm:$0xff]
    %v113 = vld [vmem:[#allocation9 + $0xb0] sm:$0xff]
    %v114 = vld [vmem:[#allocation9 + $0xb8] sm:$0xff]
    %v115 = vld [vmem:[#allocation9 + $0xc0] sm:$0xff]
    %v116 = vld [vmem:[#allocation9 + $0xc8] sm:$0xff]
    %v117 = vld [vmem:[#allocation9 + $0xd0] sm:$0xff]
    %v118 = vld [vmem:[#allocation9 + $0xd8] sm:$0xff]
    %v119 = vld [vmem:[#allocation9 + $0xe0] sm:$0xff]
    %v120 = vld [vmem:[#allocation9 + $0xe8] sm:$0xff]
    %v121 = vld [vmem:[#allocation9 + $0xf0] sm:$0xff]
    %v122 = vld [vmem:[#allocation9 + $0xf8] sm:$0xff]
    %v139 = vunpack.c.l.b16 %v75
    %v140 = vunpack.c.l.b16 %v76
    %v141 = vunpack.c.l.b16 %v77
    %v142 = vunpack.c.l.b16 %v78
    %v143 = vunpack.c.l.b16 %v79
    %v144 = vunpack.c.l.b16 %v80
    %v145 = vunpack.c.l.b16 %v81
    %v146 = vunpack.c.l.b16 %v82
    %v147 = vunpack.c.l.b16 %v83
    %v148 = vunpack.c.l.b16 %v84
    %v149 = vunpack.c.l.b16 %v85
    %v150 = vunpack.c.l.b16 %v86
    %v151 = vunpack.c.l.b16 %v87
    %v152 = vunpack.c.l.b16 %v88
    %v153 = vunpack.c.l.b16 %v89
    %v154 = vunpack.c.l.b16 %v90
    %v155 = vpack.c.b16 %v140, %v139
    %v156 = vpack.c.b16 %v142, %v141
    %v157 = vpack.c.b16 %v144, %v143
    %v158 = vpack.c.b16 %v146, %v145
    %v159 = vpack.c.b16 %v148, %v147
    %v160 = vpack.c.b16 %v150, %v149
    %v161 = vpack.c.b16 %v152, %v151
    %v162 = vpack.c.b16 %v154, %v153
    %v203 = vunpack.c.l.b16 %v91
    %v204 = vunpack.c.h.b16 %v91
    %v205 = vunpack.c.l.b16 %v92
    %v206 = vunpack.c.h.b16 %v92
    %v207 = vunpack.c.l.b16 %v93
    %v208 = vunpack.c.h.b16 %v93
    %v209 = vunpack.c.l.b16 %v94
    %v210 = vunpack.c.h.b16 %v94
    %v211 = vunpack.c.l.b16 %v95
    %v212 = vunpack.c.h.b16 %v95
    %v213 = vunpack.c.l.b16 %v96
    %v214 = vunpack.c.h.b16 %v96
    %v215 = vunpack.c.l.b16 %v97
    %v216 = vunpack.c.h.b16 %v97
    %v217 = vunpack.c.l.b16 %v98
    %v218 = vunpack.c.h.b16 %v98
    %v219 = vunpack.c.l.b16 %v99
    %v220 = vunpack.c.h.b16 %v99
    %v221 = vunpack.c.l.b16 %v100
    %v222 = vunpack.c.h.b16 %v100
    %v223 = vunpack.c.l.b16 %v101
    %v224 = vunpack.c.h.b16 %v101
    %v225 = vunpack.c.l.b16 %v102
    %v226 = vunpack.c.h.b16 %v102
    %v227 = vunpack.c.l.b16 %v103
    %v228 = vunpack.c.h.b16 %v103
    %v229 = vunpack.c.l.b16 %v104
    %v230 = vunpack.c.h.b16 %v104
    %v231 = vunpack.c.l.b16 %v105
    %v232 = vunpack.c.h.b16 %v105
    %v233 = vunpack.c.l.b16 %v106
    %v234 = vunpack.c.h.b16 %v106
    %v235 = vunpack.c.l.b16 %v107
    %v236 = vunpack.c.h.b16 %v107
    %v237 = vunpack.c.l.b16 %v108
    %v238 = vunpack.c.h.b16 %v108
    %v239 = vunpack.c.l.b16 %v109
    %v240 = vunpack.c.h.b16 %v109
    %v241 = vunpack.c.l.b16 %v110
    %v242 = vunpack.c.h.b16 %v110
    %v243 = vunpack.c.l.b16 %v111
    %v244 = vunpack.c.h.b16 %v111
    %v245 = vunpack.c.l.b16 %v112
    %v246 = vunpack.c.h.b16 %v112
    %v247 = vunpack.c.l.b16 %v113
    %v248 = vunpack.c.h.b16 %v113
    %v249 = vunpack.c.l.b16 %v114
    %v250 = vunpack.c.h.b16 %v114
    %v251 = vunpack.c.l.b16 %v115
    %v252 = vunpack.c.h.b16 %v115
    %v253 = vunpack.c.l.b16 %v116
    %v254 = vunpack.c.h.b16 %v116
    %v255 = vunpack.c.l.b16 %v117
    %v256 = vunpack.c.h.b16 %v117
    %v257 = vunpack.c.l.b16 %v118
    %v258 = vunpack.c.h.b16 %v118
    %v259 = vunpack.c.l.b16 %v119
    %v260 = vunpack.c.h.b16 %v119
    %v261 = vunpack.c.l.b16 %v120
    %v262 = vunpack.c.h.b16 %v120
    %v263 = vunpack.c.l.b16 %v121
    %v264 = vunpack.c.h.b16 %v121
    %v265 = vunpack.c.l.b16 %v122
    %v266 = vunpack.c.h.b16 %v122
    %v267 = vpack.c.b16 %v207, %v203
    %v268 = vpack.c.b16 %v208, %v204
    %v269 = vpack.c.b16 %v209, %v205
    %v270 = vpack.c.b16 %v210, %v206
    %v271 = vpack.c.b16 %v215, %v211
    %v272 = vpack.c.b16 %v216, %v212
    %v273 = vpack.c.b16 %v217, %v213
    %v274 = vpack.c.b16 %v218, %v214
    %v275 = vpack.c.b16 %v223, %v219
    %v276 = vpack.c.b16 %v224, %v220
    %v277 = vpack.c.b16 %v225, %v221
    %v278 = vpack.c.b16 %v226, %v222
    %v279 = vpack.c.b16 %v231, %v227
    %v280 = vpack.c.b16 %v232, %v228
    %v281 = vpack.c.b16 %v233, %v229
    %v282 = vpack.c.b16 %v234, %v230
    %v283 = vpack.c.b16 %v239, %v235
    %v284 = vpack.c.b16 %v240, %v236
    %v285 = vpack.c.b16 %v241, %v237
    %v286 = vpack.c.b16 %v242, %v238
    %v287 = vpack.c.b16 %v247, %v243
    %v288 = vpack.c.b16 %v248, %v244
    %v289 = vpack.c.b16 %v249, %v245
    %v290 = vpack.c.b16 %v250, %v246
    %v291 = vpack.c.b16 %v255, %v251
    %v292 = vpack.c.b16 %v256, %v252
    %v293 = vpack.c.b16 %v257, %v253
    %v294 = vpack.c.b16 %v258, %v254
    %v295 = vpack.c.b16 %v263, %v259
    %v296 = vpack.c.b16 %v264, %v260
    %v297 = vpack.c.b16 %v265, %v261
    %v298 = vpack.c.b16 %v266, %v262
    %331 = vmatprep.subr.bf16.mxu0 %v268
    %332 = vmatpush1.bf16.msra.mxu0 %v267
    %333 = vmatprep.subr.bf16.mxu0 %v272
    %334 = vmatpush1.bf16.msra.mxu0 %v271
    %335 = vmatprep.subr.bf16.mxu0 %v276
    %336 = vmatpush1.bf16.msra.mxu0 %v275
    %337 = vmatprep.subr.bf16.mxu0 %v280
    %338 = vmatpush1.bf16.msra.mxu0 %v279
    %339 = vmatprep.subr.bf16.mxu0 %v284
    %340 = vmatpush1.bf16.msra.mxu0 %v283
    %341 = vmatprep.subr.bf16.mxu0 %v288
    %342 = vmatpush1.bf16.msra.mxu0 %v287
    %343 = vmatprep.subr.bf16.mxu0 %v292
    %344 = vmatpush1.bf16.msra.mxu0 %v291
    %345 = vmatprep.subr.bf16.mxu0 %v296
    %346 = vmatpush1.bf16.msra.mxu0 %v295
    %347 = vmatprep.subr.bf16.mxu0 0
    %348 = vmatpush1.bf16.msra.mxu0 0
    %349 = vmatprep.subr.bf16.mxu0 0
    %350 = vmatpush1.bf16.msra.mxu0 0
    %351 = vmatprep.subr.bf16.mxu0 0
    %352 = vmatpush1.bf16.msra.mxu0 0
    %353 = vmatprep.subr.bf16.mxu0 0
    %354 = vmatpush1.bf16.msra.mxu0 0
    %355 = vmatprep.subr.bf16.mxu0 0
    %356 = vmatpush1.bf16.msra.mxu0 0
    %357 = vmatprep.subr.bf16.mxu0 0
    %358 = vmatpush1.bf16.msra.mxu0 0
    %359 = vmatprep.subr.bf16.mxu0 0
    %360 = vmatpush1.bf16.msra.mxu0 0
    %361 = vmatprep.subr.bf16.mxu0 0
    %362 = vmatpush1.bf16.msra.mxu0 0
    %363 = vmatprep.mubr.bf16.mxu0 0
    %364 = vmatmul.mubr.bf16.gmra.mrb[0].mxu0 %v155
    %v365 = vpop.f32.mrb[0].mxu0
    %v366 = vadd.f32 0.0, %v365
    %v367 = vpop.f32.mrb[0].mxu0
    %v368 = vadd.f32 0.0, %v367
    %v369 = vpop.f32.mrb[0].mxu0
    %v370 = vadd.f32 0.0, %v369
    %v371 = vpop.f32.mrb[0].mxu0
    %v372 = vadd.f32 0.0, %v371
    %373 = vmatprep.mubr.bf16.mxu0 0
    %374 = vmatmul.mubr.bf16.gmra.mrb[0].mxu0 %v156
    %v375 = vpop.f32.mrb[0].mxu0
    %v376 = vadd.f32 0.0, %v375
    %v377 = vpop.f32.mrb[0].mxu0
    %v378 = vadd.f32 0.0, %v377
    %v379 = vpop.f32.mrb[0].mxu0
    %v380 = vadd.f32 0.0, %v379
    %v381 = vpop.f32.mrb[0].mxu0
    %v382 = vadd.f32 0.0, %v381
    %383 = vmatprep.mubr.bf16.mxu0 0
    %384 = vmatmul.mubr.bf16.gmra.mrb[0].mxu0 %v157
    %v385 = vpop.f32.mrb[0].mxu0
    %v386 = vadd.f32 0.0, %v385
    %v387 = vpop.f32.mrb[0].mxu0
    %v388 = vadd.f32 0.0, %v387
    %v389 = vpop.f32.mrb[0].mxu0
    %v390 = vadd.f32 0.0, %v389
    %v391 = vpop.f32.mrb[0].mxu0
    %v392 = vadd.f32 0.0, %v391
    %393 = vmatprep.mubr.bf16.mxu0 0
    %394 = vmatmul.mubr.bf16.gmra.mrb[0].mxu0 %v158
    %v395 = vpop.f32.mrb[0].mxu0
    %v396 = vadd.f32 0.0, %v395
    %v397 = vpop.f32.mrb[0].mxu0
    %v398 = vadd.f32 0.0, %v397
    %v399 = vpop.f32.mrb[0].mxu0
    %v400 = vadd.f32 0.0, %v399
    %v401 = vpop.f32.mrb[0].mxu0
    %v402 = vadd.f32 0.0, %v401
    %403 = vmatprep.mubr.bf16.mxu0 0
    %404 = vmatmul.mubr.bf16.gmra.mrb[0].mxu0 %v159
    %v405 = vpop.f32.mrb[0].mxu0
    %v406 = vadd.f32 0.0, %v405
    %v407 = vpop.f32.mrb[0].mxu0
    %v408 = vadd.f32 0.0, %v407
    %v409 = vpop.f32.mrb[0].mxu0
    %v410 = vadd.f32 0.0, %v409
    %v411 = vpop.f32.mrb[0].mxu0
    %v412 = vadd.f32 0.0, %v411
    %413 = vmatprep.mubr.bf16.mxu0 0
    %414 = vmatmul.mubr.bf16.gmra.mrb[0].mxu0 %v160
    %v415 = vpop.f32.mrb[0].mxu0
    %v416 = vadd.f32 0.0, %v415
    %v417 = vpop.f32.mrb[0].mxu0
    %v418 = vadd.f32 0.0, %v417
    %v419 = vpop.f32.mrb[0].mxu0
    %v420 = vadd.f32 0.0, %v419
    %v421 = vpop.f32.mrb[0].mxu0
    %v422 = vadd.f32 0.0, %v421
    %423 = vmatprep.mubr.bf16.mxu0 0
    %424 = vmatmul.mubr.bf16.gmra.mrb[0].mxu0 %v161
    %v425 = vpop.f32.mrb[0].mxu0
    %v426 = vadd.f32 0.0, %v425
    %v427 = vpop.f32.mrb[0].mxu0
    %v428 = vadd.f32 0.0, %v427
    %v429 = vpop.f32.mrb[0].mxu0
    %v430 = vadd.f32 0.0, %v429
    %v431 = vpop.f32.mrb[0].mxu0
    %v432 = vadd.f32 0.0, %v431
    %433 = vmatprep.mubr.bf16.mxu0 0
    %434 = vmatmul.mubr.bf16.gmra.mrb[0].mxu0 %v162
    %v435 = vpop.f32.mrb[0].mxu0
    %v436 = vadd.f32 0.0, %v435
    %v437 = vpop.f32.mrb[0].mxu0
    %v438 = vadd.f32 0.0, %v437
    %v439 = vpop.f32.mrb[0].mxu0
    %v440 = vadd.f32 0.0, %v439
    %v441 = vpop.f32.mrb[0].mxu0
    %v442 = vadd.f32 0.0, %v441
    %443 = vdwg.mxu0
    %444 = vmatprep.subr.bf16.mxu0 %v270
    %445 = vmatpush1.bf16.msra.mxu0 %v269
    %446 = vmatprep.subr.bf16.mxu0 %v274
    %447 = vmatpush1.bf16.msra.mxu0 %v273
    %448 = vmatprep.subr.bf16.mxu0 %v278
    %449 = vmatpush1.bf16.msra.mxu0 %v277
    %450 = vmatprep.subr.bf16.mxu0 %v282
    %451 = vmatpush1.bf16.msra.mxu0 %v281
    %452 = vmatprep.subr.bf16.mxu0 %v286
    %453 = vmatpush1.bf16.msra.mxu0 %v285
    %454 = vmatprep.subr.bf16.mxu0 %v290
    %455 = vmatpush1.bf16.msra.mxu0 %v289
    %456 = vmatprep.subr.bf16.mxu0 %v294
    %457 = vmatpush1.bf16.msra.mxu0 %v293
    %458 = vmatprep.subr.bf16.mxu0 %v298
    %459 = vmatpush1.bf16.msra.mxu0 %v297
    %460 = vmatprep.subr.bf16.mxu0 0
    %461 = vmatpush1.bf16.msra.mxu0 0
    %462 = vmatprep.subr.bf16.mxu0 0
    %463 = vmatpush1.bf16.msra.mxu0 0
    %464 = vmatprep.subr.bf16.mxu0 0
    %465 = vmatpush1.bf16.msra.mxu0 0
    %466 = vmatprep.subr.bf16.mxu0 0
    %467 = vmatpush1.bf16.msra.mxu0 0
    %468 = vmatprep.subr.bf16.mxu0 0
    %469 = vmatpush1.bf16.msra.mxu0 0
    %470 = vmatprep.subr.bf16.mxu0 0
    %471 = vmatpush1.bf16.msra.mxu0 0
    %472 = vmatprep.subr.bf16.mxu0 0
    %473 = vmatpush1.bf16.msra.mxu0 0
    %474 = vmatprep.subr.bf16.mxu0 0
    %475 = vmatpush1.bf16.msra.mxu0 0
    %476 = vmatprep.mubr.bf16.mxu0 0
    %477 = vmatmul.mubr.bf16.gmra.mrb[0].mxu0 %v155
    %v478 = vpop.f32.mrb[0].mxu0
    %v479 = vadd.f32 0.0, %v478
    %v480 = vpop.f32.mrb[0].mxu0
    %v481 = vadd.f32 0.0, %v480
    %v482 = vpop.f32.mrb[0].mxu0
    %v483 = vadd.f32 0.0, %v482
    %v484 = vpop.f32.mrb[0].mxu0
    %v485 = vadd.f32 0.0, %v484
    %486 = vmatprep.mubr.bf16.mxu0 0
    %487 = vmatmul.mubr.bf16.gmra.mrb[0].mxu0 %v156
    %v488 = vpop.f32.mrb[0].mxu0
    %v489 = vadd.f32 0.0, %v488
    %v490 = vpop.f32.mrb[0].mxu0
    %v491 = vadd.f32 0.0, %v490
    %v492 = vpop.f32.mrb[0].mxu0
    %v493 = vadd.f32 0.0, %v492
    %v494 = vpop.f32.mrb[0].mxu0
    %v495 = vadd.f32 0.0, %v494
    %496 = vmatprep.mubr.bf16.mxu0 0
    %497 = vmatmul.mubr.bf16.gmra.mrb[0].mxu0 %v157
    %v498 = vpop.f32.mrb[0].mxu0
    %v499 = vadd.f32 0.0, %v498
    %v500 = vpop.f32.mrb[0].mxu0
    %v501 = vadd.f32 0.0, %v500
    %v502 = vpop.f32.mrb[0].mxu0
    %v503 = vadd.f32 0.0, %v502
    %v504 = vpop.f32.mrb[0].mxu0
    %v505 = vadd.f32 0.0, %v504
    %506 = vmatprep.mubr.bf16.mxu0 0
    %507 = vmatmul.mubr.bf16.gmra.mrb[0].mxu0 %v158
    %v508 = vpop.f32.mrb[0].mxu0
    %v509 = vadd.f32 0.0, %v508
    %v510 = vpop.f32.mrb[0].mxu0
    %v511 = vadd.f32 0.0, %v510
    %v512 = vpop.f32.mrb[0].mxu0
    %v513 = vadd.f32 0.0, %v512
    %v514 = vpop.f32.mrb[0].mxu0
    %v515 = vadd.f32 0.0, %v514
    %516 = vmatprep.mubr.bf16.mxu0 0
    %517 = vmatmul.mubr.bf16.gmra.mrb[0].mxu0 %v159
    %v518 = vpop.f32.mrb[0].mxu0
    %v519 = vadd.f32 0.0, %v518
    %v520 = vpop.f32.mrb[0].mxu0
    %v521 = vadd.f32 0.0, %v520
    %v522 = vpop.f32.mrb[0].mxu0
    %v523 = vadd.f32 0.0, %v522
    %v524 = vpop.f32.mrb[0].mxu0
    %v525 = vadd.f32 0.0, %v524
    %526 = vmatprep.mubr.bf16.mxu0 0
    %527 = vmatmul.mubr.bf16.gmra.mrb[0].mxu0 %v160
    %v528 = vpop.f32.mrb[0].mxu0
    %v529 = vadd.f32 0.0, %v528
    %v530 = vpop.f32.mrb[0].mxu0
    %v531 = vadd.f32 0.0, %v530
    %v532 = vpop.f32.mrb[0].mxu0
    %v533 = vadd.f32 0.0, %v532
    %v534 = vpop.f32.mrb[0].mxu0
    %v535 = vadd.f32 0.0, %v534
    %536 = vmatprep.mubr.bf16.mxu0 0
    %537 = vmatmul.mubr.bf16.gmra.mrb[0].mxu0 %v161
    %v538 = vpop.f32.mrb[0].mxu0
    %v539 = vadd.f32 0.0, %v538
    %v540 = vpop.f32.mrb[0].mxu0
    %v541 = vadd.f32 0.0, %v540
    %v542 = vpop.f32.mrb[0].mxu0
    %v543 = vadd.f32 0.0, %v542
    %v544 = vpop.f32.mrb[0].mxu0
    %v545 = vadd.f32 0.0, %v544
    %546 = vmatprep.mubr.bf16.mxu0 0
    %547 = vmatmul.mubr.bf16.gmra.mrb[0].mxu0 %v162
    %v548 = vpop.f32.mrb[0].mxu0
    %v549 = vadd.f32 0.0, %v548
    %v550 = vpop.f32.mrb[0].mxu0
    %v551 = vadd.f32 0.0, %v550
    %v552 = vpop.f32.mrb[0].mxu0
    %v553 = vadd.f32 0.0, %v552
    %v554 = vpop.f32.mrb[0].mxu0
    %v555 = vadd.f32 0.0, %v554
    %556 = vdwg.mxu0
    %v557 = vpack.c.bf16 %v370, %v366
    %v558 = vpack.c.bf16 %v372, %v368
    %v559 = vpack.c.bf16 %v483, %v479
    %v560 = vpack.c.bf16 %v485, %v481
    %v561 = vpack.c.bf16 %v380, %v376
    %v562 = vpack.c.bf16 %v382, %v378
    %v563 = vpack.c.bf16 %v493, %v489
    %v564 = vpack.c.bf16 %v495, %v491
    %v565 = vpack.c.bf16 %v390, %v386
    %v566 = vpack.c.bf16 %v392, %v388
    %v567 = vpack.c.bf16 %v503, %v499
    %v568 = vpack.c.bf16 %v505, %v501
    %v569 = vpack.c.bf16 %v400, %v396
    %v570 = vpack.c.bf16 %v402, %v398
    %v571 = vpack.c.bf16 %v513, %v509
    %v572 = vpack.c.bf16 %v515, %v511
    %v573 = vpack.c.bf16 %v410, %v406
    %v574 = vpack.c.bf16 %v412, %v408
    %v575 = vpack.c.bf16 %v523, %v519
    %v576 = vpack.c.bf16 %v525, %v521
    %v577 = vpack.c.bf16 %v420, %v416
    %v578 = vpack.c.bf16 %v422, %v418
    %v579 = vpack.c.bf16 %v533, %v529
    %v580 = vpack.c.bf16 %v535, %v531
    %v581 = vpack.c.bf16 %v430, %v426
    %v582 = vpack.c.bf16 %v432, %v428
    %v583 = vpack.c.bf16 %v543, %v539
    %v584 = vpack.c.bf16 %v545, %v541
    %v585 = vpack.c.bf16 %v440, %v436
    %v586 = vpack.c.bf16 %v442, %v438
    %v587 = vpack.c.bf16 %v553, %v549
    %v588 = vpack.c.bf16 %v555, %v551
    %589 = vst [vmem:[#allocation2] sm:$0xff] %v557
    %590 = vst [vmem:[#allocation2 + $0x8] sm:$0xff] %v558
    %591 = vst [vmem:[#allocation2 + $0x10] sm:$0xff] %v559
    %592 = vst [vmem:[#allocation2 + $0x18] sm:$0xff] %v560
    %593 = vst [vmem:[#allocation2 + $0x20] sm:$0xff] %v561
    %594 = vst [vmem:[#allocation2 + $0x28] sm:$0xff] %v562
    %595 = vst [vmem:[#allocation2 + $0x30] sm:$0xff] %v563
    %596 = vst [vmem:[#allocation2 + $0x38] sm:$0xff] %v564
    %597 = vst [vmem:[#allocation2 + $0x40] sm:$0xff] %v565
    %598 = vst [vmem:[#allocation2 + $0x48] sm:$0xff] %v566
    %599 = vst [vmem:[#allocation2 + $0x50] sm:$0xff] %v567
    %600 = vst [vmem:[#allocation2 + $0x58] sm:$0xff] %v568
    %601 = vst [vmem:[#allocation2 + $0x60] sm:$0xff] %v569
    %602 = vst [vmem:[#allocation2 + $0x68] sm:$0xff] %v570
    %603 = vst [vmem:[#allocation2 + $0x70] sm:$0xff] %v571
    %604 = vst [vmem:[#allocation2 + $0x78] sm:$0xff] %v572
    %605 = vst [vmem:[#allocation2 + $0x80] sm:$0xff] %v573
    %606 = vst [vmem:[#allocation2 + $0x88] sm:$0xff] %v574
    %607 = vst [vmem:[#allocation2 + $0x90] sm:$0xff] %v575
    %608 = vst [vmem:[#allocation2 + $0x98] sm:$0xff] %v576
    %609 = vst [vmem:[#allocation2 + $0xa0] sm:$0xff] %v577
    %610 = vst [vmem:[#allocation2 + $0xa8] sm:$0xff] %v578
    %611 = vst [vmem:[#allocation2 + $0xb0] sm:$0xff] %v579
    %612 = vst [vmem:[#allocation2 + $0xb8] sm:$0xff] %v580
    %613 = vst [vmem:[#allocation2 + $0xc0] sm:$0xff] %v581
    %614 = vst [vmem:[#allocation2 + $0xc8] sm:$0xff] %v582
    %615 = vst [vmem:[#allocation2 + $0xd0] sm:$0xff] %v583
    %616 = vst [vmem:[#allocation2 + $0xd8] sm:$0xff] %v584
    %617 = vst [vmem:[#allocation2 + $0xe0] sm:$0xff] %v585
    %618 = vst [vmem:[#allocation2 + $0xe8] sm:$0xff] %v586
    %619 = vst [vmem:[#allocation2 + $0xf0] sm:$0xff] %v587
    %620 = vst [vmem:[#allocation2 + $0xf8] sm:$0xff] %v588
    %v621 = vld [vmem:[#allocation11] sm:$0xff]
    %v622 = vld [vmem:[#allocation11 + $0x8] sm:$0xff]
    %v623 = vld [vmem:[#allocation11 + $0x10] sm:$0xff]
    %v624 = vld [vmem:[#allocation11 + $0x18] sm:$0xff]
    %v625 = vld [vmem:[#allocation11 + $0x20] sm:$0xff]
    %v626 = vld [vmem:[#allocation11 + $0x28] sm:$0xff]
    %v627 = vld [vmem:[#allocation11 + $0x30] sm:$0xff]
    %v628 = vld [vmem:[#allocation11 + $0x38] sm:$0xff]
    %v629 = vld [vmem:[#allocation11 + $0x40] sm:$0xff]
    %v630 = vld [vmem:[#allocation11 + $0x48] sm:$0xff]
    %v631 = vld [vmem:[#allocation11 + $0x50] sm:$0xff]
    %v632 = vld [vmem:[#allocation11 + $0x58] sm:$0xff]
    %v633 = vld [vmem:[#allocation11 + $0x60] sm:$0xff]
    %v634 = vld [vmem:[#allocation11 + $0x68] sm:$0xff]
    %v635 = vld [vmem:[#allocation11 + $0x70] sm:$0xff]
    %v636 = vld [vmem:[#allocation11 + $0x78] sm:$0xff]
    %v637 = vld [vmem:[#allocation11 + $0x80] sm:$0xff]
    %v638 = vld [vmem:[#allocation11 + $0x88] sm:$0xff]
    %v639 = vld [vmem:[#allocation11 + $0x90] sm:$0xff]
    %v640 = vld [vmem:[#allocation11 + $0x98] sm:$0xff]
    %v641 = vld [vmem:[#allocation11 + $0xa0] sm:$0xff]
    %v642 = vld [vmem:[#allocation11 + $0xa8] sm:$0xff]
    %v643 = vld [vmem:[#allocation11 + $0xb0] sm:$0xff]
    %v644 = vld [vmem:[#allocation11 + $0xb8] sm:$0xff]
    %v645 = vld [vmem:[#allocation11 + $0xc0] sm:$0xff]
    %v646 = vld [vmem:[#allocation11 + $0xc8] sm:$0xff]
    %v647 = vld [vmem:[#allocation11 + $0xd0] sm:$0xff]
    %v648 = vld [vmem:[#allocation11 + $0xd8] sm:$0xff]
    %v649 = vld [vmem:[#allocation11 + $0xe0] sm:$0xff]
    %v650 = vld [vmem:[#allocation11 + $0xe8] sm:$0xff]
    %v651 = vld [vmem:[#allocation11 + $0xf0] sm:$0xff]
    %v652 = vld [vmem:[#allocation11 + $0xf8] sm:$0xff]
    %v653 = vld [vmem:[%s4] sm:$0xf]
    %v654 = vld [vmem:[%s1] sm:$0xff]
    %v655 = vld [vmem:[%s1 + $0x8] sm:$0xff]
    %s656 = smul.u32 0, 8
    %v657 = vld [vmem:[#allocation4] sm:$0xff]
    %v658 = vld [vmem:[#allocation4 + $0x8] sm:$0xff]
    %v659 = vld [vmem:[#allocation5] sm:$0xff]
    %v660 = vld [vmem:[#allocation5 + $0x8] sm:$0xff]
    %s661 = smul.u32 0, 4
    %s662 = smul.addr %s661, 8
    %s663 = scalar_lea.vmem [#allocation2], %s662
    %v664 = vld [vmem:[%s663] sm:$0xff]
    %v665 = vld [vmem:[%s663 + $0x8] sm:$0xff]
    %v666 = vld [vmem:[%s663 + $0x10] sm:$0xff]
    %v667 = vld [vmem:[%s663 + $0x18] sm:$0xff]
    %v668 = vpack.c.bf16 %v658, %v657
    %v669 = vunpack.c.l.bf16 %v664
    %v670 = vunpack.c.l.bf16 %v665
    %v671 = vunpack.c.l.bf16 %v666
    %v672 = vunpack.c.l.bf16 %v667
    %v673 = vunpack.c.h.bf16 %v664
    %v674 = vunpack.c.h.bf16 %v665
    %v675 = vunpack.c.h.bf16 %v666
    %v676 = vunpack.c.h.bf16 %v667
    %v709 = vunpack.c.l.b16 %v621
    %v710 = vunpack.c.h.b16 %v621
    %v711 = vunpack.c.l.b16 %v622
    %v712 = vunpack.c.h.b16 %v622
    %v713 = vunpack.c.l.b16 %v623
    %v714 = vunpack.c.h.b16 %v623
    %v715 = vunpack.c.l.b16 %v624
    %v716 = vunpack.c.h.b16 %v624
    %v717 = vunpack.c.l.b16 %v625
    %v718 = vunpack.c.h.b16 %v625
    %v719 = vunpack.c.l.b16 %v626
    %v720 = vunpack.c.h.b16 %v626
    %v721 = vunpack.c.l.b16 %v627
    %v722 = vunpack.c.h.b16 %v627
    %v723 = vunpack.c.l.b16 %v628
    %v724 = vunpack.c.h.b16 %v628
    %v725 = vunpack.c.l.b16 %v629
    %v726 = vunpack.c.h.b16 %v629
    %v727 = vunpack.c.l.b16 %v630
    %v728 = vunpack.c.h.b16 %v630
    %v729 = vunpack.c.l.b16 %v631
    %v730 = vunpack.c.h.b16 %v631
    %v731 = vunpack.c.l.b16 %v632
    %v732 = vunpack.c.h.b16 %v632
    %v733 = vunpack.c.l.b16 %v633
    %v734 = vunpack.c.h.b16 %v633
    %v735 = vunpack.c.l.b16 %v634
    %v736 = vunpack.c.h.b16 %v634
    %v737 = vunpack.c.l.b16 %v635
    %v738 = vunpack.c.h.b16 %v635
    %v739 = vunpack.c.l.b16 %v636
    %v740 = vunpack.c.h.b16 %v636
    %v741 = vunpack.c.l.b16 %v637
    %v742 = vunpack.c.h.b16 %v637
    %v743 = vunpack.c.l.b16 %v638
    %v744 = vunpack.c.h.b16 %v638
    %v745 = vunpack.c.l.b16 %v639
    %v746 = vunpack.c.h.b16 %v639
    %v747 = vunpack.c.l.b16 %v640
    %v748 = vunpack.c.h.b16 %v640
    %v749 = vunpack.c.l.b16 %v641
    %v750 = vunpack.c.h.b16 %v641
    %v751 = vunpack.c.l.b16 %v642
    %v752 = vunpack.c.h.b16 %v642
    %v753 = vunpack.c.l.b16 %v643
    %v754 = vunpack.c.h.b16 %v643
    %v755 = vunpack.c.l.b16 %v644
    %v756 = vunpack.c.h.b16 %v644
    %v757 = vunpack.c.l.b16 %v645
    %v758 = vunpack.c.h.b16 %v645
    %v759 = vunpack.c.l.b16 %v646
    %v760 = vunpack.c.h.b16 %v646
    %v761 = vunpack.c.l.b16 %v647
    %v762 = vunpack.c.h.b16 %v647
    %v763 = vunpack.c.l.b16 %v648
    %v764 = vunpack.c.h.b16 %v648
    %v765 = vunpack.c.l.b16 %v649
    %v766 = vunpack.c.h.b16 %v649
    %v767 = vunpack.c.l.b16 %v650
    %v768 = vunpack.c.h.b16 %v650
    %v769 = vunpack.c.l.b16 %v651
    %v770 = vunpack.c.h.b16 %v651
    %v771 = vunpack.c.l.b16 %v652
    %v772 = vunpack.c.h.b16 %v652
    %v773 = vpack.c.b16 %v713, %v709
    %v774 = vpack.c.b16 %v714, %v710
    %v775 = vpack.c.b16 %v715, %v711
    %v776 = vpack.c.b16 %v716, %v712
    %v777 = vpack.c.b16 %v721, %v717
    %v778 = vpack.c.b16 %v722, %v718
    %v779 = vpack.c.b16 %v723, %v719
    %v780 = vpack.c.b16 %v724, %v720
    %v781 = vpack.c.b16 %v729, %v725
    %v782 = vpack.c.b16 %v730, %v726
    %v783 = vpack.c.b16 %v731, %v727
    %v784 = vpack.c.b16 %v732, %v728
    %v785 = vpack.c.b16 %v737, %v733
    %v786 = vpack.c.b16 %v738, %v734
    %v787 = vpack.c.b16 %v739, %v735
    %v788 = vpack.c.b16 %v740, %v736
    %v789 = vpack.c.b16 %v745, %v741
    %v790 = vpack.c.b16 %v746, %v742
    %v791 = vpack.c.b16 %v747, %v743
    %v792 = vpack.c.b16 %v748, %v744
    %v793 = vpack.c.b16 %v753, %v749
    %v794 = vpack.c.b16 %v754, %v750
    %v795 = vpack.c.b16 %v755, %v751
    %v796 = vpack.c.b16 %v756, %v752
    %v797 = vpack.c.b16 %v761, %v757
    %v798 = vpack.c.b16 %v762, %v758
    %v799 = vpack.c.b16 %v763, %v759
    %v800 = vpack.c.b16 %v764, %v760
    %v801 = vpack.c.b16 %v769, %v765
    %v802 = vpack.c.b16 %v770, %v766
    %v803 = vpack.c.b16 %v771, %v767
    %v804 = vpack.c.b16 %v772, %v768
    %837 = vmatprep.subr.bf16.mxu0 %v774
    %838 = vmatpush1.bf16.msra.mxu0 %v773
    %839 = vmatprep.subr.bf16.mxu0 %v778
    %840 = vmatpush1.bf16.msra.mxu0 %v777
    %841 = vmatprep.subr.bf16.mxu0 %v782
    %842 = vmatpush1.bf16.msra.mxu0 %v781
    %843 = vmatprep.subr.bf16.mxu0 %v786
    %844 = vmatpush1.bf16.msra.mxu0 %v785
    %845 = vmatprep.subr.bf16.mxu0 %v790
    %846 = vmatpush1.bf16.msra.mxu0 %v789
    %847 = vmatprep.subr.bf16.mxu0 %v794
    %848 = vmatpush1.bf16.msra.mxu0 %v793
    %849 = vmatprep.subr.bf16.mxu0 %v798
    %850 = vmatpush1.bf16.msra.mxu0 %v797
    %851 = vmatprep.subr.bf16.mxu0 %v802
    %852 = vmatpush1.bf16.msra.mxu0 %v801
    %853 = vmatprep.subr.bf16.mxu0 0
    %854 = vmatpush1.bf16.msra.mxu0 0
    %855 = vmatprep.subr.bf16.mxu0 0
    %856 = vmatpush1.bf16.msra.mxu0 0
    %857 = vmatprep.subr.bf16.mxu0 0
    %858 = vmatpush1.bf16.msra.mxu0 0
    %859 = vmatprep.subr.bf16.mxu0 0
    %860 = vmatpush1.bf16.msra.mxu0 0
    %861 = vmatprep.subr.bf16.mxu0 0
    %862 = vmatpush1.bf16.msra.mxu0 0
    %863 = vmatprep.subr.bf16.mxu0 0
    %864 = vmatpush1.bf16.msra.mxu0 0
    %865 = vmatprep.subr.bf16.mxu0 0
    %866 = vmatpush1.bf16.msra.mxu0 0
    %867 = vmatprep.subr.bf16.mxu0 0
    %868 = vmatpush1.bf16.msra.mxu0 0
    %869 = vmatprep.mubr.bf16.mxu0 0
    %870 = vmatmul.mubr.bf16.gmra.mrb[0].mxu0 %v668
    %v871 = vpop.f32.mrb[0].mxu0
    %v872 = vadd.f32 %v669, %v871
    %v873 = vpop.f32.mrb[0].mxu0
    %v874 = vadd.f32 %v670, %v873
    %v875 = vpop.f32.mrb[0].mxu0
    %v876 = vadd.f32 %v673, %v875
    %v877 = vpop.f32.mrb[0].mxu0
    %v878 = vadd.f32 %v674, %v877
    %879 = vdwg.mxu0
    %880 = vmatprep.subr.bf16.mxu0 %v776
    %881 = vmatpush1.bf16.msra.mxu0 %v775
    %882 = vmatprep.subr.bf16.mxu0 %v780
    %883 = vmatpush1.bf16.msra.mxu0 %v779
    %884 = vmatprep.subr.bf16.mxu0 %v784
    %885 = vmatpush1.bf16.msra.mxu0 %v783
    %886 = vmatprep.subr.bf16.mxu0 %v788
    %887 = vmatpush1.bf16.msra.mxu0 %v787
    %888 = vmatprep.subr.bf16.mxu0 %v792
    %889 = vmatpush1.bf16.msra.mxu0 %v791
    %890 = vmatprep.subr.bf16.mxu0 %v796
    %891 = vmatpush1.bf16.msra.mxu0 %v795
    %892 = vmatprep.subr.bf16.mxu0 %v800
    %893 = vmatpush1.bf16.msra.mxu0 %v799
    %894 = vmatprep.subr.bf16.mxu0 %v804
    %895 = vmatpush1.bf16.msra.mxu0 %v803
    %896 = vmatprep.subr.bf16.mxu0 0
    %897 = vmatpush1.bf16.msra.mxu0 0
    %898 = vmatprep.subr.bf16.mxu0 0
    %899 = vmatpush1.bf16.msra.mxu0 0
    %900 = vmatprep.subr.bf16.mxu0 0
    %901 = vmatpush1.bf16.msra.mxu0 0
    %902 = vmatprep.subr.bf16.mxu0 0
    %903 = vmatpush1.bf16.msra.mxu0 0
    %904 = vmatprep.subr.bf16.mxu0 0
    %905 = vmatpush1.bf16.msra.mxu0 0
    %906 = vmatprep.subr.bf16.mxu0 0
    %907 = vmatpush1.bf16.msra.mxu0 0
    %908 = vmatprep.subr.bf16.mxu0 0
    %909 = vmatpush1.bf16.msra.mxu0 0
    %910 = vmatprep.subr.bf16.mxu0 0
    %911 = vmatpush1.bf16.msra.mxu0 0
    %912 = vmatprep.mubr.bf16.mxu0 0
    %913 = vmatmul.mubr.bf16.gmra.mrb[0].mxu0 %v668
    %v914 = vpop.f32.mrb[0].mxu0
    %v915 = vadd.f32 %v671, %v914
    %v916 = vpop.f32.mrb[0].mxu0
    %v917 = vadd.f32 %v672, %v916
    %v918 = vpop.f32.mrb[0].mxu0
    %v919 = vadd.f32 %v675, %v918
    %v920 = vpop.f32.mrb[0].mxu0
    %v921 = vadd.f32 %v676, %v920
    %922 = vdwg.mxu0
    %v924 = vlaneseq
    %v925 = vshrl.u32 %v924, 7
    %v926 = vsub.s32 0, %v925
    %v927 = vrot.slane %v653, %v926
    %v928 = vlaneseq
    %v929 = vshrl.u32 %v928, 7
    %v930 = vsub.s32 1, %v929
    %v931 = vrot.slane %v653, %v930
    %v932 = vlaneseq
    %v933 = vshrl.u32 %v932, 7
    %v934 = vsub.s32 2, %v933
    %v935 = vrot.slane %v653, %v934
    %v936 = vlaneseq
    %v937 = vshrl.u32 %v936, 7
    %v938 = vsub.s32 3, %v937
    %v939 = vrot.slane %v653, %v938
    %v944 = vadd.f32 %v872, %v927
    %v945 = vadd.f32 %v874, %v931
    %v946 = vadd.f32 %v915, %v935
    %v947 = vadd.f32 %v917, %v939
    %v948 = vadd.f32 %v876, %v927
    %v949 = vadd.f32 %v878, %v931
    %v950 = vadd.f32 %v919, %v935
    %v951 = vadd.f32 %v921, %v939
    %952 = vst [vmem:[#allocation3] sm:$0xff] %v944
    %953 = vst [vmem:[#allocation3 + $0x8] sm:$0xff] %v945
    %954 = vst [vmem:[#allocation3 + $0x10] sm:$0xff] %v946
    %955 = vst [vmem:[#allocation3 + $0x18] sm:$0xff] %v947
    %956 = vst [vmem:[#allocation3 + $0x20] sm:$0xff] %v948
    %957 = vst [vmem:[#allocation3 + $0x28] sm:$0xff] %v949
    %958 = vst [vmem:[#allocation3 + $0x30] sm:$0xff] %v950
    %959 = vst [vmem:[#allocation3 + $0x38] sm:$0xff] %v951
    %v960 = vld [vmem:[#allocation3] sm:$0xff]
    %v961 = vld [vmem:[#allocation3 + $0x20] sm:$0xff]
    %v962 = vxor.u32 %v960, 2147483648
    %v963 = vxor.u32 %v961, 2147483648
    %v964 = vmul.f32 %v962, 1.442695
    %v965 = vpow.pop %v964
    %v966 = vmul.f32 %v963, 1.442695
    %v967 = vpow.pop %v966
    %v968 = vadd.f32 %v965, 1.0
    %v969 = vadd.f32 %v967, 1.0
    %v970 = vrcp.pop %v968
    %v971 = vmul.f32 1.0, %v970
    %v972 = vrcp.pop %v969
    %v973 = vmul.f32 1.0, %v972
    %v974 = vld [vmem:[#allocation3 + $0x8] sm:$0xff]
    %v975 = vld [vmem:[#allocation3 + $0x28] sm:$0xff]
    %v976 = vxor.u32 %v974, 2147483648
    %v977 = vxor.u32 %v975, 2147483648
    %v978 = vmul.f32 %v976, 1.442695
    %v979 = vpow.pop %v978
    %v980 = vmul.f32 %v977, 1.442695
    %v981 = vpow.pop %v980
    %v982 = vadd.f32 %v979, 1.0
    %v983 = vadd.f32 %v981, 1.0
    %v984 = vrcp.pop %v982
    %v985 = vmul.f32 1.0, %v984
    %v986 = vrcp.pop %v983
    %v987 = vmul.f32 1.0, %v986
    %v988 = vld [vmem:[#allocation3 + $0x10] sm:$0xff]
    %v989 = vld [vmem:[#allocation3 + $0x30] sm:$0xff]
    %v990 = vtanh.pop %v988
    %v991 = vtanh.pop %v989
    %v992 = vld [vmem:[#allocation3 + $0x18] sm:$0xff]
    %v993 = vld [vmem:[#allocation3 + $0x38] sm:$0xff]
    %v994 = vxor.u32 %v992, 2147483648
    %v995 = vxor.u32 %v993, 2147483648
    %v996 = vmul.f32 %v994, 1.442695
    %v997 = vpow.pop %v996
    %v998 = vmul.f32 %v995, 1.442695
    %v999 = vpow.pop %v998
    %v1000 = vadd.f32 %v997, 1.0
    %v1001 = vadd.f32 %v999, 1.0
    %v1002 = vrcp.pop %v1000
    %v1003 = vmul.f32 1.0, %v1002
    %v1004 = vrcp.pop %v1001
    %v1005 = vmul.f32 1.0, %v1004
    %v1006 = vmul.f32 %v985, %v659
    %v1007 = vmul.f32 %v987, %v660
    %v1008 = vmul.f32 %v971, %v990
    %v1009 = vmul.f32 %v973, %v991
    %v1010 = vadd.f32 %v1006, %v1008
    %v1011 = vadd.f32 %v1007, %v1009
    %v1012 = vtanh.pop %v1010
    %v1013 = vtanh.pop %v1011
    %v1014 = vmul.f32 %v1003, %v1012
    %v1015 = vmul.f32 %v1005, %v1013
    %v1016 = vstv %s656
    %vm1017 = vcmp.lt.s32.totalorder %v1016, %v654
    %vm1018 = vcmp.lt.s32.totalorder %v1016, %v655
    %v1019 = vsel %vm1017, 1, 0
    %v1020 = vsel %vm1018, 1, 0
    %v1021 = vcvt.s32.f32 %v1019
    %v1022 = vcvt.s32.f32 %v1020
    %v1023 = vsub.f32 %v1014, %v657
    %v1024 = vsub.f32 %v1015, %v658
    %1026 = vset.pattern.permute.xlu0 0
    %1027 = vperm.xlu0 %1026, %v1021
    %v1028 = vpop.permute.xlu0 %1027
    %1031 = vset.pattern.permute.xlu0 0
    %1032 = vperm.xlu0 %1031, %v1022
    %v1033 = vpop.permute.xlu0 %1032
    %v1035 = vmul.f32 %v1028, %v1023
    %v1036 = vmul.f32 %v1033, %v1024
    %v1037 = vadd.f32 %v657, %v1035
    %v1038 = vadd.f32 %v658, %v1036
    %v1039 = vsub.f32 %v1010, %v659
    %v1040 = vsub.f32 %v1011, %v660
    %v1041 = vmul.f32 %v1028, %v1039
    %v1042 = vmul.f32 %v1033, %v1040
    %v1043 = vadd.f32 %v659, %v1041
    %v1044 = vadd.f32 %v660, %v1042
    %1045 = vst [vmem:[#allocation12] sm:$0xff] %v1037
    %1046 = vst [vmem:[#allocation12 + $0x8] sm:$0xff] %v1038
    %s1047 = smul.u32 1, 4
    %s1048 = smul.addr %s1047, 8
    %s1049 = scalar_lea.vmem [#allocation2], %s1048
    %v1050 = vld [vmem:[%s1049] sm:$0xff]
    %v1051 = vld [vmem:[%s1049 + $0x8] sm:$0xff]
    %v1052 = vld [vmem:[%s1049 + $0x10] sm:$0xff]
    %v1053 = vld [vmem:[%s1049 + $0x18] sm:$0xff]
    %v1054 = vpack.c.bf16 %v1038, %v1037
    %v1055 = vunpack.c.l.bf16 %v1050
    %v1056 = vunpack.c.l.bf16 %v1051
    %v1057 = vunpack.c.l.bf16 %v1052
    %v1058 = vunpack.c.l.bf16 %v1053
    %v1059 = vunpack.c.h.bf16 %v1050
    %v1060 = vunpack.c.h.bf16 %v1051
    %v1061 = vunpack.c.h.bf16 %v1052
    %v1062 = vunpack.c.h.bf16 %v1053
    %1063 = vmatprep.subr.bf16.mxu0 %v774
    %1064 = vmatpush1.bf16.msra.mxu0 %v773
    %1065 = vmatprep.subr.bf16.mxu0 %v778
    %1066 = vmatpush1.bf16.msra.mxu0 %v777
    %1067 = vmatprep.subr.bf16.mxu0 %v782
    %1068 = vmatpush1.bf16.msra.mxu0 %v781
    %1069 = vmatprep.subr.bf16.mxu0 %v786
    %1070 = vmatpush1.bf16.msra.mxu0 %v785
    %1071 = vmatprep.subr.bf16.mxu0 %v790
    %1072 = vmatpush1.bf16.msra.mxu0 %v789
    %1073 = vmatprep.subr.bf16.mxu0 %v794
    %1074 = vmatpush1.bf16.msra.mxu0 %v793
    %1075 = vmatprep.subr.bf16.mxu0 %v798
    %1076 = vmatpush1.bf16.msra.mxu0 %v797
    %1077 = vmatprep.subr.bf16.mxu0 %v802
    %1078 = vmatpush1.bf16.msra.mxu0 %v801
    %1079 = vmatprep.subr.bf16.mxu0 0
    %1080 = vmatpush1.bf16.msra.mxu0 0
    %1081 = vmatprep.subr.bf16.mxu0 0
    %1082 = vmatpush1.bf16.msra.mxu0 0
    %1083 = vmatprep.subr.bf16.mxu0 0
    %1084 = vmatpush1.bf16.msra.mxu0 0
    %1085 = vmatprep.subr.bf16.mxu0 0
    %1086 = vmatpush1.bf16.msra.mxu0 0
    %1087 = vmatprep.subr.bf16.mxu0 0
    %1088 = vmatpush1.bf16.msra.mxu0 0
    %1089 = vmatprep.subr.bf16.mxu0 0
    %1090 = vmatpush1.bf16.msra.mxu0 0
    %1091 = vmatprep.subr.bf16.mxu0 0
    %1092 = vmatpush1.bf16.msra.mxu0 0
    %1093 = vmatprep.subr.bf16.mxu0 0
    %1094 = vmatpush1.bf16.msra.mxu0 0
    %1095 = vmatprep.mubr.bf16.mxu0 0
    %1096 = vmatmul.mubr.bf16.gmra.mrb[0].mxu0 %v1054
    %v1097 = vpop.f32.mrb[0].mxu0
    %v1098 = vadd.f32 %v1055, %v1097
    %v1099 = vpop.f32.mrb[0].mxu0
    %v1100 = vadd.f32 %v1056, %v1099
    %v1101 = vpop.f32.mrb[0].mxu0
    %v1102 = vadd.f32 %v1059, %v1101
    %v1103 = vpop.f32.mrb[0].mxu0
    %v1104 = vadd.f32 %v1060, %v1103
    %1105 = vdwg.mxu0
    %1106 = vmatprep.subr.bf16.mxu0 %v776
    %1107 = vmatpush1.bf16.msra.mxu0 %v775
    %1108 = vmatprep.subr.bf16.mxu0 %v780
    %1109 = vmatpush1.bf16.msra.mxu0 %v779
    %1110 = vmatprep.subr.bf16.mxu0 %v784
    %1111 = vmatpush1.bf16.msra.mxu0 %v783
    %1112 = vmatprep.subr.bf16.mxu0 %v788
    %1113 = vmatpush1.bf16.msra.mxu0 %v787
    %1114 = vmatprep.subr.bf16.mxu0 %v792
    %1115 = vmatpush1.bf16.msra.mxu0 %v791
    %1116 = vmatprep.subr.bf16.mxu0 %v796
    %1117 = vmatpush1.bf16.msra.mxu0 %v795
    %1118 = vmatprep.subr.bf16.mxu0 %v800
    %1119 = vmatpush1.bf16.msra.mxu0 %v799
    %1120 = vmatprep.subr.bf16.mxu0 %v804
    %1121 = vmatpush1.bf16.msra.mxu0 %v803
    %1122 = vmatprep.subr.bf16.mxu0 0
    %1123 = vmatpush1.bf16.msra.mxu0 0
    %1124 = vmatprep.subr.bf16.mxu0 0
    %1125 = vmatpush1.bf16.msra.mxu0 0
    %1126 = vmatprep.subr.bf16.mxu0 0
    %1127 = vmatpush1.bf16.msra.mxu0 0
    %1128 = vmatprep.subr.bf16.mxu0 0
    %1129 = vmatpush1.bf16.msra.mxu0 0
    %1130 = vmatprep.subr.bf16.mxu0 0
    %1131 = vmatpush1.bf16.msra.mxu0 0
    %1132 = vmatprep.subr.bf16.mxu0 0
    %1133 = vmatpush1.bf16.msra.mxu0 0
    %1134 = vmatprep.subr.bf16.mxu0 0
    %1135 = vmatpush1.bf16.msra.mxu0 0
    %1136 = vmatprep.subr.bf16.mxu0 0
    %1137 = vmatpush1.bf16.msra.mxu0 0
    %1138 = vmatprep.mubr.bf16.mxu0 0
    %1139 = vmatmul.mubr.bf16.gmra.mrb[0].mxu0 %v1054
    %v1140 = vpop.f32.mrb[0].mxu0
    %v1141 = vadd.f32 %v1057, %v1140
    %v1142 = vpop.f32.mrb[0].mxu0
    %v1143 = vadd.f32 %v1058, %v1142
    %v1144 = vpop.f32.mrb[0].mxu0
    %v1145 = vadd.f32 %v1061, %v1144
    %v1146 = vpop.f32.mrb[0].mxu0
    %v1147 = vadd.f32 %v1062, %v1146
    %1148 = vdwg.mxu0
    %v1149 = vadd.f32 %v1098, %v927
    %v1150 = vadd.f32 %v1100, %v931
    %v1151 = vadd.f32 %v1141, %v935
    %v1152 = vadd.f32 %v1143, %v939
    %v1153 = vadd.f32 %v1102, %v927
    %v1154 = vadd.f32 %v1104, %v931
    %v1155 = vadd.f32 %v1145, %v935
    %v1156 = vadd.f32 %v1147, %v939
    %1157 = vst [vmem:[#allocation3] sm:$0xff] %v1149
    %1158 = vst [vmem:[#allocation3 + $0x8] sm:$0xff] %v1150
    %1159 = vst [vmem:[#allocation3 + $0x10] sm:$0xff] %v1151
    %1160 = vst [vmem:[#allocation3 + $0x18] sm:$0xff] %v1152
    %1161 = vst [vmem:[#allocation3 + $0x20] sm:$0xff] %v1153
    %1162 = vst [vmem:[#allocation3 + $0x28] sm:$0xff] %v1154
    %1163 = vst [vmem:[#allocation3 + $0x30] sm:$0xff] %v1155
    %1164 = vst [vmem:[#allocation3 + $0x38] sm:$0xff] %v1156
    %v1165 = vld [vmem:[#allocation3] sm:$0xff]
    %v1166 = vld [vmem:[#allocation3 + $0x20] sm:$0xff]
    %v1167 = vxor.u32 %v1165, 2147483648
    %v1168 = vxor.u32 %v1166, 2147483648
    %v1169 = vmul.f32 %v1167, 1.442695
    %v1170 = vpow.pop %v1169
    %v1171 = vmul.f32 %v1168, 1.442695
    %v1172 = vpow.pop %v1171
    %v1173 = vadd.f32 %v1170, 1.0
    %v1174 = vadd.f32 %v1172, 1.0
    %v1175 = vrcp.pop %v1173
    %v1176 = vmul.f32 1.0, %v1175
    %v1177 = vrcp.pop %v1174
    %v1178 = vmul.f32 1.0, %v1177
    %v1179 = vld [vmem:[#allocation3 + $0x8] sm:$0xff]
    %v1180 = vld [vmem:[#allocation3 + $0x28] sm:$0xff]
    %v1181 = vxor.u32 %v1179, 2147483648
    %v1182 = vxor.u32 %v1180, 2147483648
    %v1183 = vmul.f32 %v1181, 1.442695
    %v1184 = vpow.pop %v1183
    %v1185 = vmul.f32 %v1182, 1.442695
    %v1186 = vpow.pop %v1185
    %v1187 = vadd.f32 %v1184, 1.0
    %v1188 = vadd.f32 %v1186, 1.0
    %v1189 = vrcp.pop %v1187
    %v1190 = vmul.f32 1.0, %v1189
    %v1191 = vrcp.pop %v1188
    %v1192 = vmul.f32 1.0, %v1191
    %v1193 = vld [vmem:[#allocation3 + $0x10] sm:$0xff]
    %v1194 = vld [vmem:[#allocation3 + $0x30] sm:$0xff]
    %v1195 = vtanh.pop %v1193
    %v1196 = vtanh.pop %v1194
    %v1197 = vld [vmem:[#allocation3 + $0x18] sm:$0xff]
    %v1198 = vld [vmem:[#allocation3 + $0x38] sm:$0xff]
    %v1199 = vxor.u32 %v1197, 2147483648
    %v1200 = vxor.u32 %v1198, 2147483648
    %v1201 = vmul.f32 %v1199, 1.442695
    %v1202 = vpow.pop %v1201
    %v1203 = vmul.f32 %v1200, 1.442695
    %v1204 = vpow.pop %v1203
    %v1205 = vadd.f32 %v1202, 1.0
    %v1206 = vadd.f32 %v1204, 1.0
    %v1207 = vrcp.pop %v1205
    %v1208 = vmul.f32 1.0, %v1207
    %v1209 = vrcp.pop %v1206
    %v1210 = vmul.f32 1.0, %v1209
    %v1211 = vmul.f32 %v1190, %v1043
    %v1212 = vmul.f32 %v1192, %v1044
    %v1213 = vmul.f32 %v1176, %v1195
    %v1214 = vmul.f32 %v1178, %v1196
    %v1215 = vadd.f32 %v1211, %v1213
    %v1216 = vadd.f32 %v1212, %v1214
    %v1217 = vtanh.pop %v1215
    %v1218 = vtanh.pop %v1216
    %v1219 = vmul.f32 %v1208, %v1217
    %v1220 = vmul.f32 %v1210, %v1218
    %s1221 = sadd.s32 %s656, 1
    %v1222 = vstv %s1221
    %vm1223 = vcmp.lt.s32.totalorder %v1222, %v654
    %vm1224 = vcmp.lt.s32.totalorder %v1222, %v655
    %v1225 = vsel %vm1223, 1, 0
    %v1226 = vsel %vm1224, 1, 0
    %v1227 = vcvt.s32.f32 %v1225
    %v1228 = vcvt.s32.f32 %v1226
    %v1229 = vsub.f32 %v1219, %v1037
    %v1230 = vsub.f32 %v1220, %v1038
    %1232 = vset.pattern.permute.xlu0 0
    %1233 = vperm.xlu0 %1232, %v1227
    %v1234 = vpop.permute.xlu0 %1233
    %1237 = vset.pattern.permute.xlu0 0
    %1238 = vperm.xlu0 %1237, %v1228
    %v1239 = vpop.permute.xlu0 %1238
    %v1241 = vmul.f32 %v1234, %v1229
    %v1242 = vmul.f32 %v1239, %v1230
    %v1243 = vadd.f32 %v1037, %v1241
    %v1244 = vadd.f32 %v1038, %v1242
    %v1245 = vsub.f32 %v1215, %v1043
    %v1246 = vsub.f32 %v1216, %v1044
    %v1247 = vmul.f32 %v1234, %v1245
    %v1248 = vmul.f32 %v1239, %v1246
    %v1249 = vadd.f32 %v1043, %v1247
    %v1250 = vadd.f32 %v1044, %v1248
    %s1251 = scalar_lea.vmem [#allocation12], 16
    %1252 = vst [vmem:[%s1251] sm:$0xff] %v1243
    %1253 = vst [vmem:[%s1251 + $0x8] sm:$0xff] %v1244
    %s1254 = smul.u32 2, 4
    %s1255 = smul.addr %s1254, 8
    %s1256 = scalar_lea.vmem [#allocation2], %s1255
    %v1257 = vld [vmem:[%s1256] sm:$0xff]
    %v1258 = vld [vmem:[%s1256 + $0x8] sm:$0xff]
    %v1259 = vld [vmem:[%s1256 + $0x10] sm:$0xff]
    %v1260 = vld [vmem:[%s1256 + $0x18] sm:$0xff]
    %v1261 = vpack.c.bf16 %v1244, %v1243
    %v1262 = vunpack.c.l.bf16 %v1257
    %v1263 = vunpack.c.l.bf16 %v1258
    %v1264 = vunpack.c.l.bf16 %v1259
    %v1265 = vunpack.c.l.bf16 %v1260
    %v1266 = vunpack.c.h.bf16 %v1257
    %v1267 = vunpack.c.h.bf16 %v1258
    %v1268 = vunpack.c.h.bf16 %v1259
    %v1269 = vunpack.c.h.bf16 %v1260
    %1270 = vmatprep.subr.bf16.mxu0 %v774
    %1271 = vmatpush1.bf16.msra.mxu0 %v773
    %1272 = vmatprep.subr.bf16.mxu0 %v778
    %1273 = vmatpush1.bf16.msra.mxu0 %v777
    %1274 = vmatprep.subr.bf16.mxu0 %v782
    %1275 = vmatpush1.bf16.msra.mxu0 %v781
    %1276 = vmatprep.subr.bf16.mxu0 %v786
    %1277 = vmatpush1.bf16.msra.mxu0 %v785
    %1278 = vmatprep.subr.bf16.mxu0 %v790
    %1279 = vmatpush1.bf16.msra.mxu0 %v789
    %1280 = vmatprep.subr.bf16.mxu0 %v794
    %1281 = vmatpush1.bf16.msra.mxu0 %v793
    %1282 = vmatprep.subr.bf16.mxu0 %v798
    %1283 = vmatpush1.bf16.msra.mxu0 %v797
    %1284 = vmatprep.subr.bf16.mxu0 %v802
    %1285 = vmatpush1.bf16.msra.mxu0 %v801
    %1286 = vmatprep.subr.bf16.mxu0 0
    %1287 = vmatpush1.bf16.msra.mxu0 0
    %1288 = vmatprep.subr.bf16.mxu0 0
    %1289 = vmatpush1.bf16.msra.mxu0 0
    %1290 = vmatprep.subr.bf16.mxu0 0
    %1291 = vmatpush1.bf16.msra.mxu0 0
    %1292 = vmatprep.subr.bf16.mxu0 0
    %1293 = vmatpush1.bf16.msra.mxu0 0
    %1294 = vmatprep.subr.bf16.mxu0 0
    %1295 = vmatpush1.bf16.msra.mxu0 0
    %1296 = vmatprep.subr.bf16.mxu0 0
    %1297 = vmatpush1.bf16.msra.mxu0 0
    %1298 = vmatprep.subr.bf16.mxu0 0
    %1299 = vmatpush1.bf16.msra.mxu0 0
    %1300 = vmatprep.subr.bf16.mxu0 0
    %1301 = vmatpush1.bf16.msra.mxu0 0
    %1302 = vmatprep.mubr.bf16.mxu0 0
    %1303 = vmatmul.mubr.bf16.gmra.mrb[0].mxu0 %v1261
    %v1304 = vpop.f32.mrb[0].mxu0
    %v1305 = vadd.f32 %v1262, %v1304
    %v1306 = vpop.f32.mrb[0].mxu0
    %v1307 = vadd.f32 %v1263, %v1306
    %v1308 = vpop.f32.mrb[0].mxu0
    %v1309 = vadd.f32 %v1266, %v1308
    %v1310 = vpop.f32.mrb[0].mxu0
    %v1311 = vadd.f32 %v1267, %v1310
    %1312 = vdwg.mxu0
    %1313 = vmatprep.subr.bf16.mxu0 %v776
    %1314 = vmatpush1.bf16.msra.mxu0 %v775
    %1315 = vmatprep.subr.bf16.mxu0 %v780
    %1316 = vmatpush1.bf16.msra.mxu0 %v779
    %1317 = vmatprep.subr.bf16.mxu0 %v784
    %1318 = vmatpush1.bf16.msra.mxu0 %v783
    %1319 = vmatprep.subr.bf16.mxu0 %v788
    %1320 = vmatpush1.bf16.msra.mxu0 %v787
    %1321 = vmatprep.subr.bf16.mxu0 %v792
    %1322 = vmatpush1.bf16.msra.mxu0 %v791
    %1323 = vmatprep.subr.bf16.mxu0 %v796
    %1324 = vmatpush1.bf16.msra.mxu0 %v795
    %1325 = vmatprep.subr.bf16.mxu0 %v800
    %1326 = vmatpush1.bf16.msra.mxu0 %v799
    %1327 = vmatprep.subr.bf16.mxu0 %v804
    %1328 = vmatpush1.bf16.msra.mxu0 %v803
    %1329 = vmatprep.subr.bf16.mxu0 0
    %1330 = vmatpush1.bf16.msra.mxu0 0
    %1331 = vmatprep.subr.bf16.mxu0 0
    %1332 = vmatpush1.bf16.msra.mxu0 0
    %1333 = vmatprep.subr.bf16.mxu0 0
    %1334 = vmatpush1.bf16.msra.mxu0 0
    %1335 = vmatprep.subr.bf16.mxu0 0
    %1336 = vmatpush1.bf16.msra.mxu0 0
    %1337 = vmatprep.subr.bf16.mxu0 0
    %1338 = vmatpush1.bf16.msra.mxu0 0
    %1339 = vmatprep.subr.bf16.mxu0 0
    %1340 = vmatpush1.bf16.msra.mxu0 0
    %1341 = vmatprep.subr.bf16.mxu0 0
    %1342 = vmatpush1.bf16.msra.mxu0 0
    %1343 = vmatprep.subr.bf16.mxu0 0
    %1344 = vmatpush1.bf16.msra.mxu0 0
    %1345 = vmatprep.mubr.bf16.mxu0 0
    %1346 = vmatmul.mubr.bf16.gmra.mrb[0].mxu0 %v1261
    %v1347 = vpop.f32.mrb[0].mxu0
    %v1348 = vadd.f32 %v1264, %v1347
    %v1349 = vpop.f32.mrb[0].mxu0
    %v1350 = vadd.f32 %v1265, %v1349
    %v1351 = vpop.f32.mrb[0].mxu0
    %v1352 = vadd.f32 %v1268, %v1351
    %v1353 = vpop.f32.mrb[0].mxu0
    %v1354 = vadd.f32 %v1269, %v1353
    %1355 = vdwg.mxu0
    %v1356 = vadd.f32 %v1305, %v927
    %v1357 = vadd.f32 %v1307, %v931
    %v1358 = vadd.f32 %v1348, %v935
    %v1359 = vadd.f32 %v1350, %v939
    %v1360 = vadd.f32 %v1309, %v927
    %v1361 = vadd.f32 %v1311, %v931
    %v1362 = vadd.f32 %v1352, %v935
    %v1363 = vadd.f32 %v1354, %v939
    %1364 = vst [vmem:[#allocation3] sm:$0xff] %v1356
    %1365 = vst [vmem:[#allocation3 + $0x8] sm:$0xff] %v1357
    %1366 = vst [vmem:[#allocation3 + $0x10] sm:$0xff] %v1358
    %1367 = vst [vmem:[#allocation3 + $0x18] sm:$0xff] %v1359
    %1368 = vst [vmem:[#allocation3 + $0x20] sm:$0xff] %v1360
    %1369 = vst [vmem:[#allocation3 + $0x28] sm:$0xff] %v1361
    %1370 = vst [vmem:[#allocation3 + $0x30] sm:$0xff] %v1362
    %1371 = vst [vmem:[#allocation3 + $0x38] sm:$0xff] %v1363
    %v1372 = vld [vmem:[#allocation3] sm:$0xff]
    %v1373 = vld [vmem:[#allocation3 + $0x20] sm:$0xff]
    %v1374 = vxor.u32 %v1372, 2147483648
    %v1375 = vxor.u32 %v1373, 2147483648
    %v1376 = vmul.f32 %v1374, 1.442695
    %v1377 = vpow.pop %v1376
    %v1378 = vmul.f32 %v1375, 1.442695
    %v1379 = vpow.pop %v1378
    %v1380 = vadd.f32 %v1377, 1.0
    %v1381 = vadd.f32 %v1379, 1.0
    %v1382 = vrcp.pop %v1380
    %v1383 = vmul.f32 1.0, %v1382
    %v1384 = vrcp.pop %v1381
    %v1385 = vmul.f32 1.0, %v1384
    %v1386 = vld [vmem:[#allocation3 + $0x8] sm:$0xff]
    %v1387 = vld [vmem:[#allocation3 + $0x28] sm:$0xff]
    %v1388 = vxor.u32 %v1386, 2147483648
    %v1389 = vxor.u32 %v1387, 2147483648
    %v1390 = vmul.f32 %v1388, 1.442695
    %v1391 = vpow.pop %v1390
    %v1392 = vmul.f32 %v1389, 1.442695
    %v1393 = vpow.pop %v1392
    %v1394 = vadd.f32 %v1391, 1.0
    %v1395 = vadd.f32 %v1393, 1.0
    %v1396 = vrcp.pop %v1394
    %v1397 = vmul.f32 1.0, %v1396
    %v1398 = vrcp.pop %v1395
    %v1399 = vmul.f32 1.0, %v1398
    %v1400 = vld [vmem:[#allocation3 + $0x10] sm:$0xff]
    %v1401 = vld [vmem:[#allocation3 + $0x30] sm:$0xff]
    %v1402 = vtanh.pop %v1400
    %v1403 = vtanh.pop %v1401
    %v1404 = vld [vmem:[#allocation3 + $0x18] sm:$0xff]
    %v1405 = vld [vmem:[#allocation3 + $0x38] sm:$0xff]
    %v1406 = vxor.u32 %v1404, 2147483648
    %v1407 = vxor.u32 %v1405, 2147483648
    %v1408 = vmul.f32 %v1406, 1.442695
    %v1409 = vpow.pop %v1408
    %v1410 = vmul.f32 %v1407, 1.442695
    %v1411 = vpow.pop %v1410
    %v1412 = vadd.f32 %v1409, 1.0
    %v1413 = vadd.f32 %v1411, 1.0
    %v1414 = vrcp.pop %v1412
    %v1415 = vmul.f32 1.0, %v1414
    %v1416 = vrcp.pop %v1413
    %v1417 = vmul.f32 1.0, %v1416
    %v1418 = vmul.f32 %v1397, %v1249
    %v1419 = vmul.f32 %v1399, %v1250
    %v1420 = vmul.f32 %v1383, %v1402
    %v1421 = vmul.f32 %v1385, %v1403
    %v1422 = vadd.f32 %v1418, %v1420
    %v1423 = vadd.f32 %v1419, %v1421
    %v1424 = vtanh.pop %v1422
    %v1425 = vtanh.pop %v1423
    %v1426 = vmul.f32 %v1415, %v1424
    %v1427 = vmul.f32 %v1417, %v1425
    %s1428 = sadd.s32 %s656, 2
    %v1429 = vstv %s1428
    %vm1430 = vcmp.lt.s32.totalorder %v1429, %v654
    %vm1431 = vcmp.lt.s32.totalorder %v1429, %v655
    %v1432 = vsel %vm1430, 1, 0
    %v1433 = vsel %vm1431, 1, 0
    %v1434 = vcvt.s32.f32 %v1432
    %v1435 = vcvt.s32.f32 %v1433
    %v1436 = vsub.f32 %v1426, %v1243
    %v1437 = vsub.f32 %v1427, %v1244
    %1439 = vset.pattern.permute.xlu0 0
    %1440 = vperm.xlu0 %1439, %v1434
    %v1441 = vpop.permute.xlu0 %1440
    %1444 = vset.pattern.permute.xlu0 0
    %1445 = vperm.xlu0 %1444, %v1435
    %v1446 = vpop.permute.xlu0 %1445
    %v1448 = vmul.f32 %v1441, %v1436
    %v1449 = vmul.f32 %v1446, %v1437
    %v1450 = vadd.f32 %v1243, %v1448
    %v1451 = vadd.f32 %v1244, %v1449
    %v1452 = vsub.f32 %v1422, %v1249
    %v1453 = vsub.f32 %v1423, %v1250
    %v1454 = vmul.f32 %v1441, %v1452
    %v1455 = vmul.f32 %v1446, %v1453
    %v1456 = vadd.f32 %v1249, %v1454
    %v1457 = vadd.f32 %v1250, %v1455
    %s1458 = scalar_lea.vmem [#allocation12], 32
    %1459 = vst [vmem:[%s1458] sm:$0xff] %v1450
    %1460 = vst [vmem:[%s1458 + $0x8] sm:$0xff] %v1451
    %s1461 = smul.u32 3, 4
    %s1462 = smul.addr %s1461, 8
    %s1463 = scalar_lea.vmem [#allocation2], %s1462
    %v1464 = vld [vmem:[%s1463] sm:$0xff]
    %v1465 = vld [vmem:[%s1463 + $0x8] sm:$0xff]
    %v1466 = vld [vmem:[%s1463 + $0x10] sm:$0xff]
    %v1467 = vld [vmem:[%s1463 + $0x18] sm:$0xff]
    %v1468 = vpack.c.bf16 %v1451, %v1450
    %v1469 = vunpack.c.l.bf16 %v1464
    %v1470 = vunpack.c.l.bf16 %v1465
    %v1471 = vunpack.c.l.bf16 %v1466
    %v1472 = vunpack.c.l.bf16 %v1467
    %v1473 = vunpack.c.h.bf16 %v1464
    %v1474 = vunpack.c.h.bf16 %v1465
    %v1475 = vunpack.c.h.bf16 %v1466
    %v1476 = vunpack.c.h.bf16 %v1467
    %1477 = vmatprep.subr.bf16.mxu0 %v774
    %1478 = vmatpush1.bf16.msra.mxu0 %v773
    %1479 = vmatprep.subr.bf16.mxu0 %v778
    %1480 = vmatpush1.bf16.msra.mxu0 %v777
    %1481 = vmatprep.subr.bf16.mxu0 %v782
    %1482 = vmatpush1.bf16.msra.mxu0 %v781
    %1483 = vmatprep.subr.bf16.mxu0 %v786
    %1484 = vmatpush1.bf16.msra.mxu0 %v785
    %1485 = vmatprep.subr.bf16.mxu0 %v790
    %1486 = vmatpush1.bf16.msra.mxu0 %v789
    %1487 = vmatprep.subr.bf16.mxu0 %v794
    %1488 = vmatpush1.bf16.msra.mxu0 %v793
    %1489 = vmatprep.subr.bf16.mxu0 %v798
    %1490 = vmatpush1.bf16.msra.mxu0 %v797
    %1491 = vmatprep.subr.bf16.mxu0 %v802
    %1492 = vmatpush1.bf16.msra.mxu0 %v801
    %1493 = vmatprep.subr.bf16.mxu0 0
    %1494 = vmatpush1.bf16.msra.mxu0 0
    %1495 = vmatprep.subr.bf16.mxu0 0
    %1496 = vmatpush1.bf16.msra.mxu0 0
    %1497 = vmatprep.subr.bf16.mxu0 0
    %1498 = vmatpush1.bf16.msra.mxu0 0
    %1499 = vmatprep.subr.bf16.mxu0 0
    %1500 = vmatpush1.bf16.msra.mxu0 0
    %1501 = vmatprep.subr.bf16.mxu0 0
    %1502 = vmatpush1.bf16.msra.mxu0 0
    %1503 = vmatprep.subr.bf16.mxu0 0
    %1504 = vmatpush1.bf16.msra.mxu0 0
    %1505 = vmatprep.subr.bf16.mxu0 0
    %1506 = vmatpush1.bf16.msra.mxu0 0
    %1507 = vmatprep.subr.bf16.mxu0 0
    %1508 = vmatpush1.bf16.msra.mxu0 0
    %1509 = vmatprep.mubr.bf16.mxu0 0
    %1510 = vmatmul.mubr.bf16.gmra.mrb[0].mxu0 %v1468
    %v1511 = vpop.f32.mrb[0].mxu0
    %v1512 = vadd.f32 %v1469, %v1511
    %v1513 = vpop.f32.mrb[0].mxu0
    %v1514 = vadd.f32 %v1470, %v1513
    %v1515 = vpop.f32.mrb[0].mxu0
    %v1516 = vadd.f32 %v1473, %v1515
    %v1517 = vpop.f32.mrb[0].mxu0
    %v1518 = vadd.f32 %v1474, %v1517
    %1519 = vdwg.mxu0
    %1520 = vmatprep.subr.bf16.mxu0 %v776
    %1521 = vmatpush1.bf16.msra.mxu0 %v775
    %1522 = vmatprep.subr.bf16.mxu0 %v780
    %1523 = vmatpush1.bf16.msra.mxu0 %v779
    %1524 = vmatprep.subr.bf16.mxu0 %v784
    %1525 = vmatpush1.bf16.msra.mxu0 %v783
    %1526 = vmatprep.subr.bf16.mxu0 %v788
    %1527 = vmatpush1.bf16.msra.mxu0 %v787
    %1528 = vmatprep.subr.bf16.mxu0 %v792
    %1529 = vmatpush1.bf16.msra.mxu0 %v791
    %1530 = vmatprep.subr.bf16.mxu0 %v796
    %1531 = vmatpush1.bf16.msra.mxu0 %v795
    %1532 = vmatprep.subr.bf16.mxu0 %v800
    %1533 = vmatpush1.bf16.msra.mxu0 %v799
    %1534 = vmatprep.subr.bf16.mxu0 %v804
    %1535 = vmatpush1.bf16.msra.mxu0 %v803
    %1536 = vmatprep.subr.bf16.mxu0 0
    %1537 = vmatpush1.bf16.msra.mxu0 0
    %1538 = vmatprep.subr.bf16.mxu0 0
    %1539 = vmatpush1.bf16.msra.mxu0 0
    %1540 = vmatprep.subr.bf16.mxu0 0
    %1541 = vmatpush1.bf16.msra.mxu0 0
    %1542 = vmatprep.subr.bf16.mxu0 0
    %1543 = vmatpush1.bf16.msra.mxu0 0
    %1544 = vmatprep.subr.bf16.mxu0 0
    %1545 = vmatpush1.bf16.msra.mxu0 0
    %1546 = vmatprep.subr.bf16.mxu0 0
    %1547 = vmatpush1.bf16.msra.mxu0 0
    %1548 = vmatprep.subr.bf16.mxu0 0
    %1549 = vmatpush1.bf16.msra.mxu0 0
    %1550 = vmatprep.subr.bf16.mxu0 0
    %1551 = vmatpush1.bf16.msra.mxu0 0
    %1552 = vmatprep.mubr.bf16.mxu0 0
    %1553 = vmatmul.mubr.bf16.gmra.mrb[0].mxu0 %v1468
    %v1554 = vpop.f32.mrb[0].mxu0
    %v1555 = vadd.f32 %v1471, %v1554
    %v1556 = vpop.f32.mrb[0].mxu0
    %v1557 = vadd.f32 %v1472, %v1556
    %v1558 = vpop.f32.mrb[0].mxu0
    %v1559 = vadd.f32 %v1475, %v1558
    %v1560 = vpop.f32.mrb[0].mxu0
    %v1561 = vadd.f32 %v1476, %v1560
    %1562 = vdwg.mxu0
    %v1563 = vadd.f32 %v1512, %v927
    %v1564 = vadd.f32 %v1514, %v931
    %v1565 = vadd.f32 %v1555, %v935
    %v1566 = vadd.f32 %v1557, %v939
    %v1567 = vadd.f32 %v1516, %v927
    %v1568 = vadd.f32 %v1518, %v931
    %v1569 = vadd.f32 %v1559, %v935
    %v1570 = vadd.f32 %v1561, %v939
    %1571 = vst [vmem:[#allocation3] sm:$0xff] %v1563
    %1572 = vst [vmem:[#allocation3 + $0x8] sm:$0xff] %v1564
    %1573 = vst [vmem:[#allocation3 + $0x10] sm:$0xff] %v1565
    %1574 = vst [vmem:[#allocation3 + $0x18] sm:$0xff] %v1566
    %1575 = vst [vmem:[#allocation3 + $0x20] sm:$0xff] %v1567
    %1576 = vst [vmem:[#allocation3 + $0x28] sm:$0xff] %v1568
    %1577 = vst [vmem:[#allocation3 + $0x30] sm:$0xff] %v1569
    %1578 = vst [vmem:[#allocation3 + $0x38] sm:$0xff] %v1570
    %v1579 = vld [vmem:[#allocation3] sm:$0xff]
    %v1580 = vld [vmem:[#allocation3 + $0x20] sm:$0xff]
    %v1581 = vxor.u32 %v1579, 2147483648
    %v1582 = vxor.u32 %v1580, 2147483648
    %v1583 = vmul.f32 %v1581, 1.442695
    %v1584 = vpow.pop %v1583
    %v1585 = vmul.f32 %v1582, 1.442695
    %v1586 = vpow.pop %v1585
    %v1587 = vadd.f32 %v1584, 1.0
    %v1588 = vadd.f32 %v1586, 1.0
    %v1589 = vrcp.pop %v1587
    %v1590 = vmul.f32 1.0, %v1589
    %v1591 = vrcp.pop %v1588
    %v1592 = vmul.f32 1.0, %v1591
    %v1593 = vld [vmem:[#allocation3 + $0x8] sm:$0xff]
    %v1594 = vld [vmem:[#allocation3 + $0x28] sm:$0xff]
    %v1595 = vxor.u32 %v1593, 2147483648
    %v1596 = vxor.u32 %v1594, 2147483648
    %v1597 = vmul.f32 %v1595, 1.442695
    %v1598 = vpow.pop %v1597
    %v1599 = vmul.f32 %v1596, 1.442695
    %v1600 = vpow.pop %v1599
    %v1601 = vadd.f32 %v1598, 1.0
    %v1602 = vadd.f32 %v1600, 1.0
    %v1603 = vrcp.pop %v1601
    %v1604 = vmul.f32 1.0, %v1603
    %v1605 = vrcp.pop %v1602
    %v1606 = vmul.f32 1.0, %v1605
    %v1607 = vld [vmem:[#allocation3 + $0x10] sm:$0xff]
    %v1608 = vld [vmem:[#allocation3 + $0x30] sm:$0xff]
    %v1609 = vtanh.pop %v1607
    %v1610 = vtanh.pop %v1608
    %v1611 = vld [vmem:[#allocation3 + $0x18] sm:$0xff]
    %v1612 = vld [vmem:[#allocation3 + $0x38] sm:$0xff]
    %v1613 = vxor.u32 %v1611, 2147483648
    %v1614 = vxor.u32 %v1612, 2147483648
    %v1615 = vmul.f32 %v1613, 1.442695
    %v1616 = vpow.pop %v1615
    %v1617 = vmul.f32 %v1614, 1.442695
    %v1618 = vpow.pop %v1617
    %v1619 = vadd.f32 %v1616, 1.0
    %v1620 = vadd.f32 %v1618, 1.0
    %v1621 = vrcp.pop %v1619
    %v1622 = vmul.f32 1.0, %v1621
    %v1623 = vrcp.pop %v1620
    %v1624 = vmul.f32 1.0, %v1623
    %v1625 = vmul.f32 %v1604, %v1456
    %v1626 = vmul.f32 %v1606, %v1457
    %v1627 = vmul.f32 %v1590, %v1609
    %v1628 = vmul.f32 %v1592, %v1610
    %v1629 = vadd.f32 %v1625, %v1627
    %v1630 = vadd.f32 %v1626, %v1628
    %v1631 = vtanh.pop %v1629
    %v1632 = vtanh.pop %v1630
    %v1633 = vmul.f32 %v1622, %v1631
    %v1634 = vmul.f32 %v1624, %v1632
    %s1635 = sadd.s32 %s656, 3
    %v1636 = vstv %s1635
    %vm1637 = vcmp.lt.s32.totalorder %v1636, %v654
    %vm1638 = vcmp.lt.s32.totalorder %v1636, %v655
    %v1639 = vsel %vm1637, 1, 0
    %v1640 = vsel %vm1638, 1, 0
    %v1641 = vcvt.s32.f32 %v1639
    %v1642 = vcvt.s32.f32 %v1640
    %v1643 = vsub.f32 %v1633, %v1450
    %v1644 = vsub.f32 %v1634, %v1451
    %1646 = vset.pattern.permute.xlu0 0
    %1647 = vperm.xlu0 %1646, %v1641
    %v1648 = vpop.permute.xlu0 %1647
    %1651 = vset.pattern.permute.xlu0 0
    %1652 = vperm.xlu0 %1651, %v1642
    %v1653 = vpop.permute.xlu0 %1652
    %v1655 = vmul.f32 %v1648, %v1643
    %v1656 = vmul.f32 %v1653, %v1644
    %v1657 = vadd.f32 %v1450, %v1655
    %v1658 = vadd.f32 %v1451, %v1656
    %v1659 = vsub.f32 %v1629, %v1456
    %v1660 = vsub.f32 %v1630, %v1457
    %v1661 = vmul.f32 %v1648, %v1659
    %v1662 = vmul.f32 %v1653, %v1660
    %v1663 = vadd.f32 %v1456, %v1661
    %v1664 = vadd.f32 %v1457, %v1662
    %s1665 = scalar_lea.vmem [#allocation12], 48
    %1666 = vst [vmem:[%s1665] sm:$0xff] %v1657
    %1667 = vst [vmem:[%s1665 + $0x8] sm:$0xff] %v1658
    %s1668 = smul.u32 4, 4
    %s1669 = smul.addr %s1668, 8
    %s1670 = scalar_lea.vmem [#allocation2], %s1669
    %v1671 = vld [vmem:[%s1670] sm:$0xff]
    %v1672 = vld [vmem:[%s1670 + $0x8] sm:$0xff]
    %v1673 = vld [vmem:[%s1670 + $0x10] sm:$0xff]
    %v1674 = vld [vmem:[%s1670 + $0x18] sm:$0xff]
    %v1675 = vpack.c.bf16 %v1658, %v1657
    %v1676 = vunpack.c.l.bf16 %v1671
    %v1677 = vunpack.c.l.bf16 %v1672
    %v1678 = vunpack.c.l.bf16 %v1673
    %v1679 = vunpack.c.l.bf16 %v1674
    %v1680 = vunpack.c.h.bf16 %v1671
    %v1681 = vunpack.c.h.bf16 %v1672
    %v1682 = vunpack.c.h.bf16 %v1673
    %v1683 = vunpack.c.h.bf16 %v1674
    %1684 = vmatprep.subr.bf16.mxu0 %v774
    %1685 = vmatpush1.bf16.msra.mxu0 %v773
    %1686 = vmatprep.subr.bf16.mxu0 %v778
    %1687 = vmatpush1.bf16.msra.mxu0 %v777
    %1688 = vmatprep.subr.bf16.mxu0 %v782
    %1689 = vmatpush1.bf16.msra.mxu0 %v781
    %1690 = vmatprep.subr.bf16.mxu0 %v786
    %1691 = vmatpush1.bf16.msra.mxu0 %v785
    %1692 = vmatprep.subr.bf16.mxu0 %v790
    %1693 = vmatpush1.bf16.msra.mxu0 %v789
    %1694 = vmatprep.subr.bf16.mxu0 %v794
    %1695 = vmatpush1.bf16.msra.mxu0 %v793
    %1696 = vmatprep.subr.bf16.mxu0 %v798
    %1697 = vmatpush1.bf16.msra.mxu0 %v797
    %1698 = vmatprep.subr.bf16.mxu0 %v802
    %1699 = vmatpush1.bf16.msra.mxu0 %v801
    %1700 = vmatprep.subr.bf16.mxu0 0
    %1701 = vmatpush1.bf16.msra.mxu0 0
    %1702 = vmatprep.subr.bf16.mxu0 0
    %1703 = vmatpush1.bf16.msra.mxu0 0
    %1704 = vmatprep.subr.bf16.mxu0 0
    %1705 = vmatpush1.bf16.msra.mxu0 0
    %1706 = vmatprep.subr.bf16.mxu0 0
    %1707 = vmatpush1.bf16.msra.mxu0 0
    %1708 = vmatprep.subr.bf16.mxu0 0
    %1709 = vmatpush1.bf16.msra.mxu0 0
    %1710 = vmatprep.subr.bf16.mxu0 0
    %1711 = vmatpush1.bf16.msra.mxu0 0
    %1712 = vmatprep.subr.bf16.mxu0 0
    %1713 = vmatpush1.bf16.msra.mxu0 0
    %1714 = vmatprep.subr.bf16.mxu0 0
    %1715 = vmatpush1.bf16.msra.mxu0 0
    %1716 = vmatprep.mubr.bf16.mxu0 0
    %1717 = vmatmul.mubr.bf16.gmra.mrb[0].mxu0 %v1675
    %v1718 = vpop.f32.mrb[0].mxu0
    %v1719 = vadd.f32 %v1676, %v1718
    %v1720 = vpop.f32.mrb[0].mxu0
    %v1721 = vadd.f32 %v1677, %v1720
    %v1722 = vpop.f32.mrb[0].mxu0
    %v1723 = vadd.f32 %v1680, %v1722
    %v1724 = vpop.f32.mrb[0].mxu0
    %v1725 = vadd.f32 %v1681, %v1724
    %1726 = vdwg.mxu0
    %1727 = vmatprep.subr.bf16.mxu0 %v776
    %1728 = vmatpush1.bf16.msra.mxu0 %v775
    %1729 = vmatprep.subr.bf16.mxu0 %v780
    %1730 = vmatpush1.bf16.msra.mxu0 %v779
    %1731 = vmatprep.subr.bf16.mxu0 %v784
    %1732 = vmatpush1.bf16.msra.mxu0 %v783
    %1733 = vmatprep.subr.bf16.mxu0 %v788
    %1734 = vmatpush1.bf16.msra.mxu0 %v787
    %1735 = vmatprep.subr.bf16.mxu0 %v792
    %1736 = vmatpush1.bf16.msra.mxu0 %v791
    %1737 = vmatprep.subr.bf16.mxu0 %v796
    %1738 = vmatpush1.bf16.msra.mxu0 %v795
    %1739 = vmatprep.subr.bf16.mxu0 %v800
    %1740 = vmatpush1.bf16.msra.mxu0 %v799
    %1741 = vmatprep.subr.bf16.mxu0 %v804
    %1742 = vmatpush1.bf16.msra.mxu0 %v803
    %1743 = vmatprep.subr.bf16.mxu0 0
    %1744 = vmatpush1.bf16.msra.mxu0 0
    %1745 = vmatprep.subr.bf16.mxu0 0
    %1746 = vmatpush1.bf16.msra.mxu0 0
    %1747 = vmatprep.subr.bf16.mxu0 0
    %1748 = vmatpush1.bf16.msra.mxu0 0
    %1749 = vmatprep.subr.bf16.mxu0 0
    %1750 = vmatpush1.bf16.msra.mxu0 0
    %1751 = vmatprep.subr.bf16.mxu0 0
    %1752 = vmatpush1.bf16.msra.mxu0 0
    %1753 = vmatprep.subr.bf16.mxu0 0
    %1754 = vmatpush1.bf16.msra.mxu0 0
    %1755 = vmatprep.subr.bf16.mxu0 0
    %1756 = vmatpush1.bf16.msra.mxu0 0
    %1757 = vmatprep.subr.bf16.mxu0 0
    %1758 = vmatpush1.bf16.msra.mxu0 0
    %1759 = vmatprep.mubr.bf16.mxu0 0
    %1760 = vmatmul.mubr.bf16.gmra.mrb[0].mxu0 %v1675
    %v1761 = vpop.f32.mrb[0].mxu0
    %v1762 = vadd.f32 %v1678, %v1761
    %v1763 = vpop.f32.mrb[0].mxu0
    %v1764 = vadd.f32 %v1679, %v1763
    %v1765 = vpop.f32.mrb[0].mxu0
    %v1766 = vadd.f32 %v1682, %v1765
    %v1767 = vpop.f32.mrb[0].mxu0
    %v1768 = vadd.f32 %v1683, %v1767
    %1769 = vdwg.mxu0
    %v1770 = vadd.f32 %v1719, %v927
    %v1771 = vadd.f32 %v1721, %v931
    %v1772 = vadd.f32 %v1762, %v935
    %v1773 = vadd.f32 %v1764, %v939
    %v1774 = vadd.f32 %v1723, %v927
    %v1775 = vadd.f32 %v1725, %v931
    %v1776 = vadd.f32 %v1766, %v935
    %v1777 = vadd.f32 %v1768, %v939
    %1778 = vst [vmem:[#allocation3] sm:$0xff] %v1770
    %1779 = vst [vmem:[#allocation3 + $0x8] sm:$0xff] %v1771
    %1780 = vst [vmem:[#allocation3 + $0x10] sm:$0xff] %v1772
    %1781 = vst [vmem:[#allocation3 + $0x18] sm:$0xff] %v1773
    %1782 = vst [vmem:[#allocation3 + $0x20] sm:$0xff] %v1774
    %1783 = vst [vmem:[#allocation3 + $0x28] sm:$0xff] %v1775
    %1784 = vst [vmem:[#allocation3 + $0x30] sm:$0xff] %v1776
    %1785 = vst [vmem:[#allocation3 + $0x38] sm:$0xff] %v1777
    %v1786 = vld [vmem:[#allocation3] sm:$0xff]
    %v1787 = vld [vmem:[#allocation3 + $0x20] sm:$0xff]
    %v1788 = vxor.u32 %v1786, 2147483648
    %v1789 = vxor.u32 %v1787, 2147483648
    %v1790 = vmul.f32 %v1788, 1.442695
    %v1791 = vpow.pop %v1790
    %v1792 = vmul.f32 %v1789, 1.442695
    %v1793 = vpow.pop %v1792
    %v1794 = vadd.f32 %v1791, 1.0
    %v1795 = vadd.f32 %v1793, 1.0
    %v1796 = vrcp.pop %v1794
    %v1797 = vmul.f32 1.0, %v1796
    %v1798 = vrcp.pop %v1795
    %v1799 = vmul.f32 1.0, %v1798
    %v1800 = vld [vmem:[#allocation3 + $0x8] sm:$0xff]
    %v1801 = vld [vmem:[#allocation3 + $0x28] sm:$0xff]
    %v1802 = vxor.u32 %v1800, 2147483648
    %v1803 = vxor.u32 %v1801, 2147483648
    %v1804 = vmul.f32 %v1802, 1.442695
    %v1805 = vpow.pop %v1804
    %v1806 = vmul.f32 %v1803, 1.442695
    %v1807 = vpow.pop %v1806
    %v1808 = vadd.f32 %v1805, 1.0
    %v1809 = vadd.f32 %v1807, 1.0
    %v1810 = vrcp.pop %v1808
    %v1811 = vmul.f32 1.0, %v1810
    %v1812 = vrcp.pop %v1809
    %v1813 = vmul.f32 1.0, %v1812
    %v1814 = vld [vmem:[#allocation3 + $0x10] sm:$0xff]
    %v1815 = vld [vmem:[#allocation3 + $0x30] sm:$0xff]
    %v1816 = vtanh.pop %v1814
    %v1817 = vtanh.pop %v1815
    %v1818 = vld [vmem:[#allocation3 + $0x18] sm:$0xff]
    %v1819 = vld [vmem:[#allocation3 + $0x38] sm:$0xff]
    %v1820 = vxor.u32 %v1818, 2147483648
    %v1821 = vxor.u32 %v1819, 2147483648
    %v1822 = vmul.f32 %v1820, 1.442695
    %v1823 = vpow.pop %v1822
    %v1824 = vmul.f32 %v1821, 1.442695
    %v1825 = vpow.pop %v1824
    %v1826 = vadd.f32 %v1823, 1.0
    %v1827 = vadd.f32 %v1825, 1.0
    %v1828 = vrcp.pop %v1826
    %v1829 = vmul.f32 1.0, %v1828
    %v1830 = vrcp.pop %v1827
    %v1831 = vmul.f32 1.0, %v1830
    %v1832 = vmul.f32 %v1811, %v1663
    %v1833 = vmul.f32 %v1813, %v1664
    %v1834 = vmul.f32 %v1797, %v1816
    %v1835 = vmul.f32 %v1799, %v1817
    %v1836 = vadd.f32 %v1832, %v1834
    %v1837 = vadd.f32 %v1833, %v1835
    %v1838 = vtanh.pop %v1836
    %v1839 = vtanh.pop %v1837
    %v1840 = vmul.f32 %v1829, %v1838
    %v1841 = vmul.f32 %v1831, %v1839
    %s1842 = sadd.s32 %s656, 4
    %v1843 = vstv %s1842
    %vm1844 = vcmp.lt.s32.totalorder %v1843, %v654
    %vm1845 = vcmp.lt.s32.totalorder %v1843, %v655
    %v1846 = vsel %vm1844, 1, 0
    %v1847 = vsel %vm1845, 1, 0
    %v1848 = vcvt.s32.f32 %v1846
    %v1849 = vcvt.s32.f32 %v1847
    %v1850 = vsub.f32 %v1840, %v1657
    %v1851 = vsub.f32 %v1841, %v1658
    %1853 = vset.pattern.permute.xlu0 0
    %1854 = vperm.xlu0 %1853, %v1848
    %v1855 = vpop.permute.xlu0 %1854
    %1858 = vset.pattern.permute.xlu0 0
    %1859 = vperm.xlu0 %1858, %v1849
    %v1860 = vpop.permute.xlu0 %1859
    %v1862 = vmul.f32 %v1855, %v1850
    %v1863 = vmul.f32 %v1860, %v1851
    %v1864 = vadd.f32 %v1657, %v1862
    %v1865 = vadd.f32 %v1658, %v1863
    %v1866 = vsub.f32 %v1836, %v1663
    %v1867 = vsub.f32 %v1837, %v1664
    %v1868 = vmul.f32 %v1855, %v1866
    %v1869 = vmul.f32 %v1860, %v1867
    %v1870 = vadd.f32 %v1663, %v1868
    %v1871 = vadd.f32 %v1664, %v1869
    %s1872 = scalar_lea.vmem [#allocation12], 64
    %1873 = vst [vmem:[%s1872] sm:$0xff] %v1864
    %1874 = vst [vmem:[%s1872 + $0x8] sm:$0xff] %v1865
    %s1875 = smul.u32 5, 4
    %s1876 = smul.addr %s1875, 8
    %s1877 = scalar_lea.vmem [#allocation2], %s1876
    %v1878 = vld [vmem:[%s1877] sm:$0xff]
    %v1879 = vld [vmem:[%s1877 + $0x8] sm:$0xff]
    %v1880 = vld [vmem:[%s1877 + $0x10] sm:$0xff]
    %v1881 = vld [vmem:[%s1877 + $0x18] sm:$0xff]
    %v1882 = vpack.c.bf16 %v1865, %v1864
    %v1883 = vunpack.c.l.bf16 %v1878
    %v1884 = vunpack.c.l.bf16 %v1879
    %v1885 = vunpack.c.l.bf16 %v1880
    %v1886 = vunpack.c.l.bf16 %v1881
    %v1887 = vunpack.c.h.bf16 %v1878
    %v1888 = vunpack.c.h.bf16 %v1879
    %v1889 = vunpack.c.h.bf16 %v1880
    %v1890 = vunpack.c.h.bf16 %v1881
    %1891 = vmatprep.subr.bf16.mxu0 %v774
    %1892 = vmatpush1.bf16.msra.mxu0 %v773
    %1893 = vmatprep.subr.bf16.mxu0 %v778
    %1894 = vmatpush1.bf16.msra.mxu0 %v777
    %1895 = vmatprep.subr.bf16.mxu0 %v782
    %1896 = vmatpush1.bf16.msra.mxu0 %v781
    %1897 = vmatprep.subr.bf16.mxu0 %v786
    %1898 = vmatpush1.bf16.msra.mxu0 %v785
    %1899 = vmatprep.subr.bf16.mxu0 %v790
    %1900 = vmatpush1.bf16.msra.mxu0 %v789
    %1901 = vmatprep.subr.bf16.mxu0 %v794
    %1902 = vmatpush1.bf16.msra.mxu0 %v793
    %1903 = vmatprep.subr.bf16.mxu0 %v798
    %1904 = vmatpush1.bf16.msra.mxu0 %v797
    %1905 = vmatprep.subr.bf16.mxu0 %v802
    %1906 = vmatpush1.bf16.msra.mxu0 %v801
    %1907 = vmatprep.subr.bf16.mxu0 0
    %1908 = vmatpush1.bf16.msra.mxu0 0
    %1909 = vmatprep.subr.bf16.mxu0 0
    %1910 = vmatpush1.bf16.msra.mxu0 0
    %1911 = vmatprep.subr.bf16.mxu0 0
    %1912 = vmatpush1.bf16.msra.mxu0 0
    %1913 = vmatprep.subr.bf16.mxu0 0
    %1914 = vmatpush1.bf16.msra.mxu0 0
    %1915 = vmatprep.subr.bf16.mxu0 0
    %1916 = vmatpush1.bf16.msra.mxu0 0
    %1917 = vmatprep.subr.bf16.mxu0 0
    %1918 = vmatpush1.bf16.msra.mxu0 0
    %1919 = vmatprep.subr.bf16.mxu0 0
    %1920 = vmatpush1.bf16.msra.mxu0 0
    %1921 = vmatprep.subr.bf16.mxu0 0
    %1922 = vmatpush1.bf16.msra.mxu0 0
    %1923 = vmatprep.mubr.bf16.mxu0 0
    %1924 = vmatmul.mubr.bf16.gmra.mrb[0].mxu0 %v1882
    %v1925 = vpop.f32.mrb[0].mxu0
    %v1926 = vadd.f32 %v1883, %v1925
    %v1927 = vpop.f32.mrb[0].mxu0
    %v1928 = vadd.f32 %v1884, %v1927
    %v1929 = vpop.f32.mrb[0].mxu0
    %v1930 = vadd.f32 %v1887, %v1929
    %v1931 = vpop.f32.mrb[0].mxu0
    %v1932 = vadd.f32 %v1888, %v1931
    %1933 = vdwg.mxu0
    %1934 = vmatprep.subr.bf16.mxu0 %v776
    %1935 = vmatpush1.bf16.msra.mxu0 %v775
    %1936 = vmatprep.subr.bf16.mxu0 %v780
    %1937 = vmatpush1.bf16.msra.mxu0 %v779
    %1938 = vmatprep.subr.bf16.mxu0 %v784
    %1939 = vmatpush1.bf16.msra.mxu0 %v783
    %1940 = vmatprep.subr.bf16.mxu0 %v788
    %1941 = vmatpush1.bf16.msra.mxu0 %v787
    %1942 = vmatprep.subr.bf16.mxu0 %v792
    %1943 = vmatpush1.bf16.msra.mxu0 %v791
    %1944 = vmatprep.subr.bf16.mxu0 %v796
    %1945 = vmatpush1.bf16.msra.mxu0 %v795
    %1946 = vmatprep.subr.bf16.mxu0 %v800
    %1947 = vmatpush1.bf16.msra.mxu0 %v799
    %1948 = vmatprep.subr.bf16.mxu0 %v804
    %1949 = vmatpush1.bf16.msra.mxu0 %v803
    %1950 = vmatprep.subr.bf16.mxu0 0
    %1951 = vmatpush1.bf16.msra.mxu0 0
    %1952 = vmatprep.subr.bf16.mxu0 0
    %1953 = vmatpush1.bf16.msra.mxu0 0
    %1954 = vmatprep.subr.bf16.mxu0 0
    %1955 = vmatpush1.bf16.msra.mxu0 0
    %1956 = vmatprep.subr.bf16.mxu0 0
    %1957 = vmatpush1.bf16.msra.mxu0 0
    %1958 = vmatprep.subr.bf16.mxu0 0
    %1959 = vmatpush1.bf16.msra.mxu0 0
    %1960 = vmatprep.subr.bf16.mxu0 0
    %1961 = vmatpush1.bf16.msra.mxu0 0
    %1962 = vmatprep.subr.bf16.mxu0 0
    %1963 = vmatpush1.bf16.msra.mxu0 0
    %1964 = vmatprep.subr.bf16.mxu0 0
    %1965 = vmatpush1.bf16.msra.mxu0 0
    %1966 = vmatprep.mubr.bf16.mxu0 0
    %1967 = vmatmul.mubr.bf16.gmra.mrb[0].mxu0 %v1882
    %v1968 = vpop.f32.mrb[0].mxu0
    %v1969 = vadd.f32 %v1885, %v1968
    %v1970 = vpop.f32.mrb[0].mxu0
    %v1971 = vadd.f32 %v1886, %v1970
    %v1972 = vpop.f32.mrb[0].mxu0
    %v1973 = vadd.f32 %v1889, %v1972
    %v1974 = vpop.f32.mrb[0].mxu0
    %v1975 = vadd.f32 %v1890, %v1974
    %1976 = vdwg.mxu0
    %v1977 = vadd.f32 %v1926, %v927
    %v1978 = vadd.f32 %v1928, %v931
    %v1979 = vadd.f32 %v1969, %v935
    %v1980 = vadd.f32 %v1971, %v939
    %v1981 = vadd.f32 %v1930, %v927
    %v1982 = vadd.f32 %v1932, %v931
    %v1983 = vadd.f32 %v1973, %v935
    %v1984 = vadd.f32 %v1975, %v939
    %1985 = vst [vmem:[#allocation3] sm:$0xff] %v1977
    %1986 = vst [vmem:[#allocation3 + $0x8] sm:$0xff] %v1978
    %1987 = vst [vmem:[#allocation3 + $0x10] sm:$0xff] %v1979
    %1988 = vst [vmem:[#allocation3 + $0x18] sm:$0xff] %v1980
    %1989 = vst [vmem:[#allocation3 + $0x20] sm:$0xff] %v1981
    %1990 = vst [vmem:[#allocation3 + $0x28] sm:$0xff] %v1982
    %1991 = vst [vmem:[#allocation3 + $0x30] sm:$0xff] %v1983
    %1992 = vst [vmem:[#allocation3 + $0x38] sm:$0xff] %v1984
    %v1993 = vld [vmem:[#allocation3] sm:$0xff]
    %v1994 = vld [vmem:[#allocation3 + $0x20] sm:$0xff]
    %v1995 = vxor.u32 %v1993, 2147483648
    %v1996 = vxor.u32 %v1994, 2147483648
    %v1997 = vmul.f32 %v1995, 1.442695
    %v1998 = vpow.pop %v1997
    %v1999 = vmul.f32 %v1996, 1.442695
    %v2000 = vpow.pop %v1999
    %v2001 = vadd.f32 %v1998, 1.0
    %v2002 = vadd.f32 %v2000, 1.0
    %v2003 = vrcp.pop %v2001
    %v2004 = vmul.f32 1.0, %v2003
    %v2005 = vrcp.pop %v2002
    %v2006 = vmul.f32 1.0, %v2005
    %v2007 = vld [vmem:[#allocation3 + $0x8] sm:$0xff]
    %v2008 = vld [vmem:[#allocation3 + $0x28] sm:$0xff]
    %v2009 = vxor.u32 %v2007, 2147483648
    %v2010 = vxor.u32 %v2008, 2147483648
    %v2011 = vmul.f32 %v2009, 1.442695
    %v2012 = vpow.pop %v2011
    %v2013 = vmul.f32 %v2010, 1.442695
    %v2014 = vpow.pop %v2013
    %v2015 = vadd.f32 %v2012, 1.0
    %v2016 = vadd.f32 %v2014, 1.0
    %v2017 = vrcp.pop %v2015
    %v2018 = vmul.f32 1.0, %v2017
    %v2019 = vrcp.pop %v2016
    %v2020 = vmul.f32 1.0, %v2019
    %v2021 = vld [vmem:[#allocation3 + $0x10] sm:$0xff]
    %v2022 = vld [vmem:[#allocation3 + $0x30] sm:$0xff]
    %v2023 = vtanh.pop %v2021
    %v2024 = vtanh.pop %v2022
    %v2025 = vld [vmem:[#allocation3 + $0x18] sm:$0xff]
    %v2026 = vld [vmem:[#allocation3 + $0x38] sm:$0xff]
    %v2027 = vxor.u32 %v2025, 2147483648
    %v2028 = vxor.u32 %v2026, 2147483648
    %v2029 = vmul.f32 %v2027, 1.442695
    %v2030 = vpow.pop %v2029
    %v2031 = vmul.f32 %v2028, 1.442695
    %v2032 = vpow.pop %v2031
    %v2033 = vadd.f32 %v2030, 1.0
    %v2034 = vadd.f32 %v2032, 1.0
    %v2035 = vrcp.pop %v2033
    %v2036 = vmul.f32 1.0, %v2035
    %v2037 = vrcp.pop %v2034
    %v2038 = vmul.f32 1.0, %v2037
    %v2039 = vmul.f32 %v2018, %v1870
    %v2040 = vmul.f32 %v2020, %v1871
    %v2041 = vmul.f32 %v2004, %v2023
    %v2042 = vmul.f32 %v2006, %v2024
    %v2043 = vadd.f32 %v2039, %v2041
    %v2044 = vadd.f32 %v2040, %v2042
    %v2045 = vtanh.pop %v2043
    %v2046 = vtanh.pop %v2044
    %v2047 = vmul.f32 %v2036, %v2045
    %v2048 = vmul.f32 %v2038, %v2046
    %s2049 = sadd.s32 %s656, 5
    %v2050 = vstv %s2049
    %vm2051 = vcmp.lt.s32.totalorder %v2050, %v654
    %vm2052 = vcmp.lt.s32.totalorder %v2050, %v655
    %v2053 = vsel %vm2051, 1, 0
    %v2054 = vsel %vm2052, 1, 0
    %v2055 = vcvt.s32.f32 %v2053
    %v2056 = vcvt.s32.f32 %v2054
    %v2057 = vsub.f32 %v2047, %v1864
    %v2058 = vsub.f32 %v2048, %v1865
    %2060 = vset.pattern.permute.xlu0 0
    %2061 = vperm.xlu0 %2060, %v2055
    %v2062 = vpop.permute.xlu0 %2061
    %2065 = vset.pattern.permute.xlu0 0
    %2066 = vperm.xlu0 %2065, %v2056
    %v2067 = vpop.permute.xlu0 %2066
    %v2069 = vmul.f32 %v2062, %v2057
    %v2070 = vmul.f32 %v2067, %v2058
    %v2071 = vadd.f32 %v1864, %v2069
    %v2072 = vadd.f32 %v1865, %v2070
    %v2073 = vsub.f32 %v2043, %v1870
    %v2074 = vsub.f32 %v2044, %v1871
    %v2075 = vmul.f32 %v2062, %v2073
    %v2076 = vmul.f32 %v2067, %v2074
    %v2077 = vadd.f32 %v1870, %v2075
    %v2078 = vadd.f32 %v1871, %v2076
    %s2079 = scalar_lea.vmem [#allocation12], 80
    %2080 = vst [vmem:[%s2079] sm:$0xff] %v2071
    %2081 = vst [vmem:[%s2079 + $0x8] sm:$0xff] %v2072
    %s2082 = smul.u32 6, 4
    %s2083 = smul.addr %s2082, 8
    %s2084 = scalar_lea.vmem [#allocation2], %s2083
    %v2085 = vld [vmem:[%s2084] sm:$0xff]
    %v2086 = vld [vmem:[%s2084 + $0x8] sm:$0xff]
    %v2087 = vld [vmem:[%s2084 + $0x10] sm:$0xff]
    %v2088 = vld [vmem:[%s2084 + $0x18] sm:$0xff]
    %v2089 = vpack.c.bf16 %v2072, %v2071
    %v2090 = vunpack.c.l.bf16 %v2085
    %v2091 = vunpack.c.l.bf16 %v2086
    %v2092 = vunpack.c.l.bf16 %v2087
    %v2093 = vunpack.c.l.bf16 %v2088
    %v2094 = vunpack.c.h.bf16 %v2085
    %v2095 = vunpack.c.h.bf16 %v2086
    %v2096 = vunpack.c.h.bf16 %v2087
    %v2097 = vunpack.c.h.bf16 %v2088
    %2098 = vmatprep.subr.bf16.mxu0 %v774
    %2099 = vmatpush1.bf16.msra.mxu0 %v773
    %2100 = vmatprep.subr.bf16.mxu0 %v778
    %2101 = vmatpush1.bf16.msra.mxu0 %v777
    %2102 = vmatprep.subr.bf16.mxu0 %v782
    %2103 = vmatpush1.bf16.msra.mxu0 %v781
    %2104 = vmatprep.subr.bf16.mxu0 %v786
    %2105 = vmatpush1.bf16.msra.mxu0 %v785
    %2106 = vmatprep.subr.bf16.mxu0 %v790
    %2107 = vmatpush1.bf16.msra.mxu0 %v789
    %2108 = vmatprep.subr.bf16.mxu0 %v794
    %2109 = vmatpush1.bf16.msra.mxu0 %v793
    %2110 = vmatprep.subr.bf16.mxu0 %v798
    %2111 = vmatpush1.bf16.msra.mxu0 %v797
    %2112 = vmatprep.subr.bf16.mxu0 %v802
    %2113 = vmatpush1.bf16.msra.mxu0 %v801
    %2114 = vmatprep.subr.bf16.mxu0 0
    %2115 = vmatpush1.bf16.msra.mxu0 0
    %2116 = vmatprep.subr.bf16.mxu0 0
    %2117 = vmatpush1.bf16.msra.mxu0 0
    %2118 = vmatprep.subr.bf16.mxu0 0
    %2119 = vmatpush1.bf16.msra.mxu0 0
    %2120 = vmatprep.subr.bf16.mxu0 0
    %2121 = vmatpush1.bf16.msra.mxu0 0
    %2122 = vmatprep.subr.bf16.mxu0 0
    %2123 = vmatpush1.bf16.msra.mxu0 0
    %2124 = vmatprep.subr.bf16.mxu0 0
    %2125 = vmatpush1.bf16.msra.mxu0 0
    %2126 = vmatprep.subr.bf16.mxu0 0
    %2127 = vmatpush1.bf16.msra.mxu0 0
    %2128 = vmatprep.subr.bf16.mxu0 0
    %2129 = vmatpush1.bf16.msra.mxu0 0
    %2130 = vmatprep.mubr.bf16.mxu0 0
    %2131 = vmatmul.mubr.bf16.gmra.mrb[0].mxu0 %v2089
    %v2132 = vpop.f32.mrb[0].mxu0
    %v2133 = vadd.f32 %v2090, %v2132
    %v2134 = vpop.f32.mrb[0].mxu0
    %v2135 = vadd.f32 %v2091, %v2134
    %v2136 = vpop.f32.mrb[0].mxu0
    %v2137 = vadd.f32 %v2094, %v2136
    %v2138 = vpop.f32.mrb[0].mxu0
    %v2139 = vadd.f32 %v2095, %v2138
    %2140 = vdwg.mxu0
    %2141 = vmatprep.subr.bf16.mxu0 %v776
    %2142 = vmatpush1.bf16.msra.mxu0 %v775
    %2143 = vmatprep.subr.bf16.mxu0 %v780
    %2144 = vmatpush1.bf16.msra.mxu0 %v779
    %2145 = vmatprep.subr.bf16.mxu0 %v784
    %2146 = vmatpush1.bf16.msra.mxu0 %v783
    %2147 = vmatprep.subr.bf16.mxu0 %v788
    %2148 = vmatpush1.bf16.msra.mxu0 %v787
    %2149 = vmatprep.subr.bf16.mxu0 %v792
    %2150 = vmatpush1.bf16.msra.mxu0 %v791
    %2151 = vmatprep.subr.bf16.mxu0 %v796
    %2152 = vmatpush1.bf16.msra.mxu0 %v795
    %2153 = vmatprep.subr.bf16.mxu0 %v800
    %2154 = vmatpush1.bf16.msra.mxu0 %v799
    %2155 = vmatprep.subr.bf16.mxu0 %v804
    %2156 = vmatpush1.bf16.msra.mxu0 %v803
    %2157 = vmatprep.subr.bf16.mxu0 0
    %2158 = vmatpush1.bf16.msra.mxu0 0
    %2159 = vmatprep.subr.bf16.mxu0 0
    %2160 = vmatpush1.bf16.msra.mxu0 0
    %2161 = vmatprep.subr.bf16.mxu0 0
    %2162 = vmatpush1.bf16.msra.mxu0 0
    %2163 = vmatprep.subr.bf16.mxu0 0
    %2164 = vmatpush1.bf16.msra.mxu0 0
    %2165 = vmatprep.subr.bf16.mxu0 0
    %2166 = vmatpush1.bf16.msra.mxu0 0
    %2167 = vmatprep.subr.bf16.mxu0 0
    %2168 = vmatpush1.bf16.msra.mxu0 0
    %2169 = vmatprep.subr.bf16.mxu0 0
    %2170 = vmatpush1.bf16.msra.mxu0 0
    %2171 = vmatprep.subr.bf16.mxu0 0
    %2172 = vmatpush1.bf16.msra.mxu0 0
    %2173 = vmatprep.mubr.bf16.mxu0 0
    %2174 = vmatmul.mubr.bf16.gmra.mrb[0].mxu0 %v2089
    %v2175 = vpop.f32.mrb[0].mxu0
    %v2176 = vadd.f32 %v2092, %v2175
    %v2177 = vpop.f32.mrb[0].mxu0
    %v2178 = vadd.f32 %v2093, %v2177
    %v2179 = vpop.f32.mrb[0].mxu0
    %v2180 = vadd.f32 %v2096, %v2179
    %v2181 = vpop.f32.mrb[0].mxu0
    %v2182 = vadd.f32 %v2097, %v2181
    %2183 = vdwg.mxu0
    %v2184 = vadd.f32 %v2133, %v927
    %v2185 = vadd.f32 %v2135, %v931
    %v2186 = vadd.f32 %v2176, %v935
    %v2187 = vadd.f32 %v2178, %v939
    %v2188 = vadd.f32 %v2137, %v927
    %v2189 = vadd.f32 %v2139, %v931
    %v2190 = vadd.f32 %v2180, %v935
    %v2191 = vadd.f32 %v2182, %v939
    %2192 = vst [vmem:[#allocation3] sm:$0xff] %v2184
    %2193 = vst [vmem:[#allocation3 + $0x8] sm:$0xff] %v2185
    %2194 = vst [vmem:[#allocation3 + $0x10] sm:$0xff] %v2186
    %2195 = vst [vmem:[#allocation3 + $0x18] sm:$0xff] %v2187
    %2196 = vst [vmem:[#allocation3 + $0x20] sm:$0xff] %v2188
    %2197 = vst [vmem:[#allocation3 + $0x28] sm:$0xff] %v2189
    %2198 = vst [vmem:[#allocation3 + $0x30] sm:$0xff] %v2190
    %2199 = vst [vmem:[#allocation3 + $0x38] sm:$0xff] %v2191
    %v2200 = vld [vmem:[#allocation3] sm:$0xff]
    %v2201 = vld [vmem:[#allocation3 + $0x20] sm:$0xff]
    %v2202 = vxor.u32 %v2200, 2147483648
    %v2203 = vxor.u32 %v2201, 2147483648
    %v2204 = vmul.f32 %v2202, 1.442695
    %v2205 = vpow.pop %v2204
    %v2206 = vmul.f32 %v2203, 1.442695
    %v2207 = vpow.pop %v2206
    %v2208 = vadd.f32 %v2205, 1.0
    %v2209 = vadd.f32 %v2207, 1.0
    %v2210 = vrcp.pop %v2208
    %v2211 = vmul.f32 1.0, %v2210
    %v2212 = vrcp.pop %v2209
    %v2213 = vmul.f32 1.0, %v2212
    %v2214 = vld [vmem:[#allocation3 + $0x8] sm:$0xff]
    %v2215 = vld [vmem:[#allocation3 + $0x28] sm:$0xff]
    %v2216 = vxor.u32 %v2214, 2147483648
    %v2217 = vxor.u32 %v2215, 2147483648
    %v2218 = vmul.f32 %v2216, 1.442695
    %v2219 = vpow.pop %v2218
    %v2220 = vmul.f32 %v2217, 1.442695
    %v2221 = vpow.pop %v2220
    %v2222 = vadd.f32 %v2219, 1.0
    %v2223 = vadd.f32 %v2221, 1.0
    %v2224 = vrcp.pop %v2222
    %v2225 = vmul.f32 1.0, %v2224
    %v2226 = vrcp.pop %v2223
    %v2227 = vmul.f32 1.0, %v2226
    %v2228 = vld [vmem:[#allocation3 + $0x10] sm:$0xff]
    %v2229 = vld [vmem:[#allocation3 + $0x30] sm:$0xff]
    %v2230 = vtanh.pop %v2228
    %v2231 = vtanh.pop %v2229
    %v2232 = vld [vmem:[#allocation3 + $0x18] sm:$0xff]
    %v2233 = vld [vmem:[#allocation3 + $0x38] sm:$0xff]
    %v2234 = vxor.u32 %v2232, 2147483648
    %v2235 = vxor.u32 %v2233, 2147483648
    %v2236 = vmul.f32 %v2234, 1.442695
    %v2237 = vpow.pop %v2236
    %v2238 = vmul.f32 %v2235, 1.442695
    %v2239 = vpow.pop %v2238
    %v2240 = vadd.f32 %v2237, 1.0
    %v2241 = vadd.f32 %v2239, 1.0
    %v2242 = vrcp.pop %v2240
    %v2243 = vmul.f32 1.0, %v2242
    %v2244 = vrcp.pop %v2241
    %v2245 = vmul.f32 1.0, %v2244
    %v2246 = vmul.f32 %v2225, %v2077
    %v2247 = vmul.f32 %v2227, %v2078
    %v2248 = vmul.f32 %v2211, %v2230
    %v2249 = vmul.f32 %v2213, %v2231
    %v2250 = vadd.f32 %v2246, %v2248
    %v2251 = vadd.f32 %v2247, %v2249
    %v2252 = vtanh.pop %v2250
    %v2253 = vtanh.pop %v2251
    %v2254 = vmul.f32 %v2243, %v2252
    %v2255 = vmul.f32 %v2245, %v2253
    %s2256 = sadd.s32 %s656, 6
    %v2257 = vstv %s2256
    %vm2258 = vcmp.lt.s32.totalorder %v2257, %v654
    %vm2259 = vcmp.lt.s32.totalorder %v2257, %v655
    %v2260 = vsel %vm2258, 1, 0
    %v2261 = vsel %vm2259, 1, 0
    %v2262 = vcvt.s32.f32 %v2260
    %v2263 = vcvt.s32.f32 %v2261
    %v2264 = vsub.f32 %v2254, %v2071
    %v2265 = vsub.f32 %v2255, %v2072
    %2267 = vset.pattern.permute.xlu0 0
    %2268 = vperm.xlu0 %2267, %v2262
    %v2269 = vpop.permute.xlu0 %2268
    %2272 = vset.pattern.permute.xlu0 0
    %2273 = vperm.xlu0 %2272, %v2263
    %v2274 = vpop.permute.xlu0 %2273
    %v2276 = vmul.f32 %v2269, %v2264
    %v2277 = vmul.f32 %v2274, %v2265
    %v2278 = vadd.f32 %v2071, %v2276
    %v2279 = vadd.f32 %v2072, %v2277
    %v2280 = vsub.f32 %v2250, %v2077
    %v2281 = vsub.f32 %v2251, %v2078
    %v2282 = vmul.f32 %v2269, %v2280
    %v2283 = vmul.f32 %v2274, %v2281
    %v2284 = vadd.f32 %v2077, %v2282
    %v2285 = vadd.f32 %v2078, %v2283
    %s2286 = scalar_lea.vmem [#allocation12], 96
    %2287 = vst [vmem:[%s2286] sm:$0xff] %v2278
    %2288 = vst [vmem:[%s2286 + $0x8] sm:$0xff] %v2279
    %s2289 = smul.u32 7, 4
    %s2290 = smul.addr %s2289, 8
    %s2291 = scalar_lea.vmem [#allocation2], %s2290
    %v2292 = vld [vmem:[%s2291] sm:$0xff]
    %v2293 = vld [vmem:[%s2291 + $0x8] sm:$0xff]
    %v2294 = vld [vmem:[%s2291 + $0x10] sm:$0xff]
    %v2295 = vld [vmem:[%s2291 + $0x18] sm:$0xff]
    %v2296 = vpack.c.bf16 %v2279, %v2278
    %v2297 = vunpack.c.l.bf16 %v2292
    %v2298 = vunpack.c.l.bf16 %v2293
    %v2299 = vunpack.c.l.bf16 %v2294
    %v2300 = vunpack.c.l.bf16 %v2295
    %v2301 = vunpack.c.h.bf16 %v2292
    %v2302 = vunpack.c.h.bf16 %v2293
    %v2303 = vunpack.c.h.bf16 %v2294
    %v2304 = vunpack.c.h.bf16 %v2295
    %2305 = vmatprep.subr.bf16.mxu0 %v774
    %2306 = vmatpush1.bf16.msra.mxu0 %v773
    %2307 = vmatprep.subr.bf16.mxu0 %v778
    %2308 = vmatpush1.bf16.msra.mxu0 %v777
    %2309 = vmatprep.subr.bf16.mxu0 %v782
    %2310 = vmatpush1.bf16.msra.mxu0 %v781
    %2311 = vmatprep.subr.bf16.mxu0 %v786
    %2312 = vmatpush1.bf16.msra.mxu0 %v785
    %2313 = vmatprep.subr.bf16.mxu0 %v790
    %2314 = vmatpush1.bf16.msra.mxu0 %v789
    %2315 = vmatprep.subr.bf16.mxu0 %v794
    %2316 = vmatpush1.bf16.msra.mxu0 %v793
    %2317 = vmatprep.subr.bf16.mxu0 %v798
    %2318 = vmatpush1.bf16.msra.mxu0 %v797
    %2319 = vmatprep.subr.bf16.mxu0 %v802
    %2320 = vmatpush1.bf16.msra.mxu0 %v801
    %2321 = vmatprep.subr.bf16.mxu0 0
    %2322 = vmatpush1.bf16.msra.mxu0 0
    %2323 = vmatprep.subr.bf16.mxu0 0
    %2324 = vmatpush1.bf16.msra.mxu0 0
    %2325 = vmatprep.subr.bf16.mxu0 0
    %2326 = vmatpush1.bf16.msra.mxu0 0
    %2327 = vmatprep.subr.bf16.mxu0 0
    %2328 = vmatpush1.bf16.msra.mxu0 0
    %2329 = vmatprep.subr.bf16.mxu0 0
    %2330 = vmatpush1.bf16.msra.mxu0 0
    %2331 = vmatprep.subr.bf16.mxu0 0
    %2332 = vmatpush1.bf16.msra.mxu0 0
    %2333 = vmatprep.subr.bf16.mxu0 0
    %2334 = vmatpush1.bf16.msra.mxu0 0
    %2335 = vmatprep.subr.bf16.mxu0 0
    %2336 = vmatpush1.bf16.msra.mxu0 0
    %2337 = vmatprep.mubr.bf16.mxu0 0
    %2338 = vmatmul.mubr.bf16.gmra.mrb[0].mxu0 %v2296
    %v2339 = vpop.f32.mrb[0].mxu0
    %v2340 = vadd.f32 %v2297, %v2339
    %v2341 = vpop.f32.mrb[0].mxu0
    %v2342 = vadd.f32 %v2298, %v2341
    %v2343 = vpop.f32.mrb[0].mxu0
    %v2344 = vadd.f32 %v2301, %v2343
    %v2345 = vpop.f32.mrb[0].mxu0
    %v2346 = vadd.f32 %v2302, %v2345
    %2347 = vdwg.mxu0
    %2348 = vmatprep.subr.bf16.mxu0 %v776
    %2349 = vmatpush1.bf16.msra.mxu0 %v775
    %2350 = vmatprep.subr.bf16.mxu0 %v780
    %2351 = vmatpush1.bf16.msra.mxu0 %v779
    %2352 = vmatprep.subr.bf16.mxu0 %v784
    %2353 = vmatpush1.bf16.msra.mxu0 %v783
    %2354 = vmatprep.subr.bf16.mxu0 %v788
    %2355 = vmatpush1.bf16.msra.mxu0 %v787
    %2356 = vmatprep.subr.bf16.mxu0 %v792
    %2357 = vmatpush1.bf16.msra.mxu0 %v791
    %2358 = vmatprep.subr.bf16.mxu0 %v796
    %2359 = vmatpush1.bf16.msra.mxu0 %v795
    %2360 = vmatprep.subr.bf16.mxu0 %v800
    %2361 = vmatpush1.bf16.msra.mxu0 %v799
    %2362 = vmatprep.subr.bf16.mxu0 %v804
    %2363 = vmatpush1.bf16.msra.mxu0 %v803
    %2364 = vmatprep.subr.bf16.mxu0 0
    %2365 = vmatpush1.bf16.msra.mxu0 0
    %2366 = vmatprep.subr.bf16.mxu0 0
    %2367 = vmatpush1.bf16.msra.mxu0 0
    %2368 = vmatprep.subr.bf16.mxu0 0
    %2369 = vmatpush1.bf16.msra.mxu0 0
    %2370 = vmatprep.subr.bf16.mxu0 0
    %2371 = vmatpush1.bf16.msra.mxu0 0
    %2372 = vmatprep.subr.bf16.mxu0 0
    %2373 = vmatpush1.bf16.msra.mxu0 0
    %2374 = vmatprep.subr.bf16.mxu0 0
    %2375 = vmatpush1.bf16.msra.mxu0 0
    %2376 = vmatprep.subr.bf16.mxu0 0
    %2377 = vmatpush1.bf16.msra.mxu0 0
    %2378 = vmatprep.subr.bf16.mxu0 0
    %2379 = vmatpush1.bf16.msra.mxu0 0
    %2380 = vmatprep.mubr.bf16.mxu0 0
    %2381 = vmatmul.mubr.bf16.gmra.mrb[0].mxu0 %v2296
    %v2382 = vpop.f32.mrb[0].mxu0
    %v2383 = vadd.f32 %v2299, %v2382
    %v2384 = vpop.f32.mrb[0].mxu0
    %v2385 = vadd.f32 %v2300, %v2384
    %v2386 = vpop.f32.mrb[0].mxu0
    %v2387 = vadd.f32 %v2303, %v2386
    %v2388 = vpop.f32.mrb[0].mxu0
    %v2389 = vadd.f32 %v2304, %v2388
    %2390 = vdwg.mxu0
    %v2391 = vadd.f32 %v2340, %v927
    %v2392 = vadd.f32 %v2342, %v931
    %v2393 = vadd.f32 %v2383, %v935
    %v2394 = vadd.f32 %v2385, %v939
    %v2395 = vadd.f32 %v2344, %v927
    %v2396 = vadd.f32 %v2346, %v931
    %v2397 = vadd.f32 %v2387, %v935
    %v2398 = vadd.f32 %v2389, %v939
    %2399 = vst [vmem:[#allocation3] sm:$0xff] %v2391
    %2400 = vst [vmem:[#allocation3 + $0x8] sm:$0xff] %v2392
    %2401 = vst [vmem:[#allocation3 + $0x10] sm:$0xff] %v2393
    %2402 = vst [vmem:[#allocation3 + $0x18] sm:$0xff] %v2394
    %2403 = vst [vmem:[#allocation3 + $0x20] sm:$0xff] %v2395
    %2404 = vst [vmem:[#allocation3 + $0x28] sm:$0xff] %v2396
    %2405 = vst [vmem:[#allocation3 + $0x30] sm:$0xff] %v2397
    %2406 = vst [vmem:[#allocation3 + $0x38] sm:$0xff] %v2398
    %v2407 = vld [vmem:[#allocation3] sm:$0xff]
    %v2408 = vld [vmem:[#allocation3 + $0x20] sm:$0xff]
    %v2409 = vxor.u32 %v2407, 2147483648
    %v2410 = vxor.u32 %v2408, 2147483648
    %v2411 = vmul.f32 %v2409, 1.442695
    %v2412 = vpow.pop %v2411
    %v2413 = vmul.f32 %v2410, 1.442695
    %v2414 = vpow.pop %v2413
    %v2415 = vadd.f32 %v2412, 1.0
    %v2416 = vadd.f32 %v2414, 1.0
    %v2417 = vrcp.pop %v2415
    %v2418 = vmul.f32 1.0, %v2417
    %v2419 = vrcp.pop %v2416
    %v2420 = vmul.f32 1.0, %v2419
    %v2421 = vld [vmem:[#allocation3 + $0x8] sm:$0xff]
    %v2422 = vld [vmem:[#allocation3 + $0x28] sm:$0xff]
    %v2423 = vxor.u32 %v2421, 2147483648
    %v2424 = vxor.u32 %v2422, 2147483648
    %v2425 = vmul.f32 %v2423, 1.442695
    %v2426 = vpow.pop %v2425
    %v2427 = vmul.f32 %v2424, 1.442695
    %v2428 = vpow.pop %v2427
    %v2429 = vadd.f32 %v2426, 1.0
    %v2430 = vadd.f32 %v2428, 1.0
    %v2431 = vrcp.pop %v2429
    %v2432 = vmul.f32 1.0, %v2431
    %v2433 = vrcp.pop %v2430
    %v2434 = vmul.f32 1.0, %v2433
    %v2435 = vld [vmem:[#allocation3 + $0x10] sm:$0xff]
    %v2436 = vld [vmem:[#allocation3 + $0x30] sm:$0xff]
    %v2437 = vtanh.pop %v2435
    %v2438 = vtanh.pop %v2436
    %v2439 = vld [vmem:[#allocation3 + $0x18] sm:$0xff]
    %v2440 = vld [vmem:[#allocation3 + $0x38] sm:$0xff]
    %v2441 = vxor.u32 %v2439, 2147483648
    %v2442 = vxor.u32 %v2440, 2147483648
    %v2443 = vmul.f32 %v2441, 1.442695
    %v2444 = vpow.pop %v2443
    %v2445 = vmul.f32 %v2442, 1.442695
    %v2446 = vpow.pop %v2445
    %v2447 = vadd.f32 %v2444, 1.0
    %v2448 = vadd.f32 %v2446, 1.0
    %v2449 = vrcp.pop %v2447
    %v2450 = vmul.f32 1.0, %v2449
    %v2451 = vrcp.pop %v2448
    %v2452 = vmul.f32 1.0, %v2451
    %v2453 = vmul.f32 %v2432, %v2284
    %v2454 = vmul.f32 %v2434, %v2285
    %v2455 = vmul.f32 %v2418, %v2437
    %v2456 = vmul.f32 %v2420, %v2438
    %v2457 = vadd.f32 %v2453, %v2455
    %v2458 = vadd.f32 %v2454, %v2456
    %v2459 = vtanh.pop %v2457
    %v2460 = vtanh.pop %v2458
    %v2461 = vmul.f32 %v2450, %v2459
    %v2462 = vmul.f32 %v2452, %v2460
    %s2463 = sadd.s32 %s656, 7
    %v2464 = vstv %s2463
    %vm2465 = vcmp.lt.s32.totalorder %v2464, %v654
    %vm2466 = vcmp.lt.s32.totalorder %v2464, %v655
    %v2467 = vsel %vm2465, 1, 0
    %v2468 = vsel %vm2466, 1, 0
    %v2469 = vcvt.s32.f32 %v2467
    %v2470 = vcvt.s32.f32 %v2468
    %v2471 = vsub.f32 %v2461, %v2278
    %v2472 = vsub.f32 %v2462, %v2279
    %2474 = vset.pattern.permute.xlu0 0
    %2475 = vperm.xlu0 %2474, %v2469
    %v2476 = vpop.permute.xlu0 %2475
    %2479 = vset.pattern.permute.xlu0 0
    %2480 = vperm.xlu0 %2479, %v2470
    %v2481 = vpop.permute.xlu0 %2480
    %v2483 = vmul.f32 %v2476, %v2471
    %v2484 = vmul.f32 %v2481, %v2472
    %v2485 = vadd.f32 %v2278, %v2483
    %v2486 = vadd.f32 %v2279, %v2484
    %v2487 = vsub.f32 %v2457, %v2284
    %v2488 = vsub.f32 %v2458, %v2285
    %v2489 = vmul.f32 %v2476, %v2487
    %v2490 = vmul.f32 %v2481, %v2488
    %v2491 = vadd.f32 %v2284, %v2489
    %v2492 = vadd.f32 %v2285, %v2490
    %s2493 = scalar_lea.vmem [#allocation12], 112
    %2494 = vst [vmem:[%s2493] sm:$0xff] %v2485
    %2495 = vst [vmem:[%s2493 + $0x8] sm:$0xff] %v2486
    %2496 = vst [vmem:[#allocation4] sm:$0xff] %v2485
    %2497 = vst [vmem:[#allocation4 + $0x8] sm:$0xff] %v2486
    %2498 = vst [vmem:[#allocation5] sm:$0xff] %v2491
    %2499 = vst [vmem:[#allocation5 + $0x8] sm:$0xff] %v2492
    // Predicated region
    $region38: #{tpu_custom_call.1} parent=1 // pred_check
      %p2500 = pneg %p67
    $region39: #{tpu_custom_call.1} parent=1 // pred_check_branch
      %2502 = sbr.rel (%p2500) target = $region41
    $region40: #{tpu_custom_call.1} parent=1 // pred_region
      %2503 = vst [vmem:[#allocation13] sm:$0xff] %v2485
      %2504 = vst [vmem:[#allocation13 + $0x8] sm:$0xff] %v2486
      %2505 = vst [vmem:[#allocation15] sm:$0xff] %v2491
      %2506 = vst [vmem:[#allocation15 + $0x8] sm:$0xff] %v2492
    $region41: #{tpu_custom_call.1} parent=1 // pred_fallthru
      _
    // Predicated region
    $region42: #{tpu_custom_call.1} parent=1 // pred_check
      _
    $region43: #{tpu_custom_call.1} parent=1 // pred_check_branch
      %2508 = sbr.rel (0) target = $region45
    $region44: #{tpu_custom_call.1} parent=1 // pred_region
      %s2510 = ssub.s32 2048, 2048
      %2511 = vsyncadd [#allocation8], %s2510
      %s2512 = sshll.u32 [#allocation12], 4
      %s2513 = int_to_ptr.vmem [resolvable:$true] %s2512
      %2518 = dma.vmem_to_hbm [thread:$0]  %s2513, 2048, %s5, [#allocation8], 128, 128, 8
    $region45: #{tpu_custom_call.1} parent=1 // pred_fallthru
      _
    // Predicated region
    $region46: #{tpu_custom_call.1} parent=1 // pred_check
      _
    $region47: #{tpu_custom_call.1} parent=1 // pred_check_branch
      %2520 = sbr.rel (0) target = $region49
    $region48: #{tpu_custom_call.1} parent=1 // pred_region
      %s2522 = ssub.s32 256, 256
      %2523 = vsyncadd [#allocation14], %s2522
      %s2524 = sshll.u32 [#allocation13], 4
      %s2525 = int_to_ptr.vmem [resolvable:$true] %s2524
      %2530 = dma.vmem_to_hbm [thread:$0]  %s2525, 256, %s6, [#allocation14], 128, 128, 8
    $region49: #{tpu_custom_call.1} parent=1 // pred_fallthru
      _
    // Predicated region
    $region50: #{tpu_custom_call.1} parent=1 // pred_check
      _
    $region51: #{tpu_custom_call.1} parent=1 // pred_check_branch
      %2532 = sbr.rel (0) target = $region53
    $region52: #{tpu_custom_call.1} parent=1 // pred_region
      %s2534 = ssub.s32 256, 256
      %2535 = vsyncadd [#allocation14], %s2534
      %s2536 = sshll.u32 [#allocation15], 4
      %s2537 = int_to_ptr.vmem [resolvable:$true] %s2536
      %2542 = dma.vmem_to_hbm [thread:$0]  %s2537, 256, %s7, [#allocation14], 128, 128, 8
    $region53: #{tpu_custom_call.1} parent=1 // pred_fallthru
      _
    // Predicated region
    $region54: #{tpu_custom_call.1} parent=1 // pred_check
      _
    $region55: #{tpu_custom_call.1} parent=1 // pred_check_branch
      %2544 = sbr.rel (0) target = $region57
    $region56: #{tpu_custom_call.1} parent=1 // pred_region
      %2545 = dma.done [#allocation8], 2048
    $region57: #{tpu_custom_call.1} parent=1 // pred_fallthru
      _
    // Predicated region
    $region58: #{tpu_custom_call.1} parent=1 // pred_check
      _
    $region59: #{tpu_custom_call.1} parent=1 // pred_check_branch
      %2547 = sbr.rel (0) target = $region61
    $region60: #{tpu_custom_call.1} parent=1 // pred_region
      %2548 = dma.done [#allocation14], 256
    $region61: #{tpu_custom_call.1} parent=1 // pred_fallthru
      _
    // Predicated region
    $region62: #{tpu_custom_call.1} parent=1 // pred_check
      _
    $region63: #{tpu_custom_call.1} parent=1 // pred_check_branch
      %2550 = sbr.rel (0) target = $region65
    $region64: #{tpu_custom_call.1} parent=1 // pred_region
      %2551 = dma.done [#allocation14], 256
    $region65: #{tpu_custom_call.1} parent=1 // pred_fallthru
      _
    %2552 = vsyncpa [#allocation7], 1
    %2553 = vsyncpa [#allocation10], 1
    %2554 = vsyncpa [#allocation8], 1
    %2555 = vsyncpa [#allocation14], 1

// kernel: tpu_custom_call.1
$region0: #{tpu_custom_call.1}
  #allocation0 [shape = 'u32[]', space=smem, size = 0x4, offset = 0x4, fixed_abs, tag = 'smem constant byte address 0x4 - core index']
  #allocation1 [shape = 'u32[144,128]{1,0:T(1,128)}', space=vmem, size = 0x12000, scoped, tag = 'internal scratch']
  #allocation2 [shape = 'bf16[128,512]{1,0:T(16,128)(2,1)}', space=vmem, size = 0x20000, scoped, tag = 'scratch operand']
  #allocation3 [shape = 'f32[16,512]{1,0:T(8,128)}', space=vmem, size = 0x8000, scoped, tag = 'scratch operand']
  #allocation4 [shape = 'f32[16,128]{1,0:T(8,128)}', space=vmem, size = 0x2000, scoped, tag = 'scratch operand']
  #allocation5 [shape = 'f32[16,128]{1,0:T(8,128)}', space=vmem, size = 0x2000, scoped, tag = 'scratch operand']
  %s0 = inlined_call_operand.hbm [shape: bf16[8,16,128], index: 0, kind: input, shape index: {}]
  %s1 = inlined_call_operand.vmem [shape: s32[16,1], index: 1, kind: input, shape index: {}]
  %s2 = inlined_call_operand.hbm [shape: bf16[128,512], index: 2, kind: input, shape index: {}]
  %s3 = inlined_call_operand.hbm [shape: bf16[128,512], index: 3, kind: input, shape index: {}]
  %s4 = inlined_call_operand.vmem [shape: f32[1,512], index: 4, kind: input, shape index: {}]
  %s5 = inlined_call_operand.hbm [shape: f32[8,16,128], index: 5, kind: output, shape index: {0}]
  %s6 = inlined_call_operand.hbm [shape: f32[16,128], index: 6, kind: output, shape index: {1}]
  %s7 = inlined_call_operand.hbm [shape: f32[16,128], index: 7, kind: output, shape index: {2}]
  %8 = xla_tuple %s5, %s6, %s7
  %s9 = sld [smem:[#allocation0]]
  $region66: #{tpu_custom_call.1} parent=0
    _
  %s11 = ssub.s32 1, %s9
  %s12 = scalar_select 0, %s11, %s9
  $region1: #{tpu_custom_call.1} parent=0
    #allocation6 [shape = 'u8[32768]{0}', space=vmem, size = 0x8000, scoped, tag = 'input window, operand 0, single buffered']
    #allocation7 [shape = 's32[1]{0}', space=sflag, size = 0x4, scoped, tag = 'scoped memory for tpu_custom_call.1']
    #allocation8 [shape = 's32[1]{0}', space=sflag, size = 0x4, scoped, tag = 'scoped memory for tpu_custom_call.1']
    #allocation9 [shape = 'u8[131072]{0}', space=vmem, size = 0x20000, scoped, tag = 'input window, operand 2, single buffered']
    #allocation10 [shape = 's32[1]{0}', space=sflag, size = 0x4, scoped, tag = 'scoped memory for tpu_custom_call.1']
    #allocation11 [shape = 'u8[131072]{0}', space=vmem, size = 0x20000, scoped, tag = 'input window, operand 3, single buffered']
    #allocation12 [shape = 'u8[65536]{0}', space=vmem, size = 0x10000, scoped, tag = 'output window, operand 0, single buffered']
    #allocation13 [shape = 'u8[8192]{0}', space=vmem, size = 0x2000, scoped, tag = 'output window, operand 1, single buffered']
    #allocation14 [shape = 's32[1]{0}', space=sflag, size = 0x4, scoped, tag = 'scoped memory for tpu_custom_call.1']
    #allocation15 [shape = 'u8[8192]{0}', space=vmem, size = 0x2000, scoped, tag = 'output window, operand 2, single buffered']
    %13 = vsyncpa [#allocation7], 0
    %14 = vsyncpa [#allocation10], 0
    %15 = vsyncpa [#allocation8], 0
    %16 = vsyncpa [#allocation14], 0
    // Predicated region
    $region2: #{tpu_custom_call.1} parent=1 // pred_check
      _
    $region3: #{tpu_custom_call.1} parent=1 // pred_check_branch
      %18 = sbr.rel (0) target = $region5
    $region4: #{tpu_custom_call.1} parent=1 // pred_region
      %s20 = ssub.s32 1024, 1024
      %21 = vsyncadd [#allocation7], %s20
      %s22 = sshll.u32 [#allocation6], 4
      %s23 = int_to_ptr.vmem [resolvable:$true] %s22
      %28 = dma.hbm_to_vmem [thread:$0]  %s0, 1024, %s23, [#allocation7], 64, 64, 4
    $region5: #{tpu_custom_call.1} parent=1 // pred_fallthru
      _
    // Predicated region
    $region6: #{tpu_custom_call.1} parent=1 // pred_check
      _
    $region7: #{tpu_custom_call.1} parent=1 // pred_check_branch
      %30 = sbr.rel (0) target = $region9
    $region8: #{tpu_custom_call.1} parent=1 // pred_region
      _
    $region9: #{tpu_custom_call.1} parent=1 // pred_fallthru
      _
    // Predicated region
    $region10: #{tpu_custom_call.1} parent=1 // pred_check
      _
    $region11: #{tpu_custom_call.1} parent=1 // pred_check_branch
      %32 = sbr.rel (0) target = $region13
    $region12: #{tpu_custom_call.1} parent=1 // pred_region
      %s34 = ssub.s32 4096, 4096
      %35 = vsyncadd [#allocation10], %s34
      %s36 = sshll.u32 [#allocation9], 4
      %s37 = int_to_ptr.vmem [resolvable:$true] %s36
      %42 = dma.hbm_to_vmem [thread:$0]  %s2, 4096, %s37, [#allocation10], 256, 256, 16
    $region13: #{tpu_custom_call.1} parent=1 // pred_fallthru
      _
    // Predicated region
    $region14: #{tpu_custom_call.1} parent=1 // pred_check
      _
    $region15: #{tpu_custom_call.1} parent=1 // pred_check_branch
      %44 = sbr.rel (0) target = $region17
    $region16: #{tpu_custom_call.1} parent=1 // pred_region
      %s46 = ssub.s32 4096, 4096
      %47 = vsyncadd [#allocation10], %s46
      %s48 = sshll.u32 [#allocation11], 4
      %s49 = int_to_ptr.vmem [resolvable:$true] %s48
      %54 = dma.hbm_to_vmem [thread:$0]  %s3, 4096, %s49, [#allocation10], 256, 256, 16
    $region17: #{tpu_custom_call.1} parent=1 // pred_fallthru
      _
    // Predicated region
    $region18: #{tpu_custom_call.1} parent=1 // pred_check
      _
    $region19: #{tpu_custom_call.1} parent=1 // pred_check_branch
      %56 = sbr.rel (0) target = $region21
    $region20: #{tpu_custom_call.1} parent=1 // pred_region
      _
    $region21: #{tpu_custom_call.1} parent=1 // pred_fallthru
      _
    // Predicated region
    $region22: #{tpu_custom_call.1} parent=1 // pred_check
      _
    $region23: #{tpu_custom_call.1} parent=1 // pred_check_branch
      %58 = sbr.rel (0) target = $region25
    $region24: #{tpu_custom_call.1} parent=1 // pred_region
      %59 = dma.done [#allocation7], 1024
    $region25: #{tpu_custom_call.1} parent=1 // pred_fallthru
      _
    // Predicated region
    $region26: #{tpu_custom_call.1} parent=1 // pred_check
      _
    $region27: #{tpu_custom_call.1} parent=1 // pred_check_branch
      %61 = sbr.rel (0) target = $region29
    $region28: #{tpu_custom_call.1} parent=1 // pred_region
      %62 = dma.done [#allocation10], 4096
    $region29: #{tpu_custom_call.1} parent=1 // pred_fallthru
      _
    // Predicated region
    $region30: #{tpu_custom_call.1} parent=1 // pred_check
      _
    $region31: #{tpu_custom_call.1} parent=1 // pred_check_branch
      %64 = sbr.rel (0) target = $region33
    $region32: #{tpu_custom_call.1} parent=1 // pred_region
      %65 = dma.done [#allocation10], 4096
    $region33: #{tpu_custom_call.1} parent=1 // pred_fallthru
      _
    %p67 = scmp.eq.s32.totalorder 0, 0
    // Predicated region
    $region34: #{tpu_custom_call.1} parent=1 // pred_check
      %p68 = pneg %p67
    $region35: #{tpu_custom_call.1} parent=1 // pred_check_branch
      %70 = sbr.rel (%p68) target = $region37
    $region36: #{tpu_custom_call.1} parent=1 // pred_region
      %71 = vst [vmem:[#allocation4] sm:$0xff] 0.0
      %72 = vst [vmem:[#allocation4 + $0x8] sm:$0xff] 0.0
      %73 = vst [vmem:[#allocation5] sm:$0xff] 0.0
      %74 = vst [vmem:[#allocation5 + $0x8] sm:$0xff] 0.0
    $region37: #{tpu_custom_call.1} parent=1 // pred_fallthru
      _
    %v75 = vld [vmem:[#allocation6] sm:$0xf]
    %v76 = vld [vmem:[#allocation6 + $0x4] sm:$0xf]
    %v77 = vld [vmem:[#allocation6 + $0x8] sm:$0xf]
    %v78 = vld [vmem:[#allocation6 + $0xc] sm:$0xf]
    %v79 = vld [vmem:[#allocation6 + $0x10] sm:$0xf]
    %v80 = vld [vmem:[#allocation6 + $0x14] sm:$0xf]
    %v81 = vld [vmem:[#allocation6 + $0x18] sm:$0xf]
    %v82 = vld [vmem:[#allocation6 + $0x1c] sm:$0xf]
    %v83 = vld [vmem:[#allocation6 + $0x20] sm:$0xf]
    %v84 = vld [vmem:[#allocation6 + $0x24] sm:$0xf]
    %v85 = vld [vmem:[#allocation6 + $0x28] sm:$0xf]
    %v86 = vld [vmem:[#allocation6 + $0x2c] sm:$0xf]
    %v87 = vld [vmem:[#allocation6 + $0x30] sm:$0xf]
    %v88 = vld [vmem:[#allocation6 + $0x34] sm:$0xf]
    %v89 = vld [vmem:[#allocation6 + $0x38] sm:$0xf]
    %v90 = vld [vmem:[#allocation6 + $0x3c] sm:$0xf]
    %v91 = vld [vmem:[#allocation9] sm:$0xff]
    %v92 = vld [vmem:[#allocation9 + $0x8] sm:$0xff]
    %v93 = vld [vmem:[#allocation9 + $0x10] sm:$0xff]
    %v94 = vld [vmem:[#allocation9 + $0x18] sm:$0xff]
    %v95 = vld [vmem:[#allocation9 + $0x20] sm:$0xff]
    %v96 = vld [vmem:[#allocation9 + $0x28] sm:$0xff]
    %v97 = vld [vmem:[#allocation9 + $0x30] sm:$0xff]
    %v98 = vld [vmem:[#allocation9 + $0x38] sm:$0xff]
    %v99 = vld [vmem:[#allocation9 + $0x40] sm:$0xff]
    %v100 = vld [vmem:[#allocation9 + $0x48] sm:$0xff]
    %v101 = vld [vmem:[#allocation9 + $0x50] sm:$0xff]
    %v102 = vld [vmem:[#allocation9 + $0x58] sm:$0xff]
    %v103 = vld [vmem:[#allocation9 + $0x60] sm:$0xff]
    %v104 = vld [vmem:[#allocation9 + $0x68] sm:$0xff]
    %v105 = vld [vmem:[#allocation9 + $0x70] sm:$0xff]
    %v106 = vld [vmem:[#allocation9 + $0x78] sm:$0xff]
    %v107 = vld [vmem:[#allocation9 + $0x80] sm:$0xff]
    %v108 = vld [vmem:[#allocation9 + $0x88] sm:$0xff]
    %v109 = vld [vmem:[#allocation9 + $0x90] sm:$0xff]
    %v110 = vld [vmem:[#allocation9 + $0x98] sm:$0xff]
    %v111 = vld [vmem:[#allocation9 + $0xa0] sm:$0xff]
    %v112 = vld [vmem:[#allocation9 + $0xa8] sm:$0xff]
    %v113 = vld [vmem:[#allocation9 + $0xb0] sm:$0xff]
    %v114 = vld [vmem:[#allocation9 + $0xb8] sm:$0xff]
    %v115 = vld [vmem:[#allocation9 + $0xc0] sm:$0xff]
    %v116 = vld [vmem:[#allocation9 + $0xc8] sm:$0xff]
    %v117 = vld [vmem:[#allocation9 + $0xd0] sm:$0xff]
    %v118 = vld [vmem:[#allocation9 + $0xd8] sm:$0xff]
    %v119 = vld [vmem:[#allocation9 + $0xe0] sm:$0xff]
    %v120 = vld [vmem:[#allocation9 + $0xe8] sm:$0xff]
    %v121 = vld [vmem:[#allocation9 + $0xf0] sm:$0xff]
    %v122 = vld [vmem:[#allocation9 + $0xf8] sm:$0xff]
    %v139 = vunpack.c.l.b16 %v75
    %v140 = vunpack.c.l.b16 %v76
    %v141 = vunpack.c.l.b16 %v77
    %v142 = vunpack.c.l.b16 %v78
    %v143 = vunpack.c.l.b16 %v79
    %v144 = vunpack.c.l.b16 %v80
    %v145 = vunpack.c.l.b16 %v81
    %v146 = vunpack.c.l.b16 %v82
    %v147 = vunpack.c.l.b16 %v83
    %v148 = vunpack.c.l.b16 %v84
    %v149 = vunpack.c.l.b16 %v85
    %v150 = vunpack.c.l.b16 %v86
    %v151 = vunpack.c.l.b16 %v87
    %v152 = vunpack.c.l.b16 %v88
    %v153 = vunpack.c.l.b16 %v89
    %v154 = vunpack.c.l.b16 %v90
    %v155 = vpack.c.b16 %v140, %v139
    %v156 = vpack.c.b16 %v142, %v141
    %v157 = vpack.c.b16 %v144, %v143
    %v158 = vpack.c.b16 %v146, %v145
    %v159 = vpack.c.b16 %v148, %v147
    %v160 = vpack.c.b16 %v150, %v149
    %v161 = vpack.c.b16 %v152, %v151
    %v162 = vpack.c.b16 %v154, %v153
    %v203 = vunpack.c.l.b16 %v91
    %v204 = vunpack.c.h.b16 %v91
    %v205 = vunpack.c.l.b16 %v92
    %v206 = vunpack.c.h.b16 %v92
    %v207 = vunpack.c.l.b16 %v93
    %v208 = vunpack.c.h.b16 %v93
    %v209 = vunpack.c.l.b16 %v94
    %v210 = vunpack.c.h.b16 %v94
    %v211 = vunpack.c.l.b16 %v95
    %v212 = vunpack.c.h.b16 %v95
    %v213 = vunpack.c.l.b16 %v96
    %v214 = vunpack.c.h.b16 %v96
    %v215 = vunpack.c.l.b16 %v97
    %v216 = vunpack.c.h.b16 %v97
    %v217 = vunpack.c.l.b16 %v98
    %v218 = vunpack.c.h.b16 %v98
    %v219 = vunpack.c.l.b16 %v99
    %v220 = vunpack.c.h.b16 %v99
    %v221 = vunpack.c.l.b16 %v100
    %v222 = vunpack.c.h.b16 %v100
    %v223 = vunpack.c.l.b16 %v101
    %v224 = vunpack.c.h.b16 %v101
    %v225 = vunpack.c.l.b16 %v102
    %v226 = vunpack.c.h.b16 %v102
    %v227 = vunpack.c.l.b16 %v103
    %v228 = vunpack.c.h.b16 %v103
    %v229 = vunpack.c.l.b16 %v104
    %v230 = vunpack.c.h.b16 %v104
    %v231 = vunpack.c.l.b16 %v105
    %v232 = vunpack.c.h.b16 %v105
    %v233 = vunpack.c.l.b16 %v106
    %v234 = vunpack.c.h.b16 %v106
    %v235 = vunpack.c.l.b16 %v107
    %v236 = vunpack.c.h.b16 %v107
    %v237 = vunpack.c.l.b16 %v108
    %v238 = vunpack.c.h.b16 %v108
    %v239 = vunpack.c.l.b16 %v109
    %v240 = vunpack.c.h.b16 %v109
    %v241 = vunpack.c.l.b16 %v110
    %v242 = vunpack.c.h.b16 %v110
    %v243 = vunpack.c.l.b16 %v111
    %v244 = vunpack.c.h.b16 %v111
    %v245 = vunpack.c.l.b16 %v112
    %v246 = vunpack.c.h.b16 %v112
    %v247 = vunpack.c.l.b16 %v113
    %v248 = vunpack.c.h.b16 %v113
    %v249 = vunpack.c.l.b16 %v114
    %v250 = vunpack.c.h.b16 %v114
    %v251 = vunpack.c.l.b16 %v115
    %v252 = vunpack.c.h.b16 %v115
    %v253 = vunpack.c.l.b16 %v116
    %v254 = vunpack.c.h.b16 %v116
    %v255 = vunpack.c.l.b16 %v117
    %v256 = vunpack.c.h.b16 %v117
    %v257 = vunpack.c.l.b16 %v118
    %v258 = vunpack.c.h.b16 %v118
    %v259 = vunpack.c.l.b16 %v119
    %v260 = vunpack.c.h.b16 %v119
    %v261 = vunpack.c.l.b16 %v120
    %v262 = vunpack.c.h.b16 %v120
    %v263 = vunpack.c.l.b16 %v121
    %v264 = vunpack.c.h.b16 %v121
    %v265 = vunpack.c.l.b16 %v122
    %v266 = vunpack.c.h.b16 %v122
    %v267 = vpack.c.b16 %v207, %v203
    %v268 = vpack.c.b16 %v208, %v204
    %v269 = vpack.c.b16 %v209, %v205
    %v270 = vpack.c.b16 %v210, %v206
    %v271 = vpack.c.b16 %v215, %v211
    %v272 = vpack.c.b16 %v216, %v212
    %v273 = vpack.c.b16 %v217, %v213
    %v274 = vpack.c.b16 %v218, %v214
    %v275 = vpack.c.b16 %v223, %v219
    %v276 = vpack.c.b16 %v224, %v220
    %v277 = vpack.c.b16 %v225, %v221
    %v278 = vpack.c.b16 %v226, %v222
    %v279 = vpack.c.b16 %v231, %v227
    %v280 = vpack.c.b16 %v232, %v228
    %v281 = vpack.c.b16 %v233, %v229
    %v282 = vpack.c.b16 %v234, %v230
    %v283 = vpack.c.b16 %v239, %v235
    %v284 = vpack.c.b16 %v240, %v236
    %v285 = vpack.c.b16 %v241, %v237
    %v286 = vpack.c.b16 %v242, %v238
    %v287 = vpack.c.b16 %v247, %v243
    %v288 = vpack.c.b16 %v248, %v244
    %v289 = vpack.c.b16 %v249, %v245
    %v290 = vpack.c.b16 %v250, %v246
    %v291 = vpack.c.b16 %v255, %v251
    %v292 = vpack.c.b16 %v256, %v252
    %v293 = vpack.c.b16 %v257, %v253
    %v294 = vpack.c.b16 %v258, %v254
    %v295 = vpack.c.b16 %v263, %v259
    %v296 = vpack.c.b16 %v264, %v260
    %v297 = vpack.c.b16 %v265, %v261
    %v298 = vpack.c.b16 %v266, %v262
    %331 = vmatprep.subr.bf16.mxu0 %v268
    %332 = vmatpush1.bf16.msra.mxu0 %v267
    %333 = vmatprep.subr.bf16.mxu0 %v272
    %334 = vmatpush1.bf16.msra.mxu0 %v271
    %335 = vmatprep.subr.bf16.mxu0 %v276
    %336 = vmatpush1.bf16.msra.mxu0 %v275
    %337 = vmatprep.subr.bf16.mxu0 %v280
    %338 = vmatpush1.bf16.msra.mxu0 %v279
    %339 = vmatprep.subr.bf16.mxu0 %v284
    %340 = vmatpush1.bf16.msra.mxu0 %v283
    %341 = vmatprep.subr.bf16.mxu0 %v288
    %342 = vmatpush1.bf16.msra.mxu0 %v287
    %343 = vmatprep.subr.bf16.mxu0 %v292
    %344 = vmatpush1.bf16.msra.mxu0 %v291
    %345 = vmatprep.subr.bf16.mxu0 %v296
    %346 = vmatpush1.bf16.msra.mxu0 %v295
    %347 = vmatprep.subr.bf16.mxu0 0
    %348 = vmatpush1.bf16.msra.mxu0 0
    %349 = vmatprep.subr.bf16.mxu0 0
    %350 = vmatpush1.bf16.msra.mxu0 0
    %351 = vmatprep.subr.bf16.mxu0 0
    %352 = vmatpush1.bf16.msra.mxu0 0
    %353 = vmatprep.subr.bf16.mxu0 0
    %354 = vmatpush1.bf16.msra.mxu0 0
    %355 = vmatprep.subr.bf16.mxu0 0
    %356 = vmatpush1.bf16.msra.mxu0 0
    %357 = vmatprep.subr.bf16.mxu0 0
    %358 = vmatpush1.bf16.msra.mxu0 0
    %359 = vmatprep.subr.bf16.mxu0 0
    %360 = vmatpush1.bf16.msra.mxu0 0
    %361 = vmatprep.subr.bf16.mxu0 0
    %362 = vmatpush1.bf16.msra.mxu0 0
    %363 = vmatprep.mubr.bf16.mxu0 0
    %364 = vmatmul.mubr.bf16.gmra.mrb[0].mxu0 %v155
    %v365 = vpop.f32.mrb[0].mxu0
    %v366 = vadd.f32 0.0, %v365
    %v367 = vpop.f32.mrb[0].mxu0
    %v368 = vadd.f32 0.0, %v367
    %v369 = vpop.f32.mrb[0].mxu0
    %v370 = vadd.f32 0.0, %v369
    %v371 = vpop.f32.mrb[0].mxu0
    %v372 = vadd.f32 0.0, %v371
    %373 = vmatprep.mubr.bf16.mxu0 0
    %374 = vmatmul.mubr.bf16.gmra.mrb[0].mxu0 %v156
    %v375 = vpop.f32.mrb[0].mxu0
    %v376 = vadd.f32 0.0, %v375
    %v377 = vpop.f32.mrb[0].mxu0
    %v378 = vadd.f32 0.0, %v377
    %v379 = vpop.f32.mrb[0].mxu0
    %v380 = vadd.f32 0.0, %v379
    %v381 = vpop.f32.mrb[0].mxu0
    %v382 = vadd.f32 0.0, %v381
    %383 = vmatprep.mubr.bf16.mxu0 0
    %384 = vmatmul.mubr.bf16.gmra.mrb[0].mxu0 %v157
    %v385 = vpop.f32.mrb[0].mxu0
    %v386 = vadd.f32 0.0, %v385
    %v387 = vpop.f32.mrb[0].mxu0
    %v388 = vadd.f32 0.0, %v387
    %v389 = vpop.f32.mrb[0].mxu0
    %v390 = vadd.f32 0.0, %v389
    %v391 = vpop.f32.mrb[0].mxu0
    %v392 = vadd.f32 0.0, %v391
    %393 = vmatprep.mubr.bf16.mxu0 0
    %394 = vmatmul.mubr.bf16.gmra.mrb[0].mxu0 %v158
    %v395 = vpop.f32.mrb[0].mxu0
    %v396 = vadd.f32 0.0, %v395
    %v397 = vpop.f32.mrb[0].mxu0
    %v398 = vadd.f32 0.0, %v397
    %v399 = vpop.f32.mrb[0].mxu0
    %v400 = vadd.f32 0.0, %v399
    %v401 = vpop.f32.mrb[0].mxu0
    %v402 = vadd.f32 0.0, %v401
    %403 = vmatprep.mubr.bf16.mxu0 0
    %404 = vmatmul.mubr.bf16.gmra.mrb[0].mxu0 %v159
    %v405 = vpop.f32.mrb[0].mxu0
    %v406 = vadd.f32 0.0, %v405
    %v407 = vpop.f32.mrb[0].mxu0
    %v408 = vadd.f32 0.0, %v407
    %v409 = vpop.f32.mrb[0].mxu0
    %v410 = vadd.f32 0.0, %v409
    %v411 = vpop.f32.mrb[0].mxu0
    %v412 = vadd.f32 0.0, %v411
    %413 = vmatprep.mubr.bf16.mxu0 0
    %414 = vmatmul.mubr.bf16.gmra.mrb[0].mxu0 %v160
    %v415 = vpop.f32.mrb[0].mxu0
    %v416 = vadd.f32 0.0, %v415
    %v417 = vpop.f32.mrb[0].mxu0
    %v418 = vadd.f32 0.0, %v417
    %v419 = vpop.f32.mrb[0].mxu0
    %v420 = vadd.f32 0.0, %v419
    %v421 = vpop.f32.mrb[0].mxu0
    %v422 = vadd.f32 0.0, %v421
    %423 = vmatprep.mubr.bf16.mxu0 0
    %424 = vmatmul.mubr.bf16.gmra.mrb[0].mxu0 %v161
    %v425 = vpop.f32.mrb[0].mxu0
    %v426 = vadd.f32 0.0, %v425
    %v427 = vpop.f32.mrb[0].mxu0
    %v428 = vadd.f32 0.0, %v427
    %v429 = vpop.f32.mrb[0].mxu0
    %v430 = vadd.f32 0.0, %v429
    %v431 = vpop.f32.mrb[0].mxu0
    %v432 = vadd.f32 0.0, %v431
    %433 = vmatprep.mubr.bf16.mxu0 0
    %434 = vmatmul.mubr.bf16.gmra.mrb[0].mxu0 %v162
    %v435 = vpop.f32.mrb[0].mxu0
    %v436 = vadd.f32 0.0, %v435
    %v437 = vpop.f32.mrb[0].mxu0
    %v438 = vadd.f32 0.0, %v437
    %v439 = vpop.f32.mrb[0].mxu0
    %v440 = vadd.f32 0.0, %v439
    %v441 = vpop.f32.mrb[0].mxu0
    %v442 = vadd.f32 0.0, %v441
    %443 = vdwg.mxu0
    %444 = vmatprep.subr.bf16.mxu0 %v270
    %445 = vmatpush1.bf16.msra.mxu0 %v269
    %446 = vmatprep.subr.bf16.mxu0 %v274
    %447 = vmatpush1.bf16.msra.mxu0 %v273
    %448 = vmatprep.subr.bf16.mxu0 %v278
    %449 = vmatpush1.bf16.msra.mxu0 %v277
    %450 = vmatprep.subr.bf16.mxu0 %v282
    %451 = vmatpush1.bf16.msra.mxu0 %v281
    %452 = vmatprep.subr.bf16.mxu0 %v286
    %453 = vmatpush1.bf16.msra.mxu0 %v285
    %454 = vmatprep.subr.bf16.mxu0 %v290
    %455 = vmatpush1.bf16.msra.mxu0 %v289
    %456 = vmatprep.subr.bf16.mxu0 %v294
    %457 = vmatpush1.bf16.msra.mxu0 %v293
    %458 = vmatprep.subr.bf16.mxu0 %v298
    %459 = vmatpush1.bf16.msra.mxu0 %v297
    %460 = vmatprep.subr.bf16.mxu0 0
    %461 = vmatpush1.bf16.msra.mxu0 0
    %462 = vmatprep.subr.bf16.mxu0 0
    %463 = vmatpush1.bf16.msra.mxu0 0
    %464 = vmatprep.subr.bf16.mxu0 0
    %465 = vmatpush1.bf16.msra.mxu0 0
    %466 = vmatprep.subr.bf16.mxu0 0
    %467 = vmatpush1.bf16.msra.mxu0 0
    %468 = vmatprep.subr.bf16.mxu0 0
    %469 = vmatpush1.bf16.msra.mxu0 0
    %470 = vmatprep.subr.bf16.mxu0 0
    %471 = vmatpush1.bf16.msra.mxu0 0
    %472 = vmatprep.subr.bf16.mxu0 0
    %473 = vmatpush1.bf16.msra.mxu0 0
    %474 = vmatprep.subr.bf16.mxu0 0
    %475 = vmatpush1.bf16.msra.mxu0 0
    %476 = vmatprep.mubr.bf16.mxu0 0
    %477 = vmatmul.mubr.bf16.gmra.mrb[0].mxu0 %v155
    %v478 = vpop.f32.mrb[0].mxu0
    %v479 = vadd.f32 0.0, %v478
    %v480 = vpop.f32.mrb[0].mxu0
    %v481 = vadd.f32 0.0, %v480
    %v482 = vpop.f32.mrb[0].mxu0
    %v483 = vadd.f32 0.0, %v482
    %v484 = vpop.f32.mrb[0].mxu0
    %v485 = vadd.f32 0.0, %v484
    %486 = vmatprep.mubr.bf16.mxu0 0
    %487 = vmatmul.mubr.bf16.gmra.mrb[0].mxu0 %v156
    %v488 = vpop.f32.mrb[0].mxu0
    %v489 = vadd.f32 0.0, %v488
    %v490 = vpop.f32.mrb[0].mxu0
    %v491 = vadd.f32 0.0, %v490
    %v492 = vpop.f32.mrb[0].mxu0
    %v493 = vadd.f32 0.0, %v492
    %v494 = vpop.f32.mrb[0].mxu0
    %v495 = vadd.f32 0.0, %v494
    %496 = vmatprep.mubr.bf16.mxu0 0
    %497 = vmatmul.mubr.bf16.gmra.mrb[0].mxu0 %v157
    %v498 = vpop.f32.mrb[0].mxu0
    %v499 = vadd.f32 0.0, %v498
    %v500 = vpop.f32.mrb[0].mxu0
    %v501 = vadd.f32 0.0, %v500
    %v502 = vpop.f32.mrb[0].mxu0
    %v503 = vadd.f32 0.0, %v502
    %v504 = vpop.f32.mrb[0].mxu0
    %v505 = vadd.f32 0.0, %v504
    %506 = vmatprep.mubr.bf16.mxu0 0
    %507 = vmatmul.mubr.bf16.gmra.mrb[0].mxu0 %v158
    %v508 = vpop.f32.mrb[0].mxu0
    %v509 = vadd.f32 0.0, %v508
    %v510 = vpop.f32.mrb[0].mxu0
    %v511 = vadd.f32 0.0, %v510
    %v512 = vpop.f32.mrb[0].mxu0
    %v513 = vadd.f32 0.0, %v512
    %v514 = vpop.f32.mrb[0].mxu0
    %v515 = vadd.f32 0.0, %v514
    %516 = vmatprep.mubr.bf16.mxu0 0
    %517 = vmatmul.mubr.bf16.gmra.mrb[0].mxu0 %v159
    %v518 = vpop.f32.mrb[0].mxu0
    %v519 = vadd.f32 0.0, %v518
    %v520 = vpop.f32.mrb[0].mxu0
    %v521 = vadd.f32 0.0, %v520
    %v522 = vpop.f32.mrb[0].mxu0
    %v523 = vadd.f32 0.0, %v522
    %v524 = vpop.f32.mrb[0].mxu0
    %v525 = vadd.f32 0.0, %v524
    %526 = vmatprep.mubr.bf16.mxu0 0
    %527 = vmatmul.mubr.bf16.gmra.mrb[0].mxu0 %v160
    %v528 = vpop.f32.mrb[0].mxu0
    %v529 = vadd.f32 0.0, %v528
    %v530 = vpop.f32.mrb[0].mxu0
    %v531 = vadd.f32 0.0, %v530
    %v532 = vpop.f32.mrb[0].mxu0
    %v533 = vadd.f32 0.0, %v532
    %v534 = vpop.f32.mrb[0].mxu0
    %v535 = vadd.f32 0.0, %v534
    %536 = vmatprep.mubr.bf16.mxu0 0
    %537 = vmatmul.mubr.bf16.gmra.mrb[0].mxu0 %v161
    %v538 = vpop.f32.mrb[0].mxu0
    %v539 = vadd.f32 0.0, %v538
    %v540 = vpop.f32.mrb[0].mxu0
    %v541 = vadd.f32 0.0, %v540
    %v542 = vpop.f32.mrb[0].mxu0
    %v543 = vadd.f32 0.0, %v542
    %v544 = vpop.f32.mrb[0].mxu0
    %v545 = vadd.f32 0.0, %v544
    %546 = vmatprep.mubr.bf16.mxu0 0
    %547 = vmatmul.mubr.bf16.gmra.mrb[0].mxu0 %v162
    %v548 = vpop.f32.mrb[0].mxu0
    %v549 = vadd.f32 0.0, %v548
    %v550 = vpop.f32.mrb[0].mxu0
    %v551 = vadd.f32 0.0, %v550
    %v552 = vpop.f32.mrb[0].mxu0
    %v553 = vadd.f32 0.0, %v552
    %v554 = vpop.f32.mrb[0].mxu0
    %v555 = vadd.f32 0.0, %v554
    %556 = vdwg.mxu0
    %v557 = vpack.c.bf16 %v370, %v366
    %v558 = vpack.c.bf16 %v372, %v368
    %v559 = vpack.c.bf16 %v483, %v479
    %v560 = vpack.c.bf16 %v485, %v481
    %v561 = vpack.c.bf16 %v380, %v376
    %v562 = vpack.c.bf16 %v382, %v378
    %v563 = vpack.c.bf16 %v493, %v489
    %v564 = vpack.c.bf16 %v495, %v491
    %v565 = vpack.c.bf16 %v390, %v386
    %v566 = vpack.c.bf16 %v392, %v388
    %v567 = vpack.c.bf16 %v503, %v499
    %v568 = vpack.c.bf16 %v505, %v501
    %v569 = vpack.c.bf16 %v400, %v396
    %v570 = vpack.c.bf16 %v402, %v398
    %v571 = vpack.c.bf16 %v513, %v509
    %v572 = vpack.c.bf16 %v515, %v511
    %v573 = vpack.c.bf16 %v410, %v406
    %v574 = vpack.c.bf16 %v412, %v408
    %v575 = vpack.c.bf16 %v523, %v519
    %v576 = vpack.c.bf16 %v525, %v521
    %v577 = vpack.c.bf16 %v420, %v416
    %v578 = vpack.c.bf16 %v422, %v418
    %v579 = vpack.c.bf16 %v533, %v529
    %v580 = vpack.c.bf16 %v535, %v531
    %v581 = vpack.c.bf16 %v430, %v426
    %v582 = vpack.c.bf16 %v432, %v428
    %v583 = vpack.c.bf16 %v543, %v539
    %v584 = vpack.c.bf16 %v545, %v541
    %v585 = vpack.c.bf16 %v440, %v436
    %v586 = vpack.c.bf16 %v442, %v438
    %v587 = vpack.c.bf16 %v553, %v549
    %v588 = vpack.c.bf16 %v555, %v551
    %589 = vst [vmem:[#allocation2] sm:$0xff] %v557
    %590 = vst [vmem:[#allocation2 + $0x8] sm:$0xff] %v558
    %591 = vst [vmem:[#allocation2 + $0x10] sm:$0xff] %v559
    %592 = vst [vmem:[#allocation2 + $0x18] sm:$0xff] %v560
    %593 = vst [vmem:[#allocation2 + $0x20] sm:$0xff] %v561
    %594 = vst [vmem:[#allocation2 + $0x28] sm:$0xff] %v562
    %595 = vst [vmem:[#allocation2 + $0x30] sm:$0xff] %v563
    %596 = vst [vmem:[#allocation2 + $0x38] sm:$0xff] %v564
    %597 = vst [vmem:[#allocation2 + $0x40] sm:$0xff] %v565
    %598 = vst [vmem:[#allocation2 + $0x48] sm:$0xff] %v566
    %599 = vst [vmem:[#allocation2 + $0x50] sm:$0xff] %v567
    %600 = vst [vmem:[#allocation2 + $0x58] sm:$0xff] %v568
    %601 = vst [vmem:[#allocation2 + $0x60] sm:$0xff] %v569
    %602 = vst [vmem:[#allocation2 + $0x68] sm:$0xff] %v570
    %603 = vst [vmem:[#allocation2 + $0x70] sm:$0xff] %v571
    %604 = vst [vmem:[#allocation2 + $0x78] sm:$0xff] %v572
    %605 = vst [vmem:[#allocation2 + $0x80] sm:$0xff] %v573
    %606 = vst [vmem:[#allocation2 + $0x88] sm:$0xff] %v574
    %607 = vst [vmem:[#allocation2 + $0x90] sm:$0xff] %v575
    %608 = vst [vmem:[#allocation2 + $0x98] sm:$0xff] %v576
    %609 = vst [vmem:[#allocation2 + $0xa0] sm:$0xff] %v577
    %610 = vst [vmem:[#allocation2 + $0xa8] sm:$0xff] %v578
    %611 = vst [vmem:[#allocation2 + $0xb0] sm:$0xff] %v579
    %612 = vst [vmem:[#allocation2 + $0xb8] sm:$0xff] %v580
    %613 = vst [vmem:[#allocation2 + $0xc0] sm:$0xff] %v581
    %614 = vst [vmem:[#allocation2 + $0xc8] sm:$0xff] %v582
    %615 = vst [vmem:[#allocation2 + $0xd0] sm:$0xff] %v583
    %616 = vst [vmem:[#allocation2 + $0xd8] sm:$0xff] %v584
    %617 = vst [vmem:[#allocation2 + $0xe0] sm:$0xff] %v585
    %618 = vst [vmem:[#allocation2 + $0xe8] sm:$0xff] %v586
    %619 = vst [vmem:[#allocation2 + $0xf0] sm:$0xff] %v587
    %620 = vst [vmem:[#allocation2 + $0xf8] sm:$0xff] %v588
    %v621 = vld [vmem:[#allocation11] sm:$0xff]
    %v622 = vld [vmem:[#allocation11 + $0x8] sm:$0xff]
    %v623 = vld [vmem:[#allocation11 + $0x10] sm:$0xff]
    %v624 = vld [vmem:[#allocation11 + $0x18] sm:$0xff]
    %v625 = vld [vmem:[#allocation11 + $0x20] sm:$0xff]
    %v626 = vld [vmem:[#allocation11 + $0x28] sm:$0xff]
    %v627 = vld [vmem:[#allocation11 + $0x30] sm:$0xff]
    %v628 = vld [vmem:[#allocation11 + $0x38] sm:$0xff]
    %v629 = vld [vmem:[#allocation11 + $0x40] sm:$0xff]
    %v630 = vld [vmem:[#allocation11 + $0x48] sm:$0xff]
    %v631 = vld [vmem:[#allocation11 + $0x50] sm:$0xff]
    %v632 = vld [vmem:[#allocation11 + $0x58] sm:$0xff]
    %v633 = vld [vmem:[#allocation11 + $0x60] sm:$0xff]
    %v634 = vld [vmem:[#allocation11 + $0x68] sm:$0xff]
    %v635 = vld [vmem:[#allocation11 + $0x70] sm:$0xff]
    %v636 = vld [vmem:[#allocation11 + $0x78] sm:$0xff]
    %v637 = vld [vmem:[#allocation11 + $0x80] sm:$0xff]
    %v638 = vld [vmem:[#allocation11 + $0x88] sm:$0xff]
    %v639 = vld [vmem:[#allocation11 + $0x90] sm:$0xff]
    %v640 = vld [vmem:[#allocation11 + $0x98] sm:$0xff]
    %v641 = vld [vmem:[#allocation11 + $0xa0] sm:$0xff]
    %v642 = vld [vmem:[#allocation11 + $0xa8] sm:$0xff]
    %v643 = vld [vmem:[#allocation11 + $0xb0] sm:$0xff]
    %v644 = vld [vmem:[#allocation11 + $0xb8] sm:$0xff]
    %v645 = vld [vmem:[#allocation11 + $0xc0] sm:$0xff]
    %v646 = vld [vmem:[#allocation11 + $0xc8] sm:$0xff]
    %v647 = vld [vmem:[#allocation11 + $0xd0] sm:$0xff]
    %v648 = vld [vmem:[#allocation11 + $0xd8] sm:$0xff]
    %v649 = vld [vmem:[#allocation11 + $0xe0] sm:$0xff]
    %v650 = vld [vmem:[#allocation11 + $0xe8] sm:$0xff]
    %v651 = vld [vmem:[#allocation11 + $0xf0] sm:$0xff]
    %v652 = vld [vmem:[#allocation11 + $0xf8] sm:$0xff]
    %v653 = vld [vmem:[%s4] sm:$0xf]
    %v654 = vld [vmem:[%s1] sm:$0xff]
    %v655 = vld [vmem:[%s1 + $0x8] sm:$0xff]
    %s656 = smul.u32 0, 8
    %v657 = vld [vmem:[#allocation4] sm:$0xff]
    %v658 = vld [vmem:[#allocation4 + $0x8] sm:$0xff]
    %v659 = vld [vmem:[#allocation5] sm:$0xff]
    %v660 = vld [vmem:[#allocation5 + $0x8] sm:$0xff]
    %s661 = smul.u32 0, 4
    %s662 = smul.addr %s661, 8
    %s663 = scalar_lea.vmem [#allocation2], %s662
    %v664 = vld [vmem:[%s663] sm:$0xff]
    %v665 = vld [vmem:[%s663 + $0x8] sm:$0xff]
    %v666 = vld [vmem:[%s663 + $0x10] sm:$0xff]
    %v667 = vld [vmem:[%s663 + $0x18] sm:$0xff]
    %v668 = vpack.c.bf16 %v658, %v657
    %v669 = vunpack.c.l.bf16 %v664
    %v670 = vunpack.c.l.bf16 %v665
    %v671 = vunpack.c.l.bf16 %v666
    %v672 = vunpack.c.l.bf16 %v667
    %v673 = vunpack.c.h.bf16 %v664
    %v674 = vunpack.c.h.bf16 %v665
    %v675 = vunpack.c.h.bf16 %v666
    %v676 = vunpack.c.h.bf16 %v667
    %v709 = vunpack.c.l.b16 %v621
    %v710 = vunpack.c.h.b16 %v621
    %v711 = vunpack.c.l.b16 %v622
    %v712 = vunpack.c.h.b16 %v622
    %v713 = vunpack.c.l.b16 %v623
    %v714 = vunpack.c.h.b16 %v623
    %v715 = vunpack.c.l.b16 %v624
    %v716 = vunpack.c.h.b16 %v624
    %v717 = vunpack.c.l.b16 %v625
    %v718 = vunpack.c.h.b16 %v625
    %v719 = vunpack.c.l.b16 %v626
    %v720 = vunpack.c.h.b16 %v626
    %v721 = vunpack.c.l.b16 %v627
    %v722 = vunpack.c.h.b16 %v627
    %v723 = vunpack.c.l.b16 %v628
    %v724 = vunpack.c.h.b16 %v628
    %v725 = vunpack.c.l.b16 %v629
    %v726 = vunpack.c.h.b16 %v629
    %v727 = vunpack.c.l.b16 %v630
    %v728 = vunpack.c.h.b16 %v630
    %v729 = vunpack.c.l.b16 %v631
    %v730 = vunpack.c.h.b16 %v631
    %v731 = vunpack.c.l.b16 %v632
    %v732 = vunpack.c.h.b16 %v632
    %v733 = vunpack.c.l.b16 %v633
    %v734 = vunpack.c.h.b16 %v633
    %v735 = vunpack.c.l.b16 %v634
    %v736 = vunpack.c.h.b16 %v634
    %v737 = vunpack.c.l.b16 %v635
    %v738 = vunpack.c.h.b16 %v635
    %v739 = vunpack.c.l.b16 %v636
    %v740 = vunpack.c.h.b16 %v636
    %v741 = vunpack.c.l.b16 %v637
    %v742 = vunpack.c.h.b16 %v637
    %v743 = vunpack.c.l.b16 %v638
    %v744 = vunpack.c.h.b16 %v638
    %v745 = vunpack.c.l.b16 %v639
    %v746 = vunpack.c.h.b16 %v639
    %v747 = vunpack.c.l.b16 %v640
    %v748 = vunpack.c.h.b16 %v640
    %v749 = vunpack.c.l.b16 %v641
    %v750 = vunpack.c.h.b16 %v641
    %v751 = vunpack.c.l.b16 %v642
    %v752 = vunpack.c.h.b16 %v642
    %v753 = vunpack.c.l.b16 %v643
    %v754 = vunpack.c.h.b16 %v643
    %v755 = vunpack.c.l.b16 %v644
    %v756 = vunpack.c.h.b16 %v644
    %v757 = vunpack.c.l.b16 %v645
    %v758 = vunpack.c.h.b16 %v645
    %v759 = vunpack.c.l.b16 %v646
    %v760 = vunpack.c.h.b16 %v646
    %v761 = vunpack.c.l.b16 %v647
    %v762 = vunpack.c.h.b16 %v647
    %v763 = vunpack.c.l.b16 %v648
    %v764 = vunpack.c.h.b16 %v648
    %v765 = vunpack.c.l.b16 %v649
    %v766 = vunpack.c.h.b16 %v649
    %v767 = vunpack.c.l.b16 %v650
    %v768 = vunpack.c.h.b16 %v650
    %v769 = vunpack.c.l.b16 %v651
    %v770 = vunpack.c.h.b16 %v651
    %v771 = vunpack.c.l.b16 %v652
    %v772 = vunpack.c.h.b16 %v652
    %v773 = vpack.c.b16 %v713, %v709
    %v774 = vpack.c.b16 %v714, %v710
    %v775 = vpack.c.b16 %v715, %v711
    %v776 = vpack.c.b16 %v716, %v712
    %v777 = vpack.c.b16 %v721, %v717
    %v778 = vpack.c.b16 %v722, %v718
    %v779 = vpack.c.b16 %v723, %v719
    %v780 = vpack.c.b16 %v724, %v720
    %v781 = vpack.c.b16 %v729, %v725
    %v782 = vpack.c.b16 %v730, %v726
    %v783 = vpack.c.b16 %v731, %v727
    %v784 = vpack.c.b16 %v732, %v728
    %v785 = vpack.c.b16 %v737, %v733
    %v786 = vpack.c.b16 %v738, %v734
    %v787 = vpack.c.b16 %v739, %v735
    %v788 = vpack.c.b16 %v740, %v736
    %v789 = vpack.c.b16 %v745, %v741
    %v790 = vpack.c.b16 %v746, %v742
    %v791 = vpack.c.b16 %v747, %v743
    %v792 = vpack.c.b16 %v748, %v744
    %v793 = vpack.c.b16 %v753, %v749
    %v794 = vpack.c.b16 %v754, %v750
    %v795 = vpack.c.b16 %v755, %v751
    %v796 = vpack.c.b16 %v756, %v752
    %v797 = vpack.c.b16 %v761, %v757
    %v798 = vpack.c.b16 %v762, %v758
    %v799 = vpack.c.b16 %v763, %v759
    %v800 = vpack.c.b16 %v764, %v760
    %v801 = vpack.c.b16 %v769, %v765
    %v802 = vpack.c.b16 %v770, %v766
    %v803 = vpack.c.b16 %v771, %v767
    %v804 = vpack.c.b16 %v772, %v768
    %837 = vmatprep.subr.bf16.mxu0 %v774
    %838 = vmatpush1.bf16.msra.mxu0 %v773
    %839 = vmatprep.subr.bf16.mxu0 %v778
    %840 = vmatpush1.bf16.msra.mxu0 %v777
    %841 = vmatprep.subr.bf16.mxu0 %v782
    %842 = vmatpush1.bf16.msra.mxu0 %v781
    %843 = vmatprep.subr.bf16.mxu0 %v786
    %844 = vmatpush1.bf16.msra.mxu0 %v785
    %845 = vmatprep.subr.bf16.mxu0 %v790
    %846 = vmatpush1.bf16.msra.mxu0 %v789
    %847 = vmatprep.subr.bf16.mxu0 %v794
    %848 = vmatpush1.bf16.msra.mxu0 %v793
    %849 = vmatprep.subr.bf16.mxu0 %v798
    %850 = vmatpush1.bf16.msra.mxu0 %v797
    %851 = vmatprep.subr.bf16.mxu0 %v802
    %852 = vmatpush1.bf16.msra.mxu0 %v801
    %853 = vmatprep.subr.bf16.mxu0 0
    %854 = vmatpush1.bf16.msra.mxu0 0
    %855 = vmatprep.subr.bf16.mxu0 0
    %856 = vmatpush1.bf16.msra.mxu0 0
    %857 = vmatprep.subr.bf16.mxu0 0
    %858 = vmatpush1.bf16.msra.mxu0 0
    %859 = vmatprep.subr.bf16.mxu0 0
    %860 = vmatpush1.bf16.msra.mxu0 0
    %861 = vmatprep.subr.bf16.mxu0 0
    %862 = vmatpush1.bf16.msra.mxu0 0
    %863 = vmatprep.subr.bf16.mxu0 0
    %864 = vmatpush1.bf16.msra.mxu0 0
    %865 = vmatprep.subr.bf16.mxu0 0
    %866 = vmatpush1.bf16.msra.mxu0 0
    %867 = vmatprep.subr.bf16.mxu0 0
    %868 = vmatpush1.bf16.msra.mxu0 0
    %869 = vmatprep.mubr.bf16.mxu0 0
    %870 = vmatmul.mubr.bf16.gmra.mrb[0].mxu0 %v668
    %v871 = vpop.f32.mrb[0].mxu0
    %v872 = vadd.f32 %v669, %v871
    %v873 = vpop.f32.mrb[0].mxu0
    %v874 = vadd.f32 %v670, %v873
    %v875 = vpop.f32.mrb[0].mxu0
    %v876 = vadd.f32 %v673, %v875
    %v877 = vpop.f32.mrb[0].mxu0
    %v878 = vadd.f32 %v674, %v877
    %879 = vdwg.mxu0
    %880 = vmatprep.subr.bf16.mxu0 %v776
    %881 = vmatpush1.bf16.msra.mxu0 %v775
    %882 = vmatprep.subr.bf16.mxu0 %v780
    %883 = vmatpush1.bf16.msra.mxu0 %v779
    %884 = vmatprep.subr.bf16.mxu0 %v784
    %885 = vmatpush1.bf16.msra.mxu0 %v783
    %886 = vmatprep.subr.bf16.mxu0 %v788
    %887 = vmatpush1.bf16.msra.mxu0 %v787
    %888 = vmatprep.subr.bf16.mxu0 %v792
    %889 = vmatpush1.bf16.msra.mxu0 %v791
    %890 = vmatprep.subr.bf16.mxu0 %v796
    %891 = vmatpush1.bf16.msra.mxu0 %v795
    %892 = vmatprep.subr.bf16.mxu0 %v800
    %893 = vmatpush1.bf16.msra.mxu0 %v799
    %894 = vmatprep.subr.bf16.mxu0 %v804
    %895 = vmatpush1.bf16.msra.mxu0 %v803
    %896 = vmatprep.subr.bf16.mxu0 0
    %897 = vmatpush1.bf16.msra.mxu0 0
    %898 = vmatprep.subr.bf16.mxu0 0
    %899 = vmatpush1.bf16.msra.mxu0 0
    %900 = vmatprep.subr.bf16.mxu0 0
    %901 = vmatpush1.bf16.msra.mxu0 0
    %902 = vmatprep.subr.bf16.mxu0 0
    %903 = vmatpush1.bf16.msra.mxu0 0
    %904 = vmatprep.subr.bf16.mxu0 0
    %905 = vmatpush1.bf16.msra.mxu0 0
    %906 = vmatprep.subr.bf16.mxu0 0
    %907 = vmatpush1.bf16.msra.mxu0 0
    %908 = vmatprep.subr.bf16.mxu0 0
    %909 = vmatpush1.bf16.msra.mxu0 0
    %910 = vmatprep.subr.bf16.mxu0 0
    %911 = vmatpush1.bf16.msra.mxu0 0
    %912 = vmatprep.mubr.bf16.mxu0 0
    %913 = vmatmul.mubr.bf16.gmra.mrb[0].mxu0 %v668
    %v914 = vpop.f32.mrb[0].mxu0
    %v915 = vadd.f32 %v671, %v914
    %v916 = vpop.f32.mrb[0].mxu0
    %v917 = vadd.f32 %v672, %v916
    %v918 = vpop.f32.mrb[0].mxu0
    %v919 = vadd.f32 %v675, %v918
    %v920 = vpop.f32.mrb[0].mxu0
    %v921 = vadd.f32 %v676, %v920
    %922 = vdwg.mxu0
    %v924 = vlaneseq
    %v925 = vshrl.u32 %v924, 7
    %v926 = vsub.s32 0, %v925
    %v927 = vrot.slane %v653, %v926
    %v928 = vlaneseq
    %v929 = vshrl.u32 %v928, 7
    %v930 = vsub.s32 1, %v929
    %v931 = vrot.slane %v653, %v930
    %v932 = vlaneseq
    %v933 = vshrl.u32 %v932, 7
    %v934 = vsub.s32 2, %v933
    %v935 = vrot.slane %v653, %v934
    %v936 = vlaneseq
    %v937 = vshrl.u32 %v936, 7
    %v938 = vsub.s32 3, %v937
    %v939 = vrot.slane %v653, %v938
    %v944 = vadd.f32 %v872, %v927
    %v945 = vadd.f32 %v874, %v931
    %v946 = vadd.f32 %v915, %v935
    %v947 = vadd.f32 %v917, %v939
    %v948 = vadd.f32 %v876, %v927
    %v949 = vadd.f32 %v878, %v931
    %v950 = vadd.f32 %v919, %v935
    %v951 = vadd.f32 %v921, %v939
    %952 = vst [vmem:[#allocation3] sm:$0xff] %v944
    %953 = vst [vmem:[#allocation3 + $0x8] sm:$0xff] %v945
    %954 = vst [vmem:[#allocation3 + $0x10] sm:$0xff] %v946
    %955 = vst [vmem:[#allocation3 + $0x18] sm:$0xff] %v947
    %956 = vst [vmem:[#allocation3 + $0x20] sm:$0xff] %v948
    %957 = vst [vmem:[#allocation3 + $0x28] sm:$0xff] %v949
    %958 = vst [vmem:[#allocation3 + $0x30] sm:$0xff] %v950
    %959 = vst [vmem:[#allocation3 + $0x38] sm:$0xff] %v951
    %v960 = vld [vmem:[#allocation3] sm:$0xff]
    %v961 = vld [vmem:[#allocation3 + $0x20] sm:$0xff]
    %v962 = vxor.u32 %v960, 2147483648
    %v963 = vxor.u32 %v961, 2147483648
    %v964 = vmul.f32 %v962, 1.442695
    %v965 = vpow.pop %v964
    %v966 = vmul.f32 %v963, 1.442695
    %v967 = vpow.pop %v966
    %v968 = vadd.f32 %v965, 1.0
    %v969 = vadd.f32 %v967, 1.0
    %v970 = vrcp.pop %v968
    %v971 = vmul.f32 1.0, %v970
    %v972 = vrcp.pop %v969
    %v973 = vmul.f32 1.0, %v972
    %v974 = vld [vmem:[#allocation3 + $0x8] sm:$0xff]
    %v975 = vld [vmem:[#allocation3 + $0x28] sm:$0xff]
    %v976 = vxor.u32 %v974, 2147483648
    %v977 = vxor.u32 %v975, 2147483648
    %v978 = vmul.f32 %v976, 1.442695
    %v979 = vpow.pop %v978
    %v980 = vmul.f32 %v977, 1.442695
    %v981 = vpow.pop %v980
    %v982 = vadd.f32 %v979, 1.0
    %v983 = vadd.f32 %v981, 1.0
    %v984 = vrcp.pop %v982
    %v985 = vmul.f32 1.0, %v984
    %v986 = vrcp.pop %v983
    %v987 = vmul.f32 1.0, %v986
    %v988 = vld [vmem:[#allocation3 + $0x10] sm:$0xff]
    %v989 = vld [vmem:[#allocation3 + $0x30] sm:$0xff]
    %v990 = vtanh.pop %v988
    %v991 = vtanh.pop %v989
    %v992 = vld [vmem:[#allocation3 + $0x18] sm:$0xff]
    %v993 = vld [vmem:[#allocation3 + $0x38] sm:$0xff]
    %v994 = vxor.u32 %v992, 2147483648
    %v995 = vxor.u32 %v993, 2147483648
    %v996 = vmul.f32 %v994, 1.442695
    %v997 = vpow.pop %v996
    %v998 = vmul.f32 %v995, 1.442695
    %v999 = vpow.pop %v998
    %v1000 = vadd.f32 %v997, 1.0
    %v1001 = vadd.f32 %v999, 1.0
    %v1002 = vrcp.pop %v1000
    %v1003 = vmul.f32 1.0, %v1002
    %v1004 = vrcp.pop %v1001
    %v1005 = vmul.f32 1.0, %v1004
    %v1006 = vmul.f32 %v985, %v659
    %v1007 = vmul.f32 %v987, %v660
    %v1008 = vmul.f32 %v971, %v990
    %v1009 = vmul.f32 %v973, %v991
    %v1010 = vadd.f32 %v1006, %v1008
    %v1011 = vadd.f32 %v1007, %v1009
    %v1012 = vtanh.pop %v1010
    %v1013 = vtanh.pop %v1011
    %v1014 = vmul.f32 %v1003, %v1012
    %v1015 = vmul.f32 %v1005, %v1013
    %v1016 = vstv %s656
    %vm1017 = vcmp.lt.s32.totalorder %v1016, %v654
    %vm1018 = vcmp.lt.s32.totalorder %v1016, %v655
    %v1019 = vsel %vm1017, 1, 0
    %v1020 = vsel %vm1018, 1, 0
    %v1021 = vcvt.s32.f32 %v1019
    %v1022 = vcvt.s32.f32 %v1020
    %v1023 = vsub.f32 %v1014, %v657
    %v1024 = vsub.f32 %v1015, %v658
    %1026 = vset.pattern.permute.xlu0 0
    %1027 = vperm.xlu0 %1026, %v1021
    %v1028 = vpop.permute.xlu0 %1027
    %1031 = vset.pattern.permute.xlu0 0
    %1032 = vperm.xlu0 %1031, %v1022
    %v1033 = vpop.permute.xlu0 %1032
    %v1035 = vmul.f32 %v1028, %v1023
    %v1036 = vmul.f32 %v1033, %v1024
    %v1037 = vadd.f32 %v657, %v1035
    %v1038 = vadd.f32 %v658, %v1036
    %v1039 = vsub.f32 %v1010, %v659
    %v1040 = vsub.f32 %v1011, %v660
    %v1041 = vmul.f32 %v1028, %v1039
    %v1042 = vmul.f32 %v1033, %v1040
    %v1043 = vadd.f32 %v659, %v1041
    %v1044 = vadd.f32 %v660, %v1042
    %1045 = vst [vmem:[#allocation12] sm:$0xff] %v1037
    %1046 = vst [vmem:[#allocation12 + $0x8] sm:$0xff] %v1038
    %s1047 = smul.u32 1, 4
    %s1048 = smul.addr %s1047, 8
    %s1049 = scalar_lea.vmem [#allocation2], %s1048
    %v1050 = vld [vmem:[%s1049] sm:$0xff]
    %v1051 = vld [vmem:[%s1049 + $0x8] sm:$0xff]
    %v1052 = vld [vmem:[%s1049 + $0x10] sm:$0xff]
    %v1053 = vld [vmem:[%s1049 + $0x18] sm:$0xff]
    %v1054 = vpack.c.bf16 %v1038, %v1037
    %v1055 = vunpack.c.l.bf16 %v1050
    %v1056 = vunpack.c.l.bf16 %v1051
    %v1057 = vunpack.c.l.bf16 %v1052
    %v1058 = vunpack.c.l.bf16 %v1053
    %v1059 = vunpack.c.h.bf16 %v1050
    %v1060 = vunpack.c.h.bf16 %v1051
    %v1061 = vunpack.c.h.bf16 %v1052
    %v1062 = vunpack.c.h.bf16 %v1053
    %1063 = vmatprep.subr.bf16.mxu0 %v774
    %1064 = vmatpush1.bf16.msra.mxu0 %v773
    %1065 = vmatprep.subr.bf16.mxu0 %v778
    %1066 = vmatpush1.bf16.msra.mxu0 %v777
    %1067 = vmatprep.subr.bf16.mxu0 %v782
    %1068 = vmatpush1.bf16.msra.mxu0 %v781
    %1069 = vmatprep.subr.bf16.mxu0 %v786
    %1070 = vmatpush1.bf16.msra.mxu0 %v785
    %1071 = vmatprep.subr.bf16.mxu0 %v790
    %1072 = vmatpush1.bf16.msra.mxu0 %v789
    %1073 = vmatprep.subr.bf16.mxu0 %v794
    %1074 = vmatpush1.bf16.msra.mxu0 %v793
    %1075 = vmatprep.subr.bf16.mxu0 %v798
    %1076 = vmatpush1.bf16.msra.mxu0 %v797
    %1077 = vmatprep.subr.bf16.mxu0 %v802
    %1078 = vmatpush1.bf16.msra.mxu0 %v801
    %1079 = vmatprep.subr.bf16.mxu0 0
    %1080 = vmatpush1.bf16.msra.mxu0 0
    %1081 = vmatprep.subr.bf16.mxu0 0
    %1082 = vmatpush1.bf16.msra.mxu0 0
    %1083 = vmatprep.subr.bf16.mxu0 0
    %1084 = vmatpush1.bf16.msra.mxu0 0
    %1085 = vmatprep.subr.bf16.mxu0 0
    %1086 = vmatpush1.bf16.msra.mxu0 0
    %1087 = vmatprep.subr.bf16.mxu0 0
    %1088 = vmatpush1.bf16.msra.mxu0 0
    %1089 = vmatprep.subr.bf16.mxu0 0
    %1090 = vmatpush1.bf16.msra.mxu0 0
    %1091 = vmatprep.subr.bf16.mxu0 0
    %1092 = vmatpush1.bf16.msra.mxu0 0
    %1093 = vmatprep.subr.bf16.mxu0 0
    %1094 = vmatpush1.bf16.msra.mxu0 0
    %1095 = vmatprep.mubr.bf16.mxu0 0
    %1096 = vmatmul.mubr.bf16.gmra.mrb[0].mxu0 %v1054
    %v1097 = vpop.f32.mrb[0].mxu0
    %v1098 = vadd.f32 %v1055, %v1097
    %v1099 = vpop.f32.mrb[0].mxu0
    %v1100 = vadd.f32 %v1056, %v1099
    %v1101 = vpop.f32.mrb[0].mxu0
    %v1102 = vadd.f32 %v1059, %v1101
    %v1103 = vpop.f32.mrb[0].mxu0
    %v1104 = vadd.f32 %v1060, %v1103
    %1105 = vdwg.mxu0
    %1106 = vmatprep.subr.bf16.mxu0 %v776
    %1107 = vmatpush1.bf16.msra.mxu0 %v775
    %1108 = vmatprep.subr.bf16.mxu0 %v780
    %1109 = vmatpush1.bf16.msra.mxu0 %v779
    %1110 = vmatprep.subr.bf16.mxu0 %v784
    %1111 = vmatpush1.bf16.msra.mxu0 %v783
    %1112 = vmatprep.subr.bf16.mxu0 %v788
    %1113 = vmatpush1.bf16.msra.mxu0 %v787
    %1114 = vmatprep.subr.bf16.mxu0 %v792
    %1115 = vmatpush1.bf16.msra.mxu0 %v791
    %1116 = vmatprep.subr.bf16.mxu0 %v796
    %1117 = vmatpush1.bf16.msra.mxu0 %v795
    %1118 = vmatprep.subr.bf16.mxu0 %v800
    %1119 = vmatpush1.bf16.msra.mxu0 %v799
    %1120 = vmatprep.subr.bf16.mxu0 %v804
    %1121 = vmatpush1.bf16.msra.mxu0 %v803
    %1122 = vmatprep.subr.bf16.mxu0 0
    %1123 = vmatpush1.bf16.msra.mxu0 0
    %1124 = vmatprep.subr.bf16.mxu0 0
    %1125 = vmatpush1.bf16.msra.mxu0 0
    %1126 = vmatprep.subr.bf16.mxu0 0
    %1127 = vmatpush1.bf16.msra.mxu0 0
    %1128 = vmatprep.subr.bf16.mxu0 0
    %1129 = vmatpush1.bf16.msra.mxu0 0
    %1130 = vmatprep.subr.bf16.mxu0 0
    %1131 = vmatpush1.bf16.msra.mxu0 0
    %1132 = vmatprep.subr.bf16.mxu0 0
    %1133 = vmatpush1.bf16.msra.mxu0 0
    %1134 = vmatprep.subr.bf16.mxu0 0
    %1135 = vmatpush1.bf16.msra.mxu0 0
    %1136 = vmatprep.subr.bf16.mxu0 0
    %1137 = vmatpush1.bf16.msra.mxu0 0
    %1138 = vmatprep.mubr.bf16.mxu0 0
    %1139 = vmatmul.mubr.bf16.gmra.mrb[0].mxu0 %v1054
    %v1140 = vpop.f32.mrb[0].mxu0
    %v1141 = vadd.f32 %v1057, %v1140
    %v1142 = vpop.f32.mrb[0].mxu0
    %v1143 = vadd.f32 %v1058, %v1142
    %v1144 = vpop.f32.mrb[0].mxu0
    %v1145 = vadd.f32 %v1061, %v1144
    %v1146 = vpop.f32.mrb[0].mxu0
    %v1147 = vadd.f32 %v1062, %v1146
    %1148 = vdwg.mxu0
    %v1149 = vadd.f32 %v1098, %v927
    %v1150 = vadd.f32 %v1100, %v931
    %v1151 = vadd.f32 %v1141, %v935
    %v1152 = vadd.f32 %v1143, %v939
    %v1153 = vadd.f32 %v1102, %v927
    %v1154 = vadd.f32 %v1104, %v931
    %v1155 = vadd.f32 %v1145, %v935
    %v1156 = vadd.f32 %v1147, %v939
    %1157 = vst [vmem:[#allocation3] sm:$0xff] %v1149
    %1158 = vst [vmem:[#allocation3 + $0x8] sm:$0xff] %v1150
    %1159 = vst [vmem:[#allocation3 + $0x10] sm:$0xff] %v1151
    %1160 = vst [vmem:[#allocation3 + $0x18] sm:$0xff] %v1152
    %1161 = vst [vmem:[#allocation3 + $0x20] sm:$0xff] %v1153
    %1162 = vst [vmem:[#allocation3 + $0x28] sm:$0xff] %v1154
    %1163 = vst [vmem:[#allocation3 + $0x30] sm:$0xff] %v1155
    %1164 = vst [vmem:[#allocation3 + $0x38] sm:$0xff] %v1156
    %v1165 = vld [vmem:[#allocation3] sm:$0xff]
    %v1166 = vld [vmem:[#allocation3 + $0x20] sm:$0xff]
    %v1167 = vxor.u32 %v1165, 2147483648
    %v1168 = vxor.u32 %v1166, 2147483648
    %v1169 = vmul.f32 %v1167, 1.442695
    %v1170 = vpow.pop %v1169
    %v1171 = vmul.f32 %v1168, 1.442695
    %v1172 = vpow.pop %v1171
    %v1173 = vadd.f32 %v1170, 1.0
    %v1174 = vadd.f32 %v1172, 1.0
    %v1175 = vrcp.pop %v1173
    %v1176 = vmul.f32 1.0, %v1175
    %v1177 = vrcp.pop %v1174
    %v1178 = vmul.f32 1.0, %v1177
    %v1179 = vld [vmem:[#allocation3 + $0x8] sm:$0xff]
    %v1180 = vld [vmem:[#allocation3 + $0x28] sm:$0xff]
    %v1181 = vxor.u32 %v1179, 2147483648
    %v1182 = vxor.u32 %v1180, 2147483648
    %v1183 = vmul.f32 %v1181, 1.442695
    %v1184 = vpow.pop %v1183
    %v1185 = vmul.f32 %v1182, 1.442695
    %v1186 = vpow.pop %v1185
    %v1187 = vadd.f32 %v1184, 1.0
    %v1188 = vadd.f32 %v1186, 1.0
    %v1189 = vrcp.pop %v1187
    %v1190 = vmul.f32 1.0, %v1189
    %v1191 = vrcp.pop %v1188
    %v1192 = vmul.f32 1.0, %v1191
    %v1193 = vld [vmem:[#allocation3 + $0x10] sm:$0xff]
    %v1194 = vld [vmem:[#allocation3 + $0x30] sm:$0xff]
    %v1195 = vtanh.pop %v1193
    %v1196 = vtanh.pop %v1194
    %v1197 = vld [vmem:[#allocation3 + $0x18] sm:$0xff]
    %v1198 = vld [vmem:[#allocation3 + $0x38] sm:$0xff]
    %v1199 = vxor.u32 %v1197, 2147483648
    %v1200 = vxor.u32 %v1198, 2147483648
    %v1201 = vmul.f32 %v1199, 1.442695
    %v1202 = vpow.pop %v1201
    %v1203 = vmul.f32 %v1200, 1.442695
    %v1204 = vpow.pop %v1203
    %v1205 = vadd.f32 %v1202, 1.0
    %v1206 = vadd.f32 %v1204, 1.0
    %v1207 = vrcp.pop %v1205
    %v1208 = vmul.f32 1.0, %v1207
    %v1209 = vrcp.pop %v1206
    %v1210 = vmul.f32 1.0, %v1209
    %v1211 = vmul.f32 %v1190, %v1043
    %v1212 = vmul.f32 %v1192, %v1044
    %v1213 = vmul.f32 %v1176, %v1195
    %v1214 = vmul.f32 %v1178, %v1196
    %v1215 = vadd.f32 %v1211, %v1213
    %v1216 = vadd.f32 %v1212, %v1214
    %v1217 = vtanh.pop %v1215
    %v1218 = vtanh.pop %v1216
    %v1219 = vmul.f32 %v1208, %v1217
    %v1220 = vmul.f32 %v1210, %v1218
    %s1221 = sadd.s32 %s656, 1
    %v1222 = vstv %s1221
    %vm1223 = vcmp.lt.s32.totalorder %v1222, %v654
    %vm1224 = vcmp.lt.s32.totalorder %v1222, %v655
    %v1225 = vsel %vm1223, 1, 0
    %v1226 = vsel %vm1224, 1, 0
    %v1227 = vcvt.s32.f32 %v1225
    %v1228 = vcvt.s32.f32 %v1226
    %v1229 = vsub.f32 %v1219, %v1037
    %v1230 = vsub.f32 %v1220, %v1038
    %1232 = vset.pattern.permute.xlu0 0
    %1233 = vperm.xlu0 %1232, %v1227
    %v1234 = vpop.permute.xlu0 %1233
    %1237 = vset.pattern.permute.xlu0 0
    %1238 = vperm.xlu0 %1237, %v1228
    %v1239 = vpop.permute.xlu0 %1238
    %v1241 = vmul.f32 %v1234, %v1229
    %v1242 = vmul.f32 %v1239, %v1230
    %v1243 = vadd.f32 %v1037, %v1241
    %v1244 = vadd.f32 %v1038, %v1242
    %v1245 = vsub.f32 %v1215, %v1043
    %v1246 = vsub.f32 %v1216, %v1044
    %v1247 = vmul.f32 %v1234, %v1245
    %v1248 = vmul.f32 %v1239, %v1246
    %v1249 = vadd.f32 %v1043, %v1247
    %v1250 = vadd.f32 %v1044, %v1248
    %s1251 = scalar_lea.vmem [#allocation12], 16
    %1252 = vst [vmem:[%s1251] sm:$0xff] %v1243
    %1253 = vst [vmem:[%s1251 + $0x8] sm:$0xff] %v1244
    %s1254 = smul.u32 2, 4
    %s1255 = smul.addr %s1254, 8
    %s1256 = scalar_lea.vmem [#allocation2], %s1255
    %v1257 = vld [vmem:[%s1256] sm:$0xff]
    %v1258 = vld [vmem:[%s1256 + $0x8] sm:$0xff]
    %v1259 = vld [vmem:[%s1256 + $0x10] sm:$0xff]
    %v1260 = vld [vmem:[%s1256 + $0x18] sm:$0xff]
    %v1261 = vpack.c.bf16 %v1244, %v1243
    %v1262 = vunpack.c.l.bf16 %v1257
    %v1263 = vunpack.c.l.bf16 %v1258
    %v1264 = vunpack.c.l.bf16 %v1259
    %v1265 = vunpack.c.l.bf16 %v1260
    %v1266 = vunpack.c.h.bf16 %v1257
    %v1267 = vunpack.c.h.bf16 %v1258
    %v1268 = vunpack.c.h.bf16 %v1259
    %v1269 = vunpack.c.h.bf16 %v1260
    %1270 = vmatprep.subr.bf16.mxu0 %v774
    %1271 = vmatpush1.bf16.msra.mxu0 %v773
    %1272 = vmatprep.subr.bf16.mxu0 %v778
    %1273 = vmatpush1.bf16.msra.mxu0 %v777
    %1274 = vmatprep.subr.bf16.mxu0 %v782
    %1275 = vmatpush1.bf16.msra.mxu0 %v781
    %1276 = vmatprep.subr.bf16.mxu0 %v786
    %1277 = vmatpush1.bf16.msra.mxu0 %v785
    %1278 = vmatprep.subr.bf16.mxu0 %v790
    %1279 = vmatpush1.bf16.msra.mxu0 %v789
    %1280 = vmatprep.subr.bf16.mxu0 %v794
    %1281 = vmatpush1.bf16.msra.mxu0 %v793
    %1282 = vmatprep.subr.bf16.mxu0 %v798
    %1283 = vmatpush1.bf16.msra.mxu0 %v797
    %1284 = vmatprep.subr.bf16.mxu0 %v802
    %1285 = vmatpush1.bf16.msra.mxu0 %v801
    %1286 = vmatprep.subr.bf16.mxu0 0
    %1287 = vmatpush1.bf16.msra.mxu0 0
    %1288 = vmatprep.subr.bf16.mxu0 0
    %1289 = vmatpush1.bf16.msra.mxu0 0
    %1290 = vmatprep.subr.bf16.mxu0 0
    %1291 = vmatpush1.bf16.msra.mxu0 0
    %1292 = vmatprep.subr.bf16.mxu0 0
    %1293 = vmatpush1.bf16.msra.mxu0 0
    %1294 = vmatprep.subr.bf16.mxu0 0
    %1295 = vmatpush1.bf16.msra.mxu0 0
    %1296 = vmatprep.subr.bf16.mxu0 0
    %1297 = vmatpush1.bf16.msra.mxu0 0
    %1298 = vmatprep.subr.bf16.mxu0 0
    %1299 = vmatpush1.bf16.msra.mxu0 0
    %1300 = vmatprep.subr.bf16.mxu0 0
    %1301 = vmatpush1.bf16.msra.mxu0 0
    %1302 = vmatprep.mubr.bf16.mxu0 0
    %1303 = vmatmul.mubr.bf16.gmra.mrb[0].mxu0 %v1261
    %v1304 = vpop.f32.mrb[0].mxu0
    %v1305 = vadd.f32 %v1262, %v1304
    %v1306 = vpop.f32.mrb[0].mxu0
    %v1307 = vadd.f32 %v1263, %v1306
    %v1308 = vpop.f32.mrb[0].mxu0
    %v1309 = vadd.f32 %v1266, %v1308
    %v1310 = vpop.f32.mrb[0].mxu0
    %v1311 = vadd.f32 %v1267, %v1310
    %1312 = vdwg.mxu0
    %1313 = vmatprep.subr.bf16.mxu0 %v776
    %1314 = vmatpush1.bf16.msra.mxu0 %v775
    %1315 = vmatprep.subr.bf16.mxu0 %v780
    %1316 = vmatpush1.bf16.msra.mxu0 %v779
    %1317 = vmatprep.subr.bf16.mxu0 %v784
    %1318 = vmatpush1.bf16.msra.mxu0 %v783
    %1319 = vmatprep.subr.bf16.mxu0 %v788
    %1320 = vmatpush1.bf16.msra.mxu0 %v787
    %1321 = vmatprep.subr.bf16.mxu0 %v792
    %1322 = vmatpush1.bf16.msra.mxu0 %v791
    %1323 = vmatprep.subr.bf16.mxu0 %v796
    %1324 = vmatpush1.bf16.msra.mxu0 %v795
    %1325 = vmatprep.subr.bf16.mxu0 %v800
    %1326 = vmatpush1.bf16.msra.mxu0 %v799
    %1327 = vmatprep.subr.bf16.mxu0 %v804
    %1328 = vmatpush1.bf16.msra.mxu0 %v803
    %1329 = vmatprep.subr.bf16.mxu0 0
    %1330 = vmatpush1.bf16.msra.mxu0 0
    %1331 = vmatprep.subr.bf16.mxu0 0
    %1332 = vmatpush1.bf16.msra.mxu0 0
    %1333 = vmatprep.subr.bf16.mxu0 0
    %1334 = vmatpush1.bf16.msra.mxu0 0
    %1335 = vmatprep.subr.bf16.mxu0 0
    %1336 = vmatpush1.bf16.msra.mxu0 0
    %1337 = vmatprep.subr.bf16.mxu0 0
    %1338 = vmatpush1.bf16.msra.mxu0 0
    %1339 = vmatprep.subr.bf16.mxu0 0
    %1340 = vmatpush1.bf16.msra.mxu0 0
    %1341 = vmatprep.subr.bf16.mxu0 0
    %1342 = vmatpush1.bf16.msra.mxu0 0
    %1343 = vmatprep.subr.bf16.mxu0 0
    %1344 = vmatpush1.bf16.msra.mxu0 0
    %1345 = vmatprep.mubr.bf16.mxu0 0
    %1346 = vmatmul.mubr.bf16.gmra.mrb[0].mxu0 %v1261
    %v1347 = vpop.f32.mrb[0].mxu0
    %v1348 = vadd.f32 %v1264, %v1347
    %v1349 = vpop.f32.mrb[0].mxu0
    %v1350 = vadd.f32 %v1265, %v1349
    %v1351 = vpop.f32.mrb[0].mxu0
    %v1352 = vadd.f32 %v1268, %v1351
    %v1353 = vpop.f32.mrb[0].mxu0
    %v1354 = vadd.f32 %v1269, %v1353
    %1355 = vdwg.mxu0
    %v1356 = vadd.f32 %v1305, %v927
    %v1357 = vadd.f32 %v1307, %v931
    %v1358 = vadd.f32 %v1348, %v935
    %v1359 = vadd.f32 %v1350, %v939
    %v1360 = vadd.f32 %v1309, %v927
    %v1361 = vadd.f32 %v1311, %v931
    %v1362 = vadd.f32 %v1352, %v935
    %v1363 = vadd.f32 %v1354, %v939
    %1364 = vst [vmem:[#allocation3] sm:$0xff] %v1356
    %1365 = vst [vmem:[#allocation3 + $0x8] sm:$0xff] %v1357
    %1366 = vst [vmem:[#allocation3 + $0x10] sm:$0xff] %v1358
    %1367 = vst [vmem:[#allocation3 + $0x18] sm:$0xff] %v1359
    %1368 = vst [vmem:[#allocation3 + $0x20] sm:$0xff] %v1360
    %1369 = vst [vmem:[#allocation3 + $0x28] sm:$0xff] %v1361
    %1370 = vst [vmem:[#allocation3 + $0x30] sm:$0xff] %v1362
    %1371 = vst [vmem:[#allocation3 + $0x38] sm:$0xff] %v1363
    %v1372 = vld [vmem:[#allocation3] sm:$0xff]
    %v1373 = vld [vmem:[#allocation3 + $0x20] sm:$0xff]
    %v1374 = vxor.u32 %v1372, 2147483648
    %v1375 = vxor.u32 %v1373, 2147483648
    %v1376 = vmul.f32 %v1374, 1.442695
    %v1377 = vpow.pop %v1376
    %v1378 = vmul.f32 %v1375, 1.442695
    %v1379 = vpow.pop %v1378
    %v1380 = vadd.f32 %v1377, 1.0
    %v1381 = vadd.f32 %v1379, 1.0
    %v1382 = vrcp.pop %v1380
    %v1383 = vmul.f32 1.0, %v1382
    %v1384 = vrcp.pop %v1381
    %v1385 = vmul.f32 1.0, %v1384
    %v1386 = vld [vmem:[#allocation3 + $0x8] sm:$0xff]
    %v1387 = vld [vmem:[#allocation3 + $0x28] sm:$0xff]
    %v1388 = vxor.u32 %v1386, 2147483648
    %v1389 = vxor.u32 %v1387, 2147483648
    %v1390 = vmul.f32 %v1388, 1.442695
    %v1391 = vpow.pop %v1390
    %v1392 = vmul.f32 %v1389, 1.442695
    %v1393 = vpow.pop %v1392
    %v1394 = vadd.f32 %v1391, 1.0
    %v1395 = vadd.f32 %v1393, 1.0
    %v1396 = vrcp.pop %v1394
    %v1397 = vmul.f32 1.0, %v1396
    %v1398 = vrcp.pop %v1395
    %v1399 = vmul.f32 1.0, %v1398
    %v1400 = vld [vmem:[#allocation3 + $0x10] sm:$0xff]
    %v1401 = vld [vmem:[#allocation3 + $0x30] sm:$0xff]
    %v1402 = vtanh.pop %v1400
    %v1403 = vtanh.pop %v1401
    %v1404 = vld [vmem:[#allocation3 + $0x18] sm:$0xff]
    %v1405 = vld [vmem:[#allocation3 + $0x38] sm:$0xff]
    %v1406 = vxor.u32 %v1404, 2147483648
    %v1407 = vxor.u32 %v1405, 2147483648
    %v1408 = vmul.f32 %v1406, 1.442695
    %v1409 = vpow.pop %v1408
    %v1410 = vmul.f32 %v1407, 1.442695
    %v1411 = vpow.pop %v1410
    %v1412 = vadd.f32 %v1409, 1.0
    %v1413 = vadd.f32 %v1411, 1.0
    %v1414 = vrcp.pop %v1412
    %v1415 = vmul.f32 1.0, %v1414
    %v1416 = vrcp.pop %v1413
    %v1417 = vmul.f32 1.0, %v1416
    %v1418 = vmul.f32 %v1397, %v1249
    %v1419 = vmul.f32 %v1399, %v1250
    %v1420 = vmul.f32 %v1383, %v1402
    %v1421 = vmul.f32 %v1385, %v1403
    %v1422 = vadd.f32 %v1418, %v1420
    %v1423 = vadd.f32 %v1419, %v1421
    %v1424 = vtanh.pop %v1422
    %v1425 = vtanh.pop %v1423
    %v1426 = vmul.f32 %v1415, %v1424
    %v1427 = vmul.f32 %v1417, %v1425
    %s1428 = sadd.s32 %s656, 2
    %v1429 = vstv %s1428
    %vm1430 = vcmp.lt.s32.totalorder %v1429, %v654
    %vm1431 = vcmp.lt.s32.totalorder %v1429, %v655
    %v1432 = vsel %vm1430, 1, 0
    %v1433 = vsel %vm1431, 1, 0
    %v1434 = vcvt.s32.f32 %v1432
    %v1435 = vcvt.s32.f32 %v1433
    %v1436 = vsub.f32 %v1426, %v1243
    %v1437 = vsub.f32 %v1427, %v1244
    %1439 = vset.pattern.permute.xlu0 0
    %1440 = vperm.xlu0 %1439, %v1434
    %v1441 = vpop.permute.xlu0 %1440
    %1444 = vset.pattern.permute.xlu0 0
    %1445 = vperm.xlu0 %1444, %v1435
    %v1446 = vpop.permute.xlu0 %1445
    %v1448 = vmul.f32 %v1441, %v1436
    %v1449 = vmul.f32 %v1446, %v1437
    %v1450 = vadd.f32 %v1243, %v1448
    %v1451 = vadd.f32 %v1244, %v1449
    %v1452 = vsub.f32 %v1422, %v1249
    %v1453 = vsub.f32 %v1423, %v1250
    %v1454 = vmul.f32 %v1441, %v1452
    %v1455 = vmul.f32 %v1446, %v1453
    %v1456 = vadd.f32 %v1249, %v1454
    %v1457 = vadd.f32 %v1250, %v1455
    %s1458 = scalar_lea.vmem [#allocation12], 32
    %1459 = vst [vmem:[%s1458] sm:$0xff] %v1450
    %1460 = vst [vmem:[%s1458 + $0x8] sm:$0xff] %v1451
    %s1461 = smul.u32 3, 4
    %s1462 = smul.addr %s1461, 8
    %s1463 = scalar_lea.vmem [#allocation2], %s1462
    %v1464 = vld [vmem:[%s1463] sm:$0xff]
    %v1465 = vld [vmem:[%s1463 + $0x8] sm:$0xff]
    %v1466 = vld [vmem:[%s1463 + $0x10] sm:$0xff]
    %v1467 = vld [vmem:[%s1463 + $0x18] sm:$0xff]
    %v1468 = vpack.c.bf16 %v1451, %v1450
    %v1469 = vunpack.c.l.bf16 %v1464
    %v1470 = vunpack.c.l.bf16 %v1465
    %v1471 = vunpack.c.l.bf16 %v1466
    %v1472 = vunpack.c.l.bf16 %v1467
    %v1473 = vunpack.c.h.bf16 %v1464
    %v1474 = vunpack.c.h.bf16 %v1465
    %v1475 = vunpack.c.h.bf16 %v1466
    %v1476 = vunpack.c.h.bf16 %v1467
    %1477 = vmatprep.subr.bf16.mxu0 %v774
    %1478 = vmatpush1.bf16.msra.mxu0 %v773
    %1479 = vmatprep.subr.bf16.mxu0 %v778
    %1480 = vmatpush1.bf16.msra.mxu0 %v777
    %1481 = vmatprep.subr.bf16.mxu0 %v782
    %1482 = vmatpush1.bf16.msra.mxu0 %v781
    %1483 = vmatprep.subr.bf16.mxu0 %v786
    %1484 = vmatpush1.bf16.msra.mxu0 %v785
    %1485 = vmatprep.subr.bf16.mxu0 %v790
    %1486 = vmatpush1.bf16.msra.mxu0 %v789
    %1487 = vmatprep.subr.bf16.mxu0 %v794
    %1488 = vmatpush1.bf16.msra.mxu0 %v793
    %1489 = vmatprep.subr.bf16.mxu0 %v798
    %1490 = vmatpush1.bf16.msra.mxu0 %v797
    %1491 = vmatprep.subr.bf16.mxu0 %v802
    %1492 = vmatpush1.bf16.msra.mxu0 %v801
    %1493 = vmatprep.subr.bf16.mxu0 0
    %1494 = vmatpush1.bf16.msra.mxu0 0
    %1495 = vmatprep.subr.bf16.mxu0 0
    %1496 = vmatpush1.bf16.msra.mxu0 0
    %1497 = vmatprep.subr.bf16.mxu0 0
    %1498 = vmatpush1.bf16.msra.mxu0 0
    %1499 = vmatprep.subr.bf16.mxu0 0
    %1500 = vmatpush1.bf16.msra.mxu0 0
    %1501 = vmatprep.subr.bf16.mxu0 0
    %1502 = vmatpush1.bf16.msra.mxu0 0
    %1503 = vmatprep.subr.bf16.mxu0 0
    %1504 = vmatpush1.bf16.msra.mxu0 0
    %1505 = vmatprep.subr.bf16.mxu0 0
    %1506 = vmatpush1.bf16.msra.mxu0 0
    %1507 = vmatprep.subr.bf16.mxu0 0
    %1508 = vmatpush1.bf16.msra.mxu0 0
    %1509 = vmatprep.mubr.bf16.mxu0 0
    %1510 = vmatmul.mubr.bf16.gmra.mrb[0].mxu0 %v1468
    %v1511 = vpop.f32.mrb[0].mxu0
    %v1512 = vadd.f32 %v1469, %v1511
    %v1513 = vpop.f32.mrb[0].mxu0
    %v1514 = vadd.f32 %v1470, %v1513
    %v1515 = vpop.f32.mrb[0].mxu0
    %v1516 = vadd.f32 %v1473, %v1515
    %v1517 = vpop.f32.mrb[0].mxu0
    %v1518 = vadd.f32 %v1474, %v1517
    %1519 = vdwg.mxu0
    %1520 = vmatprep.subr.bf16.mxu0 %v776
    %1521 = vmatpush1.bf16.msra.mxu0 %v775
    %1522 = vmatprep.subr.bf16.mxu0 %v780
    %1523 = vmatpush1.bf16.msra.mxu0 %v779
    %1524 = vmatprep.subr.bf16.mxu0 %v784
    %1525 = vmatpush1.bf16.msra.mxu0 %v783
    %1526 = vmatprep.subr.bf16.mxu0 %v788
    %1527 = vmatpush1.bf16.msra.mxu0 %v787
    %1528 = vmatprep.subr.bf16.mxu0 %v792
    %1529 = vmatpush1.bf16.msra.mxu0 %v791
    %1530 = vmatprep.subr.bf16.mxu0 %v796
    %1531 = vmatpush1.bf16.msra.mxu0 %v795
    %1532 = vmatprep.subr.bf16.mxu0 %v800
    %1533 = vmatpush1.bf16.msra.mxu0 %v799
    %1534 = vmatprep.subr.bf16.mxu0 %v804
    %1535 = vmatpush1.bf16.msra.mxu0 %v803
    %1536 = vmatprep.subr.bf16.mxu0 0
    %1537 = vmatpush1.bf16.msra.mxu0 0
    %1538 = vmatprep.subr.bf16.mxu0 0
    %1539 = vmatpush1.bf16.msra.mxu0 0
    %1540 = vmatprep.subr.bf16.mxu0 0
    %1541 = vmatpush1.bf16.msra.mxu0 0
    %1542 = vmatprep.subr.bf16.mxu0 0
    %1543 = vmatpush1.bf16.msra.mxu0 0
    %1544 = vmatprep.subr.bf16.mxu0 0
    %1545 = vmatpush1.bf16.msra.mxu0 0
    %1546 = vmatprep.subr.bf16.mxu0 0
    %1547 = vmatpush1.bf16.msra.mxu0 0
    %1548 = vmatprep.subr.bf16.mxu0 0
    %1549 = vmatpush1.bf16.msra.mxu0 0
    %1550 = vmatprep.subr.bf16.mxu0 0
    %1551 = vmatpush1.bf16.msra.mxu0 0
    %1552 = vmatprep.mubr.bf16.mxu0 0
    %1553 = vmatmul.mubr.bf16.gmra.mrb[0].mxu0 %v1468
    %v1554 = vpop.f32.mrb[0].mxu0
    %v1555 = vadd.f32 %v1471, %v1554
    %v1556 = vpop.f32.mrb[0].mxu0
    %v1557 = vadd.f32 %v1472, %v1556
    %v1558 = vpop.f32.mrb[0].mxu0
    %v1559 = vadd.f32 %v1475, %v1558
    %v1560 = vpop.f32.mrb[0].mxu0
    %v1561 = vadd.f32 %v1476, %v1560
    %1562 = vdwg.mxu0
    %v1563 = vadd.f32 %v1512, %v927
    %v1564 = vadd.f32 %v1514, %v931
    %v1565 = vadd.f32 %v1555, %v935
    %v1566 = vadd.f32 %v1557, %v939
    %v1567 = vadd.f32 %v1516, %v927
    %v1568 = vadd.f32 %v1518, %v931
    %v1569 = vadd.f32 %v1559, %v935
    %v1570 = vadd.f32 %v1561, %v939
    %1571 = vst [vmem:[#allocation3] sm:$0xff] %v1563
    %1572 = vst [vmem:[#allocation3 + $0x8] sm:$0xff] %v1564
    %1573 = vst [vmem:[#allocation3 + $0x10] sm:$0xff] %v1565
    %1574 = vst [vmem:[#allocation3 + $0x18] sm:$0xff] %v1566
    %1575 = vst [vmem:[#allocation3 + $0x20] sm:$0xff] %v1567
    %1576 = vst [vmem:[#allocation3 + $0x28] sm:$0xff] %v1568
    %1577 = vst [vmem:[#allocation3 + $0x30] sm:$0xff] %v1569
    %1578 = vst [vmem:[#allocation3 + $0x38] sm:$0xff] %v1570
    %v1579 = vld [vmem:[#allocation3] sm:$0xff]
    %v1580 = vld [vmem:[#allocation3 + $0x20] sm:$0xff]
    %v1581 = vxor.u32 %v1579, 2147483648
    %v1582 = vxor.u32 %v1580, 2147483648
    %v1583 = vmul.f32 %v1581, 1.442695
    %v1584 = vpow.pop %v1583
    %v1585 = vmul.f32 %v1582, 1.442695
    %v1586 = vpow.pop %v1585
    %v1587 = vadd.f32 %v1584, 1.0
    %v1588 = vadd.f32 %v1586, 1.0
    %v1589 = vrcp.pop %v1587
    %v1590 = vmul.f32 1.0, %v1589
    %v1591 = vrcp.pop %v1588
    %v1592 = vmul.f32 1.0, %v1591
    %v1593 = vld [vmem:[#allocation3 + $0x8] sm:$0xff]
    %v1594 = vld [vmem:[#allocation3 + $0x28] sm:$0xff]
    %v1595 = vxor.u32 %v1593, 2147483648
    %v1596 = vxor.u32 %v1594, 2147483648
    %v1597 = vmul.f32 %v1595, 1.442695
    %v1598 = vpow.pop %v1597
    %v1599 = vmul.f32 %v1596, 1.442695
    %v1600 = vpow.pop %v1599
    %v1601 = vadd.f32 %v1598, 1.0
    %v1602 = vadd.f32 %v1600, 1.0
    %v1603 = vrcp.pop %v1601
    %v1604 = vmul.f32 1.0, %v1603
    %v1605 = vrcp.pop %v1602
    %v1606 = vmul.f32 1.0, %v1605
    %v1607 = vld [vmem:[#allocation3 + $0x10] sm:$0xff]
    %v1608 = vld [vmem:[#allocation3 + $0x30] sm:$0xff]
    %v1609 = vtanh.pop %v1607
    %v1610 = vtanh.pop %v1608
    %v1611 = vld [vmem:[#allocation3 + $0x18] sm:$0xff]
    %v1612 = vld [vmem:[#allocation3 + $0x38] sm:$0xff]
    %v1613 = vxor.u32 %v1611, 2147483648
    %v1614 = vxor.u32 %v1612, 2147483648
    %v1615 = vmul.f32 %v1613, 1.442695
    %v1616 = vpow.pop %v1615
    %v1617 = vmul.f32 %v1614, 1.442695
    %v1618 = vpow.pop %v1617
    %v1619 = vadd.f32 %v1616, 1.0
    %v1620 = vadd.f32 %v1618, 1.0
    %v1621 = vrcp.pop %v1619
    %v1622 = vmul.f32 1.0, %v1621
    %v1623 = vrcp.pop %v1620
    %v1624 = vmul.f32 1.0, %v1623
    %v1625 = vmul.f32 %v1604, %v1456
    %v1626 = vmul.f32 %v1606, %v1457
    %v1627 = vmul.f32 %v1590, %v1609
    %v1628 = vmul.f32 %v1592, %v1610
    %v1629 = vadd.f32 %v1625, %v1627
    %v1630 = vadd.f32 %v1626, %v1628
    %v1631 = vtanh.pop %v1629
    %v1632 = vtanh.pop %v1630
    %v1633 = vmul.f32 %v1622, %v1631
    %v1634 = vmul.f32 %v1624, %v1632
    %s1635 = sadd.s32 %s656, 3
    %v1636 = vstv %s1635
    %vm1637 = vcmp.lt.s32.totalorder %v1636, %v654
    %vm1638 = vcmp.lt.s32.totalorder %v1636, %v655
    %v1639 = vsel %vm1637, 1, 0
    %v1640 = vsel %vm1638, 1, 0
    %v1641 = vcvt.s32.f32 %v1639
    %v1642 = vcvt.s32.f32 %v1640
    %v1643 = vsub.f32 %v1633, %v1450
    %v1644 = vsub.f32 %v1634, %v1451
    %1646 = vset.pattern.permute.xlu0 0
    %1647 = vperm.xlu0 %1646, %v1641
    %v1648 = vpop.permute.xlu0 %1647
    %1651 = vset.pattern.permute.xlu0 0
    %1652 = vperm.xlu0 %1651, %v1642
    %v1653 = vpop.permute.xlu0 %1652
    %v1655 = vmul.f32 %v1648, %v1643
    %v1656 = vmul.f32 %v1653, %v1644
    %v1657 = vadd.f32 %v1450, %v1655
    %v1658 = vadd.f32 %v1451, %v1656
    %v1659 = vsub.f32 %v1629, %v1456
    %v1660 = vsub.f32 %v1630, %v1457
    %v1661 = vmul.f32 %v1648, %v1659
    %v1662 = vmul.f32 %v1653, %v1660
    %v1663 = vadd.f32 %v1456, %v1661
    %v1664 = vadd.f32 %v1457, %v1662
    %s1665 = scalar_lea.vmem [#allocation12], 48
    %1666 = vst [vmem:[%s1665] sm:$0xff] %v1657
    %1667 = vst [vmem:[%s1665 + $0x8] sm:$0xff] %v1658
    %s1668 = smul.u32 4, 4
    %s1669 = smul.addr %s1668, 8
    %s1670 = scalar_lea.vmem [#allocation2], %s1669
    %v1671 = vld [vmem:[%s1670] sm:$0xff]
    %v1672 = vld [vmem:[%s1670 + $0x8] sm:$0xff]
    %v1673 = vld [vmem:[%s1670 + $0x10] sm:$0xff]
    %v1674 = vld [vmem:[%s1670 + $0x18] sm:$0xff]
    %v1675 = vpack.c.bf16 %v1658, %v1657
    %v1676 = vunpack.c.l.bf16 %v1671
    %v1677 = vunpack.c.l.bf16 %v1672
    %v1678 = vunpack.c.l.bf16 %v1673
    %v1679 = vunpack.c.l.bf16 %v1674
    %v1680 = vunpack.c.h.bf16 %v1671
    %v1681 = vunpack.c.h.bf16 %v1672
    %v1682 = vunpack.c.h.bf16 %v1673
    %v1683 = vunpack.c.h.bf16 %v1674
    %1684 = vmatprep.subr.bf16.mxu0 %v774
    %1685 = vmatpush1.bf16.msra.mxu0 %v773
    %1686 = vmatprep.subr.bf16.mxu0 %v778
    %1687 = vmatpush1.bf16.msra.mxu0 %v777
    %1688 = vmatprep.subr.bf16.mxu0 %v782
    %1689 = vmatpush1.bf16.msra.mxu0 %v781
    %1690 = vmatprep.subr.bf16.mxu0 %v786
    %1691 = vmatpush1.bf16.msra.mxu0 %v785
    %1692 = vmatprep.subr.bf16.mxu0 %v790
    %1693 = vmatpush1.bf16.msra.mxu0 %v789
    %1694 = vmatprep.subr.bf16.mxu0 %v794
    %1695 = vmatpush1.bf16.msra.mxu0 %v793
    %1696 = vmatprep.subr.bf16.mxu0 %v798
    %1697 = vmatpush1.bf16.msra.mxu0 %v797
    %1698 = vmatprep.subr.bf16.mxu0 %v802
    %1699 = vmatpush1.bf16.msra.mxu0 %v801
    %1700 = vmatprep.subr.bf16.mxu0 0
    %1701 = vmatpush1.bf16.msra.mxu0 0
    %1702 = vmatprep.subr.bf16.mxu0 0
    %1703 = vmatpush1.bf16.msra.mxu0 0
    %1704 = vmatprep.subr.bf16.mxu0 0
    %1705 = vmatpush1.bf16.msra.mxu0 0
    %1706 = vmatprep.subr.bf16.mxu0 0
    %1707 = vmatpush1.bf16.msra.mxu0 0
    %1708 = vmatprep.subr.bf16.mxu0 0
    %1709 = vmatpush1.bf16.msra.mxu0 0
    %1710 = vmatprep.subr.bf16.mxu0 0
    %1711 = vmatpush1.bf16.msra.mxu0 0
    %1712 = vmatprep.subr.bf16.mxu0 0
    %1713 = vmatpush1.bf16.msra.mxu0 0
    %1714 = vmatprep.subr.bf16.mxu0 0
    %1715 = vmatpush1.bf16.msra.mxu0 0
    %1716 = vmatprep.mubr.bf16.mxu0 0
    %1717 = vmatmul.mubr.bf16.gmra.mrb[0].mxu0 %v1675
    %v1718 = vpop.f32.mrb[0].mxu0
    %v1719 = vadd.f32 %v1676, %v1718
    %v1720 = vpop.f32.mrb[0].mxu0
    %v1721 = vadd.f32 %v1677, %v1720
    %v1722 = vpop.f32.mrb[0].mxu0
    %v1723 = vadd.f32 %v1680, %v1722
    %v1724 = vpop.f32.mrb[0].mxu0
    %v1725 = vadd.f32 %v1681, %v1724
    %1726 = vdwg.mxu0
    %1727 = vmatprep.subr.bf16.mxu0 %v776
    %1728 = vmatpush1.bf16.msra.mxu0 %v775
    %1729 = vmatprep.subr.bf16.mxu0 %v780
    %1730 = vmatpush1.bf16.msra.mxu0 %v779
    %1731 = vmatprep.subr.bf16.mxu0 %v784
    %1732 = vmatpush1.bf16.msra.mxu0 %v783
    %1733 = vmatprep.subr.bf16.mxu0 %v788
    %1734 = vmatpush1.bf16.msra.mxu0 %v787
    %1735 = vmatprep.subr.bf16.mxu0 %v792
    %1736 = vmatpush1.bf16.msra.mxu0 %v791
    %1737 = vmatprep.subr.bf16.mxu0 %v796
    %1738 = vmatpush1.bf16.msra.mxu0 %v795
    %1739 = vmatprep.subr.bf16.mxu0 %v800
    %1740 = vmatpush1.bf16.msra.mxu0 %v799
    %1741 = vmatprep.subr.bf16.mxu0 %v804
    %1742 = vmatpush1.bf16.msra.mxu0 %v803
    %1743 = vmatprep.subr.bf16.mxu0 0
    %1744 = vmatpush1.bf16.msra.mxu0 0
    %1745 = vmatprep.subr.bf16.mxu0 0
    %1746 = vmatpush1.bf16.msra.mxu0 0
    %1747 = vmatprep.subr.bf16.mxu0 0
    %1748 = vmatpush1.bf16.msra.mxu0 0
    %1749 = vmatprep.subr.bf16.mxu0 0
    %1750 = vmatpush1.bf16.msra.mxu0 0
    %1751 = vmatprep.subr.bf16.mxu0 0
    %1752 = vmatpush1.bf16.msra.mxu0 0
    %1753 = vmatprep.subr.bf16.mxu0 0
    %1754 = vmatpush1.bf16.msra.mxu0 0
    %1755 = vmatprep.subr.bf16.mxu0 0
    %1756 = vmatpush1.bf16.msra.mxu0 0
    %1757 = vmatprep.subr.bf16.mxu0 0
    %1758 = vmatpush1.bf16.msra.mxu0 0
    %1759 = vmatprep.mubr.bf16.mxu0 0
    %1760 = vmatmul.mubr.bf16.gmra.mrb[0].mxu0 %v1675
    %v1761 = vpop.f32.mrb[0].mxu0
    %v1762 = vadd.f32 %v1678, %v1761
    %v1763 = vpop.f32.mrb[0].mxu0
    %v1764 = vadd.f32 %v1679, %v1763
    %v1765 = vpop.f32.mrb[0].mxu0
    %v1766 = vadd.f32 %v1682, %v1765
    %v1767 = vpop.f32.mrb[0].mxu0
    %v1768 = vadd.f32 %v1683, %v1767
    %1769 = vdwg.mxu0
    %v1770 = vadd.f32 %v1719, %v927
    %v1771 = vadd.f32 %v1721, %v931
    %v1772 = vadd.f32 %v1762, %v935
    %v1773 = vadd.f32 %v1764, %v939
    %v1774 = vadd.f32 %v1723, %v927
    %v1775 = vadd.f32 %v1725, %v931
    %v1776 = vadd.f32 %v1766, %v935
    %v1777 = vadd.f32 %v1768, %v939
    %1778 = vst [vmem:[#allocation3] sm:$0xff] %v1770
    %1779 = vst [vmem:[#allocation3 + $0x8] sm:$0xff] %v1771
    %1780 = vst [vmem:[#allocation3 + $0x10] sm:$0xff] %v1772
    %1781 = vst [vmem:[#allocation3 + $0x18] sm:$0xff] %v1773
    %1782 = vst [vmem:[#allocation3 + $0x20] sm:$0xff] %v1774
    %1783 = vst [vmem:[#allocation3 + $0x28] sm:$0xff] %v1775
    %1784 = vst [vmem:[#allocation3 + $0x30] sm:$0xff] %v1776
    %1785 = vst [vmem:[#allocation3 + $0x38] sm:$0xff] %v1777
    %v1786 = vld [vmem:[#allocation3] sm:$0xff]
    %v1787 = vld [vmem:[#allocation3 + $0x20] sm:$0xff]
    %v1788 = vxor.u32 %v1786, 2147483648
    %v1789 = vxor.u32 %v1787, 2147483648
    %v1790 = vmul.f32 %v1788, 1.442695
    %v1791 = vpow.pop %v1790
    %v1792 = vmul.f32 %v1789, 1.442695
    %v1793 = vpow.pop %v1792
    %v1794 = vadd.f32 %v1791, 1.0
    %v1795 = vadd.f32 %v1793, 1.0
    %v1796 = vrcp.pop %v1794
    %v1797 = vmul.f32 1.0, %v1796
    %v1798 = vrcp.pop %v1795
    %v1799 = vmul.f32 1.0, %v1798
    %v1800 = vld [vmem:[#allocation3 + $0x8] sm:$0xff]
    %v1801 = vld [vmem:[#allocation3 + $0x28] sm:$0xff]
    %v1802 = vxor.u32 %v1800, 2147483648
    %v1803 = vxor.u32 %v1801, 2147483648
    %v1804 = vmul.f32 %v1802, 1.442695
    %v1805 = vpow.pop %v1804
    %v1806 = vmul.f32 %v1803, 1.442695
    %v1807 = vpow.pop %v1806
    %v1808 = vadd.f32 %v1805, 1.0
    %v1809 = vadd.f32 %v1807, 1.0
    %v1810 = vrcp.pop %v1808
    %v1811 = vmul.f32 1.0, %v1810
    %v1812 = vrcp.pop %v1809
    %v1813 = vmul.f32 1.0, %v1812
    %v1814 = vld [vmem:[#allocation3 + $0x10] sm:$0xff]
    %v1815 = vld [vmem:[#allocation3 + $0x30] sm:$0xff]
    %v1816 = vtanh.pop %v1814
    %v1817 = vtanh.pop %v1815
    %v1818 = vld [vmem:[#allocation3 + $0x18] sm:$0xff]
    %v1819 = vld [vmem:[#allocation3 + $0x38] sm:$0xff]
    %v1820 = vxor.u32 %v1818, 2147483648
    %v1821 = vxor.u32 %v1819, 2147483648
    %v1822 = vmul.f32 %v1820, 1.442695
    %v1823 = vpow.pop %v1822
    %v1824 = vmul.f32 %v1821, 1.442695
    %v1825 = vpow.pop %v1824
    %v1826 = vadd.f32 %v1823, 1.0
    %v1827 = vadd.f32 %v1825, 1.0
    %v1828 = vrcp.pop %v1826
    %v1829 = vmul.f32 1.0, %v1828
    %v1830 = vrcp.pop %v1827
    %v1831 = vmul.f32 1.0, %v1830
    %v1832 = vmul.f32 %v1811, %v1663
    %v1833 = vmul.f32 %v1813, %v1664
    %v1834 = vmul.f32 %v1797, %v1816
    %v1835 = vmul.f32 %v1799, %v1817
    %v1836 = vadd.f32 %v1832, %v1834
    %v1837 = vadd.f32 %v1833, %v1835
    %v1838 = vtanh.pop %v1836
    %v1839 = vtanh.pop %v1837
    %v1840 = vmul.f32 %v1829, %v1838
    %v1841 = vmul.f32 %v1831, %v1839
    %s1842 = sadd.s32 %s656, 4
    %v1843 = vstv %s1842
    %vm1844 = vcmp.lt.s32.totalorder %v1843, %v654
    %vm1845 = vcmp.lt.s32.totalorder %v1843, %v655
    %v1846 = vsel %vm1844, 1, 0
    %v1847 = vsel %vm1845, 1, 0
    %v1848 = vcvt.s32.f32 %v1846
    %v1849 = vcvt.s32.f32 %v1847
    %v1850 = vsub.f32 %v1840, %v1657
    %v1851 = vsub.f32 %v1841, %v1658
    %1853 = vset.pattern.permute.xlu0 0
    %1854 = vperm.xlu0 %1853, %v1848
    %v1855 = vpop.permute.xlu0 %1854
    %1858 = vset.pattern.permute.xlu0 0
    %1859 = vperm.xlu0 %1858, %v1849
    %v1860 = vpop.permute.xlu0 %1859
    %v1862 = vmul.f32 %v1855, %v1850
    %v1863 = vmul.f32 %v1860, %v1851
    %v1864 = vadd.f32 %v1657, %v1862
    %v1865 = vadd.f32 %v1658, %v1863
    %v1866 = vsub.f32 %v1836, %v1663
    %v1867 = vsub.f32 %v1837, %v1664
    %v1868 = vmul.f32 %v1855, %v1866
    %v1869 = vmul.f32 %v1860, %v1867
    %v1870 = vadd.f32 %v1663, %v1868
    %v1871 = vadd.f32 %v1664, %v1869
    %s1872 = scalar_lea.vmem [#allocation12], 64
    %1873 = vst [vmem:[%s1872] sm:$0xff] %v1864
    %1874 = vst [vmem:[%s1872 + $0x8] sm:$0xff] %v1865
    %s1875 = smul.u32 5, 4
    %s1876 = smul.addr %s1875, 8
    %s1877 = scalar_lea.vmem [#allocation2], %s1876
    %v1878 = vld [vmem:[%s1877] sm:$0xff]
    %v1879 = vld [vmem:[%s1877 + $0x8] sm:$0xff]
    %v1880 = vld [vmem:[%s1877 + $0x10] sm:$0xff]
    %v1881 = vld [vmem:[%s1877 + $0x18] sm:$0xff]
    %v1882 = vpack.c.bf16 %v1865, %v1864
    %v1883 = vunpack.c.l.bf16 %v1878
    %v1884 = vunpack.c.l.bf16 %v1879
    %v1885 = vunpack.c.l.bf16 %v1880
    %v1886 = vunpack.c.l.bf16 %v1881
    %v1887 = vunpack.c.h.bf16 %v1878
    %v1888 = vunpack.c.h.bf16 %v1879
    %v1889 = vunpack.c.h.bf16 %v1880
    %v1890 = vunpack.c.h.bf16 %v1881
    %1891 = vmatprep.subr.bf16.mxu0 %v774
    %1892 = vmatpush1.bf16.msra.mxu0 %v773
    %1893 = vmatprep.subr.bf16.mxu0 %v778
    %1894 = vmatpush1.bf16.msra.mxu0 %v777
    %1895 = vmatprep.subr.bf16.mxu0 %v782
    %1896 = vmatpush1.bf16.msra.mxu0 %v781
    %1897 = vmatprep.subr.bf16.mxu0 %v786
    %1898 = vmatpush1.bf16.msra.mxu0 %v785
    %1899 = vmatprep.subr.bf16.mxu0 %v790
    %1900 = vmatpush1.bf16.msra.mxu0 %v789
    %1901 = vmatprep.subr.bf16.mxu0 %v794
    %1902 = vmatpush1.bf16.msra.mxu0 %v793
    %1903 = vmatprep.subr.bf16.mxu0 %v798
    %1904 = vmatpush1.bf16.msra.mxu0 %v797
    %1905 = vmatprep.subr.bf16.mxu0 %v802
    %1906 = vmatpush1.bf16.msra.mxu0 %v801
    %1907 = vmatprep.subr.bf16.mxu0 0
    %1908 = vmatpush1.bf16.msra.mxu0 0
    %1909 = vmatprep.subr.bf16.mxu0 0
    %1910 = vmatpush1.bf16.msra.mxu0 0
    %1911 = vmatprep.subr.bf16.mxu0 0
    %1912 = vmatpush1.bf16.msra.mxu0 0
    %1913 = vmatprep.subr.bf16.mxu0 0
    %1914 = vmatpush1.bf16.msra.mxu0 0
    %1915 = vmatprep.subr.bf16.mxu0 0
    %1916 = vmatpush1.bf16.msra.mxu0 0
    %1917 = vmatprep.subr.bf16.mxu0 0
    %1918 = vmatpush1.bf16.msra.mxu0 0
    %1919 = vmatprep.subr.bf16.mxu0 0
    %1920 = vmatpush1.bf16.msra.mxu0 0
    %1921 = vmatprep.subr.bf16.mxu0 0
    %1922 = vmatpush1.bf16.msra.mxu0 0
    %1923 = vmatprep.mubr.bf16.mxu0 0
    %1924 = vmatmul.mubr.bf16.gmra.mrb[0].mxu0 %v1882
    %v1925 = vpop.f32.mrb[0].mxu0
    %v1926 = vadd.f32 %v1883, %v1925
    %v1927 = vpop.f32.mrb[0].mxu0
    %v1928 = vadd.f32 %v1884, %v1927
    %v1929 = vpop.f32.mrb[0].mxu0
    %v1930 = vadd.f32 %v1887, %v1929
    %v1931 = vpop.f32.mrb[0].mxu0
    %v1932 = vadd.f32 %v1888, %v1931
    %1933 = vdwg.mxu0
    %1934 = vmatprep.subr.bf16.mxu0 %v776
    %1935 = vmatpush1.bf16.msra.mxu0 %v775
    %1936 = vmatprep.subr.bf16.mxu0 %v780
    %1937 = vmatpush1.bf16.msra.mxu0 %v779
    %1938 = vmatprep.subr.bf16.mxu0 %v784
    %1939 = vmatpush1.bf16.msra.mxu0 %v783
    %1940 = vmatprep.subr.bf16.mxu0 %v788
    %1941 = vmatpush1.bf16.msra.mxu0 %v787
    %1942 = vmatprep.subr.bf16.mxu0 %v792
    %1943 = vmatpush1.bf16.msra.mxu0 %v791
    %1944 = vmatprep.subr.bf16.mxu0 %v796
    %1945 = vmatpush1.bf16.msra.mxu0 %v795
    %1946 = vmatprep.subr.bf16.mxu0 %v800
    %1947 = vmatpush1.bf16.msra.mxu0 %v799
    %1948 = vmatprep.subr.bf16.mxu0 %v804
    %1949 = vmatpush1.bf16.msra.mxu0 %v803
    %1950 = vmatprep.subr.bf16.mxu0 0
    %1951 = vmatpush1.bf16.msra.mxu0 0
    %1952 = vmatprep.subr.bf16.mxu0 0
    %1953 = vmatpush1.bf16.msra.mxu0 0
    %1954 = vmatprep.subr.bf16.mxu0 0
    %1955 = vmatpush1.bf16.msra.mxu0 0
    %1956 = vmatprep.subr.bf16.mxu0 0
    %1957 = vmatpush1.bf16.msra.mxu0 0
    %1958 = vmatprep.subr.bf16.mxu0 0
    %1959 = vmatpush1.bf16.msra.mxu0 0
    %1960 = vmatprep.subr.bf16.mxu0 0
    %1961 = vmatpush1.bf16.msra.mxu0 0
    %1962 = vmatprep.subr.bf16.mxu0 0
    %1963 = vmatpush1.bf16.msra.mxu0 0
    %1964 = vmatprep.subr.bf16.mxu0 0
    %1965 = vmatpush1.bf16.msra.mxu0 0
    %1966 = vmatprep.mubr.bf16.mxu0 0
    %1967 = vmatmul.mubr.bf16.gmra.mrb[0].mxu0 %v1882
    %v1968 = vpop.f32.mrb[0].mxu0
    %v1969 = vadd.f32 %v1885, %v1968
    %v1970 = vpop.f32.mrb[0].mxu0
    %v1971 = vadd.f32 %v1886, %v1970
    %v1972 = vpop.f32.mrb[0].mxu0
    %v1973 = vadd.f32 %v1889, %v1972
    %v1974 = vpop.f32.mrb[0].mxu0
    %v1975 = vadd.f32 %v1890, %v1974
    %1976 = vdwg.mxu0
    %v1977 = vadd.f32 %v1926, %v927
    %v1978 = vadd.f32 %v1928, %v931
    %v1979 = vadd.f32 %v1969, %v935
    %v1980 = vadd.f32 %v1971, %v939
    %v1981 = vadd.f32 %v1930, %v927
    %v1982 = vadd.f32 %v1932, %v931
    %v1983 = vadd.f32 %v1973, %v935
    %v1984 = vadd.f32 %v1975, %v939
    %1985 = vst [vmem:[#allocation3] sm:$0xff] %v1977
    %1986 = vst [vmem:[#allocation3 + $0x8] sm:$0xff] %v1978
    %1987 = vst [vmem:[#allocation3 + $0x10] sm:$0xff] %v1979
    %1988 = vst [vmem:[#allocation3 + $0x18] sm:$0xff] %v1980
    %1989 = vst [vmem:[#allocation3 + $0x20] sm:$0xff] %v1981
    %1990 = vst [vmem:[#allocation3 + $0x28] sm:$0xff] %v1982
    %1991 = vst [vmem:[#allocation3 + $0x30] sm:$0xff] %v1983
    %1992 = vst [vmem:[#allocation3 + $0x38] sm:$0xff] %v1984
    %v1993 = vld [vmem:[#allocation3] sm:$0xff]
    %v1994 = vld [vmem:[#allocation3 + $0x20] sm:$0xff]
    %v1995 = vxor.u32 %v1993, 2147483648
    %v1996 = vxor.u32 %v1994, 2147483648
    %v1997 = vmul.f32 %v1995, 1.442695
    %v1998 = vpow.pop %v1997
    %v1999 = vmul.f32 %v1996, 1.442695
    %v2000 = vpow.pop %v1999
    %v2001 = vadd.f32 %v1998, 1.0
    %v2002 = vadd.f32 %v2000, 1.0
    %v2003 = vrcp.pop %v2001
    %v2004 = vmul.f32 1.0, %v2003
    %v2005 = vrcp.pop %v2002
    %v2006 = vmul.f32 1.0, %v2005
    %v2007 = vld [vmem:[#allocation3 + $0x8] sm:$0xff]
    %v2008 = vld [vmem:[#allocation3 + $0x28] sm:$0xff]
    %v2009 = vxor.u32 %v2007, 2147483648
    %v2010 = vxor.u32 %v2008, 2147483648
    %v2011 = vmul.f32 %v2009, 1.442695
    %v2012 = vpow.pop %v2011
    %v2013 = vmul.f32 %v2010, 1.442695
    %v2014 = vpow.pop %v2013
    %v2015 = vadd.f32 %v2012, 1.0
    %v2016 = vadd.f32 %v2014, 1.0
    %v2017 = vrcp.pop %v2015
    %v2018 = vmul.f32 1.0, %v2017
    %v2019 = vrcp.pop %v2016
    %v2020 = vmul.f32 1.0, %v2019
    %v2021 = vld [vmem:[#allocation3 + $0x10] sm:$0xff]
    %v2022 = vld [vmem:[#allocation3 + $0x30] sm:$0xff]
    %v2023 = vtanh.pop %v2021
    %v2024 = vtanh.pop %v2022
    %v2025 = vld [vmem:[#allocation3 + $0x18] sm:$0xff]
    %v2026 = vld [vmem:[#allocation3 + $0x38] sm:$0xff]
    %v2027 = vxor.u32 %v2025, 2147483648
    %v2028 = vxor.u32 %v2026, 2147483648
    %v2029 = vmul.f32 %v2027, 1.442695
    %v2030 = vpow.pop %v2029
    %v2031 = vmul.f32 %v2028, 1.442695
    %v2032 = vpow.pop %v2031
    %v2033 = vadd.f32 %v2030, 1.0
    %v2034 = vadd.f32 %v2032, 1.0
    %v2035 = vrcp.pop %v2033
    %v2036 = vmul.f32 1.0, %v2035
    %v2037 = vrcp.pop %v2034
    %v2038 = vmul.f32 1.0, %v2037
    %v2039 = vmul.f32 %v2018, %v1870
    %v2040 = vmul.f32 %v2020, %v1871
    %v2041 = vmul.f32 %v2004, %v2023
    %v2042 = vmul.f32 %v2006, %v2024
    %v2043 = vadd.f32 %v2039, %v2041
    %v2044 = vadd.f32 %v2040, %v2042
    %v2045 = vtanh.pop %v2043
    %v2046 = vtanh.pop %v2044
    %v2047 = vmul.f32 %v2036, %v2045
    %v2048 = vmul.f32 %v2038, %v2046
    %s2049 = sadd.s32 %s656, 5
    %v2050 = vstv %s2049
    %vm2051 = vcmp.lt.s32.totalorder %v2050, %v654
    %vm2052 = vcmp.lt.s32.totalorder %v2050, %v655
    %v2053 = vsel %vm2051, 1, 0
    %v2054 = vsel %vm2052, 1, 0
    %v2055 = vcvt.s32.f32 %v2053
    %v2056 = vcvt.s32.f32 %v2054
    %v2057 = vsub.f32 %v2047, %v1864
    %v2058 = vsub.f32 %v2048, %v1865
    %2060 = vset.pattern.permute.xlu0 0
    %2061 = vperm.xlu0 %2060, %v2055
    %v2062 = vpop.permute.xlu0 %2061
    %2065 = vset.pattern.permute.xlu0 0
    %2066 = vperm.xlu0 %2065, %v2056
    %v2067 = vpop.permute.xlu0 %2066
    %v2069 = vmul.f32 %v2062, %v2057
    %v2070 = vmul.f32 %v2067, %v2058
    %v2071 = vadd.f32 %v1864, %v2069
    %v2072 = vadd.f32 %v1865, %v2070
    %v2073 = vsub.f32 %v2043, %v1870
    %v2074 = vsub.f32 %v2044, %v1871
    %v2075 = vmul.f32 %v2062, %v2073
    %v2076 = vmul.f32 %v2067, %v2074
    %v2077 = vadd.f32 %v1870, %v2075
    %v2078 = vadd.f32 %v1871, %v2076
    %s2079 = scalar_lea.vmem [#allocation12], 80
    %2080 = vst [vmem:[%s2079] sm:$0xff] %v2071
    %2081 = vst [vmem:[%s2079 + $0x8] sm:$0xff] %v2072
    %s2082 = smul.u32 6, 4
    %s2083 = smul.addr %s2082, 8
    %s2084 = scalar_lea.vmem [#allocation2], %s2083
    %v2085 = vld [vmem:[%s2084] sm:$0xff]
    %v2086 = vld [vmem:[%s2084 + $0x8] sm:$0xff]
    %v2087 = vld [vmem:[%s2084 + $0x10] sm:$0xff]
    %v2088 = vld [vmem:[%s2084 + $0x18] sm:$0xff]
    %v2089 = vpack.c.bf16 %v2072, %v2071
    %v2090 = vunpack.c.l.bf16 %v2085
    %v2091 = vunpack.c.l.bf16 %v2086
    %v2092 = vunpack.c.l.bf16 %v2087
    %v2093 = vunpack.c.l.bf16 %v2088
    %v2094 = vunpack.c.h.bf16 %v2085
    %v2095 = vunpack.c.h.bf16 %v2086
    %v2096 = vunpack.c.h.bf16 %v2087
    %v2097 = vunpack.c.h.bf16 %v2088
    %2098 = vmatprep.subr.bf16.mxu0 %v774
    %2099 = vmatpush1.bf16.msra.mxu0 %v773
    %2100 = vmatprep.subr.bf16.mxu0 %v778
    %2101 = vmatpush1.bf16.msra.mxu0 %v777
    %2102 = vmatprep.subr.bf16.mxu0 %v782
    %2103 = vmatpush1.bf16.msra.mxu0 %v781
    %2104 = vmatprep.subr.bf16.mxu0 %v786
    %2105 = vmatpush1.bf16.msra.mxu0 %v785
    %2106 = vmatprep.subr.bf16.mxu0 %v790
    %2107 = vmatpush1.bf16.msra.mxu0 %v789
    %2108 = vmatprep.subr.bf16.mxu0 %v794
    %2109 = vmatpush1.bf16.msra.mxu0 %v793
    %2110 = vmatprep.subr.bf16.mxu0 %v798
    %2111 = vmatpush1.bf16.msra.mxu0 %v797
    %2112 = vmatprep.subr.bf16.mxu0 %v802
    %2113 = vmatpush1.bf16.msra.mxu0 %v801
    %2114 = vmatprep.subr.bf16.mxu0 0
    %2115 = vmatpush1.bf16.msra.mxu0 0
    %2116 = vmatprep.subr.bf16.mxu0 0
    %2117 = vmatpush1.bf16.msra.mxu0 0
    %2118 = vmatprep.subr.bf16.mxu0 0
    %2119 = vmatpush1.bf16.msra.mxu0 0
    %2120 = vmatprep.subr.bf16.mxu0 0
    %2121 = vmatpush1.bf16.msra.mxu0 0
    %2122 = vmatprep.subr.bf16.mxu0 0
    %2123 = vmatpush1.bf16.msra.mxu0 0
    %2124 = vmatprep.subr.bf16.mxu0 0
    %2125 = vmatpush1.bf16.msra.mxu0 0
    %2126 = vmatprep.subr.bf16.mxu0 0
    %2127 = vmatpush1.bf16.msra.mxu0 0
    %2128 = vmatprep.subr.bf16.mxu0 0
    %2129 = vmatpush1.bf16.msra.mxu0 0
    %2130 = vmatprep.mubr.bf16.mxu0 0
    %2131 = vmatmul.mubr.bf16.gmra.mrb[0].mxu0 %v2089
    %v2132 = vpop.f32.mrb[0].mxu0
    %v2133 = vadd.f32 %v2090, %v2132
    %v2134 = vpop.f32.mrb[0].mxu0
    %v2135 = vadd.f32 %v2091, %v2134
    %v2136 = vpop.f32.mrb[0].mxu0
    %v2137 = vadd.f32 %v2094, %v2136
    %v2138 = vpop.f32.mrb[0].mxu0
    %v2139 = vadd.f32 %v2095, %v2138
    %2140 = vdwg.mxu0
    %2141 = vmatprep.subr.bf16.mxu0 %v776
    %2142 = vmatpush1.bf16.msra.mxu0 %v775
    %2143 = vmatprep.subr.bf16.mxu0 %v780
    %2144 = vmatpush1.bf16.msra.mxu0 %v779
    %2145 = vmatprep.subr.bf16.mxu0 %v784
    %2146 = vmatpush1.bf16.msra.mxu0 %v783
    %2147 = vmatprep.subr.bf16.mxu0 %v788
    %2148 = vmatpush1.bf16.msra.mxu0 %v787
    %2149 = vmatprep.subr.bf16.mxu0 %v792
    %2150 = vmatpush1.bf16.msra.mxu0 %v791
    %2151 = vmatprep.subr.bf16.mxu0 %v796
    %2152 = vmatpush1.bf16.msra.mxu0 %v795
    %2153 = vmatprep.subr.bf16.mxu0 %v800
    %2154 = vmatpush1.bf16.msra.mxu0 %v799
    %2155 = vmatprep.subr.bf16.mxu0 %v804
    %2156 = vmatpush1.bf16.msra.mxu0 %v803
    %2157 = vmatprep.subr.bf16.mxu0 0
    %2158 = vmatpush1.bf16.msra.mxu0 0
    %2159 = vmatprep.subr.bf16.mxu0 0
    %2160 = vmatpush1.bf16.msra.mxu0 0
    %2161 = vmatprep.subr.bf16.mxu0 0
    %2162 = vmatpush1.bf16.msra.mxu0 0
    %2163 = vmatprep.subr.bf16.mxu0 0
    %2164 = vmatpush1.bf16.msra.mxu0 0
    %2165 = vmatprep.subr.bf16.mxu0 0
    %2166 = vmatpush1.bf16.msra.mxu0 0
    %2167 = vmatprep.subr.bf16.mxu0 0
    %2168 = vmatpush1.bf16.msra.mxu0 0
    %2169 = vmatprep.subr.bf16.mxu0 0
    %2170 = vmatpush1.bf16.msra.mxu0 0
    %2171 = vmatprep.subr.bf16.mxu0 0
    %2172 = vmatpush1.bf16.msra.mxu0 0
    %2173 = vmatprep.mubr.bf16.mxu0 0
    %2174 = vmatmul.mubr.bf16.gmra.mrb[0].mxu0 %v2089
    %v2175 = vpop.f32.mrb[0].mxu0
    %v2176 = vadd.f32 %v2092, %v2175
    %v2177 = vpop.f32.mrb[0].mxu0
    %v2178 = vadd.f32 %v2093, %v2177
    %v2179 = vpop.f32.mrb[0].mxu0
    %v2180 = vadd.f32 %v2096, %v2179
    %v2181 = vpop.f32.mrb[0].mxu0
    %v2182 = vadd.f32 %v2097, %v2181
    %2183 = vdwg.mxu0
    %v2184 = vadd.f32 %v2133, %v927
    %v2185 = vadd.f32 %v2135, %v931
    %v2186 = vadd.f32 %v2176, %v935
    %v2187 = vadd.f32 %v2178, %v939
    %v2188 = vadd.f32 %v2137, %v927
    %v2189 = vadd.f32 %v2139, %v931
    %v2190 = vadd.f32 %v2180, %v935
    %v2191 = vadd.f32 %v2182, %v939
    %2192 = vst [vmem:[#allocation3] sm:$0xff] %v2184
    %2193 = vst [vmem:[#allocation3 + $0x8] sm:$0xff] %v2185
    %2194 = vst [vmem:[#allocation3 + $0x10] sm:$0xff] %v2186
    %2195 = vst [vmem:[#allocation3 + $0x18] sm:$0xff] %v2187
    %2196 = vst [vmem:[#allocation3 + $0x20] sm:$0xff] %v2188
    %2197 = vst [vmem:[#allocation3 + $0x28] sm:$0xff] %v2189
    %2198 = vst [vmem:[#allocation3 + $0x30] sm:$0xff] %v2190
    %2199 = vst [vmem:[#allocation3 + $0x38] sm:$0xff] %v2191
    %v2200 = vld [vmem:[#allocation3] sm:$0xff]
    %v2201 = vld [vmem:[#allocation3 + $0x20] sm:$0xff]
    %v2202 = vxor.u32 %v2200, 2147483648
    %v2203 = vxor.u32 %v2201, 2147483648
    %v2204 = vmul.f32 %v2202, 1.442695
    %v2205 = vpow.pop %v2204
    %v2206 = vmul.f32 %v2203, 1.442695
    %v2207 = vpow.pop %v2206
    %v2208 = vadd.f32 %v2205, 1.0
    %v2209 = vadd.f32 %v2207, 1.0
    %v2210 = vrcp.pop %v2208
    %v2211 = vmul.f32 1.0, %v2210
    %v2212 = vrcp.pop %v2209
    %v2213 = vmul.f32 1.0, %v2212
    %v2214 = vld [vmem:[#allocation3 + $0x8] sm:$0xff]
    %v2215 = vld [vmem:[#allocation3 + $0x28] sm:$0xff]
    %v2216 = vxor.u32 %v2214, 2147483648
    %v2217 = vxor.u32 %v2215, 2147483648
    %v2218 = vmul.f32 %v2216, 1.442695
    %v2219 = vpow.pop %v2218
    %v2220 = vmul.f32 %v2217, 1.442695
    %v2221 = vpow.pop %v2220
    %v2222 = vadd.f32 %v2219, 1.0
    %v2223 = vadd.f32 %v2221, 1.0
    %v2224 = vrcp.pop %v2222
    %v2225 = vmul.f32 1.0, %v2224
    %v2226 = vrcp.pop %v2223
    %v2227 = vmul.f32 1.0, %v2226
    %v2228 = vld [vmem:[#allocation3 + $0x10] sm:$0xff]
    %v2229 = vld [vmem:[#allocation3 + $0x30] sm:$0xff]
    %v2230 = vtanh.pop %v2228
    %v2231 = vtanh.pop %v2229
    %v2232 = vld [vmem:[#allocation3 + $0x18] sm:$0xff]
    %v2233 = vld [vmem:[#allocation3 + $0x38] sm:$0xff]
    %v2234 = vxor.u32 %v2232, 2147483648
    %v2235 = vxor.u32 %v2233, 2147483648
    %v2236 = vmul.f32 %v2234, 1.442695
    %v2237 = vpow.pop %v2236
    %v2238 = vmul.f32 %v2235, 1.442695
    %v2239 = vpow.pop %v2238
    %v2240 = vadd.f32 %v2237, 1.0
    %v2241 = vadd.f32 %v2239, 1.0
    %v2242 = vrcp.pop %v2240
    %v2243 = vmul.f32 1.0, %v2242
    %v2244 = vrcp.pop %v2241
    %v2245 = vmul.f32 1.0, %v2244
    %v2246 = vmul.f32 %v2225, %v2077
    %v2247 = vmul.f32 %v2227, %v2078
    %v2248 = vmul.f32 %v2211, %v2230
    %v2249 = vmul.f32 %v2213, %v2231
    %v2250 = vadd.f32 %v2246, %v2248
    %v2251 = vadd.f32 %v2247, %v2249
    %v2252 = vtanh.pop %v2250
    %v2253 = vtanh.pop %v2251
    %v2254 = vmul.f32 %v2243, %v2252
    %v2255 = vmul.f32 %v2245, %v2253
    %s2256 = sadd.s32 %s656, 6
    %v2257 = vstv %s2256
    %vm2258 = vcmp.lt.s32.totalorder %v2257, %v654
    %vm2259 = vcmp.lt.s32.totalorder %v2257, %v655
    %v2260 = vsel %vm2258, 1, 0
    %v2261 = vsel %vm2259, 1, 0
    %v2262 = vcvt.s32.f32 %v2260
    %v2263 = vcvt.s32.f32 %v2261
    %v2264 = vsub.f32 %v2254, %v2071
    %v2265 = vsub.f32 %v2255, %v2072
    %2267 = vset.pattern.permute.xlu0 0
    %2268 = vperm.xlu0 %2267, %v2262
    %v2269 = vpop.permute.xlu0 %2268
    %2272 = vset.pattern.permute.xlu0 0
    %2273 = vperm.xlu0 %2272, %v2263
    %v2274 = vpop.permute.xlu0 %2273
    %v2276 = vmul.f32 %v2269, %v2264
    %v2277 = vmul.f32 %v2274, %v2265
    %v2278 = vadd.f32 %v2071, %v2276
    %v2279 = vadd.f32 %v2072, %v2277
    %v2280 = vsub.f32 %v2250, %v2077
    %v2281 = vsub.f32 %v2251, %v2078
    %v2282 = vmul.f32 %v2269, %v2280
    %v2283 = vmul.f32 %v2274, %v2281
    %v2284 = vadd.f32 %v2077, %v2282
    %v2285 = vadd.f32 %v2078, %v2283
    %s2286 = scalar_lea.vmem [#allocation12], 96
    %2287 = vst [vmem:[%s2286] sm:$0xff] %v2278
    %2288 = vst [vmem:[%s2286 + $0x8] sm:$0xff] %v2279
    %s2289 = smul.u32 7, 4
    %s2290 = smul.addr %s2289, 8
    %s2291 = scalar_lea.vmem [#allocation2], %s2290
    %v2292 = vld [vmem:[%s2291] sm:$0xff]
    %v2293 = vld [vmem:[%s2291 + $0x8] sm:$0xff]
    %v2294 = vld [vmem:[%s2291 + $0x10] sm:$0xff]
    %v2295 = vld [vmem:[%s2291 + $0x18] sm:$0xff]
    %v2296 = vpack.c.bf16 %v2279, %v2278
    %v2297 = vunpack.c.l.bf16 %v2292
    %v2298 = vunpack.c.l.bf16 %v2293
    %v2299 = vunpack.c.l.bf16 %v2294
    %v2300 = vunpack.c.l.bf16 %v2295
    %v2301 = vunpack.c.h.bf16 %v2292
    %v2302 = vunpack.c.h.bf16 %v2293
    %v2303 = vunpack.c.h.bf16 %v2294
    %v2304 = vunpack.c.h.bf16 %v2295
    %2305 = vmatprep.subr.bf16.mxu0 %v774
    %2306 = vmatpush1.bf16.msra.mxu0 %v773
    %2307 = vmatprep.subr.bf16.mxu0 %v778
    %2308 = vmatpush1.bf16.msra.mxu0 %v777
    %2309 = vmatprep.subr.bf16.mxu0 %v782
    %2310 = vmatpush1.bf16.msra.mxu0 %v781
    %2311 = vmatprep.subr.bf16.mxu0 %v786
    %2312 = vmatpush1.bf16.msra.mxu0 %v785
    %2313 = vmatprep.subr.bf16.mxu0 %v790
    %2314 = vmatpush1.bf16.msra.mxu0 %v789
    %2315 = vmatprep.subr.bf16.mxu0 %v794
    %2316 = vmatpush1.bf16.msra.mxu0 %v793
    %2317 = vmatprep.subr.bf16.mxu0 %v798
    %2318 = vmatpush1.bf16.msra.mxu0 %v797
    %2319 = vmatprep.subr.bf16.mxu0 %v802
    %2320 = vmatpush1.bf16.msra.mxu0 %v801
    %2321 = vmatprep.subr.bf16.mxu0 0
    %2322 = vmatpush1.bf16.msra.mxu0 0
    %2323 = vmatprep.subr.bf16.mxu0 0
    %2324 = vmatpush1.bf16.msra.mxu0 0
    %2325 = vmatprep.subr.bf16.mxu0 0
    %2326 = vmatpush1.bf16.msra.mxu0 0
    %2327 = vmatprep.subr.bf16.mxu0 0
    %2328 = vmatpush1.bf16.msra.mxu0 0
    %2329 = vmatprep.subr.bf16.mxu0 0
    %2330 = vmatpush1.bf16.msra.mxu0 0
    %2331 = vmatprep.subr.bf16.mxu0 0
    %2332 = vmatpush1.bf16.msra.mxu0 0
    %2333 = vmatprep.subr.bf16.mxu0 0
    %2334 = vmatpush1.bf16.msra.mxu0 0
    %2335 = vmatprep.subr.bf16.mxu0 0
    %2336 = vmatpush1.bf16.msra.mxu0 0
    %2337 = vmatprep.mubr.bf16.mxu0 0
    %2338 = vmatmul.mubr.bf16.gmra.mrb[0].mxu0 %v2296
    %v2339 = vpop.f32.mrb[0].mxu0
    %v2340 = vadd.f32 %v2297, %v2339
    %v2341 = vpop.f32.mrb[0].mxu0
    %v2342 = vadd.f32 %v2298, %v2341
    %v2343 = vpop.f32.mrb[0].mxu0
    %v2344 = vadd.f32 %v2301, %v2343
    %v2345 = vpop.f32.mrb[0].mxu0
    %v2346 = vadd.f32 %v2302, %v2345
    %2347 = vdwg.mxu0
    %2348 = vmatprep.subr.bf16.mxu0 %v776
    %2349 = vmatpush1.bf16.msra.mxu0 %v775
    %2350 = vmatprep.subr.bf16.mxu0 %v780
    %2351 = vmatpush1.bf16.msra.mxu0 %v779
    %2352 = vmatprep.subr.bf16.mxu0 %v784
    %2353 = vmatpush1.bf16.msra.mxu0 %v783
    %2354 = vmatprep.subr.bf16.mxu0 %v788
    %2355 = vmatpush1.bf16.msra.mxu0 %v787
    %2356 = vmatprep.subr.bf16.mxu0 %v792
    %2357 = vmatpush1.bf16.msra.mxu0 %v791
    %2358 = vmatprep.subr.bf16.mxu0 %v796
    %2359 = vmatpush1.bf16.msra.mxu0 %v795
    %2360 = vmatprep.subr.bf16.mxu0 %v800
    %2361 = vmatpush1.bf16.msra.mxu0 %v799
    %2362 = vmatprep.subr.bf16.mxu0 %v804
    %2363 = vmatpush1.bf16.msra.mxu0 %v803
    %2364 = vmatprep.subr.bf16.mxu0 0
    %2365 = vmatpush1.bf16.msra.mxu0 0
    %2366 = vmatprep.subr.bf16.mxu0 0
    %2367 = vmatpush1.bf16.msra.mxu0 0
    %2368 = vmatprep.subr.bf16.mxu0 0
    %2369 = vmatpush1.bf16.msra.mxu0 0
    %2370 = vmatprep.subr.bf16.mxu0 0
    %2371 = vmatpush1.bf16.msra.mxu0 0
    %2372 = vmatprep.subr.bf16.mxu0 0
    %2373 = vmatpush1.bf16.msra.mxu0 0
    %2374 = vmatprep.subr.bf16.mxu0 0
    %2375 = vmatpush1.bf16.msra.mxu0 0
    %2376 = vmatprep.subr.bf16.mxu0 0
    %2377 = vmatpush1.bf16.msra.mxu0 0
    %2378 = vmatprep.subr.bf16.mxu0 0
    %2379 = vmatpush1.bf16.msra.mxu0 0
    %2380 = vmatprep.mubr.bf16.mxu0 0
    %2381 = vmatmul.mubr.bf16.gmra.mrb[0].mxu0 %v2296
    %v2382 = vpop.f32.mrb[0].mxu0
    %v2383 = vadd.f32 %v2299, %v2382
    %v2384 = vpop.f32.mrb[0].mxu0
    %v2385 = vadd.f32 %v2300, %v2384
    %v2386 = vpop.f32.mrb[0].mxu0
    %v2387 = vadd.f32 %v2303, %v2386
    %v2388 = vpop.f32.mrb[0].mxu0
    %v2389 = vadd.f32 %v2304, %v2388
    %2390 = vdwg.mxu0
    %v2391 = vadd.f32 %v2340, %v927
    %v2392 = vadd.f32 %v2342, %v931
    %v2393 = vadd.f32 %v2383, %v935
    %v2394 = vadd.f32 %v2385, %v939
    %v2395 = vadd.f32 %v2344, %v927
    %v2396 = vadd.f32 %v2346, %v931
    %v2397 = vadd.f32 %v2387, %v935
    %v2398 = vadd.f32 %v2389, %v939
    %2399 = vst [vmem:[#allocation3] sm:$0xff] %v2391
    %2400 = vst [vmem:[#allocation3 + $0x8] sm:$0xff] %v2392
    %2401 = vst [vmem:[#allocation3 + $0x10] sm:$0xff] %v2393
    %2402 = vst [vmem:[#allocation3 + $0x18] sm:$0xff] %v2394
    %2403 = vst [vmem:[#allocation3 + $0x20] sm:$0xff] %v2395
    %2404 = vst [vmem:[#allocation3 + $0x28] sm:$0xff] %v2396
    %2405 = vst [vmem:[#allocation3 + $0x30] sm:$0xff] %v2397
    %2406 = vst [vmem:[#allocation3 + $0x38] sm:$0xff] %v2398
    %v2407 = vld [vmem:[#allocation3] sm:$0xff]
    %v2408 = vld [vmem:[#allocation3 + $0x20] sm:$0xff]
    %v2409 = vxor.u32 %v2407, 2147483648
    %v2410 = vxor.u32 %v2408, 2147483648
    %v2411 = vmul.f32 %v2409, 1.442695
    %v2412 = vpow.pop %v2411
    %v2413 = vmul.f32 %v2410, 1.442695
    %v2414 = vpow.pop %v2413
    %v2415 = vadd.f32 %v2412, 1.0
    %v2416 = vadd.f32 %v2414, 1.0
    %v2417 = vrcp.pop %v2415
    %v2418 = vmul.f32 1.0, %v2417
    %v2419 = vrcp.pop %v2416
    %v2420 = vmul.f32 1.0, %v2419
    %v2421 = vld [vmem:[#allocation3 + $0x8] sm:$0xff]
    %v2422 = vld [vmem:[#allocation3 + $0x28] sm:$0xff]
    %v2423 = vxor.u32 %v2421, 2147483648
    %v2424 = vxor.u32 %v2422, 2147483648
    %v2425 = vmul.f32 %v2423, 1.442695
    %v2426 = vpow.pop %v2425
    %v2427 = vmul.f32 %v2424, 1.442695
    %v2428 = vpow.pop %v2427
    %v2429 = vadd.f32 %v2426, 1.0
    %v2430 = vadd.f32 %v2428, 1.0
    %v2431 = vrcp.pop %v2429
    %v2432 = vmul.f32 1.0, %v2431
    %v2433 = vrcp.pop %v2430
    %v2434 = vmul.f32 1.0, %v2433
    %v2435 = vld [vmem:[#allocation3 + $0x10] sm:$0xff]
    %v2436 = vld [vmem:[#allocation3 + $0x30] sm:$0xff]
    %v2437 = vtanh.pop %v2435
    %v2438 = vtanh.pop %v2436
    %v2439 = vld [vmem:[#allocation3 + $0x18] sm:$0xff]
    %v2440 = vld [vmem:[#allocation3 + $0x38] sm:$0xff]
    %v2441 = vxor.u32 %v2439, 2147483648
    %v2442 = vxor.u32 %v2440, 2147483648
    %v2443 = vmul.f32 %v2441, 1.442695
    %v2444 = vpow.pop %v2443
    %v2445 = vmul.f32 %v2442, 1.442695
    %v2446 = vpow.pop %v2445
    %v2447 = vadd.f32 %v2444, 1.0
    %v2448 = vadd.f32 %v2446, 1.0
    %v2449 = vrcp.pop %v2447
    %v2450 = vmul.f32 1.0, %v2449
    %v2451 = vrcp.pop %v2448
    %v2452 = vmul.f32 1.0, %v2451
    %v2453 = vmul.f32 %v2432, %v2284
    %v2454 = vmul.f32 %v2434, %v2285
    %v2455 = vmul.f32 %v2418, %v2437
    %v2456 = vmul.f32 %v2420, %v2438
    %v2457 = vadd.f32 %v2453, %v2455
    %v2458 = vadd.f32 %v2454, %v2456
    %v2459 = vtanh.pop %v2457
    %v2460 = vtanh.pop %v2458
    %v2461 = vmul.f32 %v2450, %v2459
    %v2462 = vmul.f32 %v2452, %v2460
    %s2463 = sadd.s32 %s656, 7
    %v2464 = vstv %s2463
    %vm2465 = vcmp.lt.s32.totalorder %v2464, %v654
    %vm2466 = vcmp.lt.s32.totalorder %v2464, %v655
    %v2467 = vsel %vm2465, 1, 0
    %v2468 = vsel %vm2466, 1, 0
    %v2469 = vcvt.s32.f32 %v2467
    %v2470 = vcvt.s32.f32 %v2468
    %v2471 = vsub.f32 %v2461, %v2278
    %v2472 = vsub.f32 %v2462, %v2279
    %2474 = vset.pattern.permute.xlu0 0
    %2475 = vperm.xlu0 %2474, %v2469
    %v2476 = vpop.permute.xlu0 %2475
    %2479 = vset.pattern.permute.xlu0 0
    %2480 = vperm.xlu0 %2479, %v2470
    %v2481 = vpop.permute.xlu0 %2480
    %v2483 = vmul.f32 %v2476, %v2471
    %v2484 = vmul.f32 %v2481, %v2472
    %v2485 = vadd.f32 %v2278, %v2483
    %v2486 = vadd.f32 %v2279, %v2484
    %v2487 = vsub.f32 %v2457, %v2284
    %v2488 = vsub.f32 %v2458, %v2285
    %v2489 = vmul.f32 %v2476, %v2487
    %v2490 = vmul.f32 %v2481, %v2488
    %v2491 = vadd.f32 %v2284, %v2489
    %v2492 = vadd.f32 %v2285, %v2490
    %s2493 = scalar_lea.vmem [#allocation12], 112
    %2494 = vst [vmem:[%s2493] sm:$0xff] %v2485
    %2495 = vst [vmem:[%s2493 + $0x8] sm:$0xff] %v2486
    %2496 = vst [vmem:[#allocation4] sm:$0xff] %v2485
    %2497 = vst [vmem:[#allocation4 + $0x8] sm:$0xff] %v2486
    %2498 = vst [vmem:[#allocation5] sm:$0xff] %v2491
    %2499 = vst [vmem:[#allocation5 + $0x8] sm:$0xff] %v2492
    // Predicated region
    $region38: #{tpu_custom_call.1} parent=1 // pred_check
      %p2500 = pneg %p67
    $region39: #{tpu_custom_call.1} parent=1 // pred_check_branch
      %2502 = sbr.rel (%p2500) target = $region41
    $region40: #{tpu_custom_call.1} parent=1 // pred_region
      %2503 = vst [vmem:[#allocation13] sm:$0xff] %v2485
      %2504 = vst [vmem:[#allocation13 + $0x8] sm:$0xff] %v2486
      %2505 = vst [vmem:[#allocation15] sm:$0xff] %v2491
      %2506 = vst [vmem:[#allocation15 + $0x8] sm:$0xff] %v2492
    $region41: #{tpu_custom_call.1} parent=1 // pred_fallthru
      _
    // Predicated region
    $region42: #{tpu_custom_call.1} parent=1 // pred_check
      _
    $region43: #{tpu_custom_call.1} parent=1 // pred_check_branch
      %2508 = sbr.rel (0) target = $region45
    $region44: #{tpu_custom_call.1} parent=1 // pred_region
      %s2510 = ssub.s32 2048, 2048
      %2511 = vsyncadd [#allocation8], %s2510
      %s2512 = sshll.u32 [#allocation12], 4
      %s2513 = int_to_ptr.vmem [resolvable:$true] %s2512
      %2518 = dma.vmem_to_hbm [thread:$0]  %s2513, 2048, %s5, [#allocation8], 128, 128, 8
    $region45: #{tpu_custom_call.1} parent=1 // pred_fallthru
      _
    // Predicated region
    $region46: #{tpu_custom_call.1} parent=1 // pred_check
      _
    $region47: #{tpu_custom_call.1} parent=1 // pred_check_branch
      %2520 = sbr.rel (0) target = $region49
    $region48: #{tpu_custom_call.1} parent=1 // pred_region
      %s2522 = ssub.s32 256, 256
      %2523 = vsyncadd [#allocation14], %s2522
      %s2524 = sshll.u32 [#allocation13], 4
      %s2525 = int_to_ptr.vmem [resolvable:$true] %s2524
      %2530 = dma.vmem_to_hbm [thread:$0]  %s2525, 256, %s6, [#allocation14], 128, 128, 8
    $region49: #{tpu_custom_call.1} parent=1 // pred_fallthru
      _
    // Predicated region
    $region50: #{tpu_custom_call.1} parent=1 // pred_check
      _
    $region51: #{tpu_custom_call.1} parent=1 // pred_check_branch
      %2532 = sbr.rel (0) target = $region53
    $region52: #{tpu_custom_call.1} parent=1 // pred_region
      %s2534 = ssub.s32 256, 256
      %2535 = vsyncadd [#allocation14], %s2534
      %s2536 = sshll.u32 [#allocation15], 4
      %s2537 = int_to_ptr.vmem [resolvable:$true] %s2536
      %2542 = dma.vmem_to_hbm [thread:$0]  %s2537, 256, %s7, [#allocation14], 128, 128, 8
    $region53: #{tpu_custom_call.1} parent=1 // pred_fallthru
      _
    // Predicated region
    $region54: #{tpu_custom_call.1} parent=1 // pred_check
      _
    $region55: #{tpu_custom_call.1} parent=1 // pred_check_branch
      %2544 = sbr.rel (0) target = $region57
    $region56: #{tpu_custom_call.1} parent=1 // pred_region
      %2545 = dma.done [#allocation8], 2048
    $region57: #{tpu_custom_call.1} parent=1 // pred_fallthru
      _
    // Predicated region
    $region58: #{tpu_custom_call.1} parent=1 // pred_check
      _
    $region59: #{tpu_custom_call.1} parent=1 // pred_check_branch
      %2547 = sbr.rel (0) target = $region61
    $region60: #{tpu_custom_call.1} parent=1 // pred_region
      %2548 = dma.done [#allocation14], 256
    $region61: #{tpu_custom_call.1} parent=1 // pred_fallthru
      _
    // Predicated region
    $region62: #{tpu_custom_call.1} parent=1 // pred_check
      _
    $region63: #{tpu_custom_call.1} parent=1 // pred_check_branch
      %2550 = sbr.rel (0) target = $region65
    $region64: #{tpu_custom_call.1} parent=1 // pred_region
      %2551 = dma.done [#allocation14], 256
    $region65: #{tpu_custom_call.1} parent=1 // pred_fallthru
      _
    %2552 = vsyncpa [#allocation7], 1
    %2553 = vsyncpa [#allocation10], 1
    %2554 = vsyncpa [#allocation8], 1
    %2555 = vsyncpa [#allocation14], 1

</llo_original>
